<compile_context>
chip_gen: v5e
topology: v5e:2x2
jax: 0.10.0
libtpu: 0.0.40
codegen_flags: <defaults>
</compile_context>

<pallas_src>
import functools

import jax
import jax.numpy as jnp
from jax.experimental import pallas as pl
from jax.experimental.pallas import tpu as pltpu

EPS = 1e-5  # nn.InstanceNorm2d default


def _instance_norm(v, HW, B):
    """v: (HW*B, C) f32, rows ordered (hw, b).
    InstanceNorm2d: per-sample, per-channel stats over spatial positions, biased
    variance, eps=1e-5, no affine.  Single pass (E[x^2]-mean^2) in f32 with a
    non-negativity clamp on the variance."""
    C = v.shape[-1]
    v3 = v.reshape(HW, B, C)
    mean = jnp.mean(v3, axis=0, keepdims=True)
    ex2 = jnp.mean(v3 * v3, axis=0, keepdims=True)
    var = jnp.maximum(ex2 - mean * mean, 0.0)
    out = (v3 - mean) * jax.lax.rsqrt(var + EPS)
    return out.reshape(HW * B, C)


def identity_block_kernel(x_ref, w1_ref, w2_ref, w3_ref, o_ref, pad_ref, col_ref,
                          *, H, W, B, dim, blk):
    HW = H * W
    M = HW * B
    nblk = dim // blk
    Wp = W + 2                    # padded row width
    Mp = H * Wp * B               # matmul rows incl. dead pad-column rows

    # ---- conv1 (1x1) == channel matmul on the MXU (bf16 in / f32 acc) -----------
    # Conv bias omitted: it is cancelled exactly by the affine-less InstanceNorm.
    x = x_ref[0]                                                  # (M, 2*dim) bf16
    y = jnp.dot(x, w1_ref[...], preferred_element_type=jnp.float32)
    y = jnp.maximum(_instance_norm(y, HW, B), 0.0)                # (M, dim) f32

    # ---- conv2: grouped 3x3, padding=1 -------------------------------------------
    # Zero-fill the spatially padded scratch (flattened (H+2)x(W+2) leading axis,
    # +1 slack row at each end), then write the interior rows.  Every tap is then a
    # plain, in-bounds slice along the untiled leading axis -- no masks, no selects,
    # no reads of uninitialized VMEM.
    pad_ref[...] = jnp.zeros_like(pad_ref)
    y3 = y.reshape(HW, B, dim)
    for h in range(H):
        r0 = (h + 1) * Wp + 2     # padded row h+1, col 1, plus the +1 slack shift
        pad_ref[r0:r0 + W] = y3[h * W:(h + 1) * W]

    outs = []
    for cb in range(nblk):
        c0 = cb * blk
        # Stage im2col in a bf16 VMEM scratch (never as a concatenated value).
        for tap in range(9):
            ky, kx = tap // 3, tap % 3
            start = ky * Wp + kx
            t = pad_ref[start:start + H * Wp, :, c0:c0 + blk]     # (H*Wp, B, blk) f32
            col_ref[:, tap * blk:(tap + 1) * blk] = (
                t.reshape(Mp, blk).astype(jnp.bfloat16))
        # One fused long-K MXU matmul per 128-wide block-diagonal weight block.
        z = jnp.dot(col_ref[...], w2_ref[cb], preferred_element_type=jnp.float32)
        # Compact away the dead pad-column rows (2 per image row).
        z = z.reshape(H, Wp, B, blk)[:, 1:W + 1].reshape(M, blk)
        outs.append(z)
    y = outs[0] if nblk == 1 else jnp.concatenate(outs, axis=1)
    y = jnp.maximum(_instance_norm(y, HW, B), 0.0)

    # ---- conv3 (1x1) == channel matmul -------------------------------------------
    y = jnp.dot(y.astype(jnp.bfloat16), w3_ref[...],
                preferred_element_type=jnp.float32)
    y = _instance_norm(y, HW, B)

    # ---- residual add (re-read the resident x block; no long-lived f32 shortcut) --
    y = jnp.maximum(y + x_ref[0].astype(jnp.float32), 0.0)
    o_ref[0] = y.astype(o_ref.dtype)


def _pack_grouped_3x3(w2, dim, groups=32, blk=None):
    """w2: (dim, dim//groups, 3, 3) PyTorch OIHW grouped weights ->
    (nblk, 9*blk, blk) block-diagonal im2col weights, rows ordered [tap, cin_local],
    columns = cout_local of the block (blk = min(dim, 128))."""
    cg = dim // groups
    if blk is None:
        blk = min(dim, 128)
    assert dim % blk == 0 and blk % cg == 0
    nblk = dim // blk
    gpb = blk // cg                               # groups packed per channel block
    w2r = w2.reshape(nblk, gpb, cg, cg, 3, 3)     # [blk, grp_in_blk, oc, ic, ky, kx]
    blocks = jnp.zeros((nblk, 9, blk, blk), jnp.float32)
    for gl in range(gpb):
        # -> [blk, ky, kx, ic, oc] -> [blk, tap, ic, oc]
        sub = jnp.transpose(w2r[:, gl], (0, 3, 4, 2, 1)).reshape(nblk, 9, cg, cg)
        blocks = blocks.at[:, :, gl * cg:(gl + 1) * cg,
                           gl * cg:(gl + 1) * cg].set(sub)
    return blocks.reshape(nblk, 9 * blk, blk)


def identity_block_slab(x_slab, packed, *, H, W, dim):
    """x_slab: (G, HW*B, 2*dim) bf16 slab, rows ordered (hw, b) with B samples packed
    on the sublane axis.  This is the persistent layout consecutive blocks would
    chain (no per-block NCHW plumbing)."""
    w1b, w2p, w3b = packed
    G, M, C2 = x_slab.shape
    HW = H * W
    B = M // HW
    blk = min(dim, 128)
    nblk = dim // blk
    Wp = W + 2
    P = (H + 2) * Wp + 2          # padded spatial rows + 1 slack row each end
    Mp = H * Wp * B

    kernel = functools.partial(identity_block_kernel,
                               H=H, W=W, B=B, dim=dim, blk=blk)
    return pl.pallas_call(
        kernel,
        out_shape=jax.ShapeDtypeStruct((G, M, C2), jnp.bfloat16),
        grid_spec=pltpu.PrefetchScalarGridSpec(
            num_scalar_prefetch=0,
            grid=(G,),
            in_specs=[
                pl.BlockSpec((1, M, C2), lambda g: (g, 0, 0)),             # x (bf16)
                pl.BlockSpec((C2, dim), lambda g: (0, 0)),                 # w1
                pl.BlockSpec((nblk, 9 * blk, blk), lambda g: (0, 0, 0)),   # w2 blocks
                pl.BlockSpec((dim, C2), lambda g: (0, 0)),                 # w3
            ],
            out_specs=pl.BlockSpec((1, M, C2), lambda g: (g, 0, 0)),
            scratch_shapes=[
                pltpu.VMEM((P, B, dim), jnp.float32),      # zero-filled padded slab
                pltpu.VMEM((Mp, 9 * blk), jnp.bfloat16),   # staged im2col columns
            ],
        ),
        compiler_params=pltpu.CompilerParams(
            dimension_semantics=("parallel",),
            vmem_limit_bytes=32 * 1024 * 1024,
        ),
    )(x_slab, w1b, w2p, w3b)


def identity_block(x_nchw, params, *, dim, batch_block=8):
    """x_nchw: (N, 2*dim, H, W) float32 (PyTorch layout).  Returns same shape."""
    N, C2, H, W = x_nchw.shape
    assert C2 == 2 * dim
    B = batch_block
    assert N % B == 0, "demo keeps N a multiple of the per-step batch"
    G = N // B
    HW = H * W

    w1, b1, w2, b2, w3, b3 = params
    # Biases are dropped: mathematically cancelled by the following affine-less
    # InstanceNorm2d layers (forward output is unchanged).
    del b1, b2, b3
    packed = (w1.astype(jnp.bfloat16),
              _pack_grouped_3x3(w2, dim).astype(jnp.bfloat16),
              w3.astype(jnp.bfloat16))

    # Layout plumbing for the PyTorch NCHW interface (see TODO(synk) at top):
    # NCHW -> (G, HW*B, C2) bf16 slab; batch packs the f32/bf16 sublane tile,
    # channels are lane-dense (C2 >= 128).
    x = jnp.transpose(x_nchw, (0, 2, 3, 1)).astype(jnp.bfloat16)        # NHWC bf16
    xg = x.reshape(G, B, HW, C2).transpose(0, 2, 1, 3).reshape(G, HW * B, C2)

    out = identity_block_slab(xg, packed, H=H, W=W, dim=dim)

    out = out.reshape(G, HW, B, C2).transpose(0, 2, 1, 3).reshape(N, H, W, C2)
    return jnp.transpose(out, (0, 3, 1, 2)).astype(jnp.float32)         # NCHW f32


def reference_identity_block(x_nchw, params):
    """Pure-JAX f32 reference matching the PyTorch IdentityBlock forward
    (including the conv biases, which InstanceNorm cancels)."""
    w1, b1, w2, b2, w3, b3 = params

    def inorm(v):  # v: NHWC
        m = jnp.mean(v, axis=(1, 2), keepdims=True)
        var = jnp.mean((v - m) ** 2, axis=(1, 2), keepdims=True)
        return (v - m) * jax.lax.rsqrt(var + EPS)

    x = jnp.transpose(x_nchw, (0, 2, 3, 1))
    s = x
    y = jnp.einsum('nhwc,cd->nhwd', x, w1) + b1.reshape(1, 1, 1, -1)
    y = jnp.maximum(inorm(y), 0.0)
    y = jax.lax.conv_general_dilated(
        y, jnp.transpose(w2, (2, 3, 1, 0)), window_strides=(1, 1), padding="SAME",
        dimension_numbers=("NHWC", "HWIO", "NHWC"),
        feature_group_count=32) + b2.reshape(1, 1, 1, -1)
    y = jnp.maximum(inorm(y), 0.0)
    y = jnp.einsum('nhwc,cd->nhwd', y, w3) + b3.reshape(1, 1, 1, -1)
    y = inorm(y)
    y = jnp.maximum(y + s, 0.0)
    return jnp.transpose(y, (0, 3, 1, 2))


def init_params(key, dim):
    """Synthetic parameters with the nn.Module's shapes.
    conv1: (dim, 2*dim, 1, 1) stored as (2*dim, dim); conv2: (dim, dim//32, 3, 3)
    grouped OIHW; conv3: (2*dim, dim, 1, 1) stored as (dim, 2*dim)."""
    ks = jax.random.split(key, 6)
    c2, cg = 2 * dim, dim // 32
    w1 = jax.random.normal(ks[0], (c2, dim), jnp.float32) * 0.1
    b1 = jax.random.normal(ks[1], (1, dim), jnp.float32) * 0.1
    w2 = jax.random.normal(ks[2], (dim, cg, 3, 3), jnp.float32) * 0.1
    b2 = jax.random.normal(ks[3], (1, dim), jnp.float32) * 0.1
    w3 = jax.random.normal(ks[4], (dim, c2), jnp.float32) * 0.1
    b3 = jax.random.normal(ks[5], (1, c2), jnp.float32) * 0.1
    return w1, b1, w2, b2, w3, b3


if __name__ == "__main__":
    # groups=32 in conv2 => dim % 32 == 0; dim=64 keeps the demo small while giving
    # C2 = 128 (lane-dense stores).  32 samples, 8 per grid step -> grid=(4,) so each
    # v7x TensorCore gets >=2 pipelined steps; every matmul has M = 8*8*8 = 512 rows.
    dim = 64
    N, H, W = 32, 8, 8
    key = jax.random.PRNGKey(0)
    kx, kp = jax.random.split(key)
    x = jax.random.normal(kx, (N, 2 * dim, H, W), jnp.float32)   # NCHW like the module
    params = init_params(kp, dim)

    out = identity_block(x, params, dim=dim)
    jax.block_until_ready(out)
    assert out.shape == (N, 2 * dim, H, W)

    # Correctness check against a pure-JAX f32 reference (with biases; the kernel
    # drops them since InstanceNorm cancels them exactly).  Activations/MXU operands
    # are bf16 in the kernel, so compare in a relative-RMS sense (~1% expected).
    ref = reference_identity_block(x, params)
    rel_rms = jnp.sqrt(jnp.mean((out - ref) ** 2) / (jnp.mean(ref ** 2) + 1e-12))
    assert float(rel_rms) < 0.05, f"relative RMS error too large: {float(rel_rms)}"

    print("KERNEL_OK")
</pallas_src>

<mosaic_0001>
module attributes {stable_mosaic.version = 11 : i64} {
  func.func @identity_block_kernel(%arg0: i32, %arg1: memref<1x512x128xbf16, #tpu.memory_space<vmem>>, %arg2: memref<128x64xbf16, #tpu.memory_space<vmem>>, %arg3: memref<1x576x64xbf16, #tpu.memory_space<vmem>>, %arg4: memref<64x128xbf16, #tpu.memory_space<vmem>>, %arg5: memref<1x512x128xbf16, #tpu.memory_space<vmem>>, %arg6: memref<102x8x64xf32, #tpu.memory_space<vmem>>, %arg7: memref<640x576xbf16, #tpu.memory_space<vmem>>) attributes {dimension_semantics = [#tpu.dimension_semantics<parallel>], iteration_bounds = array<i64: 4>, scalar_prefetch = 0 : i64, scratch_operands = 2 : i64, tpu.core_type = #tpu.core_type<tc>, window_params = [{transform_indices = @transform_0, window_bounds = array<i64: 1, 512, 128>}, {pipeline_mode = #tpu.pipeline_mode<synchronous>, transform_indices = @transform_1, window_bounds = array<i64: 128, 64>}, {pipeline_mode = #tpu.pipeline_mode<synchronous>, transform_indices = @transform_2, window_bounds = array<i64: 1, 576, 64>}, {pipeline_mode = #tpu.pipeline_mode<synchronous>, transform_indices = @transform_3, window_bounds = array<i64: 64, 128>}, {transform_indices = @transform_4, window_bounds = array<i64: 1, 512, 128>}]} {
    %c0 = arith.constant 0 : index
    %c0_0 = arith.constant 0 : index
    %c0_1 = arith.constant 0 : index
    %0 = vector.load %arg1[%c0, %c0_0, %c0_1] : memref<1x512x128xbf16, #tpu.memory_space<vmem>>, vector<1x512x128xbf16>
    %1 = vector.shape_cast %0 : vector<1x512x128xbf16> to vector<512x128xbf16>
    %c0_2 = arith.constant 0 : index
    %c0_3 = arith.constant 0 : index
    %2 = vector.load %arg2[%c0_2, %c0_3] : memref<128x64xbf16, #tpu.memory_space<vmem>>, vector<128x64xbf16>
    %cst = arith.constant dense<0.000000e+00> : vector<512x64xf32>
    %3 = tpu.matmul %1, %2, %cst {dimension_numbers = #tpu.dot_dimension_numbers<[1], [0], [0], [1], [0, 0, 1, 1], [], []>} : vector<512x128xbf16>, vector<128x64xbf16>, vector<512x64xf32> -> vector<512x64xf32>
    %4 = vector.shape_cast %3 : vector<512x64xf32> to vector<64x8x64xf32>
    %cst_4 = arith.constant dense<0.000000e+00> : vector<8x64xf32>
    %5 = vector.multi_reduction <add>, %4, %cst_4 [0] : vector<64x8x64xf32> to vector<8x64xf32>
    %6 = vector.shape_cast %5 : vector<8x64xf32> to vector<1x8x64xf32>
    %cst_5 = arith.constant 6.400000e+01 : f32
    %7 = vector.broadcast %cst_5 : f32 to vector<1x8x64xf32>
    %8 = arith.divf %6, %7 : vector<1x8x64xf32>
    %9 = arith.mulf %4, %4 : vector<64x8x64xf32>
    %cst_6 = arith.constant dense<0.000000e+00> : vector<8x64xf32>
    %10 = vector.multi_reduction <add>, %9, %cst_6 [0] : vector<64x8x64xf32> to vector<8x64xf32>
    %11 = vector.shape_cast %10 : vector<8x64xf32> to vector<1x8x64xf32>
    %cst_7 = arith.constant 6.400000e+01 : f32
    %12 = vector.broadcast %cst_7 : f32 to vector<1x8x64xf32>
    %13 = arith.divf %11, %12 : vector<1x8x64xf32>
    %14 = arith.mulf %8, %8 : vector<1x8x64xf32>
    %15 = arith.subf %13, %14 : vector<1x8x64xf32>
    %cst_8 = arith.constant 0.000000e+00 : f32
    %16 = vector.broadcast %cst_8 : f32 to vector<1x8x64xf32>
    %17 = arith.maximumf %15, %16 : vector<1x8x64xf32>
    %18 = vector.broadcast %8 : vector<1x8x64xf32> to vector<64x8x64xf32>
    %19 = arith.subf %4, %18 : vector<64x8x64xf32>
    %cst_9 = arith.constant 9.99999974E-6 : f32
    %20 = vector.broadcast %cst_9 : f32 to vector<1x8x64xf32>
    %21 = arith.addf %17, %20 : vector<1x8x64xf32>
    %22 = math.rsqrt %21 : vector<1x8x64xf32>
    %23 = vector.broadcast %22 : vector<1x8x64xf32> to vector<64x8x64xf32>
    %24 = arith.mulf %19, %23 : vector<64x8x64xf32>
    %25 = vector.shape_cast %24 : vector<64x8x64xf32> to vector<512x64xf32>
    %cst_10 = arith.constant 0.000000e+00 : f32
    %26 = vector.broadcast %cst_10 : f32 to vector<512x64xf32>
    %27 = arith.maximumf %25, %26 : vector<512x64xf32>
    %cst_11 = arith.constant 0.000000e+00 : f32
    %28 = vector.broadcast %cst_11 : f32 to vector<102x8x64xf32>
    %c0_12 = arith.constant 0 : index
    %c0_13 = arith.constant 0 : index
    %c0_14 = arith.constant 0 : index
    %29 = vector.load %arg6[%c0_12, %c0_13, %c0_14] : memref<102x8x64xf32, #tpu.memory_space<vmem>>, vector<102x8x64xf32>
    tpu.vector_store %arg6[%c0_12, %c0_13, %c0_14], %28 {strides = array<i32>} : memref<102x8x64xf32, #tpu.memory_space<vmem>>, vector<102x8x64xf32>,
    %30 = vector.shape_cast %27 : vector<512x64xf32> to vector<64x8x64xf32>
    %31 = vector.extract_strided_slice %30 {offsets = [0, 0, 0], sizes = [8, 8, 64], strides = [1, 1, 1]} : vector<64x8x64xf32> to vector<8x8x64xf32>
    %c12 = arith.constant 12 : index
    %c0_15 = arith.constant 0 : index
    %c0_16 = arith.constant 0 : index
    %32 = vector.load %arg6[%c12, %c0_15, %c0_16] : memref<102x8x64xf32, #tpu.memory_space<vmem>>, vector<8x8x64xf32>
    tpu.vector_store %arg6[%c12, %c0_15, %c0_16], %31 {strides = array<i32>} : memref<102x8x64xf32, #tpu.memory_space<vmem>>, vector<8x8x64xf32>,
    %33 = vector.extract_strided_slice %30 {offsets = [8, 0, 0], sizes = [8, 8, 64], strides = [1, 1, 1]} : vector<64x8x64xf32> to vector<8x8x64xf32>
    %c22 = arith.constant 22 : index
    %c0_17 = arith.constant 0 : index
    %c0_18 = arith.constant 0 : index
    %34 = vector.load %arg6[%c22, %c0_17, %c0_18] : memref<102x8x64xf32, #tpu.memory_space<vmem>>, vector<8x8x64xf32>
    tpu.vector_store %arg6[%c22, %c0_17, %c0_18], %33 {strides = array<i32>} : memref<102x8x64xf32, #tpu.memory_space<vmem>>, vector<8x8x64xf32>,
    %35 = vector.extract_strided_slice %30 {offsets = [16, 0, 0], sizes = [8, 8, 64], strides = [1, 1, 1]} : vector<64x8x64xf32> to vector<8x8x64xf32>
    %c32 = arith.constant 32 : index
    %c0_19 = arith.constant 0 : index
    %c0_20 = arith.constant 0 : index
    %36 = vector.load %arg6[%c32, %c0_19, %c0_20] : memref<102x8x64xf32, #tpu.memory_space<vmem>>, vector<8x8x64xf32>
    tpu.vector_store %arg6[%c32, %c0_19, %c0_20], %35 {strides = array<i32>} : memref<102x8x64xf32, #tpu.memory_space<vmem>>, vector<8x8x64xf32>,
    %37 = vector.extract_strided_slice %30 {offsets = [24, 0, 0], sizes = [8, 8, 64], strides = [1, 1, 1]} : vector<64x8x64xf32> to vector<8x8x64xf32>
    %c42 = arith.constant 42 : index
    %c0_21 = arith.constant 0 : index
    %c0_22 = arith.constant 0 : index
    %38 = vector.load %arg6[%c42, %c0_21, %c0_22] : memref<102x8x64xf32, #tpu.memory_space<vmem>>, vector<8x8x64xf32>
    tpu.vector_store %arg6[%c42, %c0_21, %c0_22], %37 {strides = array<i32>} : memref<102x8x64xf32, #tpu.memory_space<vmem>>, vector<8x8x64xf32>,
    %39 = vector.extract_strided_slice %30 {offsets = [32, 0, 0], sizes = [8, 8, 64], strides = [1, 1, 1]} : vector<64x8x64xf32> to vector<8x8x64xf32>
    %c52 = arith.constant 52 : index
    %c0_23 = arith.constant 0 : index
    %c0_24 = arith.constant 0 : index
    %40 = vector.load %arg6[%c52, %c0_23, %c0_24] : memref<102x8x64xf32, #tpu.memory_space<vmem>>, vector<8x8x64xf32>
    tpu.vector_store %arg6[%c52, %c0_23, %c0_24], %39 {strides = array<i32>} : memref<102x8x64xf32, #tpu.memory_space<vmem>>, vector<8x8x64xf32>,
    %41 = vector.extract_strided_slice %30 {offsets = [40, 0, 0], sizes = [8, 8, 64], strides = [1, 1, 1]} : vector<64x8x64xf32> to vector<8x8x64xf32>
    %c62 = arith.constant 62 : index
    %c0_25 = arith.constant 0 : index
    %c0_26 = arith.constant 0 : index
    %42 = vector.load %arg6[%c62, %c0_25, %c0_26] : memref<102x8x64xf32, #tpu.memory_space<vmem>>, vector<8x8x64xf32>
    tpu.vector_store %arg6[%c62, %c0_25, %c0_26], %41 {strides = array<i32>} : memref<102x8x64xf32, #tpu.memory_space<vmem>>, vector<8x8x64xf32>,
    %43 = vector.extract_strided_slice %30 {offsets = [48, 0, 0], sizes = [8, 8, 64], strides = [1, 1, 1]} : vector<64x8x64xf32> to vector<8x8x64xf32>
    %c72 = arith.constant 72 : index
    %c0_27 = arith.constant 0 : index
    %c0_28 = arith.constant 0 : index
    %44 = vector.load %arg6[%c72, %c0_27, %c0_28] : memref<102x8x64xf32, #tpu.memory_space<vmem>>, vector<8x8x64xf32>
    tpu.vector_store %arg6[%c72, %c0_27, %c0_28], %43 {strides = array<i32>} : memref<102x8x64xf32, #tpu.memory_space<vmem>>, vector<8x8x64xf32>,
    %45 = vector.extract_strided_slice %30 {offsets = [56, 0, 0], sizes = [8, 8, 64], strides = [1, 1, 1]} : vector<64x8x64xf32> to vector<8x8x64xf32>
    %c82 = arith.constant 82 : index
    %c0_29 = arith.constant 0 : index
    %c0_30 = arith.constant 0 : index
    %46 = vector.load %arg6[%c82, %c0_29, %c0_30] : memref<102x8x64xf32, #tpu.memory_space<vmem>>, vector<8x8x64xf32>
    tpu.vector_store %arg6[%c82, %c0_29, %c0_30], %45 {strides = array<i32>} : memref<102x8x64xf32, #tpu.memory_space<vmem>>, vector<8x8x64xf32>,
    %c0_31 = arith.constant 0 : index
    %c0_32 = arith.constant 0 : index
    %c0_33 = arith.constant 0 : index
    %47 = vector.load %arg6[%c0_31, %c0_32, %c0_33] : memref<102x8x64xf32, #tpu.memory_space<vmem>>, vector<80x8x64xf32>
    %48 = vector.shape_cast %47 : vector<80x8x64xf32> to vector<640x64xf32>
    %49 = arith.truncf %48 : vector<640x64xf32> to vector<640x64xbf16>
    %c0_34 = arith.constant 0 : index
    %c0_35 = arith.constant 0 : index
    %50 = vector.load %arg7[%c0_34, %c0_35] : memref<640x576xbf16, #tpu.memory_space<vmem>>, vector<640x64xbf16>
    tpu.vector_store %arg7[%c0_34, %c0_35], %49 {strides = array<i32>} : memref<640x576xbf16, #tpu.memory_space<vmem>>, vector<640x64xbf16>,
    %c1 = arith.constant 1 : index
    %c0_36 = arith.constant 0 : index
    %c0_37 = arith.constant 0 : index
    %51 = vector.load %arg6[%c1, %c0_36, %c0_37] : memref<102x8x64xf32, #tpu.memory_space<vmem>>, vector<80x8x64xf32>
    %52 = vector.shape_cast %51 : vector<80x8x64xf32> to vector<640x64xf32>
    %53 = arith.truncf %52 : vector<640x64xf32> to vector<640x64xbf16>
    %c0_38 = arith.constant 0 : index
    %c64 = arith.constant 64 : index
    %54 = vector.load %arg7[%c0_38, %c64] : memref<640x576xbf16, #tpu.memory_space<vmem>>, vector<640x64xbf16>
    tpu.vector_store %arg7[%c0_38, %c64], %53 {strides = array<i32>} : memref<640x576xbf16, #tpu.memory_space<vmem>>, vector<640x64xbf16>,
    %c2 = arith.constant 2 : index
    %c0_39 = arith.constant 0 : index
    %c0_40 = arith.constant 0 : index
    %55 = vector.load %arg6[%c2, %c0_39, %c0_40] : memref<102x8x64xf32, #tpu.memory_space<vmem>>, vector<80x8x64xf32>
    %56 = vector.shape_cast %55 : vector<80x8x64xf32> to vector<640x64xf32>
    %57 = arith.truncf %56 : vector<640x64xf32> to vector<640x64xbf16>
    %c0_41 = arith.constant 0 : index
    %c128 = arith.constant 128 : index
    %58 = vector.load %arg7[%c0_41, %c128] : memref<640x576xbf16, #tpu.memory_space<vmem>>, vector<640x64xbf16>
    tpu.vector_store %arg7[%c0_41, %c128], %57 {strides = array<i32>} : memref<640x576xbf16, #tpu.memory_space<vmem>>, vector<640x64xbf16>,
    %c10 = arith.constant 10 : index
    %c0_42 = arith.constant 0 : index
    %c0_43 = arith.constant 0 : index
    %59 = vector.load %arg6[%c10, %c0_42, %c0_43] : memref<102x8x64xf32, #tpu.memory_space<vmem>>, vector<80x8x64xf32>
    %60 = vector.shape_cast %59 : vector<80x8x64xf32> to vector<640x64xf32>
    %61 = arith.truncf %60 : vector<640x64xf32> to vector<640x64xbf16>
    %c0_44 = arith.constant 0 : index
    %c192 = arith.constant 192 : index
    %62 = vector.load %arg7[%c0_44, %c192] : memref<640x576xbf16, #tpu.memory_space<vmem>>, vector<640x64xbf16>
    tpu.vector_store %arg7[%c0_44, %c192], %61 {strides = array<i32>} : memref<640x576xbf16, #tpu.memory_space<vmem>>, vector<640x64xbf16>,
    %c11 = arith.constant 11 : index
    %c0_45 = arith.constant 0 : index
    %c0_46 = arith.constant 0 : index
    %63 = vector.load %arg6[%c11, %c0_45, %c0_46] : memref<102x8x64xf32, #tpu.memory_space<vmem>>, vector<80x8x64xf32>
    %64 = vector.shape_cast %63 : vector<80x8x64xf32> to vector<640x64xf32>
    %65 = arith.truncf %64 : vector<640x64xf32> to vector<640x64xbf16>
    %c0_47 = arith.constant 0 : index
    %c256 = arith.constant 256 : index
    %66 = vector.load %arg7[%c0_47, %c256] : memref<640x576xbf16, #tpu.memory_space<vmem>>, vector<640x64xbf16>
    tpu.vector_store %arg7[%c0_47, %c256], %65 {strides = array<i32>} : memref<640x576xbf16, #tpu.memory_space<vmem>>, vector<640x64xbf16>,
    %c12_48 = arith.constant 12 : index
    %c0_49 = arith.constant 0 : index
    %c0_50 = arith.constant 0 : index
    %67 = vector.load %arg6[%c12_48, %c0_49, %c0_50] : memref<102x8x64xf32, #tpu.memory_space<vmem>>, vector<80x8x64xf32>
    %68 = vector.shape_cast %67 : vector<80x8x64xf32> to vector<640x64xf32>
    %69 = arith.truncf %68 : vector<640x64xf32> to vector<640x64xbf16>
    %c0_51 = arith.constant 0 : index
    %c320 = arith.constant 320 : index
    %70 = vector.load %arg7[%c0_51, %c320] : memref<640x576xbf16, #tpu.memory_space<vmem>>, vector<640x64xbf16>
    tpu.vector_store %arg7[%c0_51, %c320], %69 {strides = array<i32>} : memref<640x576xbf16, #tpu.memory_space<vmem>>, vector<640x64xbf16>,
    %c20 = arith.constant 20 : index
    %c0_52 = arith.constant 0 : index
    %c0_53 = arith.constant 0 : index
    %71 = vector.load %arg6[%c20, %c0_52, %c0_53] : memref<102x8x64xf32, #tpu.memory_space<vmem>>, vector<80x8x64xf32>
    %72 = vector.shape_cast %71 : vector<80x8x64xf32> to vector<640x64xf32>
    %73 = arith.truncf %72 : vector<640x64xf32> to vector<640x64xbf16>
    %c0_54 = arith.constant 0 : index
    %c384 = arith.constant 384 : index
    %74 = vector.load %arg7[%c0_54, %c384] : memref<640x576xbf16, #tpu.memory_space<vmem>>, vector<640x64xbf16>
    tpu.vector_store %arg7[%c0_54, %c384], %73 {strides = array<i32>} : memref<640x576xbf16, #tpu.memory_space<vmem>>, vector<640x64xbf16>,
    %c21 = arith.constant 21 : index
    %c0_55 = arith.constant 0 : index
    %c0_56 = arith.constant 0 : index
    %75 = vector.load %arg6[%c21, %c0_55, %c0_56] : memref<102x8x64xf32, #tpu.memory_space<vmem>>, vector<80x8x64xf32>
    %76 = vector.shape_cast %75 : vector<80x8x64xf32> to vector<640x64xf32>
    %77 = arith.truncf %76 : vector<640x64xf32> to vector<640x64xbf16>
    %c0_57 = arith.constant 0 : index
    %c448 = arith.constant 448 : index
    %78 = vector.load %arg7[%c0_57, %c448] : memref<640x576xbf16, #tpu.memory_space<vmem>>, vector<640x64xbf16>
    tpu.vector_store %arg7[%c0_57, %c448], %77 {strides = array<i32>} : memref<640x576xbf16, #tpu.memory_space<vmem>>, vector<640x64xbf16>,
    %c22_58 = arith.constant 22 : index
    %c0_59 = arith.constant 0 : index
    %c0_60 = arith.constant 0 : index
    %79 = vector.load %arg6[%c22_58, %c0_59, %c0_60] : memref<102x8x64xf32, #tpu.memory_space<vmem>>, vector<80x8x64xf32>
    %80 = vector.shape_cast %79 : vector<80x8x64xf32> to vector<640x64xf32>
    %81 = arith.truncf %80 : vector<640x64xf32> to vector<640x64xbf16>
    %c0_61 = arith.constant 0 : index
    %c512 = arith.constant 512 : index
    %82 = vector.load %arg7[%c0_61, %c512] : memref<640x576xbf16, #tpu.memory_space<vmem>>, vector<640x64xbf16>
    tpu.vector_store %arg7[%c0_61, %c512], %81 {strides = array<i32>} : memref<640x576xbf16, #tpu.memory_space<vmem>>, vector<640x64xbf16>,
    %c0_62 = arith.constant 0 : index
    %c0_63 = arith.constant 0 : index
    %83 = vector.load %arg7[%c0_62, %c0_63] : memref<640x576xbf16, #tpu.memory_space<vmem>>, vector<640x576xbf16>
    %c0_64 = arith.constant 0 : index
    %c0_65 = arith.constant 0 : index
    %c0_66 = arith.constant 0 : index
    %84 = vector.load %arg3[%c0_64, %c0_65, %c0_66] : memref<1x576x64xbf16, #tpu.memory_space<vmem>>, vector<1x576x64xbf16>
    %85 = vector.shape_cast %84 : vector<1x576x64xbf16> to vector<576x64xbf16>
    %cst_67 = arith.constant dense<0.000000e+00> : vector<640x64xf32>
    %86 = tpu.matmul %83, %85, %cst_67 {dimension_numbers = #tpu.dot_dimension_numbers<[1], [0], [0], [1], [0, 0, 1, 1], [], []>} : vector<640x576xbf16>, vector<576x64xbf16>, vector<640x64xf32> -> vector<640x64xf32>
    %87 = vector.shape_cast %86 : vector<640x64xf32> to vector<8x10x8x64xf32>
    %88 = vector.extract_strided_slice %87 {offsets = [0, 1, 0, 0], sizes = [8, 8, 8, 64], strides = [1, 1, 1, 1]} : vector<8x10x8x64xf32> to vector<8x8x8x64xf32>
    %89 = vector.shape_cast %88 : vector<8x8x8x64xf32> to vector<512x64xf32>
    %90 = vector.shape_cast %89 : vector<512x64xf32> to vector<64x8x64xf32>
    %cst_68 = arith.constant dense<0.000000e+00> : vector<8x64xf32>
    %91 = vector.multi_reduction <add>, %90, %cst_68 [0] : vector<64x8x64xf32> to vector<8x64xf32>
    %92 = vector.shape_cast %91 : vector<8x64xf32> to vector<1x8x64xf32>
    %cst_69 = arith.constant 6.400000e+01 : f32
    %93 = vector.broadcast %cst_69 : f32 to vector<1x8x64xf32>
    %94 = arith.divf %92, %93 : vector<1x8x64xf32>
    %95 = arith.mulf %90, %90 : vector<64x8x64xf32>
    %cst_70 = arith.constant dense<0.000000e+00> : vector<8x64xf32>
    %96 = vector.multi_reduction <add>, %95, %cst_70 [0] : vector<64x8x64xf32> to vector<8x64xf32>
    %97 = vector.shape_cast %96 : vector<8x64xf32> to vector<1x8x64xf32>
    %cst_71 = arith.constant 6.400000e+01 : f32
    %98 = vector.broadcast %cst_71 : f32 to vector<1x8x64xf32>
    %99 = arith.divf %97, %98 : vector<1x8x64xf32>
    %100 = arith.mulf %94, %94 : vector<1x8x64xf32>
    %101 = arith.subf %99, %100 : vector<1x8x64xf32>
    %cst_72 = arith.constant 0.000000e+00 : f32
    %102 = vector.broadcast %cst_72 : f32 to vector<1x8x64xf32>
    %103 = arith.maximumf %101, %102 : vector<1x8x64xf32>
    %104 = vector.broadcast %94 : vector<1x8x64xf32> to vector<64x8x64xf32>
    %105 = arith.subf %90, %104 : vector<64x8x64xf32>
    %cst_73 = arith.constant 9.99999974E-6 : f32
    %106 = vector.broadcast %cst_73 : f32 to vector<1x8x64xf32>
    %107 = arith.addf %103, %106 : vector<1x8x64xf32>
    %108 = math.rsqrt %107 : vector<1x8x64xf32>
    %109 = vector.broadcast %108 : vector<1x8x64xf32> to vector<64x8x64xf32>
    %110 = arith.mulf %105, %109 : vector<64x8x64xf32>
    %111 = vector.shape_cast %110 : vector<64x8x64xf32> to vector<512x64xf32>
    %cst_74 = arith.constant 0.000000e+00 : f32
    %112 = vector.broadcast %cst_74 : f32 to vector<512x64xf32>
    %113 = arith.maximumf %111, %112 : vector<512x64xf32>
    %114 = arith.truncf %113 : vector<512x64xf32> to vector<512x64xbf16>
    %c0_75 = arith.constant 0 : index
    %c0_76 = arith.constant 0 : index
    %115 = vector.load %arg4[%c0_75, %c0_76] : memref<64x128xbf16, #tpu.memory_space<vmem>>, vector<64x128xbf16>
    %cst_77 = arith.constant dense<0.000000e+00> : vector<512x128xf32>
    %116 = tpu.matmul %114, %115, %cst_77 {dimension_numbers = #tpu.dot_dimension_numbers<[1], [0], [0], [1], [0, 0, 1, 1], [], []>} : vector<512x64xbf16>, vector<64x128xbf16>, vector<512x128xf32> -> vector<512x128xf32>
    %117 = vector.shape_cast %116 : vector<512x128xf32> to vector<64x8x128xf32>
    %cst_78 = arith.constant dense<0.000000e+00> : vector<8x128xf32>
    %118 = vector.multi_reduction <add>, %117, %cst_78 [0] : vector<64x8x128xf32> to vector<8x128xf32>
    %119 = vector.shape_cast %118 : vector<8x128xf32> to vector<1x8x128xf32>
    %cst_79 = arith.constant 6.400000e+01 : f32
    %120 = vector.broadcast %cst_79 : f32 to vector<1x8x128xf32>
    %121 = arith.divf %119, %120 : vector<1x8x128xf32>
    %122 = arith.mulf %117, %117 : vector<64x8x128xf32>
    %cst_80 = arith.constant dense<0.000000e+00> : vector<8x128xf32>
    %123 = vector.multi_reduction <add>, %122, %cst_80 [0] : vector<64x8x128xf32> to vector<8x128xf32>
    %124 = vector.shape_cast %123 : vector<8x128xf32> to vector<1x8x128xf32>
    %cst_81 = arith.constant 6.400000e+01 : f32
    %125 = vector.broadcast %cst_81 : f32 to vector<1x8x128xf32>
    %126 = arith.divf %124, %125 : vector<1x8x128xf32>
    %127 = arith.mulf %121, %121 : vector<1x8x128xf32>
    %128 = arith.subf %126, %127 : vector<1x8x128xf32>
    %cst_82 = arith.constant 0.000000e+00 : f32
    %129 = vector.broadcast %cst_82 : f32 to vector<1x8x128xf32>
    %130 = arith.maximumf %128, %129 : vector<1x8x128xf32>
    %131 = vector.broadcast %121 : vector<1x8x128xf32> to vector<64x8x128xf32>
    %132 = arith.subf %117, %131 : vector<64x8x128xf32>
    %cst_83 = arith.constant 9.99999974E-6 : f32
    %133 = vector.broadcast %cst_83 : f32 to vector<1x8x128xf32>
    %134 = arith.addf %130, %133 : vector<1x8x128xf32>
    %135 = math.rsqrt %134 : vector<1x8x128xf32>
    %136 = vector.broadcast %135 : vector<1x8x128xf32> to vector<64x8x128xf32>
    %137 = arith.mulf %132, %136 : vector<64x8x128xf32>
    %138 = vector.shape_cast %137 : vector<64x8x128xf32> to vector<512x128xf32>
    %c0_84 = arith.constant 0 : index
    %c0_85 = arith.constant 0 : index
    %c0_86 = arith.constant 0 : index
    %139 = vector.load %arg1[%c0_84, %c0_85, %c0_86] : memref<1x512x128xbf16, #tpu.memory_space<vmem>>, vector<1x512x128xbf16>
    %140 = vector.shape_cast %139 : vector<1x512x128xbf16> to vector<512x128xbf16>
    %141 = arith.extf %140 : vector<512x128xbf16> to vector<512x128xf32>
    %142 = arith.addf %138, %141 : vector<512x128xf32>
    %cst_87 = arith.constant 0.000000e+00 : f32
    %143 = vector.broadcast %cst_87 : f32 to vector<512x128xf32>
    %144 = arith.maximumf %142, %143 : vector<512x128xf32>
    %145 = arith.truncf %144 : vector<512x128xf32> to vector<512x128xbf16>
    %c0_88 = arith.constant 0 : index
    %c0_89 = arith.constant 0 : index
    %c0_90 = arith.constant 0 : index
    %146 = vector.load %arg5[%c0_88, %c0_89, %c0_90] : memref<1x512x128xbf16, #tpu.memory_space<vmem>>, vector<1x512x128xbf16>
    %147 = vector.shape_cast %146 : vector<1x512x128xbf16> to vector<512x128xbf16>
    %148 = vector.shape_cast %145 : vector<512x128xbf16> to vector<1x512x128xbf16>
    tpu.vector_store %arg5[%c0_88, %c0_89, %c0_90], %148 {strides = array<i32>} : memref<1x512x128xbf16, #tpu.memory_space<vmem>>, vector<1x512x128xbf16>,
    return
  }
  func.func @transform_0(%arg0: i32) -> (i32, i32, i32) {
    %c0_i32 = arith.constant 0 : i32
    %c0_i32_0 = arith.constant 0 : i32
    %c0_i32_1 = arith.constant 0 : i32
    return %arg0, %c0_i32, %c0_i32_0 : i32, i32, i32
  }
  func.func @transform_1(%arg0: i32) -> (i32, i32) {
    %c0_i32 = arith.constant 0 : i32
    %c0_i32_0 = arith.constant 0 : i32
    %c0_i32_1 = arith.constant 0 : i32
    return %c0_i32, %c0_i32_0 : i32, i32
  }
  func.func @transform_2(%arg0: i32) -> (i32, i32, i32) {
    %c0_i32 = arith.constant 0 : i32
    %c0_i32_0 = arith.constant 0 : i32
    %c0_i32_1 = arith.constant 0 : i32
    %c0_i32_2 = arith.constant 0 : i32
    return %c0_i32, %c0_i32_0, %c0_i32_1 : i32, i32, i32
  }
  func.func @transform_3(%arg0: i32) -> (i32, i32) {
    %c0_i32 = arith.constant 0 : i32
    %c0_i32_0 = arith.constant 0 : i32
    %c0_i32_1 = arith.constant 0 : i32
    return %c0_i32, %c0_i32_0 : i32, i32
  }
  func.func @transform_4(%arg0: i32) -> (i32, i32, i32) {
    %c0_i32 = arith.constant 0 : i32
    %c0_i32_0 = arith.constant 0 : i32
    %c0_i32_1 = arith.constant 0 : i32
    return %arg0, %c0_i32, %c0_i32_0 : i32, i32, i32
  }
}

</mosaic_0001>

<llo_original>
// kernel: tpu_custom_call.1
$region0: #{tpu_custom_call.1}
  #allocation0 [shape = 'u32[]', space=smem, size = 0x4, offset = 0x4, fixed_abs, tag = 'smem constant byte address 0x4 - core index']
  #allocation1 [shape = 'u32[72,128]{1,0:T(1,128)}', space=vmem, size = 0x9000, scoped, tag = 'internal scratch']
  #allocation2 [shape = 'f32[102,8,64]{2,1,0:T(8,128)}', space=vmem, size = 0x66000, scoped, tag = 'scratch operand']
  #allocation3 [shape = 'bf16[640,576]{1,0:T(8,128)(2,1)}', space=vmem, size = 0xc8000, scoped, tag = 'scratch operand']
  %s0 = inlined_call_operand.hbm [shape: bf16[4,512,128], index: 0, kind: input, shape index: {}]
  %s1 = inlined_call_operand.vmem [shape: bf16[128,64], index: 1, kind: input, shape index: {}]
  %s2 = inlined_call_operand.vmem [shape: bf16[1,576,64], index: 2, kind: input, shape index: {}]
  %s3 = inlined_call_operand.vmem [shape: bf16[64,128], index: 3, kind: input, shape index: {}]
  %s4 = inlined_call_operand.hbm [shape: bf16[4,512,128], index: 4, kind: output, shape index: {}]
  %s5 = sld [smem:[#allocation0]]
  $region53: #{tpu_custom_call.1} parent=0
    _
  %s7 = ssub.s32 1, %s5
  %s8 = scalar_select 0, %s7, %s5
  $region1: #{tpu_custom_call.1} parent=0
    #allocation4 [shape = 'u8[262144]{0}', space=vmem, size = 0x40000, scoped, tag = 'input window, operand 0']
    #allocation5 [shape = 's32[2]{0}', space=sflag, size = 0x8, scoped, tag = 'scoped memory for tpu_custom_call.1']
    #allocation6 [shape = 's32[2]{0}', space=sflag, size = 0x8, scoped, tag = 'scoped memory for tpu_custom_call.1']
    #allocation7 [shape = 'u8[262144]{0}', space=vmem, size = 0x40000, scoped, tag = 'output window, operand 0']
    %9 = vsyncpa [#allocation5], 0
    %s10 = scalar_lea.sflag [#allocation5], 1
    %11 = vsyncpa %s10, 0
    %12 = vsyncpa [#allocation6], 0
    %s13 = scalar_lea.sflag [#allocation6], 1
    %14 = vsyncpa %s13, 0
    loop: start=0, step=1, limit=6
    $region2: #{tpu_custom_call.1} parent=1 // loop_pre_header
      _
    $region3: #{tpu_custom_call.1} parent=1 // loop_header
      %s16 = sphi 0, %s20
      %p17 = scmp.ge.s32.totalorder %s16, 6
      %s26 = sphi 0, %s28
      %s29 = sphi 0, %s26
      %s30 = sphi 0, %s29
      %s46 = sphi 0, %s30
      %s50 = sphi 0, %s50
      %s52 = sphi 0, %s50
      %s53 = sphi 0, %s52
      %s67 = sphi 0, %s53
      %s71 = sphi 0, %s71
      %s73 = sphi 0, %s71
      %s74 = sphi 0, %s73
      %s88 = sphi 0, %s74
      %s92 = sphi 0, %s92
      %s94 = sphi 0, %s92
      %s95 = sphi 0, %s94
      %s109 = sphi 0, %s95
      %s115 = sphi 0, %s117
      %s118 = sphi 0, %s115
      %s119 = sphi 0, %s118
      %s135 = sphi 0, %s119
    $region4: #{tpu_custom_call.1} parent=1 // loop_header_branch
      %19 = sbr.rel (%p17) target = $region8
    $region5: #{tpu_custom_call.1} parent=1 // loop_body
      %s21 = ssub.s32 %s16, 1
      %s22 = ssub.s32 %s16, 2
      %s23 = sadd.s32 %s16, 1
      %s24 = ssub.s32 %s16, %s23
      %p25 = scmp.eq.s32.totalorder %s24, 0
      %s27 = sadd.s32 %s26, 1
      %s28 = scalar_select %p25, %s26, %s27
      %p31 = pneg %p25
      %p32 = scmp.eq.s32.totalorder %s16, 3
      %p33 = por %p31, %p32
      %p34 = scmp.ne.s32.totalorder %s26, %s29
      %p35 = scmp.eq.s32.totalorder %s16, 0
      %p36 = por %p34, %p35
      %p37 = scmp.ne.s32.totalorder %s26, %s29
      %p38 = scmp.eq.s32.totalorder %s21, 3
      %p39 = por %p37, %p38
      %p40 = scmp.ne.s32.totalorder %s29, %s30
      %p41 = scmp.eq.s32.totalorder %s21, 0
      %p42 = por %p40, %p41
      %p43 = scmp.ne.s32.totalorder %s29, %s30
      %p44 = scmp.eq.s32.totalorder %s22, 3
      %p45 = por %p43, %p44
      %p47 = scmp.ne.s32.totalorder %s30, %s46
      %p48 = scmp.eq.s32.totalorder %s22, 0
      %p49 = por %p47, %p48
      %s51 = sadd.s32 %s50, 1
      %p54 = scmp.eq.s32.totalorder %s16, 3
      %p55 = scmp.ne.s32.totalorder %s50, %s52
      %p56 = scmp.eq.s32.totalorder %s16, 0
      %p57 = por %p55, %p56
      %p58 = scmp.ne.s32.totalorder %s50, %s52
      %p59 = scmp.eq.s32.totalorder %s21, 3
      %p60 = por %p58, %p59
      %p61 = scmp.ne.s32.totalorder %s52, %s53
      %p62 = scmp.eq.s32.totalorder %s21, 0
      %p63 = por %p61, %p62
      %p64 = scmp.ne.s32.totalorder %s52, %s53
      %p65 = scmp.eq.s32.totalorder %s22, 3
      %p66 = por %p64, %p65
      %p68 = scmp.ne.s32.totalorder %s53, %s67
      %p69 = scmp.eq.s32.totalorder %s22, 0
      %p70 = por %p68, %p69
      %s72 = sadd.s32 %s71, 1
      %p75 = scmp.eq.s32.totalorder %s16, 3
      %p76 = scmp.ne.s32.totalorder %s71, %s73
      %p77 = scmp.eq.s32.totalorder %s16, 0
      %p78 = por %p76, %p77
      %p79 = scmp.ne.s32.totalorder %s71, %s73
      %p80 = scmp.eq.s32.totalorder %s21, 3
      %p81 = por %p79, %p80
      %p82 = scmp.ne.s32.totalorder %s73, %s74
      %p83 = scmp.eq.s32.totalorder %s21, 0
      %p84 = por %p82, %p83
      %p85 = scmp.ne.s32.totalorder %s73, %s74
      %p86 = scmp.eq.s32.totalorder %s22, 3
      %p87 = por %p85, %p86
      %p89 = scmp.ne.s32.totalorder %s74, %s88
      %p90 = scmp.eq.s32.totalorder %s22, 0
      %p91 = por %p89, %p90
      %s93 = sadd.s32 %s92, 1
      %p96 = scmp.eq.s32.totalorder %s16, 3
      %p97 = scmp.ne.s32.totalorder %s92, %s94
      %p98 = scmp.eq.s32.totalorder %s16, 0
      %p99 = por %p97, %p98
      %p100 = scmp.ne.s32.totalorder %s92, %s94
      %p101 = scmp.eq.s32.totalorder %s21, 3
      %p102 = por %p100, %p101
      %p103 = scmp.ne.s32.totalorder %s94, %s95
      %p104 = scmp.eq.s32.totalorder %s21, 0
      %p105 = por %p103, %p104
      %p106 = scmp.ne.s32.totalorder %s94, %s95
      %p107 = scmp.eq.s32.totalorder %s22, 3
      %p108 = por %p106, %p107
      %p110 = scmp.ne.s32.totalorder %s95, %s109
      %p111 = scmp.eq.s32.totalorder %s22, 0
      %p112 = por %p110, %p111
      %s113 = ssub.s32 %s16, %s23
      %p114 = scmp.eq.s32.totalorder %s113, 0
      %s116 = sadd.s32 %s115, 1
      %s117 = scalar_select %p114, %s115, %s116
      %p120 = pneg %p114
      %p121 = scmp.eq.s32.totalorder %s16, 3
      %p122 = por %p120, %p121
      %p123 = scmp.ne.s32.totalorder %s115, %s118
      %p124 = scmp.eq.s32.totalorder %s16, 0
      %p125 = por %p123, %p124
      %p126 = scmp.ne.s32.totalorder %s115, %s118
      %p127 = scmp.eq.s32.totalorder %s21, 3
      %p128 = por %p126, %p127
      %p129 = scmp.ne.s32.totalorder %s118, %s119
      %p130 = scmp.eq.s32.totalorder %s21, 0
      %p131 = por %p129, %p130
      %p132 = scmp.ne.s32.totalorder %s118, %s119
      %p133 = scmp.eq.s32.totalorder %s22, 3
      %p134 = por %p132, %p133
      %p136 = scmp.ne.s32.totalorder %s119, %s135
      %p137 = scmp.eq.s32.totalorder %s22, 0
      %p138 = por %p136, %p137
      %p139 = scmp.le.s32.totalorder 1, %s16
      %p140 = scmp.lt.s32.totalorder %s16, 5
      %p141 = pnand %p139, %p140
      %p142 = pneg %p141
      // Predicated region
      $region9: #{tpu_custom_call.1} parent=5 // pred_check
        _
      $region10: #{tpu_custom_call.1} parent=5 // pred_check_branch
        %144 = sbr.rel (%p141) target = $region12
      $region11: #{tpu_custom_call.1} parent=5 // pred_region
        %s145 = ssub.s32 %s16, 1
        // Predicated region
        $region13: #{tpu_custom_call.1} parent=11 // pred_check
          %p146 = pneg %p63
        $region14: #{tpu_custom_call.1} parent=11 // pred_check_branch
          %148 = sbr.rel (%p146) target = $region16
        $region15: #{tpu_custom_call.1} parent=11 // pred_region
          _
        $region16: #{tpu_custom_call.1} parent=11 // pred_fallthru
          _
        // Predicated region
        $region17: #{tpu_custom_call.1} parent=11 // pred_check
          %p149 = pneg %p84
        $region18: #{tpu_custom_call.1} parent=11 // pred_check_branch
          %151 = sbr.rel (%p149) target = $region20
        $region19: #{tpu_custom_call.1} parent=11 // pred_region
          _
        $region20: #{tpu_custom_call.1} parent=11 // pred_fallthru
          _
        // Predicated region
        $region21: #{tpu_custom_call.1} parent=11 // pred_check
          %p152 = pneg %p105
        $region22: #{tpu_custom_call.1} parent=11 // pred_check_branch
          %154 = sbr.rel (%p152) target = $region24
        $region23: #{tpu_custom_call.1} parent=11 // pred_region
          _
        $region24: #{tpu_custom_call.1} parent=11 // pred_fallthru
          _
      $region12: #{tpu_custom_call.1} parent=5 // pred_fallthru
        _
      %p155 = scmp.lt.s32.totalorder %s16, 4
      // Predicated region
      $region25: #{tpu_custom_call.1} parent=5 // pred_check
        %p156 = pneg %p155
      $region26: #{tpu_custom_call.1} parent=5 // pred_check_branch
        %158 = sbr.rel (%p156) target = $region28
      $region27: #{tpu_custom_call.1} parent=5 // pred_region
        // Predicated region
        $region29: #{tpu_custom_call.1} parent=27 // pred_check
          %p159 = pneg %p36
        $region30: #{tpu_custom_call.1} parent=27 // pred_check_branch
          %161 = sbr.rel (%p159) target = $region32
        $region31: #{tpu_custom_call.1} parent=27 // pred_region
          %s162 = sand.u32 %s26, 1
          %s163 = scalar_lea.sflag [#allocation5], %s162
          %s164 = sand.u32 %s26, 1
          %s165 = smul.addr %s164, 256
          %s166 = scalar_lea.vmem [#allocation4], %s165
          %168 = vsyncadd %s163, 0
          %s169 = smul.addr %s16, 64
          %s170 = smul.addr %s169, 4
          %s171 = scalar_lea.hbm %s0, %s170
          %s172 = sshll.u32 %s171, 4
          %s173 = int_to_ptr.hbm [resolvable:$true] %s172
          %s174 = sshll.u32 %s166, 4
          %s175 = int_to_ptr.vmem [resolvable:$true] %s174
          %180 = dma.hbm_to_vmem [thread:$0]  %s173, 4096, %s175, %s163, 64, 64, 4
        $region32: #{tpu_custom_call.1} parent=27 // pred_fallthru
          _
      $region28: #{tpu_custom_call.1} parent=5 // pred_fallthru
        _
      %p181 = scmp.le.s32.totalorder 1, %s16
      %p182 = scmp.lt.s32.totalorder %s16, 5
      %p183 = pnand %p181, %p182
      %p184 = pneg %p183
      // Predicated region
      $region33: #{tpu_custom_call.1} parent=5 // pred_check
        _
      $region34: #{tpu_custom_call.1} parent=5 // pred_check_branch
        %186 = sbr.rel (%p183) target = $region36
      $region35: #{tpu_custom_call.1} parent=5 // pred_region
        %s187 = ssub.s32 %s16, 1
        %s188 = sand.u32 %s29, 1
        %s189 = scalar_lea.sflag [#allocation5], %s188
        %s190 = sand.u32 %s29, 1
        %s191 = smul.addr %s190, 256
        %s192 = scalar_lea.vmem [#allocation4], %s191
        // Predicated region
        $region37: #{tpu_custom_call.1} parent=35 // pred_check
          %p193 = pneg %p42
        $region38: #{tpu_custom_call.1} parent=35 // pred_check_branch
          %195 = sbr.rel (%p193) target = $region40
        $region39: #{tpu_custom_call.1} parent=35 // pred_region
          %197 = dma.done %s189, 4096
        $region40: #{tpu_custom_call.1} parent=35 // pred_fallthru
          _
        %s198 = sand.u32 %s29, 1
        %s199 = scalar_lea.sflag [#allocation5], %s198
        %s200 = sand.u32 %s29, 1
        %s201 = smul.addr %s200, 256
        %s202 = scalar_lea.vmem [#allocation4], %s201
        %p203 = pneg %p42
        %p204 = pneg %p39
        %p205 = pneg %p63
        %p206 = pneg %p60
        %p207 = pneg %p84
        %p208 = pneg %p81
        %p209 = pneg %p105
        %p210 = pneg %p102
        %p211 = pneg %p131
        %p212 = pneg %p128
        %s213 = sand.u32 %s118, 1
        %s214 = scalar_lea.sflag [#allocation6], %s213
        %s215 = sand.u32 %s118, 1
        %s216 = smul.addr %s215, 256
        %s217 = scalar_lea.vmem [#allocation7], %s216
        %v219 = vld [vmem:[%s192] sm:$0xf]
        %v220 = vld [vmem:[%s192 + $0x4] sm:$0xf]
        %v221 = vld [vmem:[%s192 + $0x8] sm:$0xf]
        %v222 = vld [vmem:[%s192 + $0xc] sm:$0xf]
        %v223 = vld [vmem:[%s192 + $0x10] sm:$0xf]
        %v224 = vld [vmem:[%s192 + $0x14] sm:$0xf]
        %v225 = vld [vmem:[%s192 + $0x18] sm:$0xf]
        %v226 = vld [vmem:[%s192 + $0x1c] sm:$0xf]
        %v227 = vld [vmem:[%s192 + $0x20] sm:$0xf]
        %v228 = vld [vmem:[%s192 + $0x24] sm:$0xf]
        %v229 = vld [vmem:[%s192 + $0x28] sm:$0xf]
        %v230 = vld [vmem:[%s192 + $0x2c] sm:$0xf]
        %v231 = vld [vmem:[%s192 + $0x30] sm:$0xf]
        %v232 = vld [vmem:[%s192 + $0x34] sm:$0xf]
        %v233 = vld [vmem:[%s192 + $0x38] sm:$0xf]
        %v234 = vld [vmem:[%s192 + $0x3c] sm:$0xf]
        %v235 = vld [vmem:[%s192 + $0x40] sm:$0xf]
        %v236 = vld [vmem:[%s192 + $0x44] sm:$0xf]
        %v237 = vld [vmem:[%s192 + $0x48] sm:$0xf]
        %v238 = vld [vmem:[%s192 + $0x4c] sm:$0xf]
        %v239 = vld [vmem:[%s192 + $0x50] sm:$0xf]
        %v240 = vld [vmem:[%s192 + $0x54] sm:$0xf]
        %v241 = vld [vmem:[%s192 + $0x58] sm:$0xf]
        %v242 = vld [vmem:[%s192 + $0x5c] sm:$0xf]
        %v243 = vld [vmem:[%s192 + $0x60] sm:$0xf]
        %v244 = vld [vmem:[%s192 + $0x64] sm:$0xf]
        %v245 = vld [vmem:[%s192 + $0x68] sm:$0xf]
        %v246 = vld [vmem:[%s192 + $0x6c] sm:$0xf]
        %v247 = vld [vmem:[%s192 + $0x70] sm:$0xf]
        %v248 = vld [vmem:[%s192 + $0x74] sm:$0xf]
        %v249 = vld [vmem:[%s192 + $0x78] sm:$0xf]
        %v250 = vld [vmem:[%s192 + $0x7c] sm:$0xf]
        %v251 = vld [vmem:[%s192 + $0x80] sm:$0xf]
        %v252 = vld [vmem:[%s192 + $0x84] sm:$0xf]
        %v253 = vld [vmem:[%s192 + $0x88] sm:$0xf]
        %v254 = vld [vmem:[%s192 + $0x8c] sm:$0xf]
        %v255 = vld [vmem:[%s192 + $0x90] sm:$0xf]
        %v256 = vld [vmem:[%s192 + $0x94] sm:$0xf]
        %v257 = vld [vmem:[%s192 + $0x98] sm:$0xf]
        %v258 = vld [vmem:[%s192 + $0x9c] sm:$0xf]
        %v259 = vld [vmem:[%s192 + $0xa0] sm:$0xf]
        %v260 = vld [vmem:[%s192 + $0xa4] sm:$0xf]
        %v261 = vld [vmem:[%s192 + $0xa8] sm:$0xf]
        %v262 = vld [vmem:[%s192 + $0xac] sm:$0xf]
        %v263 = vld [vmem:[%s192 + $0xb0] sm:$0xf]
        %v264 = vld [vmem:[%s192 + $0xb4] sm:$0xf]
        %v265 = vld [vmem:[%s192 + $0xb8] sm:$0xf]
        %v266 = vld [vmem:[%s192 + $0xbc] sm:$0xf]
        %v267 = vld [vmem:[%s192 + $0xc0] sm:$0xf]
        %v268 = vld [vmem:[%s192 + $0xc4] sm:$0xf]
        %v269 = vld [vmem:[%s192 + $0xc8] sm:$0xf]
        %v270 = vld [vmem:[%s192 + $0xcc] sm:$0xf]
        %v271 = vld [vmem:[%s192 + $0xd0] sm:$0xf]
        %v272 = vld [vmem:[%s192 + $0xd4] sm:$0xf]
        %v273 = vld [vmem:[%s192 + $0xd8] sm:$0xf]
        %v274 = vld [vmem:[%s192 + $0xdc] sm:$0xf]
        %v275 = vld [vmem:[%s192 + $0xe0] sm:$0xf]
        %v276 = vld [vmem:[%s192 + $0xe4] sm:$0xf]
        %v277 = vld [vmem:[%s192 + $0xe8] sm:$0xf]
        %v278 = vld [vmem:[%s192 + $0xec] sm:$0xf]
        %v279 = vld [vmem:[%s192 + $0xf0] sm:$0xf]
        %v280 = vld [vmem:[%s192 + $0xf4] sm:$0xf]
        %v281 = vld [vmem:[%s192 + $0xf8] sm:$0xf]
        %v282 = vld [vmem:[%s192 + $0xfc] sm:$0xf]
        %v283 = vld [vmem:[%s1] sm:$0xf]
        %v284 = vld [vmem:[%s1 + $0x4] sm:$0xf]
        %v285 = vld [vmem:[%s1 + $0x8] sm:$0xf]
        %v286 = vld [vmem:[%s1 + $0xc] sm:$0xf]
        %v287 = vld [vmem:[%s1 + $0x10] sm:$0xf]
        %v288 = vld [vmem:[%s1 + $0x14] sm:$0xf]
        %v289 = vld [vmem:[%s1 + $0x18] sm:$0xf]
        %v290 = vld [vmem:[%s1 + $0x1c] sm:$0xf]
        %v291 = vld [vmem:[%s1 + $0x20] sm:$0xf]
        %v292 = vld [vmem:[%s1 + $0x24] sm:$0xf]
        %v293 = vld [vmem:[%s1 + $0x28] sm:$0xf]
        %v294 = vld [vmem:[%s1 + $0x2c] sm:$0xf]
        %v295 = vld [vmem:[%s1 + $0x30] sm:$0xf]
        %v296 = vld [vmem:[%s1 + $0x34] sm:$0xf]
        %v297 = vld [vmem:[%s1 + $0x38] sm:$0xf]
        %v298 = vld [vmem:[%s1 + $0x3c] sm:$0xf]
        %v363 = vunpack.c.l.b16 %v219
        %v364 = vunpack.c.l.b16 %v220
        %v365 = vunpack.c.l.b16 %v221
        %v366 = vunpack.c.l.b16 %v222
        %v367 = vunpack.c.l.b16 %v223
        %v368 = vunpack.c.l.b16 %v224
        %v369 = vunpack.c.l.b16 %v225
        %v370 = vunpack.c.l.b16 %v226
        %v371 = vunpack.c.l.b16 %v227
        %v372 = vunpack.c.l.b16 %v228
        %v373 = vunpack.c.l.b16 %v229
        %v374 = vunpack.c.l.b16 %v230
        %v375 = vunpack.c.l.b16 %v231
        %v376 = vunpack.c.l.b16 %v232
        %v377 = vunpack.c.l.b16 %v233
        %v378 = vunpack.c.l.b16 %v234
        %v379 = vunpack.c.l.b16 %v235
        %v380 = vunpack.c.l.b16 %v236
        %v381 = vunpack.c.l.b16 %v237
        %v382 = vunpack.c.l.b16 %v238
        %v383 = vunpack.c.l.b16 %v239
        %v384 = vunpack.c.l.b16 %v240
        %v385 = vunpack.c.l.b16 %v241
        %v386 = vunpack.c.l.b16 %v242
        %v387 = vunpack.c.l.b16 %v243
        %v388 = vunpack.c.l.b16 %v244
        %v389 = vunpack.c.l.b16 %v245
        %v390 = vunpack.c.l.b16 %v246
        %v391 = vunpack.c.l.b16 %v247
        %v392 = vunpack.c.l.b16 %v248
        %v393 = vunpack.c.l.b16 %v249
        %v394 = vunpack.c.l.b16 %v250
        %v395 = vunpack.c.l.b16 %v251
        %v396 = vunpack.c.l.b16 %v252
        %v397 = vunpack.c.l.b16 %v253
        %v398 = vunpack.c.l.b16 %v254
        %v399 = vunpack.c.l.b16 %v255
        %v400 = vunpack.c.l.b16 %v256
        %v401 = vunpack.c.l.b16 %v257
        %v402 = vunpack.c.l.b16 %v258
        %v403 = vunpack.c.l.b16 %v259
        %v404 = vunpack.c.l.b16 %v260
        %v405 = vunpack.c.l.b16 %v261
        %v406 = vunpack.c.l.b16 %v262
        %v407 = vunpack.c.l.b16 %v263
        %v408 = vunpack.c.l.b16 %v264
        %v409 = vunpack.c.l.b16 %v265
        %v410 = vunpack.c.l.b16 %v266
        %v411 = vunpack.c.l.b16 %v267
        %v412 = vunpack.c.l.b16 %v268
        %v413 = vunpack.c.l.b16 %v269
        %v414 = vunpack.c.l.b16 %v270
        %v415 = vunpack.c.l.b16 %v271
        %v416 = vunpack.c.l.b16 %v272
        %v417 = vunpack.c.l.b16 %v273
        %v418 = vunpack.c.l.b16 %v274
        %v419 = vunpack.c.l.b16 %v275
        %v420 = vunpack.c.l.b16 %v276
        %v421 = vunpack.c.l.b16 %v277
        %v422 = vunpack.c.l.b16 %v278
        %v423 = vunpack.c.l.b16 %v279
        %v424 = vunpack.c.l.b16 %v280
        %v425 = vunpack.c.l.b16 %v281
        %v426 = vunpack.c.l.b16 %v282
        %v427 = vpack.c.b16 %v364, %v363
        %v428 = vpack.c.b16 %v366, %v365
        %v429 = vpack.c.b16 %v368, %v367
        %v430 = vpack.c.b16 %v370, %v369
        %v431 = vpack.c.b16 %v372, %v371
        %v432 = vpack.c.b16 %v374, %v373
        %v433 = vpack.c.b16 %v376, %v375
        %v434 = vpack.c.b16 %v378, %v377
        %v435 = vpack.c.b16 %v380, %v379
        %v436 = vpack.c.b16 %v382, %v381
        %v437 = vpack.c.b16 %v384, %v383
        %v438 = vpack.c.b16 %v386, %v385
        %v439 = vpack.c.b16 %v388, %v387
        %v440 = vpack.c.b16 %v390, %v389
        %v441 = vpack.c.b16 %v392, %v391
        %v442 = vpack.c.b16 %v394, %v393
        %v443 = vpack.c.b16 %v396, %v395
        %v444 = vpack.c.b16 %v398, %v397
        %v445 = vpack.c.b16 %v400, %v399
        %v446 = vpack.c.b16 %v402, %v401
        %v447 = vpack.c.b16 %v404, %v403
        %v448 = vpack.c.b16 %v406, %v405
        %v449 = vpack.c.b16 %v408, %v407
        %v450 = vpack.c.b16 %v410, %v409
        %v451 = vpack.c.b16 %v412, %v411
        %v452 = vpack.c.b16 %v414, %v413
        %v453 = vpack.c.b16 %v416, %v415
        %v454 = vpack.c.b16 %v418, %v417
        %v455 = vpack.c.b16 %v420, %v419
        %v456 = vpack.c.b16 %v422, %v421
        %v457 = vpack.c.b16 %v424, %v423
        %v458 = vpack.c.b16 %v426, %v425
        %v507 = vunpack.c.l.b16 %v283
        %v508 = vunpack.c.l.b16 %v284
        %v509 = vunpack.c.l.b16 %v285
        %v510 = vunpack.c.l.b16 %v286
        %v511 = vunpack.c.l.b16 %v287
        %v512 = vunpack.c.l.b16 %v288
        %v513 = vunpack.c.l.b16 %v289
        %v514 = vunpack.c.l.b16 %v290
        %v515 = vunpack.c.l.b16 %v291
        %v516 = vunpack.c.l.b16 %v292
        %v517 = vunpack.c.l.b16 %v293
        %v518 = vunpack.c.l.b16 %v294
        %v519 = vunpack.c.l.b16 %v295
        %v520 = vunpack.c.l.b16 %v296
        %v521 = vunpack.c.l.b16 %v297
        %v522 = vunpack.c.l.b16 %v298
        %v523 = vpack.c.b16 %v508, %v507
        %v524 = vpack.c.b16 %v510, %v509
        %v525 = vpack.c.b16 %v512, %v511
        %v526 = vpack.c.b16 %v514, %v513
        %v527 = vpack.c.b16 %v516, %v515
        %v528 = vpack.c.b16 %v518, %v517
        %v529 = vpack.c.b16 %v520, %v519
        %v530 = vpack.c.b16 %v522, %v521
        %539 = vmatpush.bf16.msra.mxu0 %v530
        %540 = vmatpush.bf16.msra.mxu0 %v529
        %541 = vmatpush.bf16.msra.mxu0 %v528
        %542 = vmatpush.bf16.msra.mxu0 %v527
        %543 = vmatpush.bf16.msra.mxu0 %v526
        %544 = vmatpush.bf16.msra.mxu0 %v525
        %545 = vmatpush.bf16.msra.mxu0 %v524
        %546 = vmatpush.bf16.msra.mxu0 %v523
        %547 = vmatmul.bf16.gmra.mxu0 %v427
        %v548 = vpop.f32.mrf.mxu0
        %v549 = vadd.f32 0.0, %v548
        %v550 = vpop.f32.mrf.mxu0
        %v551 = vadd.f32 0.0, %v550
        %552 = vmatmul.bf16.gmra.mxu0 %v428
        %v553 = vpop.f32.mrf.mxu0
        %v554 = vadd.f32 0.0, %v553
        %v555 = vpop.f32.mrf.mxu0
        %v556 = vadd.f32 0.0, %v555
        %557 = vmatmul.bf16.gmra.mxu0 %v429
        %v558 = vpop.f32.mrf.mxu0
        %v559 = vadd.f32 0.0, %v558
        %v560 = vpop.f32.mrf.mxu0
        %v561 = vadd.f32 0.0, %v560
        %562 = vmatmul.bf16.gmra.mxu0 %v430
        %v563 = vpop.f32.mrf.mxu0
        %v564 = vadd.f32 0.0, %v563
        %v565 = vpop.f32.mrf.mxu0
        %v566 = vadd.f32 0.0, %v565
        %567 = vmatmul.bf16.gmra.mxu0 %v431
        %v568 = vpop.f32.mrf.mxu0
        %v569 = vadd.f32 0.0, %v568
        %v570 = vpop.f32.mrf.mxu0
        %v571 = vadd.f32 0.0, %v570
        %572 = vmatmul.bf16.gmra.mxu0 %v432
        %v573 = vpop.f32.mrf.mxu0
        %v574 = vadd.f32 0.0, %v573
        %v575 = vpop.f32.mrf.mxu0
        %v576 = vadd.f32 0.0, %v575
        %577 = vmatmul.bf16.gmra.mxu0 %v433
        %v578 = vpop.f32.mrf.mxu0
        %v579 = vadd.f32 0.0, %v578
        %v580 = vpop.f32.mrf.mxu0
        %v581 = vadd.f32 0.0, %v580
        %582 = vmatmul.bf16.gmra.mxu0 %v434
        %v583 = vpop.f32.mrf.mxu0
        %v584 = vadd.f32 0.0, %v583
        %v585 = vpop.f32.mrf.mxu0
        %v586 = vadd.f32 0.0, %v585
        %587 = vmatmul.bf16.gmra.mxu0 %v435
        %v588 = vpop.f32.mrf.mxu0
        %v589 = vadd.f32 0.0, %v588
        %v590 = vpop.f32.mrf.mxu0
        %v591 = vadd.f32 0.0, %v590
        %592 = vmatmul.bf16.gmra.mxu0 %v436
        %v593 = vpop.f32.mrf.mxu0
        %v594 = vadd.f32 0.0, %v593
        %v595 = vpop.f32.mrf.mxu0
        %v596 = vadd.f32 0.0, %v595
        %597 = vmatmul.bf16.gmra.mxu0 %v437
        %v598 = vpop.f32.mrf.mxu0
        %v599 = vadd.f32 0.0, %v598
        %v600 = vpop.f32.mrf.mxu0
        %v601 = vadd.f32 0.0, %v600
        %602 = vmatmul.bf16.gmra.mxu0 %v438
        %v603 = vpop.f32.mrf.mxu0
        %v604 = vadd.f32 0.0, %v603
        %v605 = vpop.f32.mrf.mxu0
        %v606 = vadd.f32 0.0, %v605
        %607 = vmatmul.bf16.gmra.mxu0 %v439
        %v608 = vpop.f32.mrf.mxu0
        %v609 = vadd.f32 0.0, %v608
        %v610 = vpop.f32.mrf.mxu0
        %v611 = vadd.f32 0.0, %v610
        %612 = vmatmul.bf16.gmra.mxu0 %v440
        %v613 = vpop.f32.mrf.mxu0
        %v614 = vadd.f32 0.0, %v613
        %v615 = vpop.f32.mrf.mxu0
        %v616 = vadd.f32 0.0, %v615
        %617 = vmatmul.bf16.gmra.mxu0 %v441
        %v618 = vpop.f32.mrf.mxu0
        %v619 = vadd.f32 0.0, %v618
        %v620 = vpop.f32.mrf.mxu0
        %v621 = vadd.f32 0.0, %v620
        %622 = vmatmul.bf16.gmra.mxu0 %v442
        %v623 = vpop.f32.mrf.mxu0
        %v624 = vadd.f32 0.0, %v623
        %v625 = vpop.f32.mrf.mxu0
        %v626 = vadd.f32 0.0, %v625
        %627 = vmatmul.bf16.gmra.mxu0 %v443
        %v628 = vpop.f32.mrf.mxu0
        %v629 = vadd.f32 0.0, %v628
        %v630 = vpop.f32.mrf.mxu0
        %v631 = vadd.f32 0.0, %v630
        %632 = vmatmul.bf16.gmra.mxu0 %v444
        %v633 = vpop.f32.mrf.mxu0
        %v634 = vadd.f32 0.0, %v633
        %v635 = vpop.f32.mrf.mxu0
        %v636 = vadd.f32 0.0, %v635
        %637 = vmatmul.bf16.gmra.mxu0 %v445
        %v638 = vpop.f32.mrf.mxu0
        %v639 = vadd.f32 0.0, %v638
        %v640 = vpop.f32.mrf.mxu0
        %v641 = vadd.f32 0.0, %v640
        %642 = vmatmul.bf16.gmra.mxu0 %v446
        %v643 = vpop.f32.mrf.mxu0
        %v644 = vadd.f32 0.0, %v643
        %v645 = vpop.f32.mrf.mxu0
        %v646 = vadd.f32 0.0, %v645
        %647 = vmatmul.bf16.gmra.mxu0 %v447
        %v648 = vpop.f32.mrf.mxu0
        %v649 = vadd.f32 0.0, %v648
        %v650 = vpop.f32.mrf.mxu0
        %v651 = vadd.f32 0.0, %v650
        %652 = vmatmul.bf16.gmra.mxu0 %v448
        %v653 = vpop.f32.mrf.mxu0
        %v654 = vadd.f32 0.0, %v653
        %v655 = vpop.f32.mrf.mxu0
        %v656 = vadd.f32 0.0, %v655
        %657 = vmatmul.bf16.gmra.mxu0 %v449
        %v658 = vpop.f32.mrf.mxu0
        %v659 = vadd.f32 0.0, %v658
        %v660 = vpop.f32.mrf.mxu0
        %v661 = vadd.f32 0.0, %v660
        %662 = vmatmul.bf16.gmra.mxu0 %v450
        %v663 = vpop.f32.mrf.mxu0
        %v664 = vadd.f32 0.0, %v663
        %v665 = vpop.f32.mrf.mxu0
        %v666 = vadd.f32 0.0, %v665
        %667 = vmatmul.bf16.gmra.mxu0 %v451
        %v668 = vpop.f32.mrf.mxu0
        %v669 = vadd.f32 0.0, %v668
        %v670 = vpop.f32.mrf.mxu0
        %v671 = vadd.f32 0.0, %v670
        %672 = vmatmul.bf16.gmra.mxu0 %v452
        %v673 = vpop.f32.mrf.mxu0
        %v674 = vadd.f32 0.0, %v673
        %v675 = vpop.f32.mrf.mxu0
        %v676 = vadd.f32 0.0, %v675
        %677 = vmatmul.bf16.gmra.mxu0 %v453
        %v678 = vpop.f32.mrf.mxu0
        %v679 = vadd.f32 0.0, %v678
        %v680 = vpop.f32.mrf.mxu0
        %v681 = vadd.f32 0.0, %v680
        %682 = vmatmul.bf16.gmra.mxu0 %v454
        %v683 = vpop.f32.mrf.mxu0
        %v684 = vadd.f32 0.0, %v683
        %v685 = vpop.f32.mrf.mxu0
        %v686 = vadd.f32 0.0, %v685
        %687 = vmatmul.bf16.gmra.mxu0 %v455
        %v688 = vpop.f32.mrf.mxu0
        %v689 = vadd.f32 0.0, %v688
        %v690 = vpop.f32.mrf.mxu0
        %v691 = vadd.f32 0.0, %v690
        %692 = vmatmul.bf16.gmra.mxu0 %v456
        %v693 = vpop.f32.mrf.mxu0
        %v694 = vadd.f32 0.0, %v693
        %v695 = vpop.f32.mrf.mxu0
        %v696 = vadd.f32 0.0, %v695
        %697 = vmatmul.bf16.gmra.mxu0 %v457
        %v698 = vpop.f32.mrf.mxu0
        %v699 = vadd.f32 0.0, %v698
        %v700 = vpop.f32.mrf.mxu0
        %v701 = vadd.f32 0.0, %v700
        %702 = vmatmul.bf16.gmra.mxu0 %v458
        %v703 = vpop.f32.mrf.mxu0
        %v704 = vadd.f32 0.0, %v703
        %v705 = vpop.f32.mrf.mxu0
        %v706 = vadd.f32 0.0, %v705
        %707 = vdwg.mxu0
        %vm708 = vcmask 523264
        %v709 = vsel %vm708, %v549, 0.0
        %v710 = vsel %vm708, %v551, 0.0
        %v711 = vadd.f32 %v709, %v710
        %v712 = vsel %vm708, %v554, 0.0
        %v713 = vadd.f32 %v711, %v712
        %v714 = vsel %vm708, %v556, 0.0
        %v715 = vadd.f32 %v713, %v714
        %v716 = vsel %vm708, %v559, 0.0
        %v717 = vadd.f32 %v715, %v716
        %v718 = vsel %vm708, %v561, 0.0
        %v719 = vadd.f32 %v717, %v718
        %v720 = vsel %vm708, %v564, 0.0
        %v721 = vadd.f32 %v719, %v720
        %v722 = vsel %vm708, %v566, 0.0
        %v723 = vadd.f32 %v721, %v722
        %v724 = vsel %vm708, %v569, 0.0
        %v725 = vadd.f32 %v723, %v724
        %v726 = vsel %vm708, %v571, 0.0
        %v727 = vadd.f32 %v725, %v726
        %v728 = vsel %vm708, %v574, 0.0
        %v729 = vadd.f32 %v727, %v728
        %v730 = vsel %vm708, %v576, 0.0
        %v731 = vadd.f32 %v729, %v730
        %v732 = vsel %vm708, %v579, 0.0
        %v733 = vadd.f32 %v731, %v732
        %v734 = vsel %vm708, %v581, 0.0
        %v735 = vadd.f32 %v733, %v734
        %v736 = vsel %vm708, %v584, 0.0
        %v737 = vadd.f32 %v735, %v736
        %v738 = vsel %vm708, %v586, 0.0
        %v739 = vadd.f32 %v737, %v738
        %v740 = vsel %vm708, %v589, 0.0
        %v741 = vadd.f32 %v739, %v740
        %v742 = vsel %vm708, %v591, 0.0
        %v743 = vadd.f32 %v741, %v742
        %v744 = vsel %vm708, %v594, 0.0
        %v745 = vadd.f32 %v743, %v744
        %v746 = vsel %vm708, %v596, 0.0
        %v747 = vadd.f32 %v745, %v746
        %v748 = vsel %vm708, %v599, 0.0
        %v749 = vadd.f32 %v747, %v748
        %v750 = vsel %vm708, %v601, 0.0
        %v751 = vadd.f32 %v749, %v750
        %v752 = vsel %vm708, %v604, 0.0
        %v753 = vadd.f32 %v751, %v752
        %v754 = vsel %vm708, %v606, 0.0
        %v755 = vadd.f32 %v753, %v754
        %v756 = vsel %vm708, %v609, 0.0
        %v757 = vadd.f32 %v755, %v756
        %v758 = vsel %vm708, %v611, 0.0
        %v759 = vadd.f32 %v757, %v758
        %v760 = vsel %vm708, %v614, 0.0
        %v761 = vadd.f32 %v759, %v760
        %v762 = vsel %vm708, %v616, 0.0
        %v763 = vadd.f32 %v761, %v762
        %v764 = vsel %vm708, %v619, 0.0
        %v765 = vadd.f32 %v763, %v764
        %v766 = vsel %vm708, %v621, 0.0
        %v767 = vadd.f32 %v765, %v766
        %v768 = vsel %vm708, %v624, 0.0
        %v769 = vadd.f32 %v767, %v768
        %v770 = vsel %vm708, %v626, 0.0
        %v771 = vadd.f32 %v769, %v770
        %v772 = vsel %vm708, %v629, 0.0
        %v773 = vadd.f32 %v771, %v772
        %v774 = vsel %vm708, %v631, 0.0
        %v775 = vadd.f32 %v773, %v774
        %v776 = vsel %vm708, %v634, 0.0
        %v777 = vadd.f32 %v775, %v776
        %v778 = vsel %vm708, %v636, 0.0
        %v779 = vadd.f32 %v777, %v778
        %v780 = vsel %vm708, %v639, 0.0
        %v781 = vadd.f32 %v779, %v780
        %v782 = vsel %vm708, %v641, 0.0
        %v783 = vadd.f32 %v781, %v782
        %v784 = vsel %vm708, %v644, 0.0
        %v785 = vadd.f32 %v783, %v784
        %v786 = vsel %vm708, %v646, 0.0
        %v787 = vadd.f32 %v785, %v786
        %v788 = vsel %vm708, %v649, 0.0
        %v789 = vadd.f32 %v787, %v788
        %v790 = vsel %vm708, %v651, 0.0
        %v791 = vadd.f32 %v789, %v790
        %v792 = vsel %vm708, %v654, 0.0
        %v793 = vadd.f32 %v791, %v792
        %v794 = vsel %vm708, %v656, 0.0
        %v795 = vadd.f32 %v793, %v794
        %v796 = vsel %vm708, %v659, 0.0
        %v797 = vadd.f32 %v795, %v796
        %v798 = vsel %vm708, %v661, 0.0
        %v799 = vadd.f32 %v797, %v798
        %v800 = vsel %vm708, %v664, 0.0
        %v801 = vadd.f32 %v799, %v800
        %v802 = vsel %vm708, %v666, 0.0
        %v803 = vadd.f32 %v801, %v802
        %v804 = vsel %vm708, %v669, 0.0
        %v805 = vadd.f32 %v803, %v804
        %v806 = vsel %vm708, %v671, 0.0
        %v807 = vadd.f32 %v805, %v806
        %v808 = vsel %vm708, %v674, 0.0
        %v809 = vadd.f32 %v807, %v808
        %v810 = vsel %vm708, %v676, 0.0
        %v811 = vadd.f32 %v809, %v810
        %v812 = vsel %vm708, %v679, 0.0
        %v813 = vadd.f32 %v811, %v812
        %v814 = vsel %vm708, %v681, 0.0
        %v815 = vadd.f32 %v813, %v814
        %v816 = vsel %vm708, %v684, 0.0
        %v817 = vadd.f32 %v815, %v816
        %v818 = vsel %vm708, %v686, 0.0
        %v819 = vadd.f32 %v817, %v818
        %v820 = vsel %vm708, %v689, 0.0
        %v821 = vadd.f32 %v819, %v820
        %v822 = vsel %vm708, %v691, 0.0
        %v823 = vadd.f32 %v821, %v822
        %v824 = vsel %vm708, %v694, 0.0
        %v825 = vadd.f32 %v823, %v824
        %v826 = vsel %vm708, %v696, 0.0
        %v827 = vadd.f32 %v825, %v826
        %v828 = vsel %vm708, %v699, 0.0
        %v829 = vadd.f32 %v827, %v828
        %v830 = vsel %vm708, %v701, 0.0
        %v831 = vadd.f32 %v829, %v830
        %v832 = vsel %vm708, %v704, 0.0
        %v833 = vadd.f32 %v831, %v832
        %v834 = vsel %vm708, %v706, 0.0
        %v835 = vadd.f32 %v833, %v834
        %v836 = vrcp.pop 64.0
        %v837 = vmul.f32 64.0, %v836
        %v838 = vsub.f32 1.0, %v837
        %v839 = vmul.f32 %v836, %v838
        %v840 = vadd.f32 %v836, %v839
        %vm841 = vweird.f32 %v836
        %v842 = vsel %vm841, %v836, %v840
        %v843 = vmul.f32 %v835, %v842
        %v844 = vmul.f32 %v549, %v549
        %v845 = vmul.f32 %v551, %v551
        %v846 = vmul.f32 %v554, %v554
        %v847 = vmul.f32 %v556, %v556
        %v848 = vmul.f32 %v559, %v559
        %v849 = vmul.f32 %v561, %v561
        %v850 = vmul.f32 %v564, %v564
        %v851 = vmul.f32 %v566, %v566
        %v852 = vmul.f32 %v569, %v569
        %v853 = vmul.f32 %v571, %v571
        %v854 = vmul.f32 %v574, %v574
        %v855 = vmul.f32 %v576, %v576
        %v856 = vmul.f32 %v579, %v579
        %v857 = vmul.f32 %v581, %v581
        %v858 = vmul.f32 %v584, %v584
        %v859 = vmul.f32 %v586, %v586
        %v860 = vmul.f32 %v589, %v589
        %v861 = vmul.f32 %v591, %v591
        %v862 = vmul.f32 %v594, %v594
        %v863 = vmul.f32 %v596, %v596
        %v864 = vmul.f32 %v599, %v599
        %v865 = vmul.f32 %v601, %v601
        %v866 = vmul.f32 %v604, %v604
        %v867 = vmul.f32 %v606, %v606
        %v868 = vmul.f32 %v609, %v609
        %v869 = vmul.f32 %v611, %v611
        %v870 = vmul.f32 %v614, %v614
        %v871 = vmul.f32 %v616, %v616
        %v872 = vmul.f32 %v619, %v619
        %v873 = vmul.f32 %v621, %v621
        %v874 = vmul.f32 %v624, %v624
        %v875 = vmul.f32 %v626, %v626
        %v876 = vmul.f32 %v629, %v629
        %v877 = vmul.f32 %v631, %v631
        %v878 = vmul.f32 %v634, %v634
        %v879 = vmul.f32 %v636, %v636
        %v880 = vmul.f32 %v639, %v639
        %v881 = vmul.f32 %v641, %v641
        %v882 = vmul.f32 %v644, %v644
        %v883 = vmul.f32 %v646, %v646
        %v884 = vmul.f32 %v649, %v649
        %v885 = vmul.f32 %v651, %v651
        %v886 = vmul.f32 %v654, %v654
        %v887 = vmul.f32 %v656, %v656
        %v888 = vmul.f32 %v659, %v659
        %v889 = vmul.f32 %v661, %v661
        %v890 = vmul.f32 %v664, %v664
        %v891 = vmul.f32 %v666, %v666
        %v892 = vmul.f32 %v669, %v669
        %v893 = vmul.f32 %v671, %v671
        %v894 = vmul.f32 %v674, %v674
        %v895 = vmul.f32 %v676, %v676
        %v896 = vmul.f32 %v679, %v679
        %v897 = vmul.f32 %v681, %v681
        %v898 = vmul.f32 %v684, %v684
        %v899 = vmul.f32 %v686, %v686
        %v900 = vmul.f32 %v689, %v689
        %v901 = vmul.f32 %v691, %v691
        %v902 = vmul.f32 %v694, %v694
        %v903 = vmul.f32 %v696, %v696
        %v904 = vmul.f32 %v699, %v699
        %v905 = vmul.f32 %v701, %v701
        %v906 = vmul.f32 %v704, %v704
        %v907 = vmul.f32 %v706, %v706
        %v908 = vsel %vm708, %v844, 0.0
        %v909 = vsel %vm708, %v845, 0.0
        %v910 = vadd.f32 %v908, %v909
        %v911 = vsel %vm708, %v846, 0.0
        %v912 = vadd.f32 %v910, %v911
        %v913 = vsel %vm708, %v847, 0.0
        %v914 = vadd.f32 %v912, %v913
        %v915 = vsel %vm708, %v848, 0.0
        %v916 = vadd.f32 %v914, %v915
        %v917 = vsel %vm708, %v849, 0.0
        %v918 = vadd.f32 %v916, %v917
        %v919 = vsel %vm708, %v850, 0.0
        %v920 = vadd.f32 %v918, %v919
        %v921 = vsel %vm708, %v851, 0.0
        %v922 = vadd.f32 %v920, %v921
        %v923 = vsel %vm708, %v852, 0.0
        %v924 = vadd.f32 %v922, %v923
        %v925 = vsel %vm708, %v853, 0.0
        %v926 = vadd.f32 %v924, %v925
        %v927 = vsel %vm708, %v854, 0.0
        %v928 = vadd.f32 %v926, %v927
        %v929 = vsel %vm708, %v855, 0.0
        %v930 = vadd.f32 %v928, %v929
        %v931 = vsel %vm708, %v856, 0.0
        %v932 = vadd.f32 %v930, %v931
        %v933 = vsel %vm708, %v857, 0.0
        %v934 = vadd.f32 %v932, %v933
        %v935 = vsel %vm708, %v858, 0.0
        %v936 = vadd.f32 %v934, %v935
        %v937 = vsel %vm708, %v859, 0.0
        %v938 = vadd.f32 %v936, %v937
        %v939 = vsel %vm708, %v860, 0.0
        %v940 = vadd.f32 %v938, %v939
        %v941 = vsel %vm708, %v861, 0.0
        %v942 = vadd.f32 %v940, %v941
        %v943 = vsel %vm708, %v862, 0.0
        %v944 = vadd.f32 %v942, %v943
        %v945 = vsel %vm708, %v863, 0.0
        %v946 = vadd.f32 %v944, %v945
        %v947 = vsel %vm708, %v864, 0.0
        %v948 = vadd.f32 %v946, %v947
        %v949 = vsel %vm708, %v865, 0.0
        %v950 = vadd.f32 %v948, %v949
        %v951 = vsel %vm708, %v866, 0.0
        %v952 = vadd.f32 %v950, %v951
        %v953 = vsel %vm708, %v867, 0.0
        %v954 = vadd.f32 %v952, %v953
        %v955 = vsel %vm708, %v868, 0.0
        %v956 = vadd.f32 %v954, %v955
        %v957 = vsel %vm708, %v869, 0.0
        %v958 = vadd.f32 %v956, %v957
        %v959 = vsel %vm708, %v870, 0.0
        %v960 = vadd.f32 %v958, %v959
        %v961 = vsel %vm708, %v871, 0.0
        %v962 = vadd.f32 %v960, %v961
        %v963 = vsel %vm708, %v872, 0.0
        %v964 = vadd.f32 %v962, %v963
        %v965 = vsel %vm708, %v873, 0.0
        %v966 = vadd.f32 %v964, %v965
        %v967 = vsel %vm708, %v874, 0.0
        %v968 = vadd.f32 %v966, %v967
        %v969 = vsel %vm708, %v875, 0.0
        %v970 = vadd.f32 %v968, %v969
        %v971 = vsel %vm708, %v876, 0.0
        %v972 = vadd.f32 %v970, %v971
        %v973 = vsel %vm708, %v877, 0.0
        %v974 = vadd.f32 %v972, %v973
        %v975 = vsel %vm708, %v878, 0.0
        %v976 = vadd.f32 %v974, %v975
        %v977 = vsel %vm708, %v879, 0.0
        %v978 = vadd.f32 %v976, %v977
        %v979 = vsel %vm708, %v880, 0.0
        %v980 = vadd.f32 %v978, %v979
        %v981 = vsel %vm708, %v881, 0.0
        %v982 = vadd.f32 %v980, %v981
        %v983 = vsel %vm708, %v882, 0.0
        %v984 = vadd.f32 %v982, %v983
        %v985 = vsel %vm708, %v883, 0.0
        %v986 = vadd.f32 %v984, %v985
        %v987 = vsel %vm708, %v884, 0.0
        %v988 = vadd.f32 %v986, %v987
        %v989 = vsel %vm708, %v885, 0.0
        %v990 = vadd.f32 %v988, %v989
        %v991 = vsel %vm708, %v886, 0.0
        %v992 = vadd.f32 %v990, %v991
        %v993 = vsel %vm708, %v887, 0.0
        %v994 = vadd.f32 %v992, %v993
        %v995 = vsel %vm708, %v888, 0.0
        %v996 = vadd.f32 %v994, %v995
        %v997 = vsel %vm708, %v889, 0.0
        %v998 = vadd.f32 %v996, %v997
        %v999 = vsel %vm708, %v890, 0.0
        %v1000 = vadd.f32 %v998, %v999
        %v1001 = vsel %vm708, %v891, 0.0
        %v1002 = vadd.f32 %v1000, %v1001
        %v1003 = vsel %vm708, %v892, 0.0
        %v1004 = vadd.f32 %v1002, %v1003
        %v1005 = vsel %vm708, %v893, 0.0
        %v1006 = vadd.f32 %v1004, %v1005
        %v1007 = vsel %vm708, %v894, 0.0
        %v1008 = vadd.f32 %v1006, %v1007
        %v1009 = vsel %vm708, %v895, 0.0
        %v1010 = vadd.f32 %v1008, %v1009
        %v1011 = vsel %vm708, %v896, 0.0
        %v1012 = vadd.f32 %v1010, %v1011
        %v1013 = vsel %vm708, %v897, 0.0
        %v1014 = vadd.f32 %v1012, %v1013
        %v1015 = vsel %vm708, %v898, 0.0
        %v1016 = vadd.f32 %v1014, %v1015
        %v1017 = vsel %vm708, %v899, 0.0
        %v1018 = vadd.f32 %v1016, %v1017
        %v1019 = vsel %vm708, %v900, 0.0
        %v1020 = vadd.f32 %v1018, %v1019
        %v1021 = vsel %vm708, %v901, 0.0
        %v1022 = vadd.f32 %v1020, %v1021
        %v1023 = vsel %vm708, %v902, 0.0
        %v1024 = vadd.f32 %v1022, %v1023
        %v1025 = vsel %vm708, %v903, 0.0
        %v1026 = vadd.f32 %v1024, %v1025
        %v1027 = vsel %vm708, %v904, 0.0
        %v1028 = vadd.f32 %v1026, %v1027
        %v1029 = vsel %vm708, %v905, 0.0
        %v1030 = vadd.f32 %v1028, %v1029
        %v1031 = vsel %vm708, %v906, 0.0
        %v1032 = vadd.f32 %v1030, %v1031
        %v1033 = vsel %vm708, %v907, 0.0
        %v1034 = vadd.f32 %v1032, %v1033
        %v1035 = vmul.f32 %v1034, %v842
        %v1036 = vmul.f32 %v843, %v843
        %v1037 = vsub.f32 %v1035, %v1036
        %v1038 = vmax.f32 %v1037, 0.0
        %v1039 = vsub.f32 %v549, %v843
        %v1040 = vsub.f32 %v551, %v843
        %v1041 = vsub.f32 %v554, %v843
        %v1042 = vsub.f32 %v556, %v843
        %v1043 = vsub.f32 %v559, %v843
        %v1044 = vsub.f32 %v561, %v843
        %v1045 = vsub.f32 %v564, %v843
        %v1046 = vsub.f32 %v566, %v843
        %v1047 = vsub.f32 %v569, %v843
        %v1048 = vsub.f32 %v571, %v843
        %v1049 = vsub.f32 %v574, %v843
        %v1050 = vsub.f32 %v576, %v843
        %v1051 = vsub.f32 %v579, %v843
        %v1052 = vsub.f32 %v581, %v843
        %v1053 = vsub.f32 %v584, %v843
        %v1054 = vsub.f32 %v586, %v843
        %v1055 = vsub.f32 %v589, %v843
        %v1056 = vsub.f32 %v591, %v843
        %v1057 = vsub.f32 %v594, %v843
        %v1058 = vsub.f32 %v596, %v843
        %v1059 = vsub.f32 %v599, %v843
        %v1060 = vsub.f32 %v601, %v843
        %v1061 = vsub.f32 %v604, %v843
        %v1062 = vsub.f32 %v606, %v843
        %v1063 = vsub.f32 %v609, %v843
        %v1064 = vsub.f32 %v611, %v843
        %v1065 = vsub.f32 %v614, %v843
        %v1066 = vsub.f32 %v616, %v843
        %v1067 = vsub.f32 %v619, %v843
        %v1068 = vsub.f32 %v621, %v843
        %v1069 = vsub.f32 %v624, %v843
        %v1070 = vsub.f32 %v626, %v843
        %v1071 = vsub.f32 %v629, %v843
        %v1072 = vsub.f32 %v631, %v843
        %v1073 = vsub.f32 %v634, %v843
        %v1074 = vsub.f32 %v636, %v843
        %v1075 = vsub.f32 %v639, %v843
        %v1076 = vsub.f32 %v641, %v843
        %v1077 = vsub.f32 %v644, %v843
        %v1078 = vsub.f32 %v646, %v843
        %v1079 = vsub.f32 %v649, %v843
        %v1080 = vsub.f32 %v651, %v843
        %v1081 = vsub.f32 %v654, %v843
        %v1082 = vsub.f32 %v656, %v843
        %v1083 = vsub.f32 %v659, %v843
        %v1084 = vsub.f32 %v661, %v843
        %v1085 = vsub.f32 %v664, %v843
        %v1086 = vsub.f32 %v666, %v843
        %v1087 = vsub.f32 %v669, %v843
        %v1088 = vsub.f32 %v671, %v843
        %v1089 = vsub.f32 %v674, %v843
        %v1090 = vsub.f32 %v676, %v843
        %v1091 = vsub.f32 %v679, %v843
        %v1092 = vsub.f32 %v681, %v843
        %v1093 = vsub.f32 %v684, %v843
        %v1094 = vsub.f32 %v686, %v843
        %v1095 = vsub.f32 %v689, %v843
        %v1096 = vsub.f32 %v691, %v843
        %v1097 = vsub.f32 %v694, %v843
        %v1098 = vsub.f32 %v696, %v843
        %v1099 = vsub.f32 %v699, %v843
        %v1100 = vsub.f32 %v701, %v843
        %v1101 = vsub.f32 %v704, %v843
        %v1102 = vsub.f32 %v706, %v843
        %v1103 = vadd.f32 %v1038, 1e-05
        %v1104 = vrsqrt.pop %v1103
        %v1105 = vmul.f32 %v1104, %v1103
        %v1106 = vmul.f32 %v1105, %v1104
        %v1107 = vmul.f32 0.5, %v1106
        %v1108 = vsub.f32 1.5, %v1107
        %v1109 = vmul.f32 %v1104, %v1108
        %vm1110 = vweird.f32 %v1103
        %vm1111 = vweird.f32 %v1104
        %vm1112 = vmor %vm1110, %vm1111
        %v1113 = vsel %vm1112, %v1104, %v1109
        %v1114 = vmul.f32 %v1039, %v1113
        %v1115 = vmul.f32 %v1040, %v1113
        %v1116 = vmul.f32 %v1041, %v1113
        %v1117 = vmul.f32 %v1042, %v1113
        %v1118 = vmul.f32 %v1043, %v1113
        %v1119 = vmul.f32 %v1044, %v1113
        %v1120 = vmul.f32 %v1045, %v1113
        %v1121 = vmul.f32 %v1046, %v1113
        %v1122 = vmul.f32 %v1047, %v1113
        %v1123 = vmul.f32 %v1048, %v1113
        %v1124 = vmul.f32 %v1049, %v1113
        %v1125 = vmul.f32 %v1050, %v1113
        %v1126 = vmul.f32 %v1051, %v1113
        %v1127 = vmul.f32 %v1052, %v1113
        %v1128 = vmul.f32 %v1053, %v1113
        %v1129 = vmul.f32 %v1054, %v1113
        %v1130 = vmul.f32 %v1055, %v1113
        %v1131 = vmul.f32 %v1056, %v1113
        %v1132 = vmul.f32 %v1057, %v1113
        %v1133 = vmul.f32 %v1058, %v1113
        %v1134 = vmul.f32 %v1059, %v1113
        %v1135 = vmul.f32 %v1060, %v1113
        %v1136 = vmul.f32 %v1061, %v1113
        %v1137 = vmul.f32 %v1062, %v1113
        %v1138 = vmul.f32 %v1063, %v1113
        %v1139 = vmul.f32 %v1064, %v1113
        %v1140 = vmul.f32 %v1065, %v1113
        %v1141 = vmul.f32 %v1066, %v1113
        %v1142 = vmul.f32 %v1067, %v1113
        %v1143 = vmul.f32 %v1068, %v1113
        %v1144 = vmul.f32 %v1069, %v1113
        %v1145 = vmul.f32 %v1070, %v1113
        %v1146 = vmul.f32 %v1071, %v1113
        %v1147 = vmul.f32 %v1072, %v1113
        %v1148 = vmul.f32 %v1073, %v1113
        %v1149 = vmul.f32 %v1074, %v1113
        %v1150 = vmul.f32 %v1075, %v1113
        %v1151 = vmul.f32 %v1076, %v1113
        %v1152 = vmul.f32 %v1077, %v1113
        %v1153 = vmul.f32 %v1078, %v1113
        %v1154 = vmul.f32 %v1079, %v1113
        %v1155 = vmul.f32 %v1080, %v1113
        %v1156 = vmul.f32 %v1081, %v1113
        %v1157 = vmul.f32 %v1082, %v1113
        %v1158 = vmul.f32 %v1083, %v1113
        %v1159 = vmul.f32 %v1084, %v1113
        %v1160 = vmul.f32 %v1085, %v1113
        %v1161 = vmul.f32 %v1086, %v1113
        %v1162 = vmul.f32 %v1087, %v1113
        %v1163 = vmul.f32 %v1088, %v1113
        %v1164 = vmul.f32 %v1089, %v1113
        %v1165 = vmul.f32 %v1090, %v1113
        %v1166 = vmul.f32 %v1091, %v1113
        %v1167 = vmul.f32 %v1092, %v1113
        %v1168 = vmul.f32 %v1093, %v1113
        %v1169 = vmul.f32 %v1094, %v1113
        %v1170 = vmul.f32 %v1095, %v1113
        %v1171 = vmul.f32 %v1096, %v1113
        %v1172 = vmul.f32 %v1097, %v1113
        %v1173 = vmul.f32 %v1098, %v1113
        %v1174 = vmul.f32 %v1099, %v1113
        %v1175 = vmul.f32 %v1100, %v1113
        %v1176 = vmul.f32 %v1101, %v1113
        %v1177 = vmul.f32 %v1102, %v1113
        %v1178 = vmax.f32 %v1114, 0.0
        %v1179 = vmax.f32 %v1115, 0.0
        %v1180 = vmax.f32 %v1116, 0.0
        %v1181 = vmax.f32 %v1117, 0.0
        %v1182 = vmax.f32 %v1118, 0.0
        %v1183 = vmax.f32 %v1119, 0.0
        %v1184 = vmax.f32 %v1120, 0.0
        %v1185 = vmax.f32 %v1121, 0.0
        %v1186 = vmax.f32 %v1122, 0.0
        %v1187 = vmax.f32 %v1123, 0.0
        %v1188 = vmax.f32 %v1124, 0.0
        %v1189 = vmax.f32 %v1125, 0.0
        %v1190 = vmax.f32 %v1126, 0.0
        %v1191 = vmax.f32 %v1127, 0.0
        %v1192 = vmax.f32 %v1128, 0.0
        %v1193 = vmax.f32 %v1129, 0.0
        %v1194 = vmax.f32 %v1130, 0.0
        %v1195 = vmax.f32 %v1131, 0.0
        %v1196 = vmax.f32 %v1132, 0.0
        %v1197 = vmax.f32 %v1133, 0.0
        %v1198 = vmax.f32 %v1134, 0.0
        %v1199 = vmax.f32 %v1135, 0.0
        %v1200 = vmax.f32 %v1136, 0.0
        %v1201 = vmax.f32 %v1137, 0.0
        %v1202 = vmax.f32 %v1138, 0.0
        %v1203 = vmax.f32 %v1139, 0.0
        %v1204 = vmax.f32 %v1140, 0.0
        %v1205 = vmax.f32 %v1141, 0.0
        %v1206 = vmax.f32 %v1142, 0.0
        %v1207 = vmax.f32 %v1143, 0.0
        %v1208 = vmax.f32 %v1144, 0.0
        %v1209 = vmax.f32 %v1145, 0.0
        %v1210 = vmax.f32 %v1146, 0.0
        %v1211 = vmax.f32 %v1147, 0.0
        %v1212 = vmax.f32 %v1148, 0.0
        %v1213 = vmax.f32 %v1149, 0.0
        %v1214 = vmax.f32 %v1150, 0.0
        %v1215 = vmax.f32 %v1151, 0.0
        %v1216 = vmax.f32 %v1152, 0.0
        %v1217 = vmax.f32 %v1153, 0.0
        %v1218 = vmax.f32 %v1154, 0.0
        %v1219 = vmax.f32 %v1155, 0.0
        %v1220 = vmax.f32 %v1156, 0.0
        %v1221 = vmax.f32 %v1157, 0.0
        %v1222 = vmax.f32 %v1158, 0.0
        %v1223 = vmax.f32 %v1159, 0.0
        %v1224 = vmax.f32 %v1160, 0.0
        %v1225 = vmax.f32 %v1161, 0.0
        %v1226 = vmax.f32 %v1162, 0.0
        %v1227 = vmax.f32 %v1163, 0.0
        %v1228 = vmax.f32 %v1164, 0.0
        %v1229 = vmax.f32 %v1165, 0.0
        %v1230 = vmax.f32 %v1166, 0.0
        %v1231 = vmax.f32 %v1167, 0.0
        %v1232 = vmax.f32 %v1168, 0.0
        %v1233 = vmax.f32 %v1169, 0.0
        %v1234 = vmax.f32 %v1170, 0.0
        %v1235 = vmax.f32 %v1171, 0.0
        %v1236 = vmax.f32 %v1172, 0.0
        %v1237 = vmax.f32 %v1173, 0.0
        %v1238 = vmax.f32 %v1174, 0.0
        %v1239 = vmax.f32 %v1175, 0.0
        %v1240 = vmax.f32 %v1176, 0.0
        %v1241 = vmax.f32 %v1177, 0.0
        %1242 = vst.msk [vmem:[#allocation2] sm:$0xff] %vm708, 0.0
        %1243 = vst.msk [vmem:[#allocation2 + $0x8] sm:$0xff] %vm708, 0.0
        %1244 = vst.msk [vmem:[#allocation2 + $0x10] sm:$0xff] %vm708, 0.0
        %1245 = vst.msk [vmem:[#allocation2 + $0x18] sm:$0xff] %vm708, 0.0
        %1246 = vst.msk [vmem:[#allocation2 + $0x20] sm:$0xff] %vm708, 0.0
        %1247 = vst.msk [vmem:[#allocation2 + $0x28] sm:$0xff] %vm708, 0.0
        %1248 = vst.msk [vmem:[#allocation2 + $0x30] sm:$0xff] %vm708, 0.0
        %1249 = vst.msk [vmem:[#allocation2 + $0x38] sm:$0xff] %vm708, 0.0
        %1250 = vst.msk [vmem:[#allocation2 + $0x40] sm:$0xff] %vm708, 0.0
        %1251 = vst.msk [vmem:[#allocation2 + $0x48] sm:$0xff] %vm708, 0.0
        %1252 = vst.msk [vmem:[#allocation2 + $0x50] sm:$0xff] %vm708, 0.0
        %1253 = vst.msk [vmem:[#allocation2 + $0x58] sm:$0xff] %vm708, 0.0
        %1254 = vst.msk [vmem:[#allocation2 + $0x60] sm:$0xff] %vm708, 0.0
        %1255 = vst.msk [vmem:[#allocation2 + $0x68] sm:$0xff] %vm708, 0.0
        %1256 = vst.msk [vmem:[#allocation2 + $0x70] sm:$0xff] %vm708, 0.0
        %1257 = vst.msk [vmem:[#allocation2 + $0x78] sm:$0xff] %vm708, 0.0
        %1258 = vst.msk [vmem:[#allocation2 + $0x80] sm:$0xff] %vm708, 0.0
        %1259 = vst.msk [vmem:[#allocation2 + $0x88] sm:$0xff] %vm708, 0.0
        %1260 = vst.msk [vmem:[#allocation2 + $0x90] sm:$0xff] %vm708, 0.0
        %1261 = vst.msk [vmem:[#allocation2 + $0x98] sm:$0xff] %vm708, 0.0
        %1262 = vst.msk [vmem:[#allocation2 + $0xa0] sm:$0xff] %vm708, 0.0
        %1263 = vst.msk [vmem:[#allocation2 + $0xa8] sm:$0xff] %vm708, 0.0
        %1264 = vst.msk [vmem:[#allocation2 + $0xb0] sm:$0xff] %vm708, 0.0
        %1265 = vst.msk [vmem:[#allocation2 + $0xb8] sm:$0xff] %vm708, 0.0
        %1266 = vst.msk [vmem:[#allocation2 + $0xc0] sm:$0xff] %vm708, 0.0
        %1267 = vst.msk [vmem:[#allocation2 + $0xc8] sm:$0xff] %vm708, 0.0
        %1268 = vst.msk [vmem:[#allocation2 + $0xd0] sm:$0xff] %vm708, 0.0
        %1269 = vst.msk [vmem:[#allocation2 + $0xd8] sm:$0xff] %vm708, 0.0
        %1270 = vst.msk [vmem:[#allocation2 + $0xe0] sm:$0xff] %vm708, 0.0
        %1271 = vst.msk [vmem:[#allocation2 + $0xe8] sm:$0xff] %vm708, 0.0
        %1272 = vst.msk [vmem:[#allocation2 + $0xf0] sm:$0xff] %vm708, 0.0
        %1273 = vst.msk [vmem:[#allocation2 + $0xf8] sm:$0xff] %vm708, 0.0
        %1274 = vst.msk [vmem:[#allocation2 + $0x100] sm:$0xff] %vm708, 0.0
        %1275 = vst.msk [vmem:[#allocation2 + $0x108] sm:$0xff] %vm708, 0.0
        %1276 = vst.msk [vmem:[#allocation2 + $0x110] sm:$0xff] %vm708, 0.0
        %1277 = vst.msk [vmem:[#allocation2 + $0x118] sm:$0xff] %vm708, 0.0
        %1278 = vst.msk [vmem:[#allocation2 + $0x120] sm:$0xff] %vm708, 0.0
        %1279 = vst.msk [vmem:[#allocation2 + $0x128] sm:$0xff] %vm708, 0.0
        %1280 = vst.msk [vmem:[#allocation2 + $0x130] sm:$0xff] %vm708, 0.0
        %1281 = vst.msk [vmem:[#allocation2 + $0x138] sm:$0xff] %vm708, 0.0
        %1282 = vst.msk [vmem:[#allocation2 + $0x140] sm:$0xff] %vm708, 0.0
        %1283 = vst.msk [vmem:[#allocation2 + $0x148] sm:$0xff] %vm708, 0.0
        %1284 = vst.msk [vmem:[#allocation2 + $0x150] sm:$0xff] %vm708, 0.0
        %1285 = vst.msk [vmem:[#allocation2 + $0x158] sm:$0xff] %vm708, 0.0
        %1286 = vst.msk [vmem:[#allocation2 + $0x160] sm:$0xff] %vm708, 0.0
        %1287 = vst.msk [vmem:[#allocation2 + $0x168] sm:$0xff] %vm708, 0.0
        %1288 = vst.msk [vmem:[#allocation2 + $0x170] sm:$0xff] %vm708, 0.0
        %1289 = vst.msk [vmem:[#allocation2 + $0x178] sm:$0xff] %vm708, 0.0
        %1290 = vst.msk [vmem:[#allocation2 + $0x180] sm:$0xff] %vm708, 0.0
        %1291 = vst.msk [vmem:[#allocation2 + $0x188] sm:$0xff] %vm708, 0.0
        %1292 = vst.msk [vmem:[#allocation2 + $0x190] sm:$0xff] %vm708, 0.0
        %1293 = vst.msk [vmem:[#allocation2 + $0x198] sm:$0xff] %vm708, 0.0
        %1294 = vst.msk [vmem:[#allocation2 + $0x1a0] sm:$0xff] %vm708, 0.0
        %1295 = vst.msk [vmem:[#allocation2 + $0x1a8] sm:$0xff] %vm708, 0.0
        %1296 = vst.msk [vmem:[#allocation2 + $0x1b0] sm:$0xff] %vm708, 0.0
        %1297 = vst.msk [vmem:[#allocation2 + $0x1b8] sm:$0xff] %vm708, 0.0
        %1298 = vst.msk [vmem:[#allocation2 + $0x1c0] sm:$0xff] %vm708, 0.0
        %1299 = vst.msk [vmem:[#allocation2 + $0x1c8] sm:$0xff] %vm708, 0.0
        %1300 = vst.msk [vmem:[#allocation2 + $0x1d0] sm:$0xff] %vm708, 0.0
        %1301 = vst.msk [vmem:[#allocation2 + $0x1d8] sm:$0xff] %vm708, 0.0
        %1302 = vst.msk [vmem:[#allocation2 + $0x1e0] sm:$0xff] %vm708, 0.0
        %1303 = vst.msk [vmem:[#allocation2 + $0x1e8] sm:$0xff] %vm708, 0.0
        %1304 = vst.msk [vmem:[#allocation2 + $0x1f0] sm:$0xff] %vm708, 0.0
        %1305 = vst.msk [vmem:[#allocation2 + $0x1f8] sm:$0xff] %vm708, 0.0
        %1306 = vst.msk [vmem:[#allocation2 + $0x200] sm:$0xff] %vm708, 0.0
        %1307 = vst.msk [vmem:[#allocation2 + $0x208] sm:$0xff] %vm708, 0.0
        %1308 = vst.msk [vmem:[#allocation2 + $0x210] sm:$0xff] %vm708, 0.0
        %1309 = vst.msk [vmem:[#allocation2 + $0x218] sm:$0xff] %vm708, 0.0
        %1310 = vst.msk [vmem:[#allocation2 + $0x220] sm:$0xff] %vm708, 0.0
        %1311 = vst.msk [vmem:[#allocation2 + $0x228] sm:$0xff] %vm708, 0.0
        %1312 = vst.msk [vmem:[#allocation2 + $0x230] sm:$0xff] %vm708, 0.0
        %1313 = vst.msk [vmem:[#allocation2 + $0x238] sm:$0xff] %vm708, 0.0
        %1314 = vst.msk [vmem:[#allocation2 + $0x240] sm:$0xff] %vm708, 0.0
        %1315 = vst.msk [vmem:[#allocation2 + $0x248] sm:$0xff] %vm708, 0.0
        %1316 = vst.msk [vmem:[#allocation2 + $0x250] sm:$0xff] %vm708, 0.0
        %1317 = vst.msk [vmem:[#allocation2 + $0x258] sm:$0xff] %vm708, 0.0
        %1318 = vst.msk [vmem:[#allocation2 + $0x260] sm:$0xff] %vm708, 0.0
        %1319 = vst.msk [vmem:[#allocation2 + $0x268] sm:$0xff] %vm708, 0.0
        %1320 = vst.msk [vmem:[#allocation2 + $0x270] sm:$0xff] %vm708, 0.0
        %1321 = vst.msk [vmem:[#allocation2 + $0x278] sm:$0xff] %vm708, 0.0
        %1322 = vst.msk [vmem:[#allocation2 + $0x280] sm:$0xff] %vm708, 0.0
        %1323 = vst.msk [vmem:[#allocation2 + $0x288] sm:$0xff] %vm708, 0.0
        %1324 = vst.msk [vmem:[#allocation2 + $0x290] sm:$0xff] %vm708, 0.0
        %1325 = vst.msk [vmem:[#allocation2 + $0x298] sm:$0xff] %vm708, 0.0
        %1326 = vst.msk [vmem:[#allocation2 + $0x2a0] sm:$0xff] %vm708, 0.0
        %1327 = vst.msk [vmem:[#allocation2 + $0x2a8] sm:$0xff] %vm708, 0.0
        %1328 = vst.msk [vmem:[#allocation2 + $0x2b0] sm:$0xff] %vm708, 0.0
        %1329 = vst.msk [vmem:[#allocation2 + $0x2b8] sm:$0xff] %vm708, 0.0
        %1330 = vst.msk [vmem:[#allocation2 + $0x2c0] sm:$0xff] %vm708, 0.0
        %1331 = vst.msk [vmem:[#allocation2 + $0x2c8] sm:$0xff] %vm708, 0.0
        %1332 = vst.msk [vmem:[#allocation2 + $0x2d0] sm:$0xff] %vm708, 0.0
        %1333 = vst.msk [vmem:[#allocation2 + $0x2d8] sm:$0xff] %vm708, 0.0
        %1334 = vst.msk [vmem:[#allocation2 + $0x2e0] sm:$0xff] %vm708, 0.0
        %1335 = vst.msk [vmem:[#allocation2 + $0x2e8] sm:$0xff] %vm708, 0.0
        %1336 = vst.msk [vmem:[#allocation2 + $0x2f0] sm:$0xff] %vm708, 0.0
        %1337 = vst.msk [vmem:[#allocation2 + $0x2f8] sm:$0xff] %vm708, 0.0
        %1338 = vst.msk [vmem:[#allocation2 + $0x300] sm:$0xff] %vm708, 0.0
        %1339 = vst.msk [vmem:[#allocation2 + $0x308] sm:$0xff] %vm708, 0.0
        %1340 = vst.msk [vmem:[#allocation2 + $0x310] sm:$0xff] %vm708, 0.0
        %1341 = vst.msk [vmem:[#allocation2 + $0x318] sm:$0xff] %vm708, 0.0
        %1342 = vst.msk [vmem:[#allocation2 + $0x320] sm:$0xff] %vm708, 0.0
        %1343 = vst.msk [vmem:[#allocation2 + $0x328] sm:$0xff] %vm708, 0.0
        %s1344 = scalar_lea.vmem [#allocation2], 96
        %1345 = vst.msk [vmem:[%s1344] sm:$0xff] %vm708, %v1178
        %1346 = vst.msk [vmem:[%s1344 + $0x8] sm:$0xff] %vm708, %v1179
        %1347 = vst.msk [vmem:[%s1344 + $0x10] sm:$0xff] %vm708, %v1180
        %1348 = vst.msk [vmem:[%s1344 + $0x18] sm:$0xff] %vm708, %v1181
        %1349 = vst.msk [vmem:[%s1344 + $0x20] sm:$0xff] %vm708, %v1182
        %1350 = vst.msk [vmem:[%s1344 + $0x28] sm:$0xff] %vm708, %v1183
        %1351 = vst.msk [vmem:[%s1344 + $0x30] sm:$0xff] %vm708, %v1184
        %1352 = vst.msk [vmem:[%s1344 + $0x38] sm:$0xff] %vm708, %v1185
        %s1353 = scalar_lea.vmem [#allocation2], 176
        %1354 = vst.msk [vmem:[%s1353] sm:$0xff] %vm708, %v1186
        %1355 = vst.msk [vmem:[%s1353 + $0x8] sm:$0xff] %vm708, %v1187
        %1356 = vst.msk [vmem:[%s1353 + $0x10] sm:$0xff] %vm708, %v1188
        %1357 = vst.msk [vmem:[%s1353 + $0x18] sm:$0xff] %vm708, %v1189
        %1358 = vst.msk [vmem:[%s1353 + $0x20] sm:$0xff] %vm708, %v1190
        %1359 = vst.msk [vmem:[%s1353 + $0x28] sm:$0xff] %vm708, %v1191
        %1360 = vst.msk [vmem:[%s1353 + $0x30] sm:$0xff] %vm708, %v1192
        %1361 = vst.msk [vmem:[%s1353 + $0x38] sm:$0xff] %vm708, %v1193
        %s1362 = scalar_lea.vmem [#allocation2], 256
        %1363 = vst.msk [vmem:[%s1362] sm:$0xff] %vm708, %v1194
        %1364 = vst.msk [vmem:[%s1362 + $0x8] sm:$0xff] %vm708, %v1195
        %1365 = vst.msk [vmem:[%s1362 + $0x10] sm:$0xff] %vm708, %v1196
        %1366 = vst.msk [vmem:[%s1362 + $0x18] sm:$0xff] %vm708, %v1197
        %1367 = vst.msk [vmem:[%s1362 + $0x20] sm:$0xff] %vm708, %v1198
        %1368 = vst.msk [vmem:[%s1362 + $0x28] sm:$0xff] %vm708, %v1199
        %1369 = vst.msk [vmem:[%s1362 + $0x30] sm:$0xff] %vm708, %v1200
        %1370 = vst.msk [vmem:[%s1362 + $0x38] sm:$0xff] %vm708, %v1201
        %s1371 = scalar_lea.vmem [#allocation2], 336
        %1372 = vst.msk [vmem:[%s1371] sm:$0xff] %vm708, %v1202
        %1373 = vst.msk [vmem:[%s1371 + $0x8] sm:$0xff] %vm708, %v1203
        %1374 = vst.msk [vmem:[%s1371 + $0x10] sm:$0xff] %vm708, %v1204
        %1375 = vst.msk [vmem:[%s1371 + $0x18] sm:$0xff] %vm708, %v1205
        %1376 = vst.msk [vmem:[%s1371 + $0x20] sm:$0xff] %vm708, %v1206
        %1377 = vst.msk [vmem:[%s1371 + $0x28] sm:$0xff] %vm708, %v1207
        %1378 = vst.msk [vmem:[%s1371 + $0x30] sm:$0xff] %vm708, %v1208
        %1379 = vst.msk [vmem:[%s1371 + $0x38] sm:$0xff] %vm708, %v1209
        %s1380 = scalar_lea.vmem [#allocation2], 416
        %1381 = vst.msk [vmem:[%s1380] sm:$0xff] %vm708, %v1210
        %1382 = vst.msk [vmem:[%s1380 + $0x8] sm:$0xff] %vm708, %v1211
        %1383 = vst.msk [vmem:[%s1380 + $0x10] sm:$0xff] %vm708, %v1212
        %1384 = vst.msk [vmem:[%s1380 + $0x18] sm:$0xff] %vm708, %v1213
        %1385 = vst.msk [vmem:[%s1380 + $0x20] sm:$0xff] %vm708, %v1214
        %1386 = vst.msk [vmem:[%s1380 + $0x28] sm:$0xff] %vm708, %v1215
        %1387 = vst.msk [vmem:[%s1380 + $0x30] sm:$0xff] %vm708, %v1216
        %1388 = vst.msk [vmem:[%s1380 + $0x38] sm:$0xff] %vm708, %v1217
        %s1389 = scalar_lea.vmem [#allocation2], 496
        %1390 = vst.msk [vmem:[%s1389] sm:$0xff] %vm708, %v1218
        %1391 = vst.msk [vmem:[%s1389 + $0x8] sm:$0xff] %vm708, %v1219
        %1392 = vst.msk [vmem:[%s1389 + $0x10] sm:$0xff] %vm708, %v1220
        %1393 = vst.msk [vmem:[%s1389 + $0x18] sm:$0xff] %vm708, %v1221
        %1394 = vst.msk [vmem:[%s1389 + $0x20] sm:$0xff] %vm708, %v1222
        %1395 = vst.msk [vmem:[%s1389 + $0x28] sm:$0xff] %vm708, %v1223
        %1396 = vst.msk [vmem:[%s1389 + $0x30] sm:$0xff] %vm708, %v1224
        %1397 = vst.msk [vmem:[%s1389 + $0x38] sm:$0xff] %vm708, %v1225
        %s1398 = scalar_lea.vmem [#allocation2], 576
        %1399 = vst.msk [vmem:[%s1398] sm:$0xff] %vm708, %v1226
        %1400 = vst.msk [vmem:[%s1398 + $0x8] sm:$0xff] %vm708, %v1227
        %1401 = vst.msk [vmem:[%s1398 + $0x10] sm:$0xff] %vm708, %v1228
        %1402 = vst.msk [vmem:[%s1398 + $0x18] sm:$0xff] %vm708, %v1229
        %1403 = vst.msk [vmem:[%s1398 + $0x20] sm:$0xff] %vm708, %v1230
        %1404 = vst.msk [vmem:[%s1398 + $0x28] sm:$0xff] %vm708, %v1231
        %1405 = vst.msk [vmem:[%s1398 + $0x30] sm:$0xff] %vm708, %v1232
        %1406 = vst.msk [vmem:[%s1398 + $0x38] sm:$0xff] %vm708, %v1233
        %s1407 = scalar_lea.vmem [#allocation2], 656
        %1408 = vst.msk [vmem:[%s1407] sm:$0xff] %vm708, %v1234
        %1409 = vst.msk [vmem:[%s1407 + $0x8] sm:$0xff] %vm708, %v1235
        %1410 = vst.msk [vmem:[%s1407 + $0x10] sm:$0xff] %vm708, %v1236
        %1411 = vst.msk [vmem:[%s1407 + $0x18] sm:$0xff] %vm708, %v1237
        %1412 = vst.msk [vmem:[%s1407 + $0x20] sm:$0xff] %vm708, %v1238
        %1413 = vst.msk [vmem:[%s1407 + $0x28] sm:$0xff] %vm708, %v1239
        %1414 = vst.msk [vmem:[%s1407 + $0x30] sm:$0xff] %vm708, %v1240
        %1415 = vst.msk [vmem:[%s1407 + $0x38] sm:$0xff] %vm708, %v1241
        %v1416 = vld [vmem:[#allocation2] sm:$0xff]
        %v1417 = vld [vmem:[#allocation2 + $0x8] sm:$0xff]
        %v1418 = vld [vmem:[#allocation2 + $0x10] sm:$0xff]
        %v1419 = vld [vmem:[#allocation2 + $0x18] sm:$0xff]
        %v1420 = vld [vmem:[#allocation2 + $0x20] sm:$0xff]
        %v1421 = vld [vmem:[#allocation2 + $0x28] sm:$0xff]
        %v1422 = vld [vmem:[#allocation2 + $0x30] sm:$0xff]
        %v1423 = vld [vmem:[#allocation2 + $0x38] sm:$0xff]
        %v1424 = vld [vmem:[#allocation2 + $0x40] sm:$0xff]
        %v1425 = vld [vmem:[#allocation2 + $0x48] sm:$0xff]
        %v1426 = vld [vmem:[#allocation2 + $0x50] sm:$0xff]
        %v1427 = vld [vmem:[#allocation2 + $0x58] sm:$0xff]
        %v1428 = vld [vmem:[#allocation2 + $0x60] sm:$0xff]
        %v1429 = vld [vmem:[#allocation2 + $0x68] sm:$0xff]
        %v1430 = vld [vmem:[#allocation2 + $0x70] sm:$0xff]
        %v1431 = vld [vmem:[#allocation2 + $0x78] sm:$0xff]
        %v1432 = vld [vmem:[#allocation2 + $0x80] sm:$0xff]
        %v1433 = vld [vmem:[#allocation2 + $0x88] sm:$0xff]
        %v1434 = vld [vmem:[#allocation2 + $0x90] sm:$0xff]
        %v1435 = vld [vmem:[#allocation2 + $0x98] sm:$0xff]
        %v1436 = vld [vmem:[#allocation2 + $0xa0] sm:$0xff]
        %v1437 = vld [vmem:[#allocation2 + $0xa8] sm:$0xff]
        %v1438 = vld [vmem:[#allocation2 + $0xb0] sm:$0xff]
        %v1439 = vld [vmem:[#allocation2 + $0xb8] sm:$0xff]
        %v1440 = vld [vmem:[#allocation2 + $0xc0] sm:$0xff]
        %v1441 = vld [vmem:[#allocation2 + $0xc8] sm:$0xff]
        %v1442 = vld [vmem:[#allocation2 + $0xd0] sm:$0xff]
        %v1443 = vld [vmem:[#allocation2 + $0xd8] sm:$0xff]
        %v1444 = vld [vmem:[#allocation2 + $0xe0] sm:$0xff]
        %v1445 = vld [vmem:[#allocation2 + $0xe8] sm:$0xff]
        %v1446 = vld [vmem:[#allocation2 + $0xf0] sm:$0xff]
        %v1447 = vld [vmem:[#allocation2 + $0xf8] sm:$0xff]
        %v1448 = vld [vmem:[#allocation2 + $0x100] sm:$0xff]
        %v1449 = vld [vmem:[#allocation2 + $0x108] sm:$0xff]
        %v1450 = vld [vmem:[#allocation2 + $0x110] sm:$0xff]
        %v1451 = vld [vmem:[#allocation2 + $0x118] sm:$0xff]
        %v1452 = vld [vmem:[#allocation2 + $0x120] sm:$0xff]
        %v1453 = vld [vmem:[#allocation2 + $0x128] sm:$0xff]
        %v1454 = vld [vmem:[#allocation2 + $0x130] sm:$0xff]
        %v1455 = vld [vmem:[#allocation2 + $0x138] sm:$0xff]
        %v1456 = vld [vmem:[#allocation2 + $0x140] sm:$0xff]
        %v1457 = vld [vmem:[#allocation2 + $0x148] sm:$0xff]
        %v1458 = vld [vmem:[#allocation2 + $0x150] sm:$0xff]
        %v1459 = vld [vmem:[#allocation2 + $0x158] sm:$0xff]
        %v1460 = vld [vmem:[#allocation2 + $0x160] sm:$0xff]
        %v1461 = vld [vmem:[#allocation2 + $0x168] sm:$0xff]
        %v1462 = vld [vmem:[#allocation2 + $0x170] sm:$0xff]
        %v1463 = vld [vmem:[#allocation2 + $0x178] sm:$0xff]
        %v1464 = vld [vmem:[#allocation2 + $0x180] sm:$0xff]
        %v1465 = vld [vmem:[#allocation2 + $0x188] sm:$0xff]
        %v1466 = vld [vmem:[#allocation2 + $0x190] sm:$0xff]
        %v1467 = vld [vmem:[#allocation2 + $0x198] sm:$0xff]
        %v1468 = vld [vmem:[#allocation2 + $0x1a0] sm:$0xff]
        %v1469 = vld [vmem:[#allocation2 + $0x1a8] sm:$0xff]
        %v1470 = vld [vmem:[#allocation2 + $0x1b0] sm:$0xff]
        %v1471 = vld [vmem:[#allocation2 + $0x1b8] sm:$0xff]
        %v1472 = vld [vmem:[#allocation2 + $0x1c0] sm:$0xff]
        %v1473 = vld [vmem:[#allocation2 + $0x1c8] sm:$0xff]
        %v1474 = vld [vmem:[#allocation2 + $0x1d0] sm:$0xff]
        %v1475 = vld [vmem:[#allocation2 + $0x1d8] sm:$0xff]
        %v1476 = vld [vmem:[#allocation2 + $0x1e0] sm:$0xff]
        %v1477 = vld [vmem:[#allocation2 + $0x1e8] sm:$0xff]
        %v1478 = vld [vmem:[#allocation2 + $0x1f0] sm:$0xff]
        %v1479 = vld [vmem:[#allocation2 + $0x1f8] sm:$0xff]
        %v1480 = vld [vmem:[#allocation2 + $0x200] sm:$0xff]
        %v1481 = vld [vmem:[#allocation2 + $0x208] sm:$0xff]
        %v1482 = vld [vmem:[#allocation2 + $0x210] sm:$0xff]
        %v1483 = vld [vmem:[#allocation2 + $0x218] sm:$0xff]
        %v1484 = vld [vmem:[#allocation2 + $0x220] sm:$0xff]
        %v1485 = vld [vmem:[#allocation2 + $0x228] sm:$0xff]
        %v1486 = vld [vmem:[#allocation2 + $0x230] sm:$0xff]
        %v1487 = vld [vmem:[#allocation2 + $0x238] sm:$0xff]
        %v1488 = vld [vmem:[#allocation2 + $0x240] sm:$0xff]
        %v1489 = vld [vmem:[#allocation2 + $0x248] sm:$0xff]
        %v1490 = vld [vmem:[#allocation2 + $0x250] sm:$0xff]
        %v1491 = vld [vmem:[#allocation2 + $0x258] sm:$0xff]
        %v1492 = vld [vmem:[#allocation2 + $0x260] sm:$0xff]
        %v1493 = vld [vmem:[#allocation2 + $0x268] sm:$0xff]
        %v1494 = vld [vmem:[#allocation2 + $0x270] sm:$0xff]
        %v1495 = vld [vmem:[#allocation2 + $0x278] sm:$0xff]
        %v1496 = vpack.c.bf16 %v1416, %v1416
        %v1497 = vpack.c.bf16 %v1417, %v1417
        %v1498 = vpack.c.bf16 %v1418, %v1418
        %v1499 = vpack.c.bf16 %v1419, %v1419
        %v1500 = vpack.c.bf16 %v1420, %v1420
        %v1501 = vpack.c.bf16 %v1421, %v1421
        %v1502 = vpack.c.bf16 %v1422, %v1422
        %v1503 = vpack.c.bf16 %v1423, %v1423
        %v1504 = vpack.c.bf16 %v1424, %v1424
        %v1505 = vpack.c.bf16 %v1425, %v1425
        %v1506 = vpack.c.bf16 %v1426, %v1426
        %v1507 = vpack.c.bf16 %v1427, %v1427
        %v1508 = vpack.c.bf16 %v1428, %v1428
        %v1509 = vpack.c.bf16 %v1429, %v1429
        %v1510 = vpack.c.bf16 %v1430, %v1430
        %v1511 = vpack.c.bf16 %v1431, %v1431
        %v1512 = vpack.c.bf16 %v1432, %v1432
        %v1513 = vpack.c.bf16 %v1433, %v1433
        %v1514 = vpack.c.bf16 %v1434, %v1434
        %v1515 = vpack.c.bf16 %v1435, %v1435
        %v1516 = vpack.c.bf16 %v1436, %v1436
        %v1517 = vpack.c.bf16 %v1437, %v1437
        %v1518 = vpack.c.bf16 %v1438, %v1438
        %v1519 = vpack.c.bf16 %v1439, %v1439
        %v1520 = vpack.c.bf16 %v1440, %v1440
        %v1521 = vpack.c.bf16 %v1441, %v1441
        %v1522 = vpack.c.bf16 %v1442, %v1442
        %v1523 = vpack.c.bf16 %v1443, %v1443
        %v1524 = vpack.c.bf16 %v1444, %v1444
        %v1525 = vpack.c.bf16 %v1445, %v1445
        %v1526 = vpack.c.bf16 %v1446, %v1446
        %v1527 = vpack.c.bf16 %v1447, %v1447
        %v1528 = vpack.c.bf16 %v1448, %v1448
        %v1529 = vpack.c.bf16 %v1449, %v1449
        %v1530 = vpack.c.bf16 %v1450, %v1450
        %v1531 = vpack.c.bf16 %v1451, %v1451
        %v1532 = vpack.c.bf16 %v1452, %v1452
        %v1533 = vpack.c.bf16 %v1453, %v1453
        %v1534 = vpack.c.bf16 %v1454, %v1454
        %v1535 = vpack.c.bf16 %v1455, %v1455
        %v1536 = vpack.c.bf16 %v1456, %v1456
        %v1537 = vpack.c.bf16 %v1457, %v1457
        %v1538 = vpack.c.bf16 %v1458, %v1458
        %v1539 = vpack.c.bf16 %v1459, %v1459
        %v1540 = vpack.c.bf16 %v1460, %v1460
        %v1541 = vpack.c.bf16 %v1461, %v1461
        %v1542 = vpack.c.bf16 %v1462, %v1462
        %v1543 = vpack.c.bf16 %v1463, %v1463
        %v1544 = vpack.c.bf16 %v1464, %v1464
        %v1545 = vpack.c.bf16 %v1465, %v1465
        %v1546 = vpack.c.bf16 %v1466, %v1466
        %v1547 = vpack.c.bf16 %v1467, %v1467
        %v1548 = vpack.c.bf16 %v1468, %v1468
        %v1549 = vpack.c.bf16 %v1469, %v1469
        %v1550 = vpack.c.bf16 %v1470, %v1470
        %v1551 = vpack.c.bf16 %v1471, %v1471
        %v1552 = vpack.c.bf16 %v1472, %v1472
        %v1553 = vpack.c.bf16 %v1473, %v1473
        %v1554 = vpack.c.bf16 %v1474, %v1474
        %v1555 = vpack.c.bf16 %v1475, %v1475
        %v1556 = vpack.c.bf16 %v1476, %v1476
        %v1557 = vpack.c.bf16 %v1477, %v1477
        %v1558 = vpack.c.bf16 %v1478, %v1478
        %v1559 = vpack.c.bf16 %v1479, %v1479
        %v1560 = vpack.c.bf16 %v1480, %v1480
        %v1561 = vpack.c.bf16 %v1481, %v1481
        %v1562 = vpack.c.bf16 %v1482, %v1482
        %v1563 = vpack.c.bf16 %v1483, %v1483
        %v1564 = vpack.c.bf16 %v1484, %v1484
        %v1565 = vpack.c.bf16 %v1485, %v1485
        %v1566 = vpack.c.bf16 %v1486, %v1486
        %v1567 = vpack.c.bf16 %v1487, %v1487
        %v1568 = vpack.c.bf16 %v1488, %v1488
        %v1569 = vpack.c.bf16 %v1489, %v1489
        %v1570 = vpack.c.bf16 %v1490, %v1490
        %v1571 = vpack.c.bf16 %v1491, %v1491
        %v1572 = vpack.c.bf16 %v1492, %v1492
        %v1573 = vpack.c.bf16 %v1493, %v1493
        %v1574 = vpack.c.bf16 %v1494, %v1494
        %v1575 = vpack.c.bf16 %v1495, %v1495
        %vm1576 = vcmask 519168
        %1577 = vst.msk [vmem:[#allocation3] sm:$0xf] %vm1576, %v1496
        %1578 = vst.msk [vmem:[#allocation3 + $0x14] sm:$0xf] %vm1576, %v1497
        %1579 = vst.msk [vmem:[#allocation3 + $0x28] sm:$0xf] %vm1576, %v1498
        %1580 = vst.msk [vmem:[#allocation3 + $0x3c] sm:$0xf] %vm1576, %v1499
        %1581 = vst.msk [vmem:[#allocation3 + $0x50] sm:$0xf] %vm1576, %v1500
        %1582 = vst.msk [vmem:[#allocation3 + $0x64] sm:$0xf] %vm1576, %v1501
        %1583 = vst.msk [vmem:[#allocation3 + $0x78] sm:$0xf] %vm1576, %v1502
        %1584 = vst.msk [vmem:[#allocation3 + $0x8c] sm:$0xf] %vm1576, %v1503
        %1585 = vst.msk [vmem:[#allocation3 + $0xa0] sm:$0xf] %vm1576, %v1504
        %1586 = vst.msk [vmem:[#allocation3 + $0xb4] sm:$0xf] %vm1576, %v1505
        %1587 = vst.msk [vmem:[#allocation3 + $0xc8] sm:$0xf] %vm1576, %v1506
        %1588 = vst.msk [vmem:[#allocation3 + $0xdc] sm:$0xf] %vm1576, %v1507
        %1589 = vst.msk [vmem:[#allocation3 + $0xf0] sm:$0xf] %vm1576, %v1508
        %1590 = vst.msk [vmem:[#allocation3 + $0x104] sm:$0xf] %vm1576, %v1509
        %1591 = vst.msk [vmem:[#allocation3 + $0x118] sm:$0xf] %vm1576, %v1510
        %1592 = vst.msk [vmem:[#allocation3 + $0x12c] sm:$0xf] %vm1576, %v1511
        %1593 = vst.msk [vmem:[#allocation3 + $0x140] sm:$0xf] %vm1576, %v1512
        %1594 = vst.msk [vmem:[#allocation3 + $0x154] sm:$0xf] %vm1576, %v1513
        %1595 = vst.msk [vmem:[#allocation3 + $0x168] sm:$0xf] %vm1576, %v1514
        %1596 = vst.msk [vmem:[#allocation3 + $0x17c] sm:$0xf] %vm1576, %v1515
        %1597 = vst.msk [vmem:[#allocation3 + $0x190] sm:$0xf] %vm1576, %v1516
        %1598 = vst.msk [vmem:[#allocation3 + $0x1a4] sm:$0xf] %vm1576, %v1517
        %1599 = vst.msk [vmem:[#allocation3 + $0x1b8] sm:$0xf] %vm1576, %v1518
        %1600 = vst.msk [vmem:[#allocation3 + $0x1cc] sm:$0xf] %vm1576, %v1519
        %1601 = vst.msk [vmem:[#allocation3 + $0x1e0] sm:$0xf] %vm1576, %v1520
        %1602 = vst.msk [vmem:[#allocation3 + $0x1f4] sm:$0xf] %vm1576, %v1521
        %1603 = vst.msk [vmem:[#allocation3 + $0x208] sm:$0xf] %vm1576, %v1522
        %1604 = vst.msk [vmem:[#allocation3 + $0x21c] sm:$0xf] %vm1576, %v1523
        %1605 = vst.msk [vmem:[#allocation3 + $0x230] sm:$0xf] %vm1576, %v1524
        %1606 = vst.msk [vmem:[#allocation3 + $0x244] sm:$0xf] %vm1576, %v1525
        %1607 = vst.msk [vmem:[#allocation3 + $0x258] sm:$0xf] %vm1576, %v1526
        %1608 = vst.msk [vmem:[#allocation3 + $0x26c] sm:$0xf] %vm1576, %v1527
        %1609 = vst.msk [vmem:[#allocation3 + $0x280] sm:$0xf] %vm1576, %v1528
        %1610 = vst.msk [vmem:[#allocation3 + $0x294] sm:$0xf] %vm1576, %v1529
        %1611 = vst.msk [vmem:[#allocation3 + $0x2a8] sm:$0xf] %vm1576, %v1530
        %1612 = vst.msk [vmem:[#allocation3 + $0x2bc] sm:$0xf] %vm1576, %v1531
        %1613 = vst.msk [vmem:[#allocation3 + $0x2d0] sm:$0xf] %vm1576, %v1532
        %1614 = vst.msk [vmem:[#allocation3 + $0x2e4] sm:$0xf] %vm1576, %v1533
        %1615 = vst.msk [vmem:[#allocation3 + $0x2f8] sm:$0xf] %vm1576, %v1534
        %1616 = vst.msk [vmem:[#allocation3 + $0x30c] sm:$0xf] %vm1576, %v1535
        %1617 = vst.msk [vmem:[#allocation3 + $0x320] sm:$0xf] %vm1576, %v1536
        %1618 = vst.msk [vmem:[#allocation3 + $0x334] sm:$0xf] %vm1576, %v1537
        %1619 = vst.msk [vmem:[#allocation3 + $0x348] sm:$0xf] %vm1576, %v1538
        %1620 = vst.msk [vmem:[#allocation3 + $0x35c] sm:$0xf] %vm1576, %v1539
        %1621 = vst.msk [vmem:[#allocation3 + $0x370] sm:$0xf] %vm1576, %v1540
        %1622 = vst.msk [vmem:[#allocation3 + $0x384] sm:$0xf] %vm1576, %v1541
        %1623 = vst.msk [vmem:[#allocation3 + $0x398] sm:$0xf] %vm1576, %v1542
        %1624 = vst.msk [vmem:[#allocation3 + $0x3ac] sm:$0xf] %vm1576, %v1543
        %1625 = vst.msk [vmem:[#allocation3 + $0x3c0] sm:$0xf] %vm1576, %v1544
        %1626 = vst.msk [vmem:[#allocation3 + $0x3d4] sm:$0xf] %vm1576, %v1545
        %1627 = vst.msk [vmem:[#allocation3 + $0x3e8] sm:$0xf] %vm1576, %v1546
        %1628 = vst.msk [vmem:[#allocation3 + $0x3fc] sm:$0xf] %vm1576, %v1547
        %1629 = vst.msk [vmem:[#allocation3 + $0x410] sm:$0xf] %vm1576, %v1548
        %1630 = vst.msk [vmem:[#allocation3 + $0x424] sm:$0xf] %vm1576, %v1549
        %1631 = vst.msk [vmem:[#allocation3 + $0x438] sm:$0xf] %vm1576, %v1550
        %1632 = vst.msk [vmem:[#allocation3 + $0x44c] sm:$0xf] %vm1576, %v1551
        %1633 = vst.msk [vmem:[#allocation3 + $0x460] sm:$0xf] %vm1576, %v1552
        %1634 = vst.msk [vmem:[#allocation3 + $0x474] sm:$0xf] %vm1576, %v1553
        %1635 = vst.msk [vmem:[#allocation3 + $0x488] sm:$0xf] %vm1576, %v1554
        %1636 = vst.msk [vmem:[#allocation3 + $0x49c] sm:$0xf] %vm1576, %v1555
        %1637 = vst.msk [vmem:[#allocation3 + $0x4b0] sm:$0xf] %vm1576, %v1556
        %1638 = vst.msk [vmem:[#allocation3 + $0x4c4] sm:$0xf] %vm1576, %v1557
        %1639 = vst.msk [vmem:[#allocation3 + $0x4d8] sm:$0xf] %vm1576, %v1558
        %1640 = vst.msk [vmem:[#allocation3 + $0x4ec] sm:$0xf] %vm1576, %v1559
        %1641 = vst.msk [vmem:[#allocation3 + $0x500] sm:$0xf] %vm1576, %v1560
        %1642 = vst.msk [vmem:[#allocation3 + $0x514] sm:$0xf] %vm1576, %v1561
        %1643 = vst.msk [vmem:[#allocation3 + $0x528] sm:$0xf] %vm1576, %v1562
        %1644 = vst.msk [vmem:[#allocation3 + $0x53c] sm:$0xf] %vm1576, %v1563
        %1645 = vst.msk [vmem:[#allocation3 + $0x550] sm:$0xf] %vm1576, %v1564
        %1646 = vst.msk [vmem:[#allocation3 + $0x564] sm:$0xf] %vm1576, %v1565
        %1647 = vst.msk [vmem:[#allocation3 + $0x578] sm:$0xf] %vm1576, %v1566
        %1648 = vst.msk [vmem:[#allocation3 + $0x58c] sm:$0xf] %vm1576, %v1567
        %1649 = vst.msk [vmem:[#allocation3 + $0x5a0] sm:$0xf] %vm1576, %v1568
        %1650 = vst.msk [vmem:[#allocation3 + $0x5b4] sm:$0xf] %vm1576, %v1569
        %1651 = vst.msk [vmem:[#allocation3 + $0x5c8] sm:$0xf] %vm1576, %v1570
        %1652 = vst.msk [vmem:[#allocation3 + $0x5dc] sm:$0xf] %vm1576, %v1571
        %1653 = vst.msk [vmem:[#allocation3 + $0x5f0] sm:$0xf] %vm1576, %v1572
        %1654 = vst.msk [vmem:[#allocation3 + $0x604] sm:$0xf] %vm1576, %v1573
        %1655 = vst.msk [vmem:[#allocation3 + $0x618] sm:$0xf] %vm1576, %v1574
        %1656 = vst.msk [vmem:[#allocation3 + $0x62c] sm:$0xf] %vm1576, %v1575
        %s1657 = scalar_lea.vmem [#allocation2], 8
        %v1658 = vld [vmem:[%s1657] sm:$0xff]
        %v1659 = vld [vmem:[%s1657 + $0x8] sm:$0xff]
        %v1660 = vld [vmem:[%s1657 + $0x10] sm:$0xff]
        %v1661 = vld [vmem:[%s1657 + $0x18] sm:$0xff]
        %v1662 = vld [vmem:[%s1657 + $0x20] sm:$0xff]
        %v1663 = vld [vmem:[%s1657 + $0x28] sm:$0xff]
        %v1664 = vld [vmem:[%s1657 + $0x30] sm:$0xff]
        %v1665 = vld [vmem:[%s1657 + $0x38] sm:$0xff]
        %v1666 = vld [vmem:[%s1657 + $0x40] sm:$0xff]
        %v1667 = vld [vmem:[%s1657 + $0x48] sm:$0xff]
        %v1668 = vld [vmem:[%s1657 + $0x50] sm:$0xff]
        %v1669 = vld [vmem:[%s1657 + $0x58] sm:$0xff]
        %v1670 = vld [vmem:[%s1657 + $0x60] sm:$0xff]
        %v1671 = vld [vmem:[%s1657 + $0x68] sm:$0xff]
        %v1672 = vld [vmem:[%s1657 + $0x70] sm:$0xff]
        %v1673 = vld [vmem:[%s1657 + $0x78] sm:$0xff]
        %v1674 = vld [vmem:[%s1657 + $0x80] sm:$0xff]
        %v1675 = vld [vmem:[%s1657 + $0x88] sm:$0xff]
        %v1676 = vld [vmem:[%s1657 + $0x90] sm:$0xff]
        %v1677 = vld [vmem:[%s1657 + $0x98] sm:$0xff]
        %v1678 = vld [vmem:[%s1657 + $0xa0] sm:$0xff]
        %v1679 = vld [vmem:[%s1657 + $0xa8] sm:$0xff]
        %v1680 = vld [vmem:[%s1657 + $0xb0] sm:$0xff]
        %v1681 = vld [vmem:[%s1657 + $0xb8] sm:$0xff]
        %v1682 = vld [vmem:[%s1657 + $0xc0] sm:$0xff]
        %v1683 = vld [vmem:[%s1657 + $0xc8] sm:$0xff]
        %v1684 = vld [vmem:[%s1657 + $0xd0] sm:$0xff]
        %v1685 = vld [vmem:[%s1657 + $0xd8] sm:$0xff]
        %v1686 = vld [vmem:[%s1657 + $0xe0] sm:$0xff]
        %v1687 = vld [vmem:[%s1657 + $0xe8] sm:$0xff]
        %v1688 = vld [vmem:[%s1657 + $0xf0] sm:$0xff]
        %v1689 = vld [vmem:[%s1657 + $0xf8] sm:$0xff]
        %v1690 = vld [vmem:[%s1657 + $0x100] sm:$0xff]
        %v1691 = vld [vmem:[%s1657 + $0x108] sm:$0xff]
        %v1692 = vld [vmem:[%s1657 + $0x110] sm:$0xff]
        %v1693 = vld [vmem:[%s1657 + $0x118] sm:$0xff]
        %v1694 = vld [vmem:[%s1657 + $0x120] sm:$0xff]
        %v1695 = vld [vmem:[%s1657 + $0x128] sm:$0xff]
        %v1696 = vld [vmem:[%s1657 + $0x130] sm:$0xff]
        %v1697 = vld [vmem:[%s1657 + $0x138] sm:$0xff]
        %v1698 = vld [vmem:[%s1657 + $0x140] sm:$0xff]
        %v1699 = vld [vmem:[%s1657 + $0x148] sm:$0xff]
        %v1700 = vld [vmem:[%s1657 + $0x150] sm:$0xff]
        %v1701 = vld [vmem:[%s1657 + $0x158] sm:$0xff]
        %v1702 = vld [vmem:[%s1657 + $0x160] sm:$0xff]
        %v1703 = vld [vmem:[%s1657 + $0x168] sm:$0xff]
        %v1704 = vld [vmem:[%s1657 + $0x170] sm:$0xff]
        %v1705 = vld [vmem:[%s1657 + $0x178] sm:$0xff]
        %v1706 = vld [vmem:[%s1657 + $0x180] sm:$0xff]
        %v1707 = vld [vmem:[%s1657 + $0x188] sm:$0xff]
        %v1708 = vld [vmem:[%s1657 + $0x190] sm:$0xff]
        %v1709 = vld [vmem:[%s1657 + $0x198] sm:$0xff]
        %v1710 = vld [vmem:[%s1657 + $0x1a0] sm:$0xff]
        %v1711 = vld [vmem:[%s1657 + $0x1a8] sm:$0xff]
        %v1712 = vld [vmem:[%s1657 + $0x1b0] sm:$0xff]
        %v1713 = vld [vmem:[%s1657 + $0x1b8] sm:$0xff]
        %v1714 = vld [vmem:[%s1657 + $0x1c0] sm:$0xff]
        %v1715 = vld [vmem:[%s1657 + $0x1c8] sm:$0xff]
        %v1716 = vld [vmem:[%s1657 + $0x1d0] sm:$0xff]
        %v1717 = vld [vmem:[%s1657 + $0x1d8] sm:$0xff]
        %v1718 = vld [vmem:[%s1657 + $0x1e0] sm:$0xff]
        %v1719 = vld [vmem:[%s1657 + $0x1e8] sm:$0xff]
        %v1720 = vld [vmem:[%s1657 + $0x1f0] sm:$0xff]
        %v1721 = vld [vmem:[%s1657 + $0x1f8] sm:$0xff]
        %v1722 = vld [vmem:[%s1657 + $0x200] sm:$0xff]
        %v1723 = vld [vmem:[%s1657 + $0x208] sm:$0xff]
        %v1724 = vld [vmem:[%s1657 + $0x210] sm:$0xff]
        %v1725 = vld [vmem:[%s1657 + $0x218] sm:$0xff]
        %v1726 = vld [vmem:[%s1657 + $0x220] sm:$0xff]
        %v1727 = vld [vmem:[%s1657 + $0x228] sm:$0xff]
        %v1728 = vld [vmem:[%s1657 + $0x230] sm:$0xff]
        %v1729 = vld [vmem:[%s1657 + $0x238] sm:$0xff]
        %v1730 = vld [vmem:[%s1657 + $0x240] sm:$0xff]
        %v1731 = vld [vmem:[%s1657 + $0x248] sm:$0xff]
        %v1732 = vld [vmem:[%s1657 + $0x250] sm:$0xff]
        %v1733 = vld [vmem:[%s1657 + $0x258] sm:$0xff]
        %v1734 = vld [vmem:[%s1657 + $0x260] sm:$0xff]
        %v1735 = vld [vmem:[%s1657 + $0x268] sm:$0xff]
        %v1736 = vld [vmem:[%s1657 + $0x270] sm:$0xff]
        %v1737 = vld [vmem:[%s1657 + $0x278] sm:$0xff]
        %v1738 = vpack.c.bf16 %v1658, %v1658
        %v1739 = vpack.c.bf16 %v1659, %v1659
        %v1740 = vpack.c.bf16 %v1660, %v1660
        %v1741 = vpack.c.bf16 %v1661, %v1661
        %v1742 = vpack.c.bf16 %v1662, %v1662
        %v1743 = vpack.c.bf16 %v1663, %v1663
        %v1744 = vpack.c.bf16 %v1664, %v1664
        %v1745 = vpack.c.bf16 %v1665, %v1665
        %v1746 = vpack.c.bf16 %v1666, %v1666
        %v1747 = vpack.c.bf16 %v1667, %v1667
        %v1748 = vpack.c.bf16 %v1668, %v1668
        %v1749 = vpack.c.bf16 %v1669, %v1669
        %v1750 = vpack.c.bf16 %v1670, %v1670
        %v1751 = vpack.c.bf16 %v1671, %v1671
        %v1752 = vpack.c.bf16 %v1672, %v1672
        %v1753 = vpack.c.bf16 %v1673, %v1673
        %v1754 = vpack.c.bf16 %v1674, %v1674
        %v1755 = vpack.c.bf16 %v1675, %v1675
        %v1756 = vpack.c.bf16 %v1676, %v1676
        %v1757 = vpack.c.bf16 %v1677, %v1677
        %v1758 = vpack.c.bf16 %v1678, %v1678
        %v1759 = vpack.c.bf16 %v1679, %v1679
        %v1760 = vpack.c.bf16 %v1680, %v1680
        %v1761 = vpack.c.bf16 %v1681, %v1681
        %v1762 = vpack.c.bf16 %v1682, %v1682
        %v1763 = vpack.c.bf16 %v1683, %v1683
        %v1764 = vpack.c.bf16 %v1684, %v1684
        %v1765 = vpack.c.bf16 %v1685, %v1685
        %v1766 = vpack.c.bf16 %v1686, %v1686
        %v1767 = vpack.c.bf16 %v1687, %v1687
        %v1768 = vpack.c.bf16 %v1688, %v1688
        %v1769 = vpack.c.bf16 %v1689, %v1689
        %v1770 = vpack.c.bf16 %v1690, %v1690
        %v1771 = vpack.c.bf16 %v1691, %v1691
        %v1772 = vpack.c.bf16 %v1692, %v1692
        %v1773 = vpack.c.bf16 %v1693, %v1693
        %v1774 = vpack.c.bf16 %v1694, %v1694
        %v1775 = vpack.c.bf16 %v1695, %v1695
        %v1776 = vpack.c.bf16 %v1696, %v1696
        %v1777 = vpack.c.bf16 %v1697, %v1697
        %v1778 = vpack.c.bf16 %v1698, %v1698
        %v1779 = vpack.c.bf16 %v1699, %v1699
        %v1780 = vpack.c.bf16 %v1700, %v1700
        %v1781 = vpack.c.bf16 %v1701, %v1701
        %v1782 = vpack.c.bf16 %v1702, %v1702
        %v1783 = vpack.c.bf16 %v1703, %v1703
        %v1784 = vpack.c.bf16 %v1704, %v1704
        %v1785 = vpack.c.bf16 %v1705, %v1705
        %v1786 = vpack.c.bf16 %v1706, %v1706
        %v1787 = vpack.c.bf16 %v1707, %v1707
        %v1788 = vpack.c.bf16 %v1708, %v1708
        %v1789 = vpack.c.bf16 %v1709, %v1709
        %v1790 = vpack.c.bf16 %v1710, %v1710
        %v1791 = vpack.c.bf16 %v1711, %v1711
        %v1792 = vpack.c.bf16 %v1712, %v1712
        %v1793 = vpack.c.bf16 %v1713, %v1713
        %v1794 = vpack.c.bf16 %v1714, %v1714
        %v1795 = vpack.c.bf16 %v1715, %v1715
        %v1796 = vpack.c.bf16 %v1716, %v1716
        %v1797 = vpack.c.bf16 %v1717, %v1717
        %v1798 = vpack.c.bf16 %v1718, %v1718
        %v1799 = vpack.c.bf16 %v1719, %v1719
        %v1800 = vpack.c.bf16 %v1720, %v1720
        %v1801 = vpack.c.bf16 %v1721, %v1721
        %v1802 = vpack.c.bf16 %v1722, %v1722
        %v1803 = vpack.c.bf16 %v1723, %v1723
        %v1804 = vpack.c.bf16 %v1724, %v1724
        %v1805 = vpack.c.bf16 %v1725, %v1725
        %v1806 = vpack.c.bf16 %v1726, %v1726
        %v1807 = vpack.c.bf16 %v1727, %v1727
        %v1808 = vpack.c.bf16 %v1728, %v1728
        %v1809 = vpack.c.bf16 %v1729, %v1729
        %v1810 = vpack.c.bf16 %v1730, %v1730
        %v1811 = vpack.c.bf16 %v1731, %v1731
        %v1812 = vpack.c.bf16 %v1732, %v1732
        %v1813 = vpack.c.bf16 %v1733, %v1733
        %v1814 = vpack.c.bf16 %v1734, %v1734
        %v1815 = vpack.c.bf16 %v1735, %v1735
        %v1816 = vpack.c.bf16 %v1736, %v1736
        %v1817 = vpack.c.bf16 %v1737, %v1737
        %1898 = vrot.lane.b32.xlu0 %v1738, 64
        %v1899 = vpop.permute.xlu0 %1898
        %1900 = vrot.lane.b32.xlu0 %v1739, 64
        %v1901 = vpop.permute.xlu0 %1900
        %1902 = vrot.lane.b32.xlu0 %v1740, 64
        %v1903 = vpop.permute.xlu0 %1902
        %1904 = vrot.lane.b32.xlu0 %v1741, 64
        %v1905 = vpop.permute.xlu0 %1904
        %1906 = vrot.lane.b32.xlu0 %v1742, 64
        %v1907 = vpop.permute.xlu0 %1906
        %1908 = vrot.lane.b32.xlu0 %v1743, 64
        %v1909 = vpop.permute.xlu0 %1908
        %1910 = vrot.lane.b32.xlu0 %v1744, 64
        %v1911 = vpop.permute.xlu0 %1910
        %1912 = vrot.lane.b32.xlu0 %v1745, 64
        %v1913 = vpop.permute.xlu0 %1912
        %1914 = vrot.lane.b32.xlu0 %v1746, 64
        %v1915 = vpop.permute.xlu0 %1914
        %1916 = vrot.lane.b32.xlu0 %v1747, 64
        %v1917 = vpop.permute.xlu0 %1916
        %1918 = vrot.lane.b32.xlu0 %v1748, 64
        %v1919 = vpop.permute.xlu0 %1918
        %1920 = vrot.lane.b32.xlu0 %v1749, 64
        %v1921 = vpop.permute.xlu0 %1920
        %1922 = vrot.lane.b32.xlu0 %v1750, 64
        %v1923 = vpop.permute.xlu0 %1922
        %1924 = vrot.lane.b32.xlu0 %v1751, 64
        %v1925 = vpop.permute.xlu0 %1924
        %1926 = vrot.lane.b32.xlu0 %v1752, 64
        %v1927 = vpop.permute.xlu0 %1926
        %1928 = vrot.lane.b32.xlu0 %v1753, 64
        %v1929 = vpop.permute.xlu0 %1928
        %1930 = vrot.lane.b32.xlu0 %v1754, 64
        %v1931 = vpop.permute.xlu0 %1930
        %1932 = vrot.lane.b32.xlu0 %v1755, 64
        %v1933 = vpop.permute.xlu0 %1932
        %1934 = vrot.lane.b32.xlu0 %v1756, 64
        %v1935 = vpop.permute.xlu0 %1934
        %1936 = vrot.lane.b32.xlu0 %v1757, 64
        %v1937 = vpop.permute.xlu0 %1936
        %1938 = vrot.lane.b32.xlu0 %v1758, 64
        %v1939 = vpop.permute.xlu0 %1938
        %1940 = vrot.lane.b32.xlu0 %v1759, 64
        %v1941 = vpop.permute.xlu0 %1940
        %1942 = vrot.lane.b32.xlu0 %v1760, 64
        %v1943 = vpop.permute.xlu0 %1942
        %1944 = vrot.lane.b32.xlu0 %v1761, 64
        %v1945 = vpop.permute.xlu0 %1944
        %1946 = vrot.lane.b32.xlu0 %v1762, 64
        %v1947 = vpop.permute.xlu0 %1946
        %1948 = vrot.lane.b32.xlu0 %v1763, 64
        %v1949 = vpop.permute.xlu0 %1948
        %1950 = vrot.lane.b32.xlu0 %v1764, 64
        %v1951 = vpop.permute.xlu0 %1950
        %1952 = vrot.lane.b32.xlu0 %v1765, 64
        %v1953 = vpop.permute.xlu0 %1952
        %1954 = vrot.lane.b32.xlu0 %v1766, 64
        %v1955 = vpop.permute.xlu0 %1954
        %1956 = vrot.lane.b32.xlu0 %v1767, 64
        %v1957 = vpop.permute.xlu0 %1956
        %1958 = vrot.lane.b32.xlu0 %v1768, 64
        %v1959 = vpop.permute.xlu0 %1958
        %1960 = vrot.lane.b32.xlu0 %v1769, 64
        %v1961 = vpop.permute.xlu0 %1960
        %1962 = vrot.lane.b32.xlu0 %v1770, 64
        %v1963 = vpop.permute.xlu0 %1962
        %1964 = vrot.lane.b32.xlu0 %v1771, 64
        %v1965 = vpop.permute.xlu0 %1964
        %1966 = vrot.lane.b32.xlu0 %v1772, 64
        %v1967 = vpop.permute.xlu0 %1966
        %1968 = vrot.lane.b32.xlu0 %v1773, 64
        %v1969 = vpop.permute.xlu0 %1968
        %1970 = vrot.lane.b32.xlu0 %v1774, 64
        %v1971 = vpop.permute.xlu0 %1970
        %1972 = vrot.lane.b32.xlu0 %v1775, 64
        %v1973 = vpop.permute.xlu0 %1972
        %1974 = vrot.lane.b32.xlu0 %v1776, 64
        %v1975 = vpop.permute.xlu0 %1974
        %1976 = vrot.lane.b32.xlu0 %v1777, 64
        %v1977 = vpop.permute.xlu0 %1976
        %1978 = vrot.lane.b32.xlu0 %v1778, 64
        %v1979 = vpop.permute.xlu0 %1978
        %1980 = vrot.lane.b32.xlu0 %v1779, 64
        %v1981 = vpop.permute.xlu0 %1980
        %1982 = vrot.lane.b32.xlu0 %v1780, 64
        %v1983 = vpop.permute.xlu0 %1982
        %1984 = vrot.lane.b32.xlu0 %v1781, 64
        %v1985 = vpop.permute.xlu0 %1984
        %1986 = vrot.lane.b32.xlu0 %v1782, 64
        %v1987 = vpop.permute.xlu0 %1986
        %1988 = vrot.lane.b32.xlu0 %v1783, 64
        %v1989 = vpop.permute.xlu0 %1988
        %1990 = vrot.lane.b32.xlu0 %v1784, 64
        %v1991 = vpop.permute.xlu0 %1990
        %1992 = vrot.lane.b32.xlu0 %v1785, 64
        %v1993 = vpop.permute.xlu0 %1992
        %1994 = vrot.lane.b32.xlu0 %v1786, 64
        %v1995 = vpop.permute.xlu0 %1994
        %1996 = vrot.lane.b32.xlu0 %v1787, 64
        %v1997 = vpop.permute.xlu0 %1996
        %1998 = vrot.lane.b32.xlu0 %v1788, 64
        %v1999 = vpop.permute.xlu0 %1998
        %2000 = vrot.lane.b32.xlu0 %v1789, 64
        %v2001 = vpop.permute.xlu0 %2000
        %2002 = vrot.lane.b32.xlu0 %v1790, 64
        %v2003 = vpop.permute.xlu0 %2002
        %2004 = vrot.lane.b32.xlu0 %v1791, 64
        %v2005 = vpop.permute.xlu0 %2004
        %2006 = vrot.lane.b32.xlu0 %v1792, 64
        %v2007 = vpop.permute.xlu0 %2006
        %2008 = vrot.lane.b32.xlu0 %v1793, 64
        %v2009 = vpop.permute.xlu0 %2008
        %2010 = vrot.lane.b32.xlu0 %v1794, 64
        %v2011 = vpop.permute.xlu0 %2010
        %2012 = vrot.lane.b32.xlu0 %v1795, 64
        %v2013 = vpop.permute.xlu0 %2012
        %2014 = vrot.lane.b32.xlu0 %v1796, 64
        %v2015 = vpop.permute.xlu0 %2014
        %2016 = vrot.lane.b32.xlu0 %v1797, 64
        %v2017 = vpop.permute.xlu0 %2016
        %2018 = vrot.lane.b32.xlu0 %v1798, 64
        %v2019 = vpop.permute.xlu0 %2018
        %2020 = vrot.lane.b32.xlu0 %v1799, 64
        %v2021 = vpop.permute.xlu0 %2020
        %2022 = vrot.lane.b32.xlu0 %v1800, 64
        %v2023 = vpop.permute.xlu0 %2022
        %2024 = vrot.lane.b32.xlu0 %v1801, 64
        %v2025 = vpop.permute.xlu0 %2024
        %2026 = vrot.lane.b32.xlu0 %v1802, 64
        %v2027 = vpop.permute.xlu0 %2026
        %2028 = vrot.lane.b32.xlu0 %v1803, 64
        %v2029 = vpop.permute.xlu0 %2028
        %2030 = vrot.lane.b32.xlu0 %v1804, 64
        %v2031 = vpop.permute.xlu0 %2030
        %2032 = vrot.lane.b32.xlu0 %v1805, 64
        %v2033 = vpop.permute.xlu0 %2032
        %2034 = vrot.lane.b32.xlu0 %v1806, 64
        %v2035 = vpop.permute.xlu0 %2034
        %2036 = vrot.lane.b32.xlu0 %v1807, 64
        %v2037 = vpop.permute.xlu0 %2036
        %2038 = vrot.lane.b32.xlu0 %v1808, 64
        %v2039 = vpop.permute.xlu0 %2038
        %2040 = vrot.lane.b32.xlu0 %v1809, 64
        %v2041 = vpop.permute.xlu0 %2040
        %2042 = vrot.lane.b32.xlu0 %v1810, 64
        %v2043 = vpop.permute.xlu0 %2042
        %2044 = vrot.lane.b32.xlu0 %v1811, 64
        %v2045 = vpop.permute.xlu0 %2044
        %2046 = vrot.lane.b32.xlu0 %v1812, 64
        %v2047 = vpop.permute.xlu0 %2046
        %2048 = vrot.lane.b32.xlu0 %v1813, 64
        %v2049 = vpop.permute.xlu0 %2048
        %2050 = vrot.lane.b32.xlu0 %v1814, 64
        %v2051 = vpop.permute.xlu0 %2050
        %2052 = vrot.lane.b32.xlu0 %v1815, 64
        %v2053 = vpop.permute.xlu0 %2052
        %2054 = vrot.lane.b32.xlu0 %v1816, 64
        %v2055 = vpop.permute.xlu0 %2054
        %2056 = vrot.lane.b32.xlu0 %v1817, 64
        %v2057 = vpop.permute.xlu0 %2056
        %vm2138 = vcmask 1043968
        %2139 = vst.msk [vmem:[#allocation3] sm:$0xf] %vm2138, %v1899
        %2140 = vst.msk [vmem:[#allocation3 + $0x14] sm:$0xf] %vm2138, %v1901
        %2141 = vst.msk [vmem:[#allocation3 + $0x28] sm:$0xf] %vm2138, %v1903
        %2142 = vst.msk [vmem:[#allocation3 + $0x3c] sm:$0xf] %vm2138, %v1905
        %2143 = vst.msk [vmem:[#allocation3 + $0x50] sm:$0xf] %vm2138, %v1907
        %2144 = vst.msk [vmem:[#allocation3 + $0x64] sm:$0xf] %vm2138, %v1909
        %2145 = vst.msk [vmem:[#allocation3 + $0x78] sm:$0xf] %vm2138, %v1911
        %2146 = vst.msk [vmem:[#allocation3 + $0x8c] sm:$0xf] %vm2138, %v1913
        %2147 = vst.msk [vmem:[#allocation3 + $0xa0] sm:$0xf] %vm2138, %v1915
        %2148 = vst.msk [vmem:[#allocation3 + $0xb4] sm:$0xf] %vm2138, %v1917
        %2149 = vst.msk [vmem:[#allocation3 + $0xc8] sm:$0xf] %vm2138, %v1919
        %2150 = vst.msk [vmem:[#allocation3 + $0xdc] sm:$0xf] %vm2138, %v1921
        %2151 = vst.msk [vmem:[#allocation3 + $0xf0] sm:$0xf] %vm2138, %v1923
        %2152 = vst.msk [vmem:[#allocation3 + $0x104] sm:$0xf] %vm2138, %v1925
        %2153 = vst.msk [vmem:[#allocation3 + $0x118] sm:$0xf] %vm2138, %v1927
        %2154 = vst.msk [vmem:[#allocation3 + $0x12c] sm:$0xf] %vm2138, %v1929
        %2155 = vst.msk [vmem:[#allocation3 + $0x140] sm:$0xf] %vm2138, %v1931
        %2156 = vst.msk [vmem:[#allocation3 + $0x154] sm:$0xf] %vm2138, %v1933
        %2157 = vst.msk [vmem:[#allocation3 + $0x168] sm:$0xf] %vm2138, %v1935
        %2158 = vst.msk [vmem:[#allocation3 + $0x17c] sm:$0xf] %vm2138, %v1937
        %2159 = vst.msk [vmem:[#allocation3 + $0x190] sm:$0xf] %vm2138, %v1939
        %2160 = vst.msk [vmem:[#allocation3 + $0x1a4] sm:$0xf] %vm2138, %v1941
        %2161 = vst.msk [vmem:[#allocation3 + $0x1b8] sm:$0xf] %vm2138, %v1943
        %2162 = vst.msk [vmem:[#allocation3 + $0x1cc] sm:$0xf] %vm2138, %v1945
        %2163 = vst.msk [vmem:[#allocation3 + $0x1e0] sm:$0xf] %vm2138, %v1947
        %2164 = vst.msk [vmem:[#allocation3 + $0x1f4] sm:$0xf] %vm2138, %v1949
        %2165 = vst.msk [vmem:[#allocation3 + $0x208] sm:$0xf] %vm2138, %v1951
        %2166 = vst.msk [vmem:[#allocation3 + $0x21c] sm:$0xf] %vm2138, %v1953
        %2167 = vst.msk [vmem:[#allocation3 + $0x230] sm:$0xf] %vm2138, %v1955
        %2168 = vst.msk [vmem:[#allocation3 + $0x244] sm:$0xf] %vm2138, %v1957
        %2169 = vst.msk [vmem:[#allocation3 + $0x258] sm:$0xf] %vm2138, %v1959
        %2170 = vst.msk [vmem:[#allocation3 + $0x26c] sm:$0xf] %vm2138, %v1961
        %2171 = vst.msk [vmem:[#allocation3 + $0x280] sm:$0xf] %vm2138, %v1963
        %2172 = vst.msk [vmem:[#allocation3 + $0x294] sm:$0xf] %vm2138, %v1965
        %2173 = vst.msk [vmem:[#allocation3 + $0x2a8] sm:$0xf] %vm2138, %v1967
        %2174 = vst.msk [vmem:[#allocation3 + $0x2bc] sm:$0xf] %vm2138, %v1969
        %2175 = vst.msk [vmem:[#allocation3 + $0x2d0] sm:$0xf] %vm2138, %v1971
        %2176 = vst.msk [vmem:[#allocation3 + $0x2e4] sm:$0xf] %vm2138, %v1973
        %2177 = vst.msk [vmem:[#allocation3 + $0x2f8] sm:$0xf] %vm2138, %v1975
        %2178 = vst.msk [vmem:[#allocation3 + $0x30c] sm:$0xf] %vm2138, %v1977
        %2179 = vst.msk [vmem:[#allocation3 + $0x320] sm:$0xf] %vm2138, %v1979
        %2180 = vst.msk [vmem:[#allocation3 + $0x334] sm:$0xf] %vm2138, %v1981
        %2181 = vst.msk [vmem:[#allocation3 + $0x348] sm:$0xf] %vm2138, %v1983
        %2182 = vst.msk [vmem:[#allocation3 + $0x35c] sm:$0xf] %vm2138, %v1985
        %2183 = vst.msk [vmem:[#allocation3 + $0x370] sm:$0xf] %vm2138, %v1987
        %2184 = vst.msk [vmem:[#allocation3 + $0x384] sm:$0xf] %vm2138, %v1989
        %2185 = vst.msk [vmem:[#allocation3 + $0x398] sm:$0xf] %vm2138, %v1991
        %2186 = vst.msk [vmem:[#allocation3 + $0x3ac] sm:$0xf] %vm2138, %v1993
        %2187 = vst.msk [vmem:[#allocation3 + $0x3c0] sm:$0xf] %vm2138, %v1995
        %2188 = vst.msk [vmem:[#allocation3 + $0x3d4] sm:$0xf] %vm2138, %v1997
        %2189 = vst.msk [vmem:[#allocation3 + $0x3e8] sm:$0xf] %vm2138, %v1999
        %2190 = vst.msk [vmem:[#allocation3 + $0x3fc] sm:$0xf] %vm2138, %v2001
        %2191 = vst.msk [vmem:[#allocation3 + $0x410] sm:$0xf] %vm2138, %v2003
        %2192 = vst.msk [vmem:[#allocation3 + $0x424] sm:$0xf] %vm2138, %v2005
        %2193 = vst.msk [vmem:[#allocation3 + $0x438] sm:$0xf] %vm2138, %v2007
        %2194 = vst.msk [vmem:[#allocation3 + $0x44c] sm:$0xf] %vm2138, %v2009
        %2195 = vst.msk [vmem:[#allocation3 + $0x460] sm:$0xf] %vm2138, %v2011
        %2196 = vst.msk [vmem:[#allocation3 + $0x474] sm:$0xf] %vm2138, %v2013
        %2197 = vst.msk [vmem:[#allocation3 + $0x488] sm:$0xf] %vm2138, %v2015
        %2198 = vst.msk [vmem:[#allocation3 + $0x49c] sm:$0xf] %vm2138, %v2017
        %2199 = vst.msk [vmem:[#allocation3 + $0x4b0] sm:$0xf] %vm2138, %v2019
        %2200 = vst.msk [vmem:[#allocation3 + $0x4c4] sm:$0xf] %vm2138, %v2021
        %2201 = vst.msk [vmem:[#allocation3 + $0x4d8] sm:$0xf] %vm2138, %v2023
        %2202 = vst.msk [vmem:[#allocation3 + $0x4ec] sm:$0xf] %vm2138, %v2025
        %2203 = vst.msk [vmem:[#allocation3 + $0x500] sm:$0xf] %vm2138, %v2027
        %2204 = vst.msk [vmem:[#allocation3 + $0x514] sm:$0xf] %vm2138, %v2029
        %2205 = vst.msk [vmem:[#allocation3 + $0x528] sm:$0xf] %vm2138, %v2031
        %2206 = vst.msk [vmem:[#allocation3 + $0x53c] sm:$0xf] %vm2138, %v2033
        %2207 = vst.msk [vmem:[#allocation3 + $0x550] sm:$0xf] %vm2138, %v2035
        %2208 = vst.msk [vmem:[#allocation3 + $0x564] sm:$0xf] %vm2138, %v2037
        %2209 = vst.msk [vmem:[#allocation3 + $0x578] sm:$0xf] %vm2138, %v2039
        %2210 = vst.msk [vmem:[#allocation3 + $0x58c] sm:$0xf] %vm2138, %v2041
        %2211 = vst.msk [vmem:[#allocation3 + $0x5a0] sm:$0xf] %vm2138, %v2043
        %2212 = vst.msk [vmem:[#allocation3 + $0x5b4] sm:$0xf] %vm2138, %v2045
        %2213 = vst.msk [vmem:[#allocation3 + $0x5c8] sm:$0xf] %vm2138, %v2047
        %2214 = vst.msk [vmem:[#allocation3 + $0x5dc] sm:$0xf] %vm2138, %v2049
        %2215 = vst.msk [vmem:[#allocation3 + $0x5f0] sm:$0xf] %vm2138, %v2051
        %2216 = vst.msk [vmem:[#allocation3 + $0x604] sm:$0xf] %vm2138, %v2053
        %2217 = vst.msk [vmem:[#allocation3 + $0x618] sm:$0xf] %vm2138, %v2055
        %2218 = vst.msk [vmem:[#allocation3 + $0x62c] sm:$0xf] %vm2138, %v2057
        %s2219 = scalar_lea.vmem [#allocation2], 16
        %v2220 = vld [vmem:[%s2219] sm:$0xff]
        %v2221 = vld [vmem:[%s2219 + $0x8] sm:$0xff]
        %v2222 = vld [vmem:[%s2219 + $0x10] sm:$0xff]
        %v2223 = vld [vmem:[%s2219 + $0x18] sm:$0xff]
        %v2224 = vld [vmem:[%s2219 + $0x20] sm:$0xff]
        %v2225 = vld [vmem:[%s2219 + $0x28] sm:$0xff]
        %v2226 = vld [vmem:[%s2219 + $0x30] sm:$0xff]
        %v2227 = vld [vmem:[%s2219 + $0x38] sm:$0xff]
        %v2228 = vld [vmem:[%s2219 + $0x40] sm:$0xff]
        %v2229 = vld [vmem:[%s2219 + $0x48] sm:$0xff]
        %v2230 = vld [vmem:[%s2219 + $0x50] sm:$0xff]
        %v2231 = vld [vmem:[%s2219 + $0x58] sm:$0xff]
        %v2232 = vld [vmem:[%s2219 + $0x60] sm:$0xff]
        %v2233 = vld [vmem:[%s2219 + $0x68] sm:$0xff]
        %v2234 = vld [vmem:[%s2219 + $0x70] sm:$0xff]
        %v2235 = vld [vmem:[%s2219 + $0x78] sm:$0xff]
        %v2236 = vld [vmem:[%s2219 + $0x80] sm:$0xff]
        %v2237 = vld [vmem:[%s2219 + $0x88] sm:$0xff]
        %v2238 = vld [vmem:[%s2219 + $0x90] sm:$0xff]
        %v2239 = vld [vmem:[%s2219 + $0x98] sm:$0xff]
        %v2240 = vld [vmem:[%s2219 + $0xa0] sm:$0xff]
        %v2241 = vld [vmem:[%s2219 + $0xa8] sm:$0xff]
        %v2242 = vld [vmem:[%s2219 + $0xb0] sm:$0xff]
        %v2243 = vld [vmem:[%s2219 + $0xb8] sm:$0xff]
        %v2244 = vld [vmem:[%s2219 + $0xc0] sm:$0xff]
        %v2245 = vld [vmem:[%s2219 + $0xc8] sm:$0xff]
        %v2246 = vld [vmem:[%s2219 + $0xd0] sm:$0xff]
        %v2247 = vld [vmem:[%s2219 + $0xd8] sm:$0xff]
        %v2248 = vld [vmem:[%s2219 + $0xe0] sm:$0xff]
        %v2249 = vld [vmem:[%s2219 + $0xe8] sm:$0xff]
        %v2250 = vld [vmem:[%s2219 + $0xf0] sm:$0xff]
        %v2251 = vld [vmem:[%s2219 + $0xf8] sm:$0xff]
        %v2252 = vld [vmem:[%s2219 + $0x100] sm:$0xff]
        %v2253 = vld [vmem:[%s2219 + $0x108] sm:$0xff]
        %v2254 = vld [vmem:[%s2219 + $0x110] sm:$0xff]
        %v2255 = vld [vmem:[%s2219 + $0x118] sm:$0xff]
        %v2256 = vld [vmem:[%s2219 + $0x120] sm:$0xff]
        %v2257 = vld [vmem:[%s2219 + $0x128] sm:$0xff]
        %v2258 = vld [vmem:[%s2219 + $0x130] sm:$0xff]
        %v2259 = vld [vmem:[%s2219 + $0x138] sm:$0xff]
        %v2260 = vld [vmem:[%s2219 + $0x140] sm:$0xff]
        %v2261 = vld [vmem:[%s2219 + $0x148] sm:$0xff]
        %v2262 = vld [vmem:[%s2219 + $0x150] sm:$0xff]
        %v2263 = vld [vmem:[%s2219 + $0x158] sm:$0xff]
        %v2264 = vld [vmem:[%s2219 + $0x160] sm:$0xff]
        %v2265 = vld [vmem:[%s2219 + $0x168] sm:$0xff]
        %v2266 = vld [vmem:[%s2219 + $0x170] sm:$0xff]
        %v2267 = vld [vmem:[%s2219 + $0x178] sm:$0xff]
        %v2268 = vld [vmem:[%s2219 + $0x180] sm:$0xff]
        %v2269 = vld [vmem:[%s2219 + $0x188] sm:$0xff]
        %v2270 = vld [vmem:[%s2219 + $0x190] sm:$0xff]
        %v2271 = vld [vmem:[%s2219 + $0x198] sm:$0xff]
        %v2272 = vld [vmem:[%s2219 + $0x1a0] sm:$0xff]
        %v2273 = vld [vmem:[%s2219 + $0x1a8] sm:$0xff]
        %v2274 = vld [vmem:[%s2219 + $0x1b0] sm:$0xff]
        %v2275 = vld [vmem:[%s2219 + $0x1b8] sm:$0xff]
        %v2276 = vld [vmem:[%s2219 + $0x1c0] sm:$0xff]
        %v2277 = vld [vmem:[%s2219 + $0x1c8] sm:$0xff]
        %v2278 = vld [vmem:[%s2219 + $0x1d0] sm:$0xff]
        %v2279 = vld [vmem:[%s2219 + $0x1d8] sm:$0xff]
        %v2280 = vld [vmem:[%s2219 + $0x1e0] sm:$0xff]
        %v2281 = vld [vmem:[%s2219 + $0x1e8] sm:$0xff]
        %v2282 = vld [vmem:[%s2219 + $0x1f0] sm:$0xff]
        %v2283 = vld [vmem:[%s2219 + $0x1f8] sm:$0xff]
        %v2284 = vld [vmem:[%s2219 + $0x200] sm:$0xff]
        %v2285 = vld [vmem:[%s2219 + $0x208] sm:$0xff]
        %v2286 = vld [vmem:[%s2219 + $0x210] sm:$0xff]
        %v2287 = vld [vmem:[%s2219 + $0x218] sm:$0xff]
        %v2288 = vld [vmem:[%s2219 + $0x220] sm:$0xff]
        %v2289 = vld [vmem:[%s2219 + $0x228] sm:$0xff]
        %v2290 = vld [vmem:[%s2219 + $0x230] sm:$0xff]
        %v2291 = vld [vmem:[%s2219 + $0x238] sm:$0xff]
        %v2292 = vld [vmem:[%s2219 + $0x240] sm:$0xff]
        %v2293 = vld [vmem:[%s2219 + $0x248] sm:$0xff]
        %v2294 = vld [vmem:[%s2219 + $0x250] sm:$0xff]
        %v2295 = vld [vmem:[%s2219 + $0x258] sm:$0xff]
        %v2296 = vld [vmem:[%s2219 + $0x260] sm:$0xff]
        %v2297 = vld [vmem:[%s2219 + $0x268] sm:$0xff]
        %v2298 = vld [vmem:[%s2219 + $0x270] sm:$0xff]
        %v2299 = vld [vmem:[%s2219 + $0x278] sm:$0xff]
        %v2300 = vpack.c.bf16 %v2220, %v2220
        %v2301 = vpack.c.bf16 %v2221, %v2221
        %v2302 = vpack.c.bf16 %v2222, %v2222
        %v2303 = vpack.c.bf16 %v2223, %v2223
        %v2304 = vpack.c.bf16 %v2224, %v2224
        %v2305 = vpack.c.bf16 %v2225, %v2225
        %v2306 = vpack.c.bf16 %v2226, %v2226
        %v2307 = vpack.c.bf16 %v2227, %v2227
        %v2308 = vpack.c.bf16 %v2228, %v2228
        %v2309 = vpack.c.bf16 %v2229, %v2229
        %v2310 = vpack.c.bf16 %v2230, %v2230
        %v2311 = vpack.c.bf16 %v2231, %v2231
        %v2312 = vpack.c.bf16 %v2232, %v2232
        %v2313 = vpack.c.bf16 %v2233, %v2233
        %v2314 = vpack.c.bf16 %v2234, %v2234
        %v2315 = vpack.c.bf16 %v2235, %v2235
        %v2316 = vpack.c.bf16 %v2236, %v2236
        %v2317 = vpack.c.bf16 %v2237, %v2237
        %v2318 = vpack.c.bf16 %v2238, %v2238
        %v2319 = vpack.c.bf16 %v2239, %v2239
        %v2320 = vpack.c.bf16 %v2240, %v2240
        %v2321 = vpack.c.bf16 %v2241, %v2241
        %v2322 = vpack.c.bf16 %v2242, %v2242
        %v2323 = vpack.c.bf16 %v2243, %v2243
        %v2324 = vpack.c.bf16 %v2244, %v2244
        %v2325 = vpack.c.bf16 %v2245, %v2245
        %v2326 = vpack.c.bf16 %v2246, %v2246
        %v2327 = vpack.c.bf16 %v2247, %v2247
        %v2328 = vpack.c.bf16 %v2248, %v2248
        %v2329 = vpack.c.bf16 %v2249, %v2249
        %v2330 = vpack.c.bf16 %v2250, %v2250
        %v2331 = vpack.c.bf16 %v2251, %v2251
        %v2332 = vpack.c.bf16 %v2252, %v2252
        %v2333 = vpack.c.bf16 %v2253, %v2253
        %v2334 = vpack.c.bf16 %v2254, %v2254
        %v2335 = vpack.c.bf16 %v2255, %v2255
        %v2336 = vpack.c.bf16 %v2256, %v2256
        %v2337 = vpack.c.bf16 %v2257, %v2257
        %v2338 = vpack.c.bf16 %v2258, %v2258
        %v2339 = vpack.c.bf16 %v2259, %v2259
        %v2340 = vpack.c.bf16 %v2260, %v2260
        %v2341 = vpack.c.bf16 %v2261, %v2261
        %v2342 = vpack.c.bf16 %v2262, %v2262
        %v2343 = vpack.c.bf16 %v2263, %v2263
        %v2344 = vpack.c.bf16 %v2264, %v2264
        %v2345 = vpack.c.bf16 %v2265, %v2265
        %v2346 = vpack.c.bf16 %v2266, %v2266
        %v2347 = vpack.c.bf16 %v2267, %v2267
        %v2348 = vpack.c.bf16 %v2268, %v2268
        %v2349 = vpack.c.bf16 %v2269, %v2269
        %v2350 = vpack.c.bf16 %v2270, %v2270
        %v2351 = vpack.c.bf16 %v2271, %v2271
        %v2352 = vpack.c.bf16 %v2272, %v2272
        %v2353 = vpack.c.bf16 %v2273, %v2273
        %v2354 = vpack.c.bf16 %v2274, %v2274
        %v2355 = vpack.c.bf16 %v2275, %v2275
        %v2356 = vpack.c.bf16 %v2276, %v2276
        %v2357 = vpack.c.bf16 %v2277, %v2277
        %v2358 = vpack.c.bf16 %v2278, %v2278
        %v2359 = vpack.c.bf16 %v2279, %v2279
        %v2360 = vpack.c.bf16 %v2280, %v2280
        %v2361 = vpack.c.bf16 %v2281, %v2281
        %v2362 = vpack.c.bf16 %v2282, %v2282
        %v2363 = vpack.c.bf16 %v2283, %v2283
        %v2364 = vpack.c.bf16 %v2284, %v2284
        %v2365 = vpack.c.bf16 %v2285, %v2285
        %v2366 = vpack.c.bf16 %v2286, %v2286
        %v2367 = vpack.c.bf16 %v2287, %v2287
        %v2368 = vpack.c.bf16 %v2288, %v2288
        %v2369 = vpack.c.bf16 %v2289, %v2289
        %v2370 = vpack.c.bf16 %v2290, %v2290
        %v2371 = vpack.c.bf16 %v2291, %v2291
        %v2372 = vpack.c.bf16 %v2292, %v2292
        %v2373 = vpack.c.bf16 %v2293, %v2293
        %v2374 = vpack.c.bf16 %v2294, %v2294
        %v2375 = vpack.c.bf16 %v2295, %v2295
        %v2376 = vpack.c.bf16 %v2296, %v2296
        %v2377 = vpack.c.bf16 %v2297, %v2297
        %v2378 = vpack.c.bf16 %v2298, %v2298
        %v2379 = vpack.c.bf16 %v2299, %v2299
        %2380 = vst.msk [vmem:[#allocation3 + $0x4] sm:$0xf] %vm1576, %v2300
        %2381 = vst.msk [vmem:[#allocation3 + $0x18] sm:$0xf] %vm1576, %v2301
        %2382 = vst.msk [vmem:[#allocation3 + $0x2c] sm:$0xf] %vm1576, %v2302
        %2383 = vst.msk [vmem:[#allocation3 + $0x40] sm:$0xf] %vm1576, %v2303
        %2384 = vst.msk [vmem:[#allocation3 + $0x54] sm:$0xf] %vm1576, %v2304
        %2385 = vst.msk [vmem:[#allocation3 + $0x68] sm:$0xf] %vm1576, %v2305
        %2386 = vst.msk [vmem:[#allocation3 + $0x7c] sm:$0xf] %vm1576, %v2306
        %2387 = vst.msk [vmem:[#allocation3 + $0x90] sm:$0xf] %vm1576, %v2307
        %2388 = vst.msk [vmem:[#allocation3 + $0xa4] sm:$0xf] %vm1576, %v2308
        %2389 = vst.msk [vmem:[#allocation3 + $0xb8] sm:$0xf] %vm1576, %v2309
        %2390 = vst.msk [vmem:[#allocation3 + $0xcc] sm:$0xf] %vm1576, %v2310
        %2391 = vst.msk [vmem:[#allocation3 + $0xe0] sm:$0xf] %vm1576, %v2311
        %2392 = vst.msk [vmem:[#allocation3 + $0xf4] sm:$0xf] %vm1576, %v2312
        %2393 = vst.msk [vmem:[#allocation3 + $0x108] sm:$0xf] %vm1576, %v2313
        %2394 = vst.msk [vmem:[#allocation3 + $0x11c] sm:$0xf] %vm1576, %v2314
        %2395 = vst.msk [vmem:[#allocation3 + $0x130] sm:$0xf] %vm1576, %v2315
        %2396 = vst.msk [vmem:[#allocation3 + $0x144] sm:$0xf] %vm1576, %v2316
        %2397 = vst.msk [vmem:[#allocation3 + $0x158] sm:$0xf] %vm1576, %v2317
        %2398 = vst.msk [vmem:[#allocation3 + $0x16c] sm:$0xf] %vm1576, %v2318
        %2399 = vst.msk [vmem:[#allocation3 + $0x180] sm:$0xf] %vm1576, %v2319
        %2400 = vst.msk [vmem:[#allocation3 + $0x194] sm:$0xf] %vm1576, %v2320
        %2401 = vst.msk [vmem:[#allocation3 + $0x1a8] sm:$0xf] %vm1576, %v2321
        %2402 = vst.msk [vmem:[#allocation3 + $0x1bc] sm:$0xf] %vm1576, %v2322
        %2403 = vst.msk [vmem:[#allocation3 + $0x1d0] sm:$0xf] %vm1576, %v2323
        %2404 = vst.msk [vmem:[#allocation3 + $0x1e4] sm:$0xf] %vm1576, %v2324
        %2405 = vst.msk [vmem:[#allocation3 + $0x1f8] sm:$0xf] %vm1576, %v2325
        %2406 = vst.msk [vmem:[#allocation3 + $0x20c] sm:$0xf] %vm1576, %v2326
        %2407 = vst.msk [vmem:[#allocation3 + $0x220] sm:$0xf] %vm1576, %v2327
        %2408 = vst.msk [vmem:[#allocation3 + $0x234] sm:$0xf] %vm1576, %v2328
        %2409 = vst.msk [vmem:[#allocation3 + $0x248] sm:$0xf] %vm1576, %v2329
        %2410 = vst.msk [vmem:[#allocation3 + $0x25c] sm:$0xf] %vm1576, %v2330
        %2411 = vst.msk [vmem:[#allocation3 + $0x270] sm:$0xf] %vm1576, %v2331
        %2412 = vst.msk [vmem:[#allocation3 + $0x284] sm:$0xf] %vm1576, %v2332
        %2413 = vst.msk [vmem:[#allocation3 + $0x298] sm:$0xf] %vm1576, %v2333
        %2414 = vst.msk [vmem:[#allocation3 + $0x2ac] sm:$0xf] %vm1576, %v2334
        %2415 = vst.msk [vmem:[#allocation3 + $0x2c0] sm:$0xf] %vm1576, %v2335
        %2416 = vst.msk [vmem:[#allocation3 + $0x2d4] sm:$0xf] %vm1576, %v2336
        %2417 = vst.msk [vmem:[#allocation3 + $0x2e8] sm:$0xf] %vm1576, %v2337
        %2418 = vst.msk [vmem:[#allocation3 + $0x2fc] sm:$0xf] %vm1576, %v2338
        %2419 = vst.msk [vmem:[#allocation3 + $0x310] sm:$0xf] %vm1576, %v2339
        %2420 = vst.msk [vmem:[#allocation3 + $0x324] sm:$0xf] %vm1576, %v2340
        %2421 = vst.msk [vmem:[#allocation3 + $0x338] sm:$0xf] %vm1576, %v2341
        %2422 = vst.msk [vmem:[#allocation3 + $0x34c] sm:$0xf] %vm1576, %v2342
        %2423 = vst.msk [vmem:[#allocation3 + $0x360] sm:$0xf] %vm1576, %v2343
        %2424 = vst.msk [vmem:[#allocation3 + $0x374] sm:$0xf] %vm1576, %v2344
        %2425 = vst.msk [vmem:[#allocation3 + $0x388] sm:$0xf] %vm1576, %v2345
        %2426 = vst.msk [vmem:[#allocation3 + $0x39c] sm:$0xf] %vm1576, %v2346
        %2427 = vst.msk [vmem:[#allocation3 + $0x3b0] sm:$0xf] %vm1576, %v2347
        %2428 = vst.msk [vmem:[#allocation3 + $0x3c4] sm:$0xf] %vm1576, %v2348
        %2429 = vst.msk [vmem:[#allocation3 + $0x3d8] sm:$0xf] %vm1576, %v2349
        %2430 = vst.msk [vmem:[#allocation3 + $0x3ec] sm:$0xf] %vm1576, %v2350
        %2431 = vst.msk [vmem:[#allocation3 + $0x400] sm:$0xf] %vm1576, %v2351
        %2432 = vst.msk [vmem:[#allocation3 + $0x414] sm:$0xf] %vm1576, %v2352
        %2433 = vst.msk [vmem:[#allocation3 + $0x428] sm:$0xf] %vm1576, %v2353
        %2434 = vst.msk [vmem:[#allocation3 + $0x43c] sm:$0xf] %vm1576, %v2354
        %2435 = vst.msk [vmem:[#allocation3 + $0x450] sm:$0xf] %vm1576, %v2355
        %2436 = vst.msk [vmem:[#allocation3 + $0x464] sm:$0xf] %vm1576, %v2356
        %2437 = vst.msk [vmem:[#allocation3 + $0x478] sm:$0xf] %vm1576, %v2357
        %2438 = vst.msk [vmem:[#allocation3 + $0x48c] sm:$0xf] %vm1576, %v2358
        %2439 = vst.msk [vmem:[#allocation3 + $0x4a0] sm:$0xf] %vm1576, %v2359
        %2440 = vst.msk [vmem:[#allocation3 + $0x4b4] sm:$0xf] %vm1576, %v2360
        %2441 = vst.msk [vmem:[#allocation3 + $0x4c8] sm:$0xf] %vm1576, %v2361
        %2442 = vst.msk [vmem:[#allocation3 + $0x4dc] sm:$0xf] %vm1576, %v2362
        %2443 = vst.msk [vmem:[#allocation3 + $0x4f0] sm:$0xf] %vm1576, %v2363
        %2444 = vst.msk [vmem:[#allocation3 + $0x504] sm:$0xf] %vm1576, %v2364
        %2445 = vst.msk [vmem:[#allocation3 + $0x518] sm:$0xf] %vm1576, %v2365
        %2446 = vst.msk [vmem:[#allocation3 + $0x52c] sm:$0xf] %vm1576, %v2366
        %2447 = vst.msk [vmem:[#allocation3 + $0x540] sm:$0xf] %vm1576, %v2367
        %2448 = vst.msk [vmem:[#allocation3 + $0x554] sm:$0xf] %vm1576, %v2368
        %2449 = vst.msk [vmem:[#allocation3 + $0x568] sm:$0xf] %vm1576, %v2369
        %2450 = vst.msk [vmem:[#allocation3 + $0x57c] sm:$0xf] %vm1576, %v2370
        %2451 = vst.msk [vmem:[#allocation3 + $0x590] sm:$0xf] %vm1576, %v2371
        %2452 = vst.msk [vmem:[#allocation3 + $0x5a4] sm:$0xf] %vm1576, %v2372
        %2453 = vst.msk [vmem:[#allocation3 + $0x5b8] sm:$0xf] %vm1576, %v2373
        %2454 = vst.msk [vmem:[#allocation3 + $0x5cc] sm:$0xf] %vm1576, %v2374
        %2455 = vst.msk [vmem:[#allocation3 + $0x5e0] sm:$0xf] %vm1576, %v2375
        %2456 = vst.msk [vmem:[#allocation3 + $0x5f4] sm:$0xf] %vm1576, %v2376
        %2457 = vst.msk [vmem:[#allocation3 + $0x608] sm:$0xf] %vm1576, %v2377
        %2458 = vst.msk [vmem:[#allocation3 + $0x61c] sm:$0xf] %vm1576, %v2378
        %2459 = vst.msk [vmem:[#allocation3 + $0x630] sm:$0xf] %vm1576, %v2379
        %s2460 = scalar_lea.vmem [#allocation2], 80
        %v2461 = vld [vmem:[%s2460] sm:$0xff]
        %v2462 = vld [vmem:[%s2460 + $0x8] sm:$0xff]
        %v2463 = vld [vmem:[%s2460 + $0x10] sm:$0xff]
        %v2464 = vld [vmem:[%s2460 + $0x18] sm:$0xff]
        %v2465 = vld [vmem:[%s2460 + $0x20] sm:$0xff]
        %v2466 = vld [vmem:[%s2460 + $0x28] sm:$0xff]
        %v2467 = vld [vmem:[%s2460 + $0x30] sm:$0xff]
        %v2468 = vld [vmem:[%s2460 + $0x38] sm:$0xff]
        %v2469 = vld [vmem:[%s2460 + $0x40] sm:$0xff]
        %v2470 = vld [vmem:[%s2460 + $0x48] sm:$0xff]
        %v2471 = vld [vmem:[%s2460 + $0x50] sm:$0xff]
        %v2472 = vld [vmem:[%s2460 + $0x58] sm:$0xff]
        %v2473 = vld [vmem:[%s2460 + $0x60] sm:$0xff]
        %v2474 = vld [vmem:[%s2460 + $0x68] sm:$0xff]
        %v2475 = vld [vmem:[%s2460 + $0x70] sm:$0xff]
        %v2476 = vld [vmem:[%s2460 + $0x78] sm:$0xff]
        %v2477 = vld [vmem:[%s2460 + $0x80] sm:$0xff]
        %v2478 = vld [vmem:[%s2460 + $0x88] sm:$0xff]
        %v2479 = vld [vmem:[%s2460 + $0x90] sm:$0xff]
        %v2480 = vld [vmem:[%s2460 + $0x98] sm:$0xff]
        %v2481 = vld [vmem:[%s2460 + $0xa0] sm:$0xff]
        %v2482 = vld [vmem:[%s2460 + $0xa8] sm:$0xff]
        %v2483 = vld [vmem:[%s2460 + $0xb0] sm:$0xff]
        %v2484 = vld [vmem:[%s2460 + $0xb8] sm:$0xff]
        %v2485 = vld [vmem:[%s2460 + $0xc0] sm:$0xff]
        %v2486 = vld [vmem:[%s2460 + $0xc8] sm:$0xff]
        %v2487 = vld [vmem:[%s2460 + $0xd0] sm:$0xff]
        %v2488 = vld [vmem:[%s2460 + $0xd8] sm:$0xff]
        %v2489 = vld [vmem:[%s2460 + $0xe0] sm:$0xff]
        %v2490 = vld [vmem:[%s2460 + $0xe8] sm:$0xff]
        %v2491 = vld [vmem:[%s2460 + $0xf0] sm:$0xff]
        %v2492 = vld [vmem:[%s2460 + $0xf8] sm:$0xff]
        %v2493 = vld [vmem:[%s2460 + $0x100] sm:$0xff]
        %v2494 = vld [vmem:[%s2460 + $0x108] sm:$0xff]
        %v2495 = vld [vmem:[%s2460 + $0x110] sm:$0xff]
        %v2496 = vld [vmem:[%s2460 + $0x118] sm:$0xff]
        %v2497 = vld [vmem:[%s2460 + $0x120] sm:$0xff]
        %v2498 = vld [vmem:[%s2460 + $0x128] sm:$0xff]
        %v2499 = vld [vmem:[%s2460 + $0x130] sm:$0xff]
        %v2500 = vld [vmem:[%s2460 + $0x138] sm:$0xff]
        %v2501 = vld [vmem:[%s2460 + $0x140] sm:$0xff]
        %v2502 = vld [vmem:[%s2460 + $0x148] sm:$0xff]
        %v2503 = vld [vmem:[%s2460 + $0x150] sm:$0xff]
        %v2504 = vld [vmem:[%s2460 + $0x158] sm:$0xff]
        %v2505 = vld [vmem:[%s2460 + $0x160] sm:$0xff]
        %v2506 = vld [vmem:[%s2460 + $0x168] sm:$0xff]
        %v2507 = vld [vmem:[%s2460 + $0x170] sm:$0xff]
        %v2508 = vld [vmem:[%s2460 + $0x178] sm:$0xff]
        %v2509 = vld [vmem:[%s2460 + $0x180] sm:$0xff]
        %v2510 = vld [vmem:[%s2460 + $0x188] sm:$0xff]
        %v2511 = vld [vmem:[%s2460 + $0x190] sm:$0xff]
        %v2512 = vld [vmem:[%s2460 + $0x198] sm:$0xff]
        %v2513 = vld [vmem:[%s2460 + $0x1a0] sm:$0xff]
        %v2514 = vld [vmem:[%s2460 + $0x1a8] sm:$0xff]
        %v2515 = vld [vmem:[%s2460 + $0x1b0] sm:$0xff]
        %v2516 = vld [vmem:[%s2460 + $0x1b8] sm:$0xff]
        %v2517 = vld [vmem:[%s2460 + $0x1c0] sm:$0xff]
        %v2518 = vld [vmem:[%s2460 + $0x1c8] sm:$0xff]
        %v2519 = vld [vmem:[%s2460 + $0x1d0] sm:$0xff]
        %v2520 = vld [vmem:[%s2460 + $0x1d8] sm:$0xff]
        %v2521 = vld [vmem:[%s2460 + $0x1e0] sm:$0xff]
        %v2522 = vld [vmem:[%s2460 + $0x1e8] sm:$0xff]
        %v2523 = vld [vmem:[%s2460 + $0x1f0] sm:$0xff]
        %v2524 = vld [vmem:[%s2460 + $0x1f8] sm:$0xff]
        %v2525 = vld [vmem:[%s2460 + $0x200] sm:$0xff]
        %v2526 = vld [vmem:[%s2460 + $0x208] sm:$0xff]
        %v2527 = vld [vmem:[%s2460 + $0x210] sm:$0xff]
        %v2528 = vld [vmem:[%s2460 + $0x218] sm:$0xff]
        %v2529 = vld [vmem:[%s2460 + $0x220] sm:$0xff]
        %v2530 = vld [vmem:[%s2460 + $0x228] sm:$0xff]
        %v2531 = vld [vmem:[%s2460 + $0x230] sm:$0xff]
        %v2532 = vld [vmem:[%s2460 + $0x238] sm:$0xff]
        %v2533 = vld [vmem:[%s2460 + $0x240] sm:$0xff]
        %v2534 = vld [vmem:[%s2460 + $0x248] sm:$0xff]
        %v2535 = vld [vmem:[%s2460 + $0x250] sm:$0xff]
        %v2536 = vld [vmem:[%s2460 + $0x258] sm:$0xff]
        %v2537 = vld [vmem:[%s2460 + $0x260] sm:$0xff]
        %v2538 = vld [vmem:[%s2460 + $0x268] sm:$0xff]
        %v2539 = vld [vmem:[%s2460 + $0x270] sm:$0xff]
        %v2540 = vld [vmem:[%s2460 + $0x278] sm:$0xff]
        %v2541 = vpack.c.bf16 %v2461, %v2461
        %v2542 = vpack.c.bf16 %v2462, %v2462
        %v2543 = vpack.c.bf16 %v2463, %v2463
        %v2544 = vpack.c.bf16 %v2464, %v2464
        %v2545 = vpack.c.bf16 %v2465, %v2465
        %v2546 = vpack.c.bf16 %v2466, %v2466
        %v2547 = vpack.c.bf16 %v2467, %v2467
        %v2548 = vpack.c.bf16 %v2468, %v2468
        %v2549 = vpack.c.bf16 %v2469, %v2469
        %v2550 = vpack.c.bf16 %v2470, %v2470
        %v2551 = vpack.c.bf16 %v2471, %v2471
        %v2552 = vpack.c.bf16 %v2472, %v2472
        %v2553 = vpack.c.bf16 %v2473, %v2473
        %v2554 = vpack.c.bf16 %v2474, %v2474
        %v2555 = vpack.c.bf16 %v2475, %v2475
        %v2556 = vpack.c.bf16 %v2476, %v2476
        %v2557 = vpack.c.bf16 %v2477, %v2477
        %v2558 = vpack.c.bf16 %v2478, %v2478
        %v2559 = vpack.c.bf16 %v2479, %v2479
        %v2560 = vpack.c.bf16 %v2480, %v2480
        %v2561 = vpack.c.bf16 %v2481, %v2481
        %v2562 = vpack.c.bf16 %v2482, %v2482
        %v2563 = vpack.c.bf16 %v2483, %v2483
        %v2564 = vpack.c.bf16 %v2484, %v2484
        %v2565 = vpack.c.bf16 %v2485, %v2485
        %v2566 = vpack.c.bf16 %v2486, %v2486
        %v2567 = vpack.c.bf16 %v2487, %v2487
        %v2568 = vpack.c.bf16 %v2488, %v2488
        %v2569 = vpack.c.bf16 %v2489, %v2489
        %v2570 = vpack.c.bf16 %v2490, %v2490
        %v2571 = vpack.c.bf16 %v2491, %v2491
        %v2572 = vpack.c.bf16 %v2492, %v2492
        %v2573 = vpack.c.bf16 %v2493, %v2493
        %v2574 = vpack.c.bf16 %v2494, %v2494
        %v2575 = vpack.c.bf16 %v2495, %v2495
        %v2576 = vpack.c.bf16 %v2496, %v2496
        %v2577 = vpack.c.bf16 %v2497, %v2497
        %v2578 = vpack.c.bf16 %v2498, %v2498
        %v2579 = vpack.c.bf16 %v2499, %v2499
        %v2580 = vpack.c.bf16 %v2500, %v2500
        %v2581 = vpack.c.bf16 %v2501, %v2501
        %v2582 = vpack.c.bf16 %v2502, %v2502
        %v2583 = vpack.c.bf16 %v2503, %v2503
        %v2584 = vpack.c.bf16 %v2504, %v2504
        %v2585 = vpack.c.bf16 %v2505, %v2505
        %v2586 = vpack.c.bf16 %v2506, %v2506
        %v2587 = vpack.c.bf16 %v2507, %v2507
        %v2588 = vpack.c.bf16 %v2508, %v2508
        %v2589 = vpack.c.bf16 %v2509, %v2509
        %v2590 = vpack.c.bf16 %v2510, %v2510
        %v2591 = vpack.c.bf16 %v2511, %v2511
        %v2592 = vpack.c.bf16 %v2512, %v2512
        %v2593 = vpack.c.bf16 %v2513, %v2513
        %v2594 = vpack.c.bf16 %v2514, %v2514
        %v2595 = vpack.c.bf16 %v2515, %v2515
        %v2596 = vpack.c.bf16 %v2516, %v2516
        %v2597 = vpack.c.bf16 %v2517, %v2517
        %v2598 = vpack.c.bf16 %v2518, %v2518
        %v2599 = vpack.c.bf16 %v2519, %v2519
        %v2600 = vpack.c.bf16 %v2520, %v2520
        %v2601 = vpack.c.bf16 %v2521, %v2521
        %v2602 = vpack.c.bf16 %v2522, %v2522
        %v2603 = vpack.c.bf16 %v2523, %v2523
        %v2604 = vpack.c.bf16 %v2524, %v2524
        %v2605 = vpack.c.bf16 %v2525, %v2525
        %v2606 = vpack.c.bf16 %v2526, %v2526
        %v2607 = vpack.c.bf16 %v2527, %v2527
        %v2608 = vpack.c.bf16 %v2528, %v2528
        %v2609 = vpack.c.bf16 %v2529, %v2529
        %v2610 = vpack.c.bf16 %v2530, %v2530
        %v2611 = vpack.c.bf16 %v2531, %v2531
        %v2612 = vpack.c.bf16 %v2532, %v2532
        %v2613 = vpack.c.bf16 %v2533, %v2533
        %v2614 = vpack.c.bf16 %v2534, %v2534
        %v2615 = vpack.c.bf16 %v2535, %v2535
        %v2616 = vpack.c.bf16 %v2536, %v2536
        %v2617 = vpack.c.bf16 %v2537, %v2537
        %v2618 = vpack.c.bf16 %v2538, %v2538
        %v2619 = vpack.c.bf16 %v2539, %v2539
        %v2620 = vpack.c.bf16 %v2540, %v2540
        %2701 = vrot.lane.b32.xlu0 %v2541, 64
        %v2702 = vpop.permute.xlu0 %2701
        %2703 = vrot.lane.b32.xlu0 %v2542, 64
        %v2704 = vpop.permute.xlu0 %2703
        %2705 = vrot.lane.b32.xlu0 %v2543, 64
        %v2706 = vpop.permute.xlu0 %2705
        %2707 = vrot.lane.b32.xlu0 %v2544, 64
        %v2708 = vpop.permute.xlu0 %2707
        %2709 = vrot.lane.b32.xlu0 %v2545, 64
        %v2710 = vpop.permute.xlu0 %2709
        %2711 = vrot.lane.b32.xlu0 %v2546, 64
        %v2712 = vpop.permute.xlu0 %2711
        %2713 = vrot.lane.b32.xlu0 %v2547, 64
        %v2714 = vpop.permute.xlu0 %2713
        %2715 = vrot.lane.b32.xlu0 %v2548, 64
        %v2716 = vpop.permute.xlu0 %2715
        %2717 = vrot.lane.b32.xlu0 %v2549, 64
        %v2718 = vpop.permute.xlu0 %2717
        %2719 = vrot.lane.b32.xlu0 %v2550, 64
        %v2720 = vpop.permute.xlu0 %2719
        %2721 = vrot.lane.b32.xlu0 %v2551, 64
        %v2722 = vpop.permute.xlu0 %2721
        %2723 = vrot.lane.b32.xlu0 %v2552, 64
        %v2724 = vpop.permute.xlu0 %2723
        %2725 = vrot.lane.b32.xlu0 %v2553, 64
        %v2726 = vpop.permute.xlu0 %2725
        %2727 = vrot.lane.b32.xlu0 %v2554, 64
        %v2728 = vpop.permute.xlu0 %2727
        %2729 = vrot.lane.b32.xlu0 %v2555, 64
        %v2730 = vpop.permute.xlu0 %2729
        %2731 = vrot.lane.b32.xlu0 %v2556, 64
        %v2732 = vpop.permute.xlu0 %2731
        %2733 = vrot.lane.b32.xlu0 %v2557, 64
        %v2734 = vpop.permute.xlu0 %2733
        %2735 = vrot.lane.b32.xlu0 %v2558, 64
        %v2736 = vpop.permute.xlu0 %2735
        %2737 = vrot.lane.b32.xlu0 %v2559, 64
        %v2738 = vpop.permute.xlu0 %2737
        %2739 = vrot.lane.b32.xlu0 %v2560, 64
        %v2740 = vpop.permute.xlu0 %2739
        %2741 = vrot.lane.b32.xlu0 %v2561, 64
        %v2742 = vpop.permute.xlu0 %2741
        %2743 = vrot.lane.b32.xlu0 %v2562, 64
        %v2744 = vpop.permute.xlu0 %2743
        %2745 = vrot.lane.b32.xlu0 %v2563, 64
        %v2746 = vpop.permute.xlu0 %2745
        %2747 = vrot.lane.b32.xlu0 %v2564, 64
        %v2748 = vpop.permute.xlu0 %2747
        %2749 = vrot.lane.b32.xlu0 %v2565, 64
        %v2750 = vpop.permute.xlu0 %2749
        %2751 = vrot.lane.b32.xlu0 %v2566, 64
        %v2752 = vpop.permute.xlu0 %2751
        %2753 = vrot.lane.b32.xlu0 %v2567, 64
        %v2754 = vpop.permute.xlu0 %2753
        %2755 = vrot.lane.b32.xlu0 %v2568, 64
        %v2756 = vpop.permute.xlu0 %2755
        %2757 = vrot.lane.b32.xlu0 %v2569, 64
        %v2758 = vpop.permute.xlu0 %2757
        %2759 = vrot.lane.b32.xlu0 %v2570, 64
        %v2760 = vpop.permute.xlu0 %2759
        %2761 = vrot.lane.b32.xlu0 %v2571, 64
        %v2762 = vpop.permute.xlu0 %2761
        %2763 = vrot.lane.b32.xlu0 %v2572, 64
        %v2764 = vpop.permute.xlu0 %2763
        %2765 = vrot.lane.b32.xlu0 %v2573, 64
        %v2766 = vpop.permute.xlu0 %2765
        %2767 = vrot.lane.b32.xlu0 %v2574, 64
        %v2768 = vpop.permute.xlu0 %2767
        %2769 = vrot.lane.b32.xlu0 %v2575, 64
        %v2770 = vpop.permute.xlu0 %2769
        %2771 = vrot.lane.b32.xlu0 %v2576, 64
        %v2772 = vpop.permute.xlu0 %2771
        %2773 = vrot.lane.b32.xlu0 %v2577, 64
        %v2774 = vpop.permute.xlu0 %2773
        %2775 = vrot.lane.b32.xlu0 %v2578, 64
        %v2776 = vpop.permute.xlu0 %2775
        %2777 = vrot.lane.b32.xlu0 %v2579, 64
        %v2778 = vpop.permute.xlu0 %2777
        %2779 = vrot.lane.b32.xlu0 %v2580, 64
        %v2780 = vpop.permute.xlu0 %2779
        %2781 = vrot.lane.b32.xlu0 %v2581, 64
        %v2782 = vpop.permute.xlu0 %2781
        %2783 = vrot.lane.b32.xlu0 %v2582, 64
        %v2784 = vpop.permute.xlu0 %2783
        %2785 = vrot.lane.b32.xlu0 %v2583, 64
        %v2786 = vpop.permute.xlu0 %2785
        %2787 = vrot.lane.b32.xlu0 %v2584, 64
        %v2788 = vpop.permute.xlu0 %2787
        %2789 = vrot.lane.b32.xlu0 %v2585, 64
        %v2790 = vpop.permute.xlu0 %2789
        %2791 = vrot.lane.b32.xlu0 %v2586, 64
        %v2792 = vpop.permute.xlu0 %2791
        %2793 = vrot.lane.b32.xlu0 %v2587, 64
        %v2794 = vpop.permute.xlu0 %2793
        %2795 = vrot.lane.b32.xlu0 %v2588, 64
        %v2796 = vpop.permute.xlu0 %2795
        %2797 = vrot.lane.b32.xlu0 %v2589, 64
        %v2798 = vpop.permute.xlu0 %2797
        %2799 = vrot.lane.b32.xlu0 %v2590, 64
        %v2800 = vpop.permute.xlu0 %2799
        %2801 = vrot.lane.b32.xlu0 %v2591, 64
        %v2802 = vpop.permute.xlu0 %2801
        %2803 = vrot.lane.b32.xlu0 %v2592, 64
        %v2804 = vpop.permute.xlu0 %2803
        %2805 = vrot.lane.b32.xlu0 %v2593, 64
        %v2806 = vpop.permute.xlu0 %2805
        %2807 = vrot.lane.b32.xlu0 %v2594, 64
        %v2808 = vpop.permute.xlu0 %2807
        %2809 = vrot.lane.b32.xlu0 %v2595, 64
        %v2810 = vpop.permute.xlu0 %2809
        %2811 = vrot.lane.b32.xlu0 %v2596, 64
        %v2812 = vpop.permute.xlu0 %2811
        %2813 = vrot.lane.b32.xlu0 %v2597, 64
        %v2814 = vpop.permute.xlu0 %2813
        %2815 = vrot.lane.b32.xlu0 %v2598, 64
        %v2816 = vpop.permute.xlu0 %2815
        %2817 = vrot.lane.b32.xlu0 %v2599, 64
        %v2818 = vpop.permute.xlu0 %2817
        %2819 = vrot.lane.b32.xlu0 %v2600, 64
        %v2820 = vpop.permute.xlu0 %2819
        %2821 = vrot.lane.b32.xlu0 %v2601, 64
        %v2822 = vpop.permute.xlu0 %2821
        %2823 = vrot.lane.b32.xlu0 %v2602, 64
        %v2824 = vpop.permute.xlu0 %2823
        %2825 = vrot.lane.b32.xlu0 %v2603, 64
        %v2826 = vpop.permute.xlu0 %2825
        %2827 = vrot.lane.b32.xlu0 %v2604, 64
        %v2828 = vpop.permute.xlu0 %2827
        %2829 = vrot.lane.b32.xlu0 %v2605, 64
        %v2830 = vpop.permute.xlu0 %2829
        %2831 = vrot.lane.b32.xlu0 %v2606, 64
        %v2832 = vpop.permute.xlu0 %2831
        %2833 = vrot.lane.b32.xlu0 %v2607, 64
        %v2834 = vpop.permute.xlu0 %2833
        %2835 = vrot.lane.b32.xlu0 %v2608, 64
        %v2836 = vpop.permute.xlu0 %2835
        %2837 = vrot.lane.b32.xlu0 %v2609, 64
        %v2838 = vpop.permute.xlu0 %2837
        %2839 = vrot.lane.b32.xlu0 %v2610, 64
        %v2840 = vpop.permute.xlu0 %2839
        %2841 = vrot.lane.b32.xlu0 %v2611, 64
        %v2842 = vpop.permute.xlu0 %2841
        %2843 = vrot.lane.b32.xlu0 %v2612, 64
        %v2844 = vpop.permute.xlu0 %2843
        %2845 = vrot.lane.b32.xlu0 %v2613, 64
        %v2846 = vpop.permute.xlu0 %2845
        %2847 = vrot.lane.b32.xlu0 %v2614, 64
        %v2848 = vpop.permute.xlu0 %2847
        %2849 = vrot.lane.b32.xlu0 %v2615, 64
        %v2850 = vpop.permute.xlu0 %2849
        %2851 = vrot.lane.b32.xlu0 %v2616, 64
        %v2852 = vpop.permute.xlu0 %2851
        %2853 = vrot.lane.b32.xlu0 %v2617, 64
        %v2854 = vpop.permute.xlu0 %2853
        %2855 = vrot.lane.b32.xlu0 %v2618, 64
        %v2856 = vpop.permute.xlu0 %2855
        %2857 = vrot.lane.b32.xlu0 %v2619, 64
        %v2858 = vpop.permute.xlu0 %2857
        %2859 = vrot.lane.b32.xlu0 %v2620, 64
        %v2860 = vpop.permute.xlu0 %2859
        %2941 = vst.msk [vmem:[#allocation3 + $0x4] sm:$0xf] %vm2138, %v2702
        %2942 = vst.msk [vmem:[#allocation3 + $0x18] sm:$0xf] %vm2138, %v2704
        %2943 = vst.msk [vmem:[#allocation3 + $0x2c] sm:$0xf] %vm2138, %v2706
        %2944 = vst.msk [vmem:[#allocation3 + $0x40] sm:$0xf] %vm2138, %v2708
        %2945 = vst.msk [vmem:[#allocation3 + $0x54] sm:$0xf] %vm2138, %v2710
        %2946 = vst.msk [vmem:[#allocation3 + $0x68] sm:$0xf] %vm2138, %v2712
        %2947 = vst.msk [vmem:[#allocation3 + $0x7c] sm:$0xf] %vm2138, %v2714
        %2948 = vst.msk [vmem:[#allocation3 + $0x90] sm:$0xf] %vm2138, %v2716
        %2949 = vst.msk [vmem:[#allocation3 + $0xa4] sm:$0xf] %vm2138, %v2718
        %2950 = vst.msk [vmem:[#allocation3 + $0xb8] sm:$0xf] %vm2138, %v2720
        %2951 = vst.msk [vmem:[#allocation3 + $0xcc] sm:$0xf] %vm2138, %v2722
        %2952 = vst.msk [vmem:[#allocation3 + $0xe0] sm:$0xf] %vm2138, %v2724
        %2953 = vst.msk [vmem:[#allocation3 + $0xf4] sm:$0xf] %vm2138, %v2726
        %2954 = vst.msk [vmem:[#allocation3 + $0x108] sm:$0xf] %vm2138, %v2728
        %2955 = vst.msk [vmem:[#allocation3 + $0x11c] sm:$0xf] %vm2138, %v2730
        %2956 = vst.msk [vmem:[#allocation3 + $0x130] sm:$0xf] %vm2138, %v2732
        %2957 = vst.msk [vmem:[#allocation3 + $0x144] sm:$0xf] %vm2138, %v2734
        %2958 = vst.msk [vmem:[#allocation3 + $0x158] sm:$0xf] %vm2138, %v2736
        %2959 = vst.msk [vmem:[#allocation3 + $0x16c] sm:$0xf] %vm2138, %v2738
        %2960 = vst.msk [vmem:[#allocation3 + $0x180] sm:$0xf] %vm2138, %v2740
        %2961 = vst.msk [vmem:[#allocation3 + $0x194] sm:$0xf] %vm2138, %v2742
        %2962 = vst.msk [vmem:[#allocation3 + $0x1a8] sm:$0xf] %vm2138, %v2744
        %2963 = vst.msk [vmem:[#allocation3 + $0x1bc] sm:$0xf] %vm2138, %v2746
        %2964 = vst.msk [vmem:[#allocation3 + $0x1d0] sm:$0xf] %vm2138, %v2748
        %2965 = vst.msk [vmem:[#allocation3 + $0x1e4] sm:$0xf] %vm2138, %v2750
        %2966 = vst.msk [vmem:[#allocation3 + $0x1f8] sm:$0xf] %vm2138, %v2752
        %2967 = vst.msk [vmem:[#allocation3 + $0x20c] sm:$0xf] %vm2138, %v2754
        %2968 = vst.msk [vmem:[#allocation3 + $0x220] sm:$0xf] %vm2138, %v2756
        %2969 = vst.msk [vmem:[#allocation3 + $0x234] sm:$0xf] %vm2138, %v2758
        %2970 = vst.msk [vmem:[#allocation3 + $0x248] sm:$0xf] %vm2138, %v2760
        %2971 = vst.msk [vmem:[#allocation3 + $0x25c] sm:$0xf] %vm2138, %v2762
        %2972 = vst.msk [vmem:[#allocation3 + $0x270] sm:$0xf] %vm2138, %v2764
        %2973 = vst.msk [vmem:[#allocation3 + $0x284] sm:$0xf] %vm2138, %v2766
        %2974 = vst.msk [vmem:[#allocation3 + $0x298] sm:$0xf] %vm2138, %v2768
        %2975 = vst.msk [vmem:[#allocation3 + $0x2ac] sm:$0xf] %vm2138, %v2770
        %2976 = vst.msk [vmem:[#allocation3 + $0x2c0] sm:$0xf] %vm2138, %v2772
        %2977 = vst.msk [vmem:[#allocation3 + $0x2d4] sm:$0xf] %vm2138, %v2774
        %2978 = vst.msk [vmem:[#allocation3 + $0x2e8] sm:$0xf] %vm2138, %v2776
        %2979 = vst.msk [vmem:[#allocation3 + $0x2fc] sm:$0xf] %vm2138, %v2778
        %2980 = vst.msk [vmem:[#allocation3 + $0x310] sm:$0xf] %vm2138, %v2780
        %2981 = vst.msk [vmem:[#allocation3 + $0x324] sm:$0xf] %vm2138, %v2782
        %2982 = vst.msk [vmem:[#allocation3 + $0x338] sm:$0xf] %vm2138, %v2784
        %2983 = vst.msk [vmem:[#allocation3 + $0x34c] sm:$0xf] %vm2138, %v2786
        %2984 = vst.msk [vmem:[#allocation3 + $0x360] sm:$0xf] %vm2138, %v2788
        %2985 = vst.msk [vmem:[#allocation3 + $0x374] sm:$0xf] %vm2138, %v2790
        %2986 = vst.msk [vmem:[#allocation3 + $0x388] sm:$0xf] %vm2138, %v2792
        %2987 = vst.msk [vmem:[#allocation3 + $0x39c] sm:$0xf] %vm2138, %v2794
        %2988 = vst.msk [vmem:[#allocation3 + $0x3b0] sm:$0xf] %vm2138, %v2796
        %2989 = vst.msk [vmem:[#allocation3 + $0x3c4] sm:$0xf] %vm2138, %v2798
        %2990 = vst.msk [vmem:[#allocation3 + $0x3d8] sm:$0xf] %vm2138, %v2800
        %2991 = vst.msk [vmem:[#allocation3 + $0x3ec] sm:$0xf] %vm2138, %v2802
        %2992 = vst.msk [vmem:[#allocation3 + $0x400] sm:$0xf] %vm2138, %v2804
        %2993 = vst.msk [vmem:[#allocation3 + $0x414] sm:$0xf] %vm2138, %v2806
        %2994 = vst.msk [vmem:[#allocation3 + $0x428] sm:$0xf] %vm2138, %v2808
        %2995 = vst.msk [vmem:[#allocation3 + $0x43c] sm:$0xf] %vm2138, %v2810
        %2996 = vst.msk [vmem:[#allocation3 + $0x450] sm:$0xf] %vm2138, %v2812
        %2997 = vst.msk [vmem:[#allocation3 + $0x464] sm:$0xf] %vm2138, %v2814
        %2998 = vst.msk [vmem:[#allocation3 + $0x478] sm:$0xf] %vm2138, %v2816
        %2999 = vst.msk [vmem:[#allocation3 + $0x48c] sm:$0xf] %vm2138, %v2818
        %3000 = vst.msk [vmem:[#allocation3 + $0x4a0] sm:$0xf] %vm2138, %v2820
        %3001 = vst.msk [vmem:[#allocation3 + $0x4b4] sm:$0xf] %vm2138, %v2822
        %3002 = vst.msk [vmem:[#allocation3 + $0x4c8] sm:$0xf] %vm2138, %v2824
        %3003 = vst.msk [vmem:[#allocation3 + $0x4dc] sm:$0xf] %vm2138, %v2826
        %3004 = vst.msk [vmem:[#allocation3 + $0x4f0] sm:$0xf] %vm2138, %v2828
        %3005 = vst.msk [vmem:[#allocation3 + $0x504] sm:$0xf] %vm2138, %v2830
        %3006 = vst.msk [vmem:[#allocation3 + $0x518] sm:$0xf] %vm2138, %v2832
        %3007 = vst.msk [vmem:[#allocation3 + $0x52c] sm:$0xf] %vm2138, %v2834
        %3008 = vst.msk [vmem:[#allocation3 + $0x540] sm:$0xf] %vm2138, %v2836
        %3009 = vst.msk [vmem:[#allocation3 + $0x554] sm:$0xf] %vm2138, %v2838
        %3010 = vst.msk [vmem:[#allocation3 + $0x568] sm:$0xf] %vm2138, %v2840
        %3011 = vst.msk [vmem:[#allocation3 + $0x57c] sm:$0xf] %vm2138, %v2842
        %3012 = vst.msk [vmem:[#allocation3 + $0x590] sm:$0xf] %vm2138, %v2844
        %3013 = vst.msk [vmem:[#allocation3 + $0x5a4] sm:$0xf] %vm2138, %v2846
        %3014 = vst.msk [vmem:[#allocation3 + $0x5b8] sm:$0xf] %vm2138, %v2848
        %3015 = vst.msk [vmem:[#allocation3 + $0x5cc] sm:$0xf] %vm2138, %v2850
        %3016 = vst.msk [vmem:[#allocation3 + $0x5e0] sm:$0xf] %vm2138, %v2852
        %3017 = vst.msk [vmem:[#allocation3 + $0x5f4] sm:$0xf] %vm2138, %v2854
        %3018 = vst.msk [vmem:[#allocation3 + $0x608] sm:$0xf] %vm2138, %v2856
        %3019 = vst.msk [vmem:[#allocation3 + $0x61c] sm:$0xf] %vm2138, %v2858
        %3020 = vst.msk [vmem:[#allocation3 + $0x630] sm:$0xf] %vm2138, %v2860
        %s3021 = scalar_lea.vmem [#allocation2], 88
        %v3022 = vld [vmem:[%s3021] sm:$0xff]
        %v3023 = vld [vmem:[%s3021 + $0x8] sm:$0xff]
        %v3024 = vld [vmem:[%s3021 + $0x10] sm:$0xff]
        %v3025 = vld [vmem:[%s3021 + $0x18] sm:$0xff]
        %v3026 = vld [vmem:[%s3021 + $0x20] sm:$0xff]
        %v3027 = vld [vmem:[%s3021 + $0x28] sm:$0xff]
        %v3028 = vld [vmem:[%s3021 + $0x30] sm:$0xff]
        %v3029 = vld [vmem:[%s3021 + $0x38] sm:$0xff]
        %v3030 = vld [vmem:[%s3021 + $0x40] sm:$0xff]
        %v3031 = vld [vmem:[%s3021 + $0x48] sm:$0xff]
        %v3032 = vld [vmem:[%s3021 + $0x50] sm:$0xff]
        %v3033 = vld [vmem:[%s3021 + $0x58] sm:$0xff]
        %v3034 = vld [vmem:[%s3021 + $0x60] sm:$0xff]
        %v3035 = vld [vmem:[%s3021 + $0x68] sm:$0xff]
        %v3036 = vld [vmem:[%s3021 + $0x70] sm:$0xff]
        %v3037 = vld [vmem:[%s3021 + $0x78] sm:$0xff]
        %v3038 = vld [vmem:[%s3021 + $0x80] sm:$0xff]
        %v3039 = vld [vmem:[%s3021 + $0x88] sm:$0xff]
        %v3040 = vld [vmem:[%s3021 + $0x90] sm:$0xff]
        %v3041 = vld [vmem:[%s3021 + $0x98] sm:$0xff]
        %v3042 = vld [vmem:[%s3021 + $0xa0] sm:$0xff]
        %v3043 = vld [vmem:[%s3021 + $0xa8] sm:$0xff]
        %v3044 = vld [vmem:[%s3021 + $0xb0] sm:$0xff]
        %v3045 = vld [vmem:[%s3021 + $0xb8] sm:$0xff]
        %v3046 = vld [vmem:[%s3021 + $0xc0] sm:$0xff]
        %v3047 = vld [vmem:[%s3021 + $0xc8] sm:$0xff]
        %v3048 = vld [vmem:[%s3021 + $0xd0] sm:$0xff]
        %v3049 = vld [vmem:[%s3021 + $0xd8] sm:$0xff]
        %v3050 = vld [vmem:[%s3021 + $0xe0] sm:$0xff]
        %v3051 = vld [vmem:[%s3021 + $0xe8] sm:$0xff]
        %v3052 = vld [vmem:[%s3021 + $0xf0] sm:$0xff]
        %v3053 = vld [vmem:[%s3021 + $0xf8] sm:$0xff]
        %v3054 = vld [vmem:[%s3021 + $0x100] sm:$0xff]
        %v3055 = vld [vmem:[%s3021 + $0x108] sm:$0xff]
        %v3056 = vld [vmem:[%s3021 + $0x110] sm:$0xff]
        %v3057 = vld [vmem:[%s3021 + $0x118] sm:$0xff]
        %v3058 = vld [vmem:[%s3021 + $0x120] sm:$0xff]
        %v3059 = vld [vmem:[%s3021 + $0x128] sm:$0xff]
        %v3060 = vld [vmem:[%s3021 + $0x130] sm:$0xff]
        %v3061 = vld [vmem:[%s3021 + $0x138] sm:$0xff]
        %v3062 = vld [vmem:[%s3021 + $0x140] sm:$0xff]
        %v3063 = vld [vmem:[%s3021 + $0x148] sm:$0xff]
        %v3064 = vld [vmem:[%s3021 + $0x150] sm:$0xff]
        %v3065 = vld [vmem:[%s3021 + $0x158] sm:$0xff]
        %v3066 = vld [vmem:[%s3021 + $0x160] sm:$0xff]
        %v3067 = vld [vmem:[%s3021 + $0x168] sm:$0xff]
        %v3068 = vld [vmem:[%s3021 + $0x170] sm:$0xff]
        %v3069 = vld [vmem:[%s3021 + $0x178] sm:$0xff]
        %v3070 = vld [vmem:[%s3021 + $0x180] sm:$0xff]
        %v3071 = vld [vmem:[%s3021 + $0x188] sm:$0xff]
        %v3072 = vld [vmem:[%s3021 + $0x190] sm:$0xff]
        %v3073 = vld [vmem:[%s3021 + $0x198] sm:$0xff]
        %v3074 = vld [vmem:[%s3021 + $0x1a0] sm:$0xff]
        %v3075 = vld [vmem:[%s3021 + $0x1a8] sm:$0xff]
        %v3076 = vld [vmem:[%s3021 + $0x1b0] sm:$0xff]
        %v3077 = vld [vmem:[%s3021 + $0x1b8] sm:$0xff]
        %v3078 = vld [vmem:[%s3021 + $0x1c0] sm:$0xff]
        %v3079 = vld [vmem:[%s3021 + $0x1c8] sm:$0xff]
        %v3080 = vld [vmem:[%s3021 + $0x1d0] sm:$0xff]
        %v3081 = vld [vmem:[%s3021 + $0x1d8] sm:$0xff]
        %v3082 = vld [vmem:[%s3021 + $0x1e0] sm:$0xff]
        %v3083 = vld [vmem:[%s3021 + $0x1e8] sm:$0xff]
        %v3084 = vld [vmem:[%s3021 + $0x1f0] sm:$0xff]
        %v3085 = vld [vmem:[%s3021 + $0x1f8] sm:$0xff]
        %v3086 = vld [vmem:[%s3021 + $0x200] sm:$0xff]
        %v3087 = vld [vmem:[%s3021 + $0x208] sm:$0xff]
        %v3088 = vld [vmem:[%s3021 + $0x210] sm:$0xff]
        %v3089 = vld [vmem:[%s3021 + $0x218] sm:$0xff]
        %v3090 = vld [vmem:[%s3021 + $0x220] sm:$0xff]
        %v3091 = vld [vmem:[%s3021 + $0x228] sm:$0xff]
        %v3092 = vld [vmem:[%s3021 + $0x230] sm:$0xff]
        %v3093 = vld [vmem:[%s3021 + $0x238] sm:$0xff]
        %v3094 = vld [vmem:[%s3021 + $0x240] sm:$0xff]
        %v3095 = vld [vmem:[%s3021 + $0x248] sm:$0xff]
        %v3096 = vld [vmem:[%s3021 + $0x250] sm:$0xff]
        %v3097 = vld [vmem:[%s3021 + $0x258] sm:$0xff]
        %v3098 = vld [vmem:[%s3021 + $0x260] sm:$0xff]
        %v3099 = vld [vmem:[%s3021 + $0x268] sm:$0xff]
        %v3100 = vld [vmem:[%s3021 + $0x270] sm:$0xff]
        %v3101 = vld [vmem:[%s3021 + $0x278] sm:$0xff]
        %v3102 = vpack.c.bf16 %v3022, %v3022
        %v3103 = vpack.c.bf16 %v3023, %v3023
        %v3104 = vpack.c.bf16 %v3024, %v3024
        %v3105 = vpack.c.bf16 %v3025, %v3025
        %v3106 = vpack.c.bf16 %v3026, %v3026
        %v3107 = vpack.c.bf16 %v3027, %v3027
        %v3108 = vpack.c.bf16 %v3028, %v3028
        %v3109 = vpack.c.bf16 %v3029, %v3029
        %v3110 = vpack.c.bf16 %v3030, %v3030
        %v3111 = vpack.c.bf16 %v3031, %v3031
        %v3112 = vpack.c.bf16 %v3032, %v3032
        %v3113 = vpack.c.bf16 %v3033, %v3033
        %v3114 = vpack.c.bf16 %v3034, %v3034
        %v3115 = vpack.c.bf16 %v3035, %v3035
        %v3116 = vpack.c.bf16 %v3036, %v3036
        %v3117 = vpack.c.bf16 %v3037, %v3037
        %v3118 = vpack.c.bf16 %v3038, %v3038
        %v3119 = vpack.c.bf16 %v3039, %v3039
        %v3120 = vpack.c.bf16 %v3040, %v3040
        %v3121 = vpack.c.bf16 %v3041, %v3041
        %v3122 = vpack.c.bf16 %v3042, %v3042
        %v3123 = vpack.c.bf16 %v3043, %v3043
        %v3124 = vpack.c.bf16 %v3044, %v3044
        %v3125 = vpack.c.bf16 %v3045, %v3045
        %v3126 = vpack.c.bf16 %v3046, %v3046
        %v3127 = vpack.c.bf16 %v3047, %v3047
        %v3128 = vpack.c.bf16 %v3048, %v3048
        %v3129 = vpack.c.bf16 %v3049, %v3049
        %v3130 = vpack.c.bf16 %v3050, %v3050
        %v3131 = vpack.c.bf16 %v3051, %v3051
        %v3132 = vpack.c.bf16 %v3052, %v3052
        %v3133 = vpack.c.bf16 %v3053, %v3053
        %v3134 = vpack.c.bf16 %v3054, %v3054
        %v3135 = vpack.c.bf16 %v3055, %v3055
        %v3136 = vpack.c.bf16 %v3056, %v3056
        %v3137 = vpack.c.bf16 %v3057, %v3057
        %v3138 = vpack.c.bf16 %v3058, %v3058
        %v3139 = vpack.c.bf16 %v3059, %v3059
        %v3140 = vpack.c.bf16 %v3060, %v3060
        %v3141 = vpack.c.bf16 %v3061, %v3061
        %v3142 = vpack.c.bf16 %v3062, %v3062
        %v3143 = vpack.c.bf16 %v3063, %v3063
        %v3144 = vpack.c.bf16 %v3064, %v3064
        %v3145 = vpack.c.bf16 %v3065, %v3065
        %v3146 = vpack.c.bf16 %v3066, %v3066
        %v3147 = vpack.c.bf16 %v3067, %v3067
        %v3148 = vpack.c.bf16 %v3068, %v3068
        %v3149 = vpack.c.bf16 %v3069, %v3069
        %v3150 = vpack.c.bf16 %v3070, %v3070
        %v3151 = vpack.c.bf16 %v3071, %v3071
        %v3152 = vpack.c.bf16 %v3072, %v3072
        %v3153 = vpack.c.bf16 %v3073, %v3073
        %v3154 = vpack.c.bf16 %v3074, %v3074
        %v3155 = vpack.c.bf16 %v3075, %v3075
        %v3156 = vpack.c.bf16 %v3076, %v3076
        %v3157 = vpack.c.bf16 %v3077, %v3077
        %v3158 = vpack.c.bf16 %v3078, %v3078
        %v3159 = vpack.c.bf16 %v3079, %v3079
        %v3160 = vpack.c.bf16 %v3080, %v3080
        %v3161 = vpack.c.bf16 %v3081, %v3081
        %v3162 = vpack.c.bf16 %v3082, %v3082
        %v3163 = vpack.c.bf16 %v3083, %v3083
        %v3164 = vpack.c.bf16 %v3084, %v3084
        %v3165 = vpack.c.bf16 %v3085, %v3085
        %v3166 = vpack.c.bf16 %v3086, %v3086
        %v3167 = vpack.c.bf16 %v3087, %v3087
        %v3168 = vpack.c.bf16 %v3088, %v3088
        %v3169 = vpack.c.bf16 %v3089, %v3089
        %v3170 = vpack.c.bf16 %v3090, %v3090
        %v3171 = vpack.c.bf16 %v3091, %v3091
        %v3172 = vpack.c.bf16 %v3092, %v3092
        %v3173 = vpack.c.bf16 %v3093, %v3093
        %v3174 = vpack.c.bf16 %v3094, %v3094
        %v3175 = vpack.c.bf16 %v3095, %v3095
        %v3176 = vpack.c.bf16 %v3096, %v3096
        %v3177 = vpack.c.bf16 %v3097, %v3097
        %v3178 = vpack.c.bf16 %v3098, %v3098
        %v3179 = vpack.c.bf16 %v3099, %v3099
        %v3180 = vpack.c.bf16 %v3100, %v3100
        %v3181 = vpack.c.bf16 %v3101, %v3101
        %3182 = vst.msk [vmem:[#allocation3 + $0x8] sm:$0xf] %vm1576, %v3102
        %3183 = vst.msk [vmem:[#allocation3 + $0x1c] sm:$0xf] %vm1576, %v3103
        %3184 = vst.msk [vmem:[#allocation3 + $0x30] sm:$0xf] %vm1576, %v3104
        %3185 = vst.msk [vmem:[#allocation3 + $0x44] sm:$0xf] %vm1576, %v3105
        %3186 = vst.msk [vmem:[#allocation3 + $0x58] sm:$0xf] %vm1576, %v3106
        %3187 = vst.msk [vmem:[#allocation3 + $0x6c] sm:$0xf] %vm1576, %v3107
        %3188 = vst.msk [vmem:[#allocation3 + $0x80] sm:$0xf] %vm1576, %v3108
        %3189 = vst.msk [vmem:[#allocation3 + $0x94] sm:$0xf] %vm1576, %v3109
        %3190 = vst.msk [vmem:[#allocation3 + $0xa8] sm:$0xf] %vm1576, %v3110
        %3191 = vst.msk [vmem:[#allocation3 + $0xbc] sm:$0xf] %vm1576, %v3111
        %3192 = vst.msk [vmem:[#allocation3 + $0xd0] sm:$0xf] %vm1576, %v3112
        %3193 = vst.msk [vmem:[#allocation3 + $0xe4] sm:$0xf] %vm1576, %v3113
        %3194 = vst.msk [vmem:[#allocation3 + $0xf8] sm:$0xf] %vm1576, %v3114
        %3195 = vst.msk [vmem:[#allocation3 + $0x10c] sm:$0xf] %vm1576, %v3115
        %3196 = vst.msk [vmem:[#allocation3 + $0x120] sm:$0xf] %vm1576, %v3116
        %3197 = vst.msk [vmem:[#allocation3 + $0x134] sm:$0xf] %vm1576, %v3117
        %3198 = vst.msk [vmem:[#allocation3 + $0x148] sm:$0xf] %vm1576, %v3118
        %3199 = vst.msk [vmem:[#allocation3 + $0x15c] sm:$0xf] %vm1576, %v3119
        %3200 = vst.msk [vmem:[#allocation3 + $0x170] sm:$0xf] %vm1576, %v3120
        %3201 = vst.msk [vmem:[#allocation3 + $0x184] sm:$0xf] %vm1576, %v3121
        %3202 = vst.msk [vmem:[#allocation3 + $0x198] sm:$0xf] %vm1576, %v3122
        %3203 = vst.msk [vmem:[#allocation3 + $0x1ac] sm:$0xf] %vm1576, %v3123
        %3204 = vst.msk [vmem:[#allocation3 + $0x1c0] sm:$0xf] %vm1576, %v3124
        %3205 = vst.msk [vmem:[#allocation3 + $0x1d4] sm:$0xf] %vm1576, %v3125
        %3206 = vst.msk [vmem:[#allocation3 + $0x1e8] sm:$0xf] %vm1576, %v3126
        %3207 = vst.msk [vmem:[#allocation3 + $0x1fc] sm:$0xf] %vm1576, %v3127
        %3208 = vst.msk [vmem:[#allocation3 + $0x210] sm:$0xf] %vm1576, %v3128
        %3209 = vst.msk [vmem:[#allocation3 + $0x224] sm:$0xf] %vm1576, %v3129
        %3210 = vst.msk [vmem:[#allocation3 + $0x238] sm:$0xf] %vm1576, %v3130
        %3211 = vst.msk [vmem:[#allocation3 + $0x24c] sm:$0xf] %vm1576, %v3131
        %3212 = vst.msk [vmem:[#allocation3 + $0x260] sm:$0xf] %vm1576, %v3132
        %3213 = vst.msk [vmem:[#allocation3 + $0x274] sm:$0xf] %vm1576, %v3133
        %3214 = vst.msk [vmem:[#allocation3 + $0x288] sm:$0xf] %vm1576, %v3134
        %3215 = vst.msk [vmem:[#allocation3 + $0x29c] sm:$0xf] %vm1576, %v3135
        %3216 = vst.msk [vmem:[#allocation3 + $0x2b0] sm:$0xf] %vm1576, %v3136
        %3217 = vst.msk [vmem:[#allocation3 + $0x2c4] sm:$0xf] %vm1576, %v3137
        %3218 = vst.msk [vmem:[#allocation3 + $0x2d8] sm:$0xf] %vm1576, %v3138
        %3219 = vst.msk [vmem:[#allocation3 + $0x2ec] sm:$0xf] %vm1576, %v3139
        %3220 = vst.msk [vmem:[#allocation3 + $0x300] sm:$0xf] %vm1576, %v3140
        %3221 = vst.msk [vmem:[#allocation3 + $0x314] sm:$0xf] %vm1576, %v3141
        %3222 = vst.msk [vmem:[#allocation3 + $0x328] sm:$0xf] %vm1576, %v3142
        %3223 = vst.msk [vmem:[#allocation3 + $0x33c] sm:$0xf] %vm1576, %v3143
        %3224 = vst.msk [vmem:[#allocation3 + $0x350] sm:$0xf] %vm1576, %v3144
        %3225 = vst.msk [vmem:[#allocation3 + $0x364] sm:$0xf] %vm1576, %v3145
        %3226 = vst.msk [vmem:[#allocation3 + $0x378] sm:$0xf] %vm1576, %v3146
        %3227 = vst.msk [vmem:[#allocation3 + $0x38c] sm:$0xf] %vm1576, %v3147
        %3228 = vst.msk [vmem:[#allocation3 + $0x3a0] sm:$0xf] %vm1576, %v3148
        %3229 = vst.msk [vmem:[#allocation3 + $0x3b4] sm:$0xf] %vm1576, %v3149
        %3230 = vst.msk [vmem:[#allocation3 + $0x3c8] sm:$0xf] %vm1576, %v3150
        %3231 = vst.msk [vmem:[#allocation3 + $0x3dc] sm:$0xf] %vm1576, %v3151
        %3232 = vst.msk [vmem:[#allocation3 + $0x3f0] sm:$0xf] %vm1576, %v3152
        %3233 = vst.msk [vmem:[#allocation3 + $0x404] sm:$0xf] %vm1576, %v3153
        %3234 = vst.msk [vmem:[#allocation3 + $0x418] sm:$0xf] %vm1576, %v3154
        %3235 = vst.msk [vmem:[#allocation3 + $0x42c] sm:$0xf] %vm1576, %v3155
        %3236 = vst.msk [vmem:[#allocation3 + $0x440] sm:$0xf] %vm1576, %v3156
        %3237 = vst.msk [vmem:[#allocation3 + $0x454] sm:$0xf] %vm1576, %v3157
        %3238 = vst.msk [vmem:[#allocation3 + $0x468] sm:$0xf] %vm1576, %v3158
        %3239 = vst.msk [vmem:[#allocation3 + $0x47c] sm:$0xf] %vm1576, %v3159
        %3240 = vst.msk [vmem:[#allocation3 + $0x490] sm:$0xf] %vm1576, %v3160
        %3241 = vst.msk [vmem:[#allocation3 + $0x4a4] sm:$0xf] %vm1576, %v3161
        %3242 = vst.msk [vmem:[#allocation3 + $0x4b8] sm:$0xf] %vm1576, %v3162
        %3243 = vst.msk [vmem:[#allocation3 + $0x4cc] sm:$0xf] %vm1576, %v3163
        %3244 = vst.msk [vmem:[#allocation3 + $0x4e0] sm:$0xf] %vm1576, %v3164
        %3245 = vst.msk [vmem:[#allocation3 + $0x4f4] sm:$0xf] %vm1576, %v3165
        %3246 = vst.msk [vmem:[#allocation3 + $0x508] sm:$0xf] %vm1576, %v3166
        %3247 = vst.msk [vmem:[#allocation3 + $0x51c] sm:$0xf] %vm1576, %v3167
        %3248 = vst.msk [vmem:[#allocation3 + $0x530] sm:$0xf] %vm1576, %v3168
        %3249 = vst.msk [vmem:[#allocation3 + $0x544] sm:$0xf] %vm1576, %v3169
        %3250 = vst.msk [vmem:[#allocation3 + $0x558] sm:$0xf] %vm1576, %v3170
        %3251 = vst.msk [vmem:[#allocation3 + $0x56c] sm:$0xf] %vm1576, %v3171
        %3252 = vst.msk [vmem:[#allocation3 + $0x580] sm:$0xf] %vm1576, %v3172
        %3253 = vst.msk [vmem:[#allocation3 + $0x594] sm:$0xf] %vm1576, %v3173
        %3254 = vst.msk [vmem:[#allocation3 + $0x5a8] sm:$0xf] %vm1576, %v3174
        %3255 = vst.msk [vmem:[#allocation3 + $0x5bc] sm:$0xf] %vm1576, %v3175
        %3256 = vst.msk [vmem:[#allocation3 + $0x5d0] sm:$0xf] %vm1576, %v3176
        %3257 = vst.msk [vmem:[#allocation3 + $0x5e4] sm:$0xf] %vm1576, %v3177
        %3258 = vst.msk [vmem:[#allocation3 + $0x5f8] sm:$0xf] %vm1576, %v3178
        %3259 = vst.msk [vmem:[#allocation3 + $0x60c] sm:$0xf] %vm1576, %v3179
        %3260 = vst.msk [vmem:[#allocation3 + $0x620] sm:$0xf] %vm1576, %v3180
        %3261 = vst.msk [vmem:[#allocation3 + $0x634] sm:$0xf] %vm1576, %v3181
        %v3262 = vld [vmem:[%s1344] sm:$0xff]
        %v3263 = vld [vmem:[%s1344 + $0x8] sm:$0xff]
        %v3264 = vld [vmem:[%s1344 + $0x10] sm:$0xff]
        %v3265 = vld [vmem:[%s1344 + $0x18] sm:$0xff]
        %v3266 = vld [vmem:[%s1344 + $0x20] sm:$0xff]
        %v3267 = vld [vmem:[%s1344 + $0x28] sm:$0xff]
        %v3268 = vld [vmem:[%s1344 + $0x30] sm:$0xff]
        %v3269 = vld [vmem:[%s1344 + $0x38] sm:$0xff]
        %v3270 = vld [vmem:[%s1344 + $0x40] sm:$0xff]
        %v3271 = vld [vmem:[%s1344 + $0x48] sm:$0xff]
        %v3272 = vld [vmem:[%s1344 + $0x50] sm:$0xff]
        %v3273 = vld [vmem:[%s1344 + $0x58] sm:$0xff]
        %v3274 = vld [vmem:[%s1344 + $0x60] sm:$0xff]
        %v3275 = vld [vmem:[%s1344 + $0x68] sm:$0xff]
        %v3276 = vld [vmem:[%s1344 + $0x70] sm:$0xff]
        %v3277 = vld [vmem:[%s1344 + $0x78] sm:$0xff]
        %v3278 = vld [vmem:[%s1344 + $0x80] sm:$0xff]
        %v3279 = vld [vmem:[%s1344 + $0x88] sm:$0xff]
        %v3280 = vld [vmem:[%s1344 + $0x90] sm:$0xff]
        %v3281 = vld [vmem:[%s1344 + $0x98] sm:$0xff]
        %v3282 = vld [vmem:[%s1344 + $0xa0] sm:$0xff]
        %v3283 = vld [vmem:[%s1344 + $0xa8] sm:$0xff]
        %v3284 = vld [vmem:[%s1344 + $0xb0] sm:$0xff]
        %v3285 = vld [vmem:[%s1344 + $0xb8] sm:$0xff]
        %v3286 = vld [vmem:[%s1344 + $0xc0] sm:$0xff]
        %v3287 = vld [vmem:[%s1344 + $0xc8] sm:$0xff]
        %v3288 = vld [vmem:[%s1344 + $0xd0] sm:$0xff]
        %v3289 = vld [vmem:[%s1344 + $0xd8] sm:$0xff]
        %v3290 = vld [vmem:[%s1344 + $0xe0] sm:$0xff]
        %v3291 = vld [vmem:[%s1344 + $0xe8] sm:$0xff]
        %v3292 = vld [vmem:[%s1344 + $0xf0] sm:$0xff]
        %v3293 = vld [vmem:[%s1344 + $0xf8] sm:$0xff]
        %v3294 = vld [vmem:[%s1344 + $0x100] sm:$0xff]
        %v3295 = vld [vmem:[%s1344 + $0x108] sm:$0xff]
        %v3296 = vld [vmem:[%s1344 + $0x110] sm:$0xff]
        %v3297 = vld [vmem:[%s1344 + $0x118] sm:$0xff]
        %v3298 = vld [vmem:[%s1344 + $0x120] sm:$0xff]
        %v3299 = vld [vmem:[%s1344 + $0x128] sm:$0xff]
        %v3300 = vld [vmem:[%s1344 + $0x130] sm:$0xff]
        %v3301 = vld [vmem:[%s1344 + $0x138] sm:$0xff]
        %v3302 = vld [vmem:[%s1344 + $0x140] sm:$0xff]
        %v3303 = vld [vmem:[%s1344 + $0x148] sm:$0xff]
        %v3304 = vld [vmem:[%s1344 + $0x150] sm:$0xff]
        %v3305 = vld [vmem:[%s1344 + $0x158] sm:$0xff]
        %v3306 = vld [vmem:[%s1344 + $0x160] sm:$0xff]
        %v3307 = vld [vmem:[%s1344 + $0x168] sm:$0xff]
        %v3308 = vld [vmem:[%s1344 + $0x170] sm:$0xff]
        %v3309 = vld [vmem:[%s1344 + $0x178] sm:$0xff]
        %v3310 = vld [vmem:[%s1344 + $0x180] sm:$0xff]
        %v3311 = vld [vmem:[%s1344 + $0x188] sm:$0xff]
        %v3312 = vld [vmem:[%s1344 + $0x190] sm:$0xff]
        %v3313 = vld [vmem:[%s1344 + $0x198] sm:$0xff]
        %v3314 = vld [vmem:[%s1344 + $0x1a0] sm:$0xff]
        %v3315 = vld [vmem:[%s1344 + $0x1a8] sm:$0xff]
        %v3316 = vld [vmem:[%s1344 + $0x1b0] sm:$0xff]
        %v3317 = vld [vmem:[%s1344 + $0x1b8] sm:$0xff]
        %v3318 = vld [vmem:[%s1344 + $0x1c0] sm:$0xff]
        %v3319 = vld [vmem:[%s1344 + $0x1c8] sm:$0xff]
        %v3320 = vld [vmem:[%s1344 + $0x1d0] sm:$0xff]
        %v3321 = vld [vmem:[%s1344 + $0x1d8] sm:$0xff]
        %v3322 = vld [vmem:[%s1344 + $0x1e0] sm:$0xff]
        %v3323 = vld [vmem:[%s1344 + $0x1e8] sm:$0xff]
        %v3324 = vld [vmem:[%s1344 + $0x1f0] sm:$0xff]
        %v3325 = vld [vmem:[%s1344 + $0x1f8] sm:$0xff]
        %v3326 = vld [vmem:[%s1344 + $0x200] sm:$0xff]
        %v3327 = vld [vmem:[%s1344 + $0x208] sm:$0xff]
        %v3328 = vld [vmem:[%s1344 + $0x210] sm:$0xff]
        %v3329 = vld [vmem:[%s1344 + $0x218] sm:$0xff]
        %v3330 = vld [vmem:[%s1344 + $0x220] sm:$0xff]
        %v3331 = vld [vmem:[%s1344 + $0x228] sm:$0xff]
        %v3332 = vld [vmem:[%s1344 + $0x230] sm:$0xff]
        %v3333 = vld [vmem:[%s1344 + $0x238] sm:$0xff]
        %v3334 = vld [vmem:[%s1344 + $0x240] sm:$0xff]
        %v3335 = vld [vmem:[%s1344 + $0x248] sm:$0xff]
        %v3336 = vld [vmem:[%s1344 + $0x250] sm:$0xff]
        %v3337 = vld [vmem:[%s1344 + $0x258] sm:$0xff]
        %v3338 = vld [vmem:[%s1344 + $0x260] sm:$0xff]
        %v3339 = vld [vmem:[%s1344 + $0x268] sm:$0xff]
        %v3340 = vld [vmem:[%s1344 + $0x270] sm:$0xff]
        %v3341 = vld [vmem:[%s1344 + $0x278] sm:$0xff]
        %v3342 = vpack.c.bf16 %v3262, %v3262
        %v3343 = vpack.c.bf16 %v3263, %v3263
        %v3344 = vpack.c.bf16 %v3264, %v3264
        %v3345 = vpack.c.bf16 %v3265, %v3265
        %v3346 = vpack.c.bf16 %v3266, %v3266
        %v3347 = vpack.c.bf16 %v3267, %v3267
        %v3348 = vpack.c.bf16 %v3268, %v3268
        %v3349 = vpack.c.bf16 %v3269, %v3269
        %v3350 = vpack.c.bf16 %v3270, %v3270
        %v3351 = vpack.c.bf16 %v3271, %v3271
        %v3352 = vpack.c.bf16 %v3272, %v3272
        %v3353 = vpack.c.bf16 %v3273, %v3273
        %v3354 = vpack.c.bf16 %v3274, %v3274
        %v3355 = vpack.c.bf16 %v3275, %v3275
        %v3356 = vpack.c.bf16 %v3276, %v3276
        %v3357 = vpack.c.bf16 %v3277, %v3277
        %v3358 = vpack.c.bf16 %v3278, %v3278
        %v3359 = vpack.c.bf16 %v3279, %v3279
        %v3360 = vpack.c.bf16 %v3280, %v3280
        %v3361 = vpack.c.bf16 %v3281, %v3281
        %v3362 = vpack.c.bf16 %v3282, %v3282
        %v3363 = vpack.c.bf16 %v3283, %v3283
        %v3364 = vpack.c.bf16 %v3284, %v3284
        %v3365 = vpack.c.bf16 %v3285, %v3285
        %v3366 = vpack.c.bf16 %v3286, %v3286
        %v3367 = vpack.c.bf16 %v3287, %v3287
        %v3368 = vpack.c.bf16 %v3288, %v3288
        %v3369 = vpack.c.bf16 %v3289, %v3289
        %v3370 = vpack.c.bf16 %v3290, %v3290
        %v3371 = vpack.c.bf16 %v3291, %v3291
        %v3372 = vpack.c.bf16 %v3292, %v3292
        %v3373 = vpack.c.bf16 %v3293, %v3293
        %v3374 = vpack.c.bf16 %v3294, %v3294
        %v3375 = vpack.c.bf16 %v3295, %v3295
        %v3376 = vpack.c.bf16 %v3296, %v3296
        %v3377 = vpack.c.bf16 %v3297, %v3297
        %v3378 = vpack.c.bf16 %v3298, %v3298
        %v3379 = vpack.c.bf16 %v3299, %v3299
        %v3380 = vpack.c.bf16 %v3300, %v3300
        %v3381 = vpack.c.bf16 %v3301, %v3301
        %v3382 = vpack.c.bf16 %v3302, %v3302
        %v3383 = vpack.c.bf16 %v3303, %v3303
        %v3384 = vpack.c.bf16 %v3304, %v3304
        %v3385 = vpack.c.bf16 %v3305, %v3305
        %v3386 = vpack.c.bf16 %v3306, %v3306
        %v3387 = vpack.c.bf16 %v3307, %v3307
        %v3388 = vpack.c.bf16 %v3308, %v3308
        %v3389 = vpack.c.bf16 %v3309, %v3309
        %v3390 = vpack.c.bf16 %v3310, %v3310
        %v3391 = vpack.c.bf16 %v3311, %v3311
        %v3392 = vpack.c.bf16 %v3312, %v3312
        %v3393 = vpack.c.bf16 %v3313, %v3313
        %v3394 = vpack.c.bf16 %v3314, %v3314
        %v3395 = vpack.c.bf16 %v3315, %v3315
        %v3396 = vpack.c.bf16 %v3316, %v3316
        %v3397 = vpack.c.bf16 %v3317, %v3317
        %v3398 = vpack.c.bf16 %v3318, %v3318
        %v3399 = vpack.c.bf16 %v3319, %v3319
        %v3400 = vpack.c.bf16 %v3320, %v3320
        %v3401 = vpack.c.bf16 %v3321, %v3321
        %v3402 = vpack.c.bf16 %v3322, %v3322
        %v3403 = vpack.c.bf16 %v3323, %v3323
        %v3404 = vpack.c.bf16 %v3324, %v3324
        %v3405 = vpack.c.bf16 %v3325, %v3325
        %v3406 = vpack.c.bf16 %v3326, %v3326
        %v3407 = vpack.c.bf16 %v3327, %v3327
        %v3408 = vpack.c.bf16 %v3328, %v3328
        %v3409 = vpack.c.bf16 %v3329, %v3329
        %v3410 = vpack.c.bf16 %v3330, %v3330
        %v3411 = vpack.c.bf16 %v3331, %v3331
        %v3412 = vpack.c.bf16 %v3332, %v3332
        %v3413 = vpack.c.bf16 %v3333, %v3333
        %v3414 = vpack.c.bf16 %v3334, %v3334
        %v3415 = vpack.c.bf16 %v3335, %v3335
        %v3416 = vpack.c.bf16 %v3336, %v3336
        %v3417 = vpack.c.bf16 %v3337, %v3337
        %v3418 = vpack.c.bf16 %v3338, %v3338
        %v3419 = vpack.c.bf16 %v3339, %v3339
        %v3420 = vpack.c.bf16 %v3340, %v3340
        %v3421 = vpack.c.bf16 %v3341, %v3341
        %3502 = vrot.lane.b32.xlu0 %v3342, 64
        %v3503 = vpop.permute.xlu0 %3502
        %3504 = vrot.lane.b32.xlu0 %v3343, 64
        %v3505 = vpop.permute.xlu0 %3504
        %3506 = vrot.lane.b32.xlu0 %v3344, 64
        %v3507 = vpop.permute.xlu0 %3506
        %3508 = vrot.lane.b32.xlu0 %v3345, 64
        %v3509 = vpop.permute.xlu0 %3508
        %3510 = vrot.lane.b32.xlu0 %v3346, 64
        %v3511 = vpop.permute.xlu0 %3510
        %3512 = vrot.lane.b32.xlu0 %v3347, 64
        %v3513 = vpop.permute.xlu0 %3512
        %3514 = vrot.lane.b32.xlu0 %v3348, 64
        %v3515 = vpop.permute.xlu0 %3514
        %3516 = vrot.lane.b32.xlu0 %v3349, 64
        %v3517 = vpop.permute.xlu0 %3516
        %3518 = vrot.lane.b32.xlu0 %v3350, 64
        %v3519 = vpop.permute.xlu0 %3518
        %3520 = vrot.lane.b32.xlu0 %v3351, 64
        %v3521 = vpop.permute.xlu0 %3520
        %3522 = vrot.lane.b32.xlu0 %v3352, 64
        %v3523 = vpop.permute.xlu0 %3522
        %3524 = vrot.lane.b32.xlu0 %v3353, 64
        %v3525 = vpop.permute.xlu0 %3524
        %3526 = vrot.lane.b32.xlu0 %v3354, 64
        %v3527 = vpop.permute.xlu0 %3526
        %3528 = vrot.lane.b32.xlu0 %v3355, 64
        %v3529 = vpop.permute.xlu0 %3528
        %3530 = vrot.lane.b32.xlu0 %v3356, 64
        %v3531 = vpop.permute.xlu0 %3530
        %3532 = vrot.lane.b32.xlu0 %v3357, 64
        %v3533 = vpop.permute.xlu0 %3532
        %3534 = vrot.lane.b32.xlu0 %v3358, 64
        %v3535 = vpop.permute.xlu0 %3534
        %3536 = vrot.lane.b32.xlu0 %v3359, 64
        %v3537 = vpop.permute.xlu0 %3536
        %3538 = vrot.lane.b32.xlu0 %v3360, 64
        %v3539 = vpop.permute.xlu0 %3538
        %3540 = vrot.lane.b32.xlu0 %v3361, 64
        %v3541 = vpop.permute.xlu0 %3540
        %3542 = vrot.lane.b32.xlu0 %v3362, 64
        %v3543 = vpop.permute.xlu0 %3542
        %3544 = vrot.lane.b32.xlu0 %v3363, 64
        %v3545 = vpop.permute.xlu0 %3544
        %3546 = vrot.lane.b32.xlu0 %v3364, 64
        %v3547 = vpop.permute.xlu0 %3546
        %3548 = vrot.lane.b32.xlu0 %v3365, 64
        %v3549 = vpop.permute.xlu0 %3548
        %3550 = vrot.lane.b32.xlu0 %v3366, 64
        %v3551 = vpop.permute.xlu0 %3550
        %3552 = vrot.lane.b32.xlu0 %v3367, 64
        %v3553 = vpop.permute.xlu0 %3552
        %3554 = vrot.lane.b32.xlu0 %v3368, 64
        %v3555 = vpop.permute.xlu0 %3554
        %3556 = vrot.lane.b32.xlu0 %v3369, 64
        %v3557 = vpop.permute.xlu0 %3556
        %3558 = vrot.lane.b32.xlu0 %v3370, 64
        %v3559 = vpop.permute.xlu0 %3558
        %3560 = vrot.lane.b32.xlu0 %v3371, 64
        %v3561 = vpop.permute.xlu0 %3560
        %3562 = vrot.lane.b32.xlu0 %v3372, 64
        %v3563 = vpop.permute.xlu0 %3562
        %3564 = vrot.lane.b32.xlu0 %v3373, 64
        %v3565 = vpop.permute.xlu0 %3564
        %3566 = vrot.lane.b32.xlu0 %v3374, 64
        %v3567 = vpop.permute.xlu0 %3566
        %3568 = vrot.lane.b32.xlu0 %v3375, 64
        %v3569 = vpop.permute.xlu0 %3568
        %3570 = vrot.lane.b32.xlu0 %v3376, 64
        %v3571 = vpop.permute.xlu0 %3570
        %3572 = vrot.lane.b32.xlu0 %v3377, 64
        %v3573 = vpop.permute.xlu0 %3572
        %3574 = vrot.lane.b32.xlu0 %v3378, 64
        %v3575 = vpop.permute.xlu0 %3574
        %3576 = vrot.lane.b32.xlu0 %v3379, 64
        %v3577 = vpop.permute.xlu0 %3576
        %3578 = vrot.lane.b32.xlu0 %v3380, 64
        %v3579 = vpop.permute.xlu0 %3578
        %3580 = vrot.lane.b32.xlu0 %v3381, 64
        %v3581 = vpop.permute.xlu0 %3580
        %3582 = vrot.lane.b32.xlu0 %v3382, 64
        %v3583 = vpop.permute.xlu0 %3582
        %3584 = vrot.lane.b32.xlu0 %v3383, 64
        %v3585 = vpop.permute.xlu0 %3584
        %3586 = vrot.lane.b32.xlu0 %v3384, 64
        %v3587 = vpop.permute.xlu0 %3586
        %3588 = vrot.lane.b32.xlu0 %v3385, 64
        %v3589 = vpop.permute.xlu0 %3588
        %3590 = vrot.lane.b32.xlu0 %v3386, 64
        %v3591 = vpop.permute.xlu0 %3590
        %3592 = vrot.lane.b32.xlu0 %v3387, 64
        %v3593 = vpop.permute.xlu0 %3592
        %3594 = vrot.lane.b32.xlu0 %v3388, 64
        %v3595 = vpop.permute.xlu0 %3594
        %3596 = vrot.lane.b32.xlu0 %v3389, 64
        %v3597 = vpop.permute.xlu0 %3596
        %3598 = vrot.lane.b32.xlu0 %v3390, 64
        %v3599 = vpop.permute.xlu0 %3598
        %3600 = vrot.lane.b32.xlu0 %v3391, 64
        %v3601 = vpop.permute.xlu0 %3600
        %3602 = vrot.lane.b32.xlu0 %v3392, 64
        %v3603 = vpop.permute.xlu0 %3602
        %3604 = vrot.lane.b32.xlu0 %v3393, 64
        %v3605 = vpop.permute.xlu0 %3604
        %3606 = vrot.lane.b32.xlu0 %v3394, 64
        %v3607 = vpop.permute.xlu0 %3606
        %3608 = vrot.lane.b32.xlu0 %v3395, 64
        %v3609 = vpop.permute.xlu0 %3608
        %3610 = vrot.lane.b32.xlu0 %v3396, 64
        %v3611 = vpop.permute.xlu0 %3610
        %3612 = vrot.lane.b32.xlu0 %v3397, 64
        %v3613 = vpop.permute.xlu0 %3612
        %3614 = vrot.lane.b32.xlu0 %v3398, 64
        %v3615 = vpop.permute.xlu0 %3614
        %3616 = vrot.lane.b32.xlu0 %v3399, 64
        %v3617 = vpop.permute.xlu0 %3616
        %3618 = vrot.lane.b32.xlu0 %v3400, 64
        %v3619 = vpop.permute.xlu0 %3618
        %3620 = vrot.lane.b32.xlu0 %v3401, 64
        %v3621 = vpop.permute.xlu0 %3620
        %3622 = vrot.lane.b32.xlu0 %v3402, 64
        %v3623 = vpop.permute.xlu0 %3622
        %3624 = vrot.lane.b32.xlu0 %v3403, 64
        %v3625 = vpop.permute.xlu0 %3624
        %3626 = vrot.lane.b32.xlu0 %v3404, 64
        %v3627 = vpop.permute.xlu0 %3626
        %3628 = vrot.lane.b32.xlu0 %v3405, 64
        %v3629 = vpop.permute.xlu0 %3628
        %3630 = vrot.lane.b32.xlu0 %v3406, 64
        %v3631 = vpop.permute.xlu0 %3630
        %3632 = vrot.lane.b32.xlu0 %v3407, 64
        %v3633 = vpop.permute.xlu0 %3632
        %3634 = vrot.lane.b32.xlu0 %v3408, 64
        %v3635 = vpop.permute.xlu0 %3634
        %3636 = vrot.lane.b32.xlu0 %v3409, 64
        %v3637 = vpop.permute.xlu0 %3636
        %3638 = vrot.lane.b32.xlu0 %v3410, 64
        %v3639 = vpop.permute.xlu0 %3638
        %3640 = vrot.lane.b32.xlu0 %v3411, 64
        %v3641 = vpop.permute.xlu0 %3640
        %3642 = vrot.lane.b32.xlu0 %v3412, 64
        %v3643 = vpop.permute.xlu0 %3642
        %3644 = vrot.lane.b32.xlu0 %v3413, 64
        %v3645 = vpop.permute.xlu0 %3644
        %3646 = vrot.lane.b32.xlu0 %v3414, 64
        %v3647 = vpop.permute.xlu0 %3646
        %3648 = vrot.lane.b32.xlu0 %v3415, 64
        %v3649 = vpop.permute.xlu0 %3648
        %3650 = vrot.lane.b32.xlu0 %v3416, 64
        %v3651 = vpop.permute.xlu0 %3650
        %3652 = vrot.lane.b32.xlu0 %v3417, 64
        %v3653 = vpop.permute.xlu0 %3652
        %3654 = vrot.lane.b32.xlu0 %v3418, 64
        %v3655 = vpop.permute.xlu0 %3654
        %3656 = vrot.lane.b32.xlu0 %v3419, 64
        %v3657 = vpop.permute.xlu0 %3656
        %3658 = vrot.lane.b32.xlu0 %v3420, 64
        %v3659 = vpop.permute.xlu0 %3658
        %3660 = vrot.lane.b32.xlu0 %v3421, 64
        %v3661 = vpop.permute.xlu0 %3660
        %3742 = vst.msk [vmem:[#allocation3 + $0x8] sm:$0xf] %vm2138, %v3503
        %3743 = vst.msk [vmem:[#allocation3 + $0x1c] sm:$0xf] %vm2138, %v3505
        %3744 = vst.msk [vmem:[#allocation3 + $0x30] sm:$0xf] %vm2138, %v3507
        %3745 = vst.msk [vmem:[#allocation3 + $0x44] sm:$0xf] %vm2138, %v3509
        %3746 = vst.msk [vmem:[#allocation3 + $0x58] sm:$0xf] %vm2138, %v3511
        %3747 = vst.msk [vmem:[#allocation3 + $0x6c] sm:$0xf] %vm2138, %v3513
        %3748 = vst.msk [vmem:[#allocation3 + $0x80] sm:$0xf] %vm2138, %v3515
        %3749 = vst.msk [vmem:[#allocation3 + $0x94] sm:$0xf] %vm2138, %v3517
        %3750 = vst.msk [vmem:[#allocation3 + $0xa8] sm:$0xf] %vm2138, %v3519
        %3751 = vst.msk [vmem:[#allocation3 + $0xbc] sm:$0xf] %vm2138, %v3521
        %3752 = vst.msk [vmem:[#allocation3 + $0xd0] sm:$0xf] %vm2138, %v3523
        %3753 = vst.msk [vmem:[#allocation3 + $0xe4] sm:$0xf] %vm2138, %v3525
        %3754 = vst.msk [vmem:[#allocation3 + $0xf8] sm:$0xf] %vm2138, %v3527
        %3755 = vst.msk [vmem:[#allocation3 + $0x10c] sm:$0xf] %vm2138, %v3529
        %3756 = vst.msk [vmem:[#allocation3 + $0x120] sm:$0xf] %vm2138, %v3531
        %3757 = vst.msk [vmem:[#allocation3 + $0x134] sm:$0xf] %vm2138, %v3533
        %3758 = vst.msk [vmem:[#allocation3 + $0x148] sm:$0xf] %vm2138, %v3535
        %3759 = vst.msk [vmem:[#allocation3 + $0x15c] sm:$0xf] %vm2138, %v3537
        %3760 = vst.msk [vmem:[#allocation3 + $0x170] sm:$0xf] %vm2138, %v3539
        %3761 = vst.msk [vmem:[#allocation3 + $0x184] sm:$0xf] %vm2138, %v3541
        %3762 = vst.msk [vmem:[#allocation3 + $0x198] sm:$0xf] %vm2138, %v3543
        %3763 = vst.msk [vmem:[#allocation3 + $0x1ac] sm:$0xf] %vm2138, %v3545
        %3764 = vst.msk [vmem:[#allocation3 + $0x1c0] sm:$0xf] %vm2138, %v3547
        %3765 = vst.msk [vmem:[#allocation3 + $0x1d4] sm:$0xf] %vm2138, %v3549
        %3766 = vst.msk [vmem:[#allocation3 + $0x1e8] sm:$0xf] %vm2138, %v3551
        %3767 = vst.msk [vmem:[#allocation3 + $0x1fc] sm:$0xf] %vm2138, %v3553
        %3768 = vst.msk [vmem:[#allocation3 + $0x210] sm:$0xf] %vm2138, %v3555
        %3769 = vst.msk [vmem:[#allocation3 + $0x224] sm:$0xf] %vm2138, %v3557
        %3770 = vst.msk [vmem:[#allocation3 + $0x238] sm:$0xf] %vm2138, %v3559
        %3771 = vst.msk [vmem:[#allocation3 + $0x24c] sm:$0xf] %vm2138, %v3561
        %3772 = vst.msk [vmem:[#allocation3 + $0x260] sm:$0xf] %vm2138, %v3563
        %3773 = vst.msk [vmem:[#allocation3 + $0x274] sm:$0xf] %vm2138, %v3565
        %3774 = vst.msk [vmem:[#allocation3 + $0x288] sm:$0xf] %vm2138, %v3567
        %3775 = vst.msk [vmem:[#allocation3 + $0x29c] sm:$0xf] %vm2138, %v3569
        %3776 = vst.msk [vmem:[#allocation3 + $0x2b0] sm:$0xf] %vm2138, %v3571
        %3777 = vst.msk [vmem:[#allocation3 + $0x2c4] sm:$0xf] %vm2138, %v3573
        %3778 = vst.msk [vmem:[#allocation3 + $0x2d8] sm:$0xf] %vm2138, %v3575
        %3779 = vst.msk [vmem:[#allocation3 + $0x2ec] sm:$0xf] %vm2138, %v3577
        %3780 = vst.msk [vmem:[#allocation3 + $0x300] sm:$0xf] %vm2138, %v3579
        %3781 = vst.msk [vmem:[#allocation3 + $0x314] sm:$0xf] %vm2138, %v3581
        %3782 = vst.msk [vmem:[#allocation3 + $0x328] sm:$0xf] %vm2138, %v3583
        %3783 = vst.msk [vmem:[#allocation3 + $0x33c] sm:$0xf] %vm2138, %v3585
        %3784 = vst.msk [vmem:[#allocation3 + $0x350] sm:$0xf] %vm2138, %v3587
        %3785 = vst.msk [vmem:[#allocation3 + $0x364] sm:$0xf] %vm2138, %v3589
        %3786 = vst.msk [vmem:[#allocation3 + $0x378] sm:$0xf] %vm2138, %v3591
        %3787 = vst.msk [vmem:[#allocation3 + $0x38c] sm:$0xf] %vm2138, %v3593
        %3788 = vst.msk [vmem:[#allocation3 + $0x3a0] sm:$0xf] %vm2138, %v3595
        %3789 = vst.msk [vmem:[#allocation3 + $0x3b4] sm:$0xf] %vm2138, %v3597
        %3790 = vst.msk [vmem:[#allocation3 + $0x3c8] sm:$0xf] %vm2138, %v3599
        %3791 = vst.msk [vmem:[#allocation3 + $0x3dc] sm:$0xf] %vm2138, %v3601
        %3792 = vst.msk [vmem:[#allocation3 + $0x3f0] sm:$0xf] %vm2138, %v3603
        %3793 = vst.msk [vmem:[#allocation3 + $0x404] sm:$0xf] %vm2138, %v3605
        %3794 = vst.msk [vmem:[#allocation3 + $0x418] sm:$0xf] %vm2138, %v3607
        %3795 = vst.msk [vmem:[#allocation3 + $0x42c] sm:$0xf] %vm2138, %v3609
        %3796 = vst.msk [vmem:[#allocation3 + $0x440] sm:$0xf] %vm2138, %v3611
        %3797 = vst.msk [vmem:[#allocation3 + $0x454] sm:$0xf] %vm2138, %v3613
        %3798 = vst.msk [vmem:[#allocation3 + $0x468] sm:$0xf] %vm2138, %v3615
        %3799 = vst.msk [vmem:[#allocation3 + $0x47c] sm:$0xf] %vm2138, %v3617
        %3800 = vst.msk [vmem:[#allocation3 + $0x490] sm:$0xf] %vm2138, %v3619
        %3801 = vst.msk [vmem:[#allocation3 + $0x4a4] sm:$0xf] %vm2138, %v3621
        %3802 = vst.msk [vmem:[#allocation3 + $0x4b8] sm:$0xf] %vm2138, %v3623
        %3803 = vst.msk [vmem:[#allocation3 + $0x4cc] sm:$0xf] %vm2138, %v3625
        %3804 = vst.msk [vmem:[#allocation3 + $0x4e0] sm:$0xf] %vm2138, %v3627
        %3805 = vst.msk [vmem:[#allocation3 + $0x4f4] sm:$0xf] %vm2138, %v3629
        %3806 = vst.msk [vmem:[#allocation3 + $0x508] sm:$0xf] %vm2138, %v3631
        %3807 = vst.msk [vmem:[#allocation3 + $0x51c] sm:$0xf] %vm2138, %v3633
        %3808 = vst.msk [vmem:[#allocation3 + $0x530] sm:$0xf] %vm2138, %v3635
        %3809 = vst.msk [vmem:[#allocation3 + $0x544] sm:$0xf] %vm2138, %v3637
        %3810 = vst.msk [vmem:[#allocation3 + $0x558] sm:$0xf] %vm2138, %v3639
        %3811 = vst.msk [vmem:[#allocation3 + $0x56c] sm:$0xf] %vm2138, %v3641
        %3812 = vst.msk [vmem:[#allocation3 + $0x580] sm:$0xf] %vm2138, %v3643
        %3813 = vst.msk [vmem:[#allocation3 + $0x594] sm:$0xf] %vm2138, %v3645
        %3814 = vst.msk [vmem:[#allocation3 + $0x5a8] sm:$0xf] %vm2138, %v3647
        %3815 = vst.msk [vmem:[#allocation3 + $0x5bc] sm:$0xf] %vm2138, %v3649
        %3816 = vst.msk [vmem:[#allocation3 + $0x5d0] sm:$0xf] %vm2138, %v3651
        %3817 = vst.msk [vmem:[#allocation3 + $0x5e4] sm:$0xf] %vm2138, %v3653
        %3818 = vst.msk [vmem:[#allocation3 + $0x5f8] sm:$0xf] %vm2138, %v3655
        %3819 = vst.msk [vmem:[#allocation3 + $0x60c] sm:$0xf] %vm2138, %v3657
        %3820 = vst.msk [vmem:[#allocation3 + $0x620] sm:$0xf] %vm2138, %v3659
        %3821 = vst.msk [vmem:[#allocation3 + $0x634] sm:$0xf] %vm2138, %v3661
        %s3822 = scalar_lea.vmem [#allocation2], 160
        %v3823 = vld [vmem:[%s3822] sm:$0xff]
        %v3824 = vld [vmem:[%s3822 + $0x8] sm:$0xff]
        %v3825 = vld [vmem:[%s3822 + $0x10] sm:$0xff]
        %v3826 = vld [vmem:[%s3822 + $0x18] sm:$0xff]
        %v3827 = vld [vmem:[%s3822 + $0x20] sm:$0xff]
        %v3828 = vld [vmem:[%s3822 + $0x28] sm:$0xff]
        %v3829 = vld [vmem:[%s3822 + $0x30] sm:$0xff]
        %v3830 = vld [vmem:[%s3822 + $0x38] sm:$0xff]
        %v3831 = vld [vmem:[%s3822 + $0x40] sm:$0xff]
        %v3832 = vld [vmem:[%s3822 + $0x48] sm:$0xff]
        %v3833 = vld [vmem:[%s3822 + $0x50] sm:$0xff]
        %v3834 = vld [vmem:[%s3822 + $0x58] sm:$0xff]
        %v3835 = vld [vmem:[%s3822 + $0x60] sm:$0xff]
        %v3836 = vld [vmem:[%s3822 + $0x68] sm:$0xff]
        %v3837 = vld [vmem:[%s3822 + $0x70] sm:$0xff]
        %v3838 = vld [vmem:[%s3822 + $0x78] sm:$0xff]
        %v3839 = vld [vmem:[%s3822 + $0x80] sm:$0xff]
        %v3840 = vld [vmem:[%s3822 + $0x88] sm:$0xff]
        %v3841 = vld [vmem:[%s3822 + $0x90] sm:$0xff]
        %v3842 = vld [vmem:[%s3822 + $0x98] sm:$0xff]
        %v3843 = vld [vmem:[%s3822 + $0xa0] sm:$0xff]
        %v3844 = vld [vmem:[%s3822 + $0xa8] sm:$0xff]
        %v3845 = vld [vmem:[%s3822 + $0xb0] sm:$0xff]
        %v3846 = vld [vmem:[%s3822 + $0xb8] sm:$0xff]
        %v3847 = vld [vmem:[%s3822 + $0xc0] sm:$0xff]
        %v3848 = vld [vmem:[%s3822 + $0xc8] sm:$0xff]
        %v3849 = vld [vmem:[%s3822 + $0xd0] sm:$0xff]
        %v3850 = vld [vmem:[%s3822 + $0xd8] sm:$0xff]
        %v3851 = vld [vmem:[%s3822 + $0xe0] sm:$0xff]
        %v3852 = vld [vmem:[%s3822 + $0xe8] sm:$0xff]
        %v3853 = vld [vmem:[%s3822 + $0xf0] sm:$0xff]
        %v3854 = vld [vmem:[%s3822 + $0xf8] sm:$0xff]
        %v3855 = vld [vmem:[%s3822 + $0x100] sm:$0xff]
        %v3856 = vld [vmem:[%s3822 + $0x108] sm:$0xff]
        %v3857 = vld [vmem:[%s3822 + $0x110] sm:$0xff]
        %v3858 = vld [vmem:[%s3822 + $0x118] sm:$0xff]
        %v3859 = vld [vmem:[%s3822 + $0x120] sm:$0xff]
        %v3860 = vld [vmem:[%s3822 + $0x128] sm:$0xff]
        %v3861 = vld [vmem:[%s3822 + $0x130] sm:$0xff]
        %v3862 = vld [vmem:[%s3822 + $0x138] sm:$0xff]
        %v3863 = vld [vmem:[%s3822 + $0x140] sm:$0xff]
        %v3864 = vld [vmem:[%s3822 + $0x148] sm:$0xff]
        %v3865 = vld [vmem:[%s3822 + $0x150] sm:$0xff]
        %v3866 = vld [vmem:[%s3822 + $0x158] sm:$0xff]
        %v3867 = vld [vmem:[%s3822 + $0x160] sm:$0xff]
        %v3868 = vld [vmem:[%s3822 + $0x168] sm:$0xff]
        %v3869 = vld [vmem:[%s3822 + $0x170] sm:$0xff]
        %v3870 = vld [vmem:[%s3822 + $0x178] sm:$0xff]
        %v3871 = vld [vmem:[%s3822 + $0x180] sm:$0xff]
        %v3872 = vld [vmem:[%s3822 + $0x188] sm:$0xff]
        %v3873 = vld [vmem:[%s3822 + $0x190] sm:$0xff]
        %v3874 = vld [vmem:[%s3822 + $0x198] sm:$0xff]
        %v3875 = vld [vmem:[%s3822 + $0x1a0] sm:$0xff]
        %v3876 = vld [vmem:[%s3822 + $0x1a8] sm:$0xff]
        %v3877 = vld [vmem:[%s3822 + $0x1b0] sm:$0xff]
        %v3878 = vld [vmem:[%s3822 + $0x1b8] sm:$0xff]
        %v3879 = vld [vmem:[%s3822 + $0x1c0] sm:$0xff]
        %v3880 = vld [vmem:[%s3822 + $0x1c8] sm:$0xff]
        %v3881 = vld [vmem:[%s3822 + $0x1d0] sm:$0xff]
        %v3882 = vld [vmem:[%s3822 + $0x1d8] sm:$0xff]
        %v3883 = vld [vmem:[%s3822 + $0x1e0] sm:$0xff]
        %v3884 = vld [vmem:[%s3822 + $0x1e8] sm:$0xff]
        %v3885 = vld [vmem:[%s3822 + $0x1f0] sm:$0xff]
        %v3886 = vld [vmem:[%s3822 + $0x1f8] sm:$0xff]
        %v3887 = vld [vmem:[%s3822 + $0x200] sm:$0xff]
        %v3888 = vld [vmem:[%s3822 + $0x208] sm:$0xff]
        %v3889 = vld [vmem:[%s3822 + $0x210] sm:$0xff]
        %v3890 = vld [vmem:[%s3822 + $0x218] sm:$0xff]
        %v3891 = vld [vmem:[%s3822 + $0x220] sm:$0xff]
        %v3892 = vld [vmem:[%s3822 + $0x228] sm:$0xff]
        %v3893 = vld [vmem:[%s3822 + $0x230] sm:$0xff]
        %v3894 = vld [vmem:[%s3822 + $0x238] sm:$0xff]
        %v3895 = vld [vmem:[%s3822 + $0x240] sm:$0xff]
        %v3896 = vld [vmem:[%s3822 + $0x248] sm:$0xff]
        %v3897 = vld [vmem:[%s3822 + $0x250] sm:$0xff]
        %v3898 = vld [vmem:[%s3822 + $0x258] sm:$0xff]
        %v3899 = vld [vmem:[%s3822 + $0x260] sm:$0xff]
        %v3900 = vld [vmem:[%s3822 + $0x268] sm:$0xff]
        %v3901 = vld [vmem:[%s3822 + $0x270] sm:$0xff]
        %v3902 = vld [vmem:[%s3822 + $0x278] sm:$0xff]
        %v3903 = vpack.c.bf16 %v3823, %v3823
        %v3904 = vpack.c.bf16 %v3824, %v3824
        %v3905 = vpack.c.bf16 %v3825, %v3825
        %v3906 = vpack.c.bf16 %v3826, %v3826
        %v3907 = vpack.c.bf16 %v3827, %v3827
        %v3908 = vpack.c.bf16 %v3828, %v3828
        %v3909 = vpack.c.bf16 %v3829, %v3829
        %v3910 = vpack.c.bf16 %v3830, %v3830
        %v3911 = vpack.c.bf16 %v3831, %v3831
        %v3912 = vpack.c.bf16 %v3832, %v3832
        %v3913 = vpack.c.bf16 %v3833, %v3833
        %v3914 = vpack.c.bf16 %v3834, %v3834
        %v3915 = vpack.c.bf16 %v3835, %v3835
        %v3916 = vpack.c.bf16 %v3836, %v3836
        %v3917 = vpack.c.bf16 %v3837, %v3837
        %v3918 = vpack.c.bf16 %v3838, %v3838
        %v3919 = vpack.c.bf16 %v3839, %v3839
        %v3920 = vpack.c.bf16 %v3840, %v3840
        %v3921 = vpack.c.bf16 %v3841, %v3841
        %v3922 = vpack.c.bf16 %v3842, %v3842
        %v3923 = vpack.c.bf16 %v3843, %v3843
        %v3924 = vpack.c.bf16 %v3844, %v3844
        %v3925 = vpack.c.bf16 %v3845, %v3845
        %v3926 = vpack.c.bf16 %v3846, %v3846
        %v3927 = vpack.c.bf16 %v3847, %v3847
        %v3928 = vpack.c.bf16 %v3848, %v3848
        %v3929 = vpack.c.bf16 %v3849, %v3849
        %v3930 = vpack.c.bf16 %v3850, %v3850
        %v3931 = vpack.c.bf16 %v3851, %v3851
        %v3932 = vpack.c.bf16 %v3852, %v3852
        %v3933 = vpack.c.bf16 %v3853, %v3853
        %v3934 = vpack.c.bf16 %v3854, %v3854
        %v3935 = vpack.c.bf16 %v3855, %v3855
        %v3936 = vpack.c.bf16 %v3856, %v3856
        %v3937 = vpack.c.bf16 %v3857, %v3857
        %v3938 = vpack.c.bf16 %v3858, %v3858
        %v3939 = vpack.c.bf16 %v3859, %v3859
        %v3940 = vpack.c.bf16 %v3860, %v3860
        %v3941 = vpack.c.bf16 %v3861, %v3861
        %v3942 = vpack.c.bf16 %v3862, %v3862
        %v3943 = vpack.c.bf16 %v3863, %v3863
        %v3944 = vpack.c.bf16 %v3864, %v3864
        %v3945 = vpack.c.bf16 %v3865, %v3865
        %v3946 = vpack.c.bf16 %v3866, %v3866
        %v3947 = vpack.c.bf16 %v3867, %v3867
        %v3948 = vpack.c.bf16 %v3868, %v3868
        %v3949 = vpack.c.bf16 %v3869, %v3869
        %v3950 = vpack.c.bf16 %v3870, %v3870
        %v3951 = vpack.c.bf16 %v3871, %v3871
        %v3952 = vpack.c.bf16 %v3872, %v3872
        %v3953 = vpack.c.bf16 %v3873, %v3873
        %v3954 = vpack.c.bf16 %v3874, %v3874
        %v3955 = vpack.c.bf16 %v3875, %v3875
        %v3956 = vpack.c.bf16 %v3876, %v3876
        %v3957 = vpack.c.bf16 %v3877, %v3877
        %v3958 = vpack.c.bf16 %v3878, %v3878
        %v3959 = vpack.c.bf16 %v3879, %v3879
        %v3960 = vpack.c.bf16 %v3880, %v3880
        %v3961 = vpack.c.bf16 %v3881, %v3881
        %v3962 = vpack.c.bf16 %v3882, %v3882
        %v3963 = vpack.c.bf16 %v3883, %v3883
        %v3964 = vpack.c.bf16 %v3884, %v3884
        %v3965 = vpack.c.bf16 %v3885, %v3885
        %v3966 = vpack.c.bf16 %v3886, %v3886
        %v3967 = vpack.c.bf16 %v3887, %v3887
        %v3968 = vpack.c.bf16 %v3888, %v3888
        %v3969 = vpack.c.bf16 %v3889, %v3889
        %v3970 = vpack.c.bf16 %v3890, %v3890
        %v3971 = vpack.c.bf16 %v3891, %v3891
        %v3972 = vpack.c.bf16 %v3892, %v3892
        %v3973 = vpack.c.bf16 %v3893, %v3893
        %v3974 = vpack.c.bf16 %v3894, %v3894
        %v3975 = vpack.c.bf16 %v3895, %v3895
        %v3976 = vpack.c.bf16 %v3896, %v3896
        %v3977 = vpack.c.bf16 %v3897, %v3897
        %v3978 = vpack.c.bf16 %v3898, %v3898
        %v3979 = vpack.c.bf16 %v3899, %v3899
        %v3980 = vpack.c.bf16 %v3900, %v3900
        %v3981 = vpack.c.bf16 %v3901, %v3901
        %v3982 = vpack.c.bf16 %v3902, %v3902
        %3983 = vst.msk [vmem:[#allocation3 + $0xc] sm:$0xf] %vm1576, %v3903
        %3984 = vst.msk [vmem:[#allocation3 + $0x20] sm:$0xf] %vm1576, %v3904
        %3985 = vst.msk [vmem:[#allocation3 + $0x34] sm:$0xf] %vm1576, %v3905
        %3986 = vst.msk [vmem:[#allocation3 + $0x48] sm:$0xf] %vm1576, %v3906
        %3987 = vst.msk [vmem:[#allocation3 + $0x5c] sm:$0xf] %vm1576, %v3907
        %3988 = vst.msk [vmem:[#allocation3 + $0x70] sm:$0xf] %vm1576, %v3908
        %3989 = vst.msk [vmem:[#allocation3 + $0x84] sm:$0xf] %vm1576, %v3909
        %3990 = vst.msk [vmem:[#allocation3 + $0x98] sm:$0xf] %vm1576, %v3910
        %3991 = vst.msk [vmem:[#allocation3 + $0xac] sm:$0xf] %vm1576, %v3911
        %3992 = vst.msk [vmem:[#allocation3 + $0xc0] sm:$0xf] %vm1576, %v3912
        %3993 = vst.msk [vmem:[#allocation3 + $0xd4] sm:$0xf] %vm1576, %v3913
        %3994 = vst.msk [vmem:[#allocation3 + $0xe8] sm:$0xf] %vm1576, %v3914
        %3995 = vst.msk [vmem:[#allocation3 + $0xfc] sm:$0xf] %vm1576, %v3915
        %3996 = vst.msk [vmem:[#allocation3 + $0x110] sm:$0xf] %vm1576, %v3916
        %3997 = vst.msk [vmem:[#allocation3 + $0x124] sm:$0xf] %vm1576, %v3917
        %3998 = vst.msk [vmem:[#allocation3 + $0x138] sm:$0xf] %vm1576, %v3918
        %3999 = vst.msk [vmem:[#allocation3 + $0x14c] sm:$0xf] %vm1576, %v3919
        %4000 = vst.msk [vmem:[#allocation3 + $0x160] sm:$0xf] %vm1576, %v3920
        %4001 = vst.msk [vmem:[#allocation3 + $0x174] sm:$0xf] %vm1576, %v3921
        %4002 = vst.msk [vmem:[#allocation3 + $0x188] sm:$0xf] %vm1576, %v3922
        %4003 = vst.msk [vmem:[#allocation3 + $0x19c] sm:$0xf] %vm1576, %v3923
        %4004 = vst.msk [vmem:[#allocation3 + $0x1b0] sm:$0xf] %vm1576, %v3924
        %4005 = vst.msk [vmem:[#allocation3 + $0x1c4] sm:$0xf] %vm1576, %v3925
        %4006 = vst.msk [vmem:[#allocation3 + $0x1d8] sm:$0xf] %vm1576, %v3926
        %4007 = vst.msk [vmem:[#allocation3 + $0x1ec] sm:$0xf] %vm1576, %v3927
        %4008 = vst.msk [vmem:[#allocation3 + $0x200] sm:$0xf] %vm1576, %v3928
        %4009 = vst.msk [vmem:[#allocation3 + $0x214] sm:$0xf] %vm1576, %v3929
        %4010 = vst.msk [vmem:[#allocation3 + $0x228] sm:$0xf] %vm1576, %v3930
        %4011 = vst.msk [vmem:[#allocation3 + $0x23c] sm:$0xf] %vm1576, %v3931
        %4012 = vst.msk [vmem:[#allocation3 + $0x250] sm:$0xf] %vm1576, %v3932
        %4013 = vst.msk [vmem:[#allocation3 + $0x264] sm:$0xf] %vm1576, %v3933
        %4014 = vst.msk [vmem:[#allocation3 + $0x278] sm:$0xf] %vm1576, %v3934
        %4015 = vst.msk [vmem:[#allocation3 + $0x28c] sm:$0xf] %vm1576, %v3935
        %4016 = vst.msk [vmem:[#allocation3 + $0x2a0] sm:$0xf] %vm1576, %v3936
        %4017 = vst.msk [vmem:[#allocation3 + $0x2b4] sm:$0xf] %vm1576, %v3937
        %4018 = vst.msk [vmem:[#allocation3 + $0x2c8] sm:$0xf] %vm1576, %v3938
        %4019 = vst.msk [vmem:[#allocation3 + $0x2dc] sm:$0xf] %vm1576, %v3939
        %4020 = vst.msk [vmem:[#allocation3 + $0x2f0] sm:$0xf] %vm1576, %v3940
        %4021 = vst.msk [vmem:[#allocation3 + $0x304] sm:$0xf] %vm1576, %v3941
        %4022 = vst.msk [vmem:[#allocation3 + $0x318] sm:$0xf] %vm1576, %v3942
        %4023 = vst.msk [vmem:[#allocation3 + $0x32c] sm:$0xf] %vm1576, %v3943
        %4024 = vst.msk [vmem:[#allocation3 + $0x340] sm:$0xf] %vm1576, %v3944
        %4025 = vst.msk [vmem:[#allocation3 + $0x354] sm:$0xf] %vm1576, %v3945
        %4026 = vst.msk [vmem:[#allocation3 + $0x368] sm:$0xf] %vm1576, %v3946
        %4027 = vst.msk [vmem:[#allocation3 + $0x37c] sm:$0xf] %vm1576, %v3947
        %4028 = vst.msk [vmem:[#allocation3 + $0x390] sm:$0xf] %vm1576, %v3948
        %4029 = vst.msk [vmem:[#allocation3 + $0x3a4] sm:$0xf] %vm1576, %v3949
        %4030 = vst.msk [vmem:[#allocation3 + $0x3b8] sm:$0xf] %vm1576, %v3950
        %4031 = vst.msk [vmem:[#allocation3 + $0x3cc] sm:$0xf] %vm1576, %v3951
        %4032 = vst.msk [vmem:[#allocation3 + $0x3e0] sm:$0xf] %vm1576, %v3952
        %4033 = vst.msk [vmem:[#allocation3 + $0x3f4] sm:$0xf] %vm1576, %v3953
        %4034 = vst.msk [vmem:[#allocation3 + $0x408] sm:$0xf] %vm1576, %v3954
        %4035 = vst.msk [vmem:[#allocation3 + $0x41c] sm:$0xf] %vm1576, %v3955
        %4036 = vst.msk [vmem:[#allocation3 + $0x430] sm:$0xf] %vm1576, %v3956
        %4037 = vst.msk [vmem:[#allocation3 + $0x444] sm:$0xf] %vm1576, %v3957
        %4038 = vst.msk [vmem:[#allocation3 + $0x458] sm:$0xf] %vm1576, %v3958
        %4039 = vst.msk [vmem:[#allocation3 + $0x46c] sm:$0xf] %vm1576, %v3959
        %4040 = vst.msk [vmem:[#allocation3 + $0x480] sm:$0xf] %vm1576, %v3960
        %4041 = vst.msk [vmem:[#allocation3 + $0x494] sm:$0xf] %vm1576, %v3961
        %4042 = vst.msk [vmem:[#allocation3 + $0x4a8] sm:$0xf] %vm1576, %v3962
        %4043 = vst.msk [vmem:[#allocation3 + $0x4bc] sm:$0xf] %vm1576, %v3963
        %4044 = vst.msk [vmem:[#allocation3 + $0x4d0] sm:$0xf] %vm1576, %v3964
        %4045 = vst.msk [vmem:[#allocation3 + $0x4e4] sm:$0xf] %vm1576, %v3965
        %4046 = vst.msk [vmem:[#allocation3 + $0x4f8] sm:$0xf] %vm1576, %v3966
        %4047 = vst.msk [vmem:[#allocation3 + $0x50c] sm:$0xf] %vm1576, %v3967
        %4048 = vst.msk [vmem:[#allocation3 + $0x520] sm:$0xf] %vm1576, %v3968
        %4049 = vst.msk [vmem:[#allocation3 + $0x534] sm:$0xf] %vm1576, %v3969
        %4050 = vst.msk [vmem:[#allocation3 + $0x548] sm:$0xf] %vm1576, %v3970
        %4051 = vst.msk [vmem:[#allocation3 + $0x55c] sm:$0xf] %vm1576, %v3971
        %4052 = vst.msk [vmem:[#allocation3 + $0x570] sm:$0xf] %vm1576, %v3972
        %4053 = vst.msk [vmem:[#allocation3 + $0x584] sm:$0xf] %vm1576, %v3973
        %4054 = vst.msk [vmem:[#allocation3 + $0x598] sm:$0xf] %vm1576, %v3974
        %4055 = vst.msk [vmem:[#allocation3 + $0x5ac] sm:$0xf] %vm1576, %v3975
        %4056 = vst.msk [vmem:[#allocation3 + $0x5c0] sm:$0xf] %vm1576, %v3976
        %4057 = vst.msk [vmem:[#allocation3 + $0x5d4] sm:$0xf] %vm1576, %v3977
        %4058 = vst.msk [vmem:[#allocation3 + $0x5e8] sm:$0xf] %vm1576, %v3978
        %4059 = vst.msk [vmem:[#allocation3 + $0x5fc] sm:$0xf] %vm1576, %v3979
        %4060 = vst.msk [vmem:[#allocation3 + $0x610] sm:$0xf] %vm1576, %v3980
        %4061 = vst.msk [vmem:[#allocation3 + $0x624] sm:$0xf] %vm1576, %v3981
        %4062 = vst.msk [vmem:[#allocation3 + $0x638] sm:$0xf] %vm1576, %v3982
        %s4063 = scalar_lea.vmem [#allocation2], 168
        %v4064 = vld [vmem:[%s4063] sm:$0xff]
        %v4065 = vld [vmem:[%s4063 + $0x8] sm:$0xff]
        %v4066 = vld [vmem:[%s4063 + $0x10] sm:$0xff]
        %v4067 = vld [vmem:[%s4063 + $0x18] sm:$0xff]
        %v4068 = vld [vmem:[%s4063 + $0x20] sm:$0xff]
        %v4069 = vld [vmem:[%s4063 + $0x28] sm:$0xff]
        %v4070 = vld [vmem:[%s4063 + $0x30] sm:$0xff]
        %v4071 = vld [vmem:[%s4063 + $0x38] sm:$0xff]
        %v4072 = vld [vmem:[%s4063 + $0x40] sm:$0xff]
        %v4073 = vld [vmem:[%s4063 + $0x48] sm:$0xff]
        %v4074 = vld [vmem:[%s4063 + $0x50] sm:$0xff]
        %v4075 = vld [vmem:[%s4063 + $0x58] sm:$0xff]
        %v4076 = vld [vmem:[%s4063 + $0x60] sm:$0xff]
        %v4077 = vld [vmem:[%s4063 + $0x68] sm:$0xff]
        %v4078 = vld [vmem:[%s4063 + $0x70] sm:$0xff]
        %v4079 = vld [vmem:[%s4063 + $0x78] sm:$0xff]
        %v4080 = vld [vmem:[%s4063 + $0x80] sm:$0xff]
        %v4081 = vld [vmem:[%s4063 + $0x88] sm:$0xff]
        %v4082 = vld [vmem:[%s4063 + $0x90] sm:$0xff]
        %v4083 = vld [vmem:[%s4063 + $0x98] sm:$0xff]
        %v4084 = vld [vmem:[%s4063 + $0xa0] sm:$0xff]
        %v4085 = vld [vmem:[%s4063 + $0xa8] sm:$0xff]
        %v4086 = vld [vmem:[%s4063 + $0xb0] sm:$0xff]
        %v4087 = vld [vmem:[%s4063 + $0xb8] sm:$0xff]
        %v4088 = vld [vmem:[%s4063 + $0xc0] sm:$0xff]
        %v4089 = vld [vmem:[%s4063 + $0xc8] sm:$0xff]
        %v4090 = vld [vmem:[%s4063 + $0xd0] sm:$0xff]
        %v4091 = vld [vmem:[%s4063 + $0xd8] sm:$0xff]
        %v4092 = vld [vmem:[%s4063 + $0xe0] sm:$0xff]
        %v4093 = vld [vmem:[%s4063 + $0xe8] sm:$0xff]
        %v4094 = vld [vmem:[%s4063 + $0xf0] sm:$0xff]
        %v4095 = vld [vmem:[%s4063 + $0xf8] sm:$0xff]
        %v4096 = vld [vmem:[%s4063 + $0x100] sm:$0xff]
        %v4097 = vld [vmem:[%s4063 + $0x108] sm:$0xff]
        %v4098 = vld [vmem:[%s4063 + $0x110] sm:$0xff]
        %v4099 = vld [vmem:[%s4063 + $0x118] sm:$0xff]
        %v4100 = vld [vmem:[%s4063 + $0x120] sm:$0xff]
        %v4101 = vld [vmem:[%s4063 + $0x128] sm:$0xff]
        %v4102 = vld [vmem:[%s4063 + $0x130] sm:$0xff]
        %v4103 = vld [vmem:[%s4063 + $0x138] sm:$0xff]
        %v4104 = vld [vmem:[%s4063 + $0x140] sm:$0xff]
        %v4105 = vld [vmem:[%s4063 + $0x148] sm:$0xff]
        %v4106 = vld [vmem:[%s4063 + $0x150] sm:$0xff]
        %v4107 = vld [vmem:[%s4063 + $0x158] sm:$0xff]
        %v4108 = vld [vmem:[%s4063 + $0x160] sm:$0xff]
        %v4109 = vld [vmem:[%s4063 + $0x168] sm:$0xff]
        %v4110 = vld [vmem:[%s4063 + $0x170] sm:$0xff]
        %v4111 = vld [vmem:[%s4063 + $0x178] sm:$0xff]
        %v4112 = vld [vmem:[%s4063 + $0x180] sm:$0xff]
        %v4113 = vld [vmem:[%s4063 + $0x188] sm:$0xff]
        %v4114 = vld [vmem:[%s4063 + $0x190] sm:$0xff]
        %v4115 = vld [vmem:[%s4063 + $0x198] sm:$0xff]
        %v4116 = vld [vmem:[%s4063 + $0x1a0] sm:$0xff]
        %v4117 = vld [vmem:[%s4063 + $0x1a8] sm:$0xff]
        %v4118 = vld [vmem:[%s4063 + $0x1b0] sm:$0xff]
        %v4119 = vld [vmem:[%s4063 + $0x1b8] sm:$0xff]
        %v4120 = vld [vmem:[%s4063 + $0x1c0] sm:$0xff]
        %v4121 = vld [vmem:[%s4063 + $0x1c8] sm:$0xff]
        %v4122 = vld [vmem:[%s4063 + $0x1d0] sm:$0xff]
        %v4123 = vld [vmem:[%s4063 + $0x1d8] sm:$0xff]
        %v4124 = vld [vmem:[%s4063 + $0x1e0] sm:$0xff]
        %v4125 = vld [vmem:[%s4063 + $0x1e8] sm:$0xff]
        %v4126 = vld [vmem:[%s4063 + $0x1f0] sm:$0xff]
        %v4127 = vld [vmem:[%s4063 + $0x1f8] sm:$0xff]
        %v4128 = vld [vmem:[%s4063 + $0x200] sm:$0xff]
        %v4129 = vld [vmem:[%s4063 + $0x208] sm:$0xff]
        %v4130 = vld [vmem:[%s4063 + $0x210] sm:$0xff]
        %v4131 = vld [vmem:[%s4063 + $0x218] sm:$0xff]
        %v4132 = vld [vmem:[%s4063 + $0x220] sm:$0xff]
        %v4133 = vld [vmem:[%s4063 + $0x228] sm:$0xff]
        %v4134 = vld [vmem:[%s4063 + $0x230] sm:$0xff]
        %v4135 = vld [vmem:[%s4063 + $0x238] sm:$0xff]
        %v4136 = vld [vmem:[%s4063 + $0x240] sm:$0xff]
        %v4137 = vld [vmem:[%s4063 + $0x248] sm:$0xff]
        %v4138 = vld [vmem:[%s4063 + $0x250] sm:$0xff]
        %v4139 = vld [vmem:[%s4063 + $0x258] sm:$0xff]
        %v4140 = vld [vmem:[%s4063 + $0x260] sm:$0xff]
        %v4141 = vld [vmem:[%s4063 + $0x268] sm:$0xff]
        %v4142 = vld [vmem:[%s4063 + $0x270] sm:$0xff]
        %v4143 = vld [vmem:[%s4063 + $0x278] sm:$0xff]
        %v4144 = vpack.c.bf16 %v4064, %v4064
        %v4145 = vpack.c.bf16 %v4065, %v4065
        %v4146 = vpack.c.bf16 %v4066, %v4066
        %v4147 = vpack.c.bf16 %v4067, %v4067
        %v4148 = vpack.c.bf16 %v4068, %v4068
        %v4149 = vpack.c.bf16 %v4069, %v4069
        %v4150 = vpack.c.bf16 %v4070, %v4070
        %v4151 = vpack.c.bf16 %v4071, %v4071
        %v4152 = vpack.c.bf16 %v4072, %v4072
        %v4153 = vpack.c.bf16 %v4073, %v4073
        %v4154 = vpack.c.bf16 %v4074, %v4074
        %v4155 = vpack.c.bf16 %v4075, %v4075
        %v4156 = vpack.c.bf16 %v4076, %v4076
        %v4157 = vpack.c.bf16 %v4077, %v4077
        %v4158 = vpack.c.bf16 %v4078, %v4078
        %v4159 = vpack.c.bf16 %v4079, %v4079
        %v4160 = vpack.c.bf16 %v4080, %v4080
        %v4161 = vpack.c.bf16 %v4081, %v4081
        %v4162 = vpack.c.bf16 %v4082, %v4082
        %v4163 = vpack.c.bf16 %v4083, %v4083
        %v4164 = vpack.c.bf16 %v4084, %v4084
        %v4165 = vpack.c.bf16 %v4085, %v4085
        %v4166 = vpack.c.bf16 %v4086, %v4086
        %v4167 = vpack.c.bf16 %v4087, %v4087
        %v4168 = vpack.c.bf16 %v4088, %v4088
        %v4169 = vpack.c.bf16 %v4089, %v4089
        %v4170 = vpack.c.bf16 %v4090, %v4090
        %v4171 = vpack.c.bf16 %v4091, %v4091
        %v4172 = vpack.c.bf16 %v4092, %v4092
        %v4173 = vpack.c.bf16 %v4093, %v4093
        %v4174 = vpack.c.bf16 %v4094, %v4094
        %v4175 = vpack.c.bf16 %v4095, %v4095
        %v4176 = vpack.c.bf16 %v4096, %v4096
        %v4177 = vpack.c.bf16 %v4097, %v4097
        %v4178 = vpack.c.bf16 %v4098, %v4098
        %v4179 = vpack.c.bf16 %v4099, %v4099
        %v4180 = vpack.c.bf16 %v4100, %v4100
        %v4181 = vpack.c.bf16 %v4101, %v4101
        %v4182 = vpack.c.bf16 %v4102, %v4102
        %v4183 = vpack.c.bf16 %v4103, %v4103
        %v4184 = vpack.c.bf16 %v4104, %v4104
        %v4185 = vpack.c.bf16 %v4105, %v4105
        %v4186 = vpack.c.bf16 %v4106, %v4106
        %v4187 = vpack.c.bf16 %v4107, %v4107
        %v4188 = vpack.c.bf16 %v4108, %v4108
        %v4189 = vpack.c.bf16 %v4109, %v4109
        %v4190 = vpack.c.bf16 %v4110, %v4110
        %v4191 = vpack.c.bf16 %v4111, %v4111
        %v4192 = vpack.c.bf16 %v4112, %v4112
        %v4193 = vpack.c.bf16 %v4113, %v4113
        %v4194 = vpack.c.bf16 %v4114, %v4114
        %v4195 = vpack.c.bf16 %v4115, %v4115
        %v4196 = vpack.c.bf16 %v4116, %v4116
        %v4197 = vpack.c.bf16 %v4117, %v4117
        %v4198 = vpack.c.bf16 %v4118, %v4118
        %v4199 = vpack.c.bf16 %v4119, %v4119
        %v4200 = vpack.c.bf16 %v4120, %v4120
        %v4201 = vpack.c.bf16 %v4121, %v4121
        %v4202 = vpack.c.bf16 %v4122, %v4122
        %v4203 = vpack.c.bf16 %v4123, %v4123
        %v4204 = vpack.c.bf16 %v4124, %v4124
        %v4205 = vpack.c.bf16 %v4125, %v4125
        %v4206 = vpack.c.bf16 %v4126, %v4126
        %v4207 = vpack.c.bf16 %v4127, %v4127
        %v4208 = vpack.c.bf16 %v4128, %v4128
        %v4209 = vpack.c.bf16 %v4129, %v4129
        %v4210 = vpack.c.bf16 %v4130, %v4130
        %v4211 = vpack.c.bf16 %v4131, %v4131
        %v4212 = vpack.c.bf16 %v4132, %v4132
        %v4213 = vpack.c.bf16 %v4133, %v4133
        %v4214 = vpack.c.bf16 %v4134, %v4134
        %v4215 = vpack.c.bf16 %v4135, %v4135
        %v4216 = vpack.c.bf16 %v4136, %v4136
        %v4217 = vpack.c.bf16 %v4137, %v4137
        %v4218 = vpack.c.bf16 %v4138, %v4138
        %v4219 = vpack.c.bf16 %v4139, %v4139
        %v4220 = vpack.c.bf16 %v4140, %v4140
        %v4221 = vpack.c.bf16 %v4141, %v4141
        %v4222 = vpack.c.bf16 %v4142, %v4142
        %v4223 = vpack.c.bf16 %v4143, %v4143
        %4304 = vrot.lane.b32.xlu0 %v4144, 64
        %v4305 = vpop.permute.xlu0 %4304
        %4306 = vrot.lane.b32.xlu0 %v4145, 64
        %v4307 = vpop.permute.xlu0 %4306
        %4308 = vrot.lane.b32.xlu0 %v4146, 64
        %v4309 = vpop.permute.xlu0 %4308
        %4310 = vrot.lane.b32.xlu0 %v4147, 64
        %v4311 = vpop.permute.xlu0 %4310
        %4312 = vrot.lane.b32.xlu0 %v4148, 64
        %v4313 = vpop.permute.xlu0 %4312
        %4314 = vrot.lane.b32.xlu0 %v4149, 64
        %v4315 = vpop.permute.xlu0 %4314
        %4316 = vrot.lane.b32.xlu0 %v4150, 64
        %v4317 = vpop.permute.xlu0 %4316
        %4318 = vrot.lane.b32.xlu0 %v4151, 64
        %v4319 = vpop.permute.xlu0 %4318
        %4320 = vrot.lane.b32.xlu0 %v4152, 64
        %v4321 = vpop.permute.xlu0 %4320
        %4322 = vrot.lane.b32.xlu0 %v4153, 64
        %v4323 = vpop.permute.xlu0 %4322
        %4324 = vrot.lane.b32.xlu0 %v4154, 64
        %v4325 = vpop.permute.xlu0 %4324
        %4326 = vrot.lane.b32.xlu0 %v4155, 64
        %v4327 = vpop.permute.xlu0 %4326
        %4328 = vrot.lane.b32.xlu0 %v4156, 64
        %v4329 = vpop.permute.xlu0 %4328
        %4330 = vrot.lane.b32.xlu0 %v4157, 64
        %v4331 = vpop.permute.xlu0 %4330
        %4332 = vrot.lane.b32.xlu0 %v4158, 64
        %v4333 = vpop.permute.xlu0 %4332
        %4334 = vrot.lane.b32.xlu0 %v4159, 64
        %v4335 = vpop.permute.xlu0 %4334
        %4336 = vrot.lane.b32.xlu0 %v4160, 64
        %v4337 = vpop.permute.xlu0 %4336
        %4338 = vrot.lane.b32.xlu0 %v4161, 64
        %v4339 = vpop.permute.xlu0 %4338
        %4340 = vrot.lane.b32.xlu0 %v4162, 64
        %v4341 = vpop.permute.xlu0 %4340
        %4342 = vrot.lane.b32.xlu0 %v4163, 64
        %v4343 = vpop.permute.xlu0 %4342
        %4344 = vrot.lane.b32.xlu0 %v4164, 64
        %v4345 = vpop.permute.xlu0 %4344
        %4346 = vrot.lane.b32.xlu0 %v4165, 64
        %v4347 = vpop.permute.xlu0 %4346
        %4348 = vrot.lane.b32.xlu0 %v4166, 64
        %v4349 = vpop.permute.xlu0 %4348
        %4350 = vrot.lane.b32.xlu0 %v4167, 64
        %v4351 = vpop.permute.xlu0 %4350
        %4352 = vrot.lane.b32.xlu0 %v4168, 64
        %v4353 = vpop.permute.xlu0 %4352
        %4354 = vrot.lane.b32.xlu0 %v4169, 64
        %v4355 = vpop.permute.xlu0 %4354
        %4356 = vrot.lane.b32.xlu0 %v4170, 64
        %v4357 = vpop.permute.xlu0 %4356
        %4358 = vrot.lane.b32.xlu0 %v4171, 64
        %v4359 = vpop.permute.xlu0 %4358
        %4360 = vrot.lane.b32.xlu0 %v4172, 64
        %v4361 = vpop.permute.xlu0 %4360
        %4362 = vrot.lane.b32.xlu0 %v4173, 64
        %v4363 = vpop.permute.xlu0 %4362
        %4364 = vrot.lane.b32.xlu0 %v4174, 64
        %v4365 = vpop.permute.xlu0 %4364
        %4366 = vrot.lane.b32.xlu0 %v4175, 64
        %v4367 = vpop.permute.xlu0 %4366
        %4368 = vrot.lane.b32.xlu0 %v4176, 64
        %v4369 = vpop.permute.xlu0 %4368
        %4370 = vrot.lane.b32.xlu0 %v4177, 64
        %v4371 = vpop.permute.xlu0 %4370
        %4372 = vrot.lane.b32.xlu0 %v4178, 64
        %v4373 = vpop.permute.xlu0 %4372
        %4374 = vrot.lane.b32.xlu0 %v4179, 64
        %v4375 = vpop.permute.xlu0 %4374
        %4376 = vrot.lane.b32.xlu0 %v4180, 64
        %v4377 = vpop.permute.xlu0 %4376
        %4378 = vrot.lane.b32.xlu0 %v4181, 64
        %v4379 = vpop.permute.xlu0 %4378
        %4380 = vrot.lane.b32.xlu0 %v4182, 64
        %v4381 = vpop.permute.xlu0 %4380
        %4382 = vrot.lane.b32.xlu0 %v4183, 64
        %v4383 = vpop.permute.xlu0 %4382
        %4384 = vrot.lane.b32.xlu0 %v4184, 64
        %v4385 = vpop.permute.xlu0 %4384
        %4386 = vrot.lane.b32.xlu0 %v4185, 64
        %v4387 = vpop.permute.xlu0 %4386
        %4388 = vrot.lane.b32.xlu0 %v4186, 64
        %v4389 = vpop.permute.xlu0 %4388
        %4390 = vrot.lane.b32.xlu0 %v4187, 64
        %v4391 = vpop.permute.xlu0 %4390
        %4392 = vrot.lane.b32.xlu0 %v4188, 64
        %v4393 = vpop.permute.xlu0 %4392
        %4394 = vrot.lane.b32.xlu0 %v4189, 64
        %v4395 = vpop.permute.xlu0 %4394
        %4396 = vrot.lane.b32.xlu0 %v4190, 64
        %v4397 = vpop.permute.xlu0 %4396
        %4398 = vrot.lane.b32.xlu0 %v4191, 64
        %v4399 = vpop.permute.xlu0 %4398
        %4400 = vrot.lane.b32.xlu0 %v4192, 64
        %v4401 = vpop.permute.xlu0 %4400
        %4402 = vrot.lane.b32.xlu0 %v4193, 64
        %v4403 = vpop.permute.xlu0 %4402
        %4404 = vrot.lane.b32.xlu0 %v4194, 64
        %v4405 = vpop.permute.xlu0 %4404
        %4406 = vrot.lane.b32.xlu0 %v4195, 64
        %v4407 = vpop.permute.xlu0 %4406
        %4408 = vrot.lane.b32.xlu0 %v4196, 64
        %v4409 = vpop.permute.xlu0 %4408
        %4410 = vrot.lane.b32.xlu0 %v4197, 64
        %v4411 = vpop.permute.xlu0 %4410
        %4412 = vrot.lane.b32.xlu0 %v4198, 64
        %v4413 = vpop.permute.xlu0 %4412
        %4414 = vrot.lane.b32.xlu0 %v4199, 64
        %v4415 = vpop.permute.xlu0 %4414
        %4416 = vrot.lane.b32.xlu0 %v4200, 64
        %v4417 = vpop.permute.xlu0 %4416
        %4418 = vrot.lane.b32.xlu0 %v4201, 64
        %v4419 = vpop.permute.xlu0 %4418
        %4420 = vrot.lane.b32.xlu0 %v4202, 64
        %v4421 = vpop.permute.xlu0 %4420
        %4422 = vrot.lane.b32.xlu0 %v4203, 64
        %v4423 = vpop.permute.xlu0 %4422
        %4424 = vrot.lane.b32.xlu0 %v4204, 64
        %v4425 = vpop.permute.xlu0 %4424
        %4426 = vrot.lane.b32.xlu0 %v4205, 64
        %v4427 = vpop.permute.xlu0 %4426
        %4428 = vrot.lane.b32.xlu0 %v4206, 64
        %v4429 = vpop.permute.xlu0 %4428
        %4430 = vrot.lane.b32.xlu0 %v4207, 64
        %v4431 = vpop.permute.xlu0 %4430
        %4432 = vrot.lane.b32.xlu0 %v4208, 64
        %v4433 = vpop.permute.xlu0 %4432
        %4434 = vrot.lane.b32.xlu0 %v4209, 64
        %v4435 = vpop.permute.xlu0 %4434
        %4436 = vrot.lane.b32.xlu0 %v4210, 64
        %v4437 = vpop.permute.xlu0 %4436
        %4438 = vrot.lane.b32.xlu0 %v4211, 64
        %v4439 = vpop.permute.xlu0 %4438
        %4440 = vrot.lane.b32.xlu0 %v4212, 64
        %v4441 = vpop.permute.xlu0 %4440
        %4442 = vrot.lane.b32.xlu0 %v4213, 64
        %v4443 = vpop.permute.xlu0 %4442
        %4444 = vrot.lane.b32.xlu0 %v4214, 64
        %v4445 = vpop.permute.xlu0 %4444
        %4446 = vrot.lane.b32.xlu0 %v4215, 64
        %v4447 = vpop.permute.xlu0 %4446
        %4448 = vrot.lane.b32.xlu0 %v4216, 64
        %v4449 = vpop.permute.xlu0 %4448
        %4450 = vrot.lane.b32.xlu0 %v4217, 64
        %v4451 = vpop.permute.xlu0 %4450
        %4452 = vrot.lane.b32.xlu0 %v4218, 64
        %v4453 = vpop.permute.xlu0 %4452
        %4454 = vrot.lane.b32.xlu0 %v4219, 64
        %v4455 = vpop.permute.xlu0 %4454
        %4456 = vrot.lane.b32.xlu0 %v4220, 64
        %v4457 = vpop.permute.xlu0 %4456
        %4458 = vrot.lane.b32.xlu0 %v4221, 64
        %v4459 = vpop.permute.xlu0 %4458
        %4460 = vrot.lane.b32.xlu0 %v4222, 64
        %v4461 = vpop.permute.xlu0 %4460
        %4462 = vrot.lane.b32.xlu0 %v4223, 64
        %v4463 = vpop.permute.xlu0 %4462
        %4544 = vst.msk [vmem:[#allocation3 + $0xc] sm:$0xf] %vm2138, %v4305
        %4545 = vst.msk [vmem:[#allocation3 + $0x20] sm:$0xf] %vm2138, %v4307
        %4546 = vst.msk [vmem:[#allocation3 + $0x34] sm:$0xf] %vm2138, %v4309
        %4547 = vst.msk [vmem:[#allocation3 + $0x48] sm:$0xf] %vm2138, %v4311
        %4548 = vst.msk [vmem:[#allocation3 + $0x5c] sm:$0xf] %vm2138, %v4313
        %4549 = vst.msk [vmem:[#allocation3 + $0x70] sm:$0xf] %vm2138, %v4315
        %4550 = vst.msk [vmem:[#allocation3 + $0x84] sm:$0xf] %vm2138, %v4317
        %4551 = vst.msk [vmem:[#allocation3 + $0x98] sm:$0xf] %vm2138, %v4319
        %4552 = vst.msk [vmem:[#allocation3 + $0xac] sm:$0xf] %vm2138, %v4321
        %4553 = vst.msk [vmem:[#allocation3 + $0xc0] sm:$0xf] %vm2138, %v4323
        %4554 = vst.msk [vmem:[#allocation3 + $0xd4] sm:$0xf] %vm2138, %v4325
        %4555 = vst.msk [vmem:[#allocation3 + $0xe8] sm:$0xf] %vm2138, %v4327
        %4556 = vst.msk [vmem:[#allocation3 + $0xfc] sm:$0xf] %vm2138, %v4329
        %4557 = vst.msk [vmem:[#allocation3 + $0x110] sm:$0xf] %vm2138, %v4331
        %4558 = vst.msk [vmem:[#allocation3 + $0x124] sm:$0xf] %vm2138, %v4333
        %4559 = vst.msk [vmem:[#allocation3 + $0x138] sm:$0xf] %vm2138, %v4335
        %4560 = vst.msk [vmem:[#allocation3 + $0x14c] sm:$0xf] %vm2138, %v4337
        %4561 = vst.msk [vmem:[#allocation3 + $0x160] sm:$0xf] %vm2138, %v4339
        %4562 = vst.msk [vmem:[#allocation3 + $0x174] sm:$0xf] %vm2138, %v4341
        %4563 = vst.msk [vmem:[#allocation3 + $0x188] sm:$0xf] %vm2138, %v4343
        %4564 = vst.msk [vmem:[#allocation3 + $0x19c] sm:$0xf] %vm2138, %v4345
        %4565 = vst.msk [vmem:[#allocation3 + $0x1b0] sm:$0xf] %vm2138, %v4347
        %4566 = vst.msk [vmem:[#allocation3 + $0x1c4] sm:$0xf] %vm2138, %v4349
        %4567 = vst.msk [vmem:[#allocation3 + $0x1d8] sm:$0xf] %vm2138, %v4351
        %4568 = vst.msk [vmem:[#allocation3 + $0x1ec] sm:$0xf] %vm2138, %v4353
        %4569 = vst.msk [vmem:[#allocation3 + $0x200] sm:$0xf] %vm2138, %v4355
        %4570 = vst.msk [vmem:[#allocation3 + $0x214] sm:$0xf] %vm2138, %v4357
        %4571 = vst.msk [vmem:[#allocation3 + $0x228] sm:$0xf] %vm2138, %v4359
        %4572 = vst.msk [vmem:[#allocation3 + $0x23c] sm:$0xf] %vm2138, %v4361
        %4573 = vst.msk [vmem:[#allocation3 + $0x250] sm:$0xf] %vm2138, %v4363
        %4574 = vst.msk [vmem:[#allocation3 + $0x264] sm:$0xf] %vm2138, %v4365
        %4575 = vst.msk [vmem:[#allocation3 + $0x278] sm:$0xf] %vm2138, %v4367
        %4576 = vst.msk [vmem:[#allocation3 + $0x28c] sm:$0xf] %vm2138, %v4369
        %4577 = vst.msk [vmem:[#allocation3 + $0x2a0] sm:$0xf] %vm2138, %v4371
        %4578 = vst.msk [vmem:[#allocation3 + $0x2b4] sm:$0xf] %vm2138, %v4373
        %4579 = vst.msk [vmem:[#allocation3 + $0x2c8] sm:$0xf] %vm2138, %v4375
        %4580 = vst.msk [vmem:[#allocation3 + $0x2dc] sm:$0xf] %vm2138, %v4377
        %4581 = vst.msk [vmem:[#allocation3 + $0x2f0] sm:$0xf] %vm2138, %v4379
        %4582 = vst.msk [vmem:[#allocation3 + $0x304] sm:$0xf] %vm2138, %v4381
        %4583 = vst.msk [vmem:[#allocation3 + $0x318] sm:$0xf] %vm2138, %v4383
        %4584 = vst.msk [vmem:[#allocation3 + $0x32c] sm:$0xf] %vm2138, %v4385
        %4585 = vst.msk [vmem:[#allocation3 + $0x340] sm:$0xf] %vm2138, %v4387
        %4586 = vst.msk [vmem:[#allocation3 + $0x354] sm:$0xf] %vm2138, %v4389
        %4587 = vst.msk [vmem:[#allocation3 + $0x368] sm:$0xf] %vm2138, %v4391
        %4588 = vst.msk [vmem:[#allocation3 + $0x37c] sm:$0xf] %vm2138, %v4393
        %4589 = vst.msk [vmem:[#allocation3 + $0x390] sm:$0xf] %vm2138, %v4395
        %4590 = vst.msk [vmem:[#allocation3 + $0x3a4] sm:$0xf] %vm2138, %v4397
        %4591 = vst.msk [vmem:[#allocation3 + $0x3b8] sm:$0xf] %vm2138, %v4399
        %4592 = vst.msk [vmem:[#allocation3 + $0x3cc] sm:$0xf] %vm2138, %v4401
        %4593 = vst.msk [vmem:[#allocation3 + $0x3e0] sm:$0xf] %vm2138, %v4403
        %4594 = vst.msk [vmem:[#allocation3 + $0x3f4] sm:$0xf] %vm2138, %v4405
        %4595 = vst.msk [vmem:[#allocation3 + $0x408] sm:$0xf] %vm2138, %v4407
        %4596 = vst.msk [vmem:[#allocation3 + $0x41c] sm:$0xf] %vm2138, %v4409
        %4597 = vst.msk [vmem:[#allocation3 + $0x430] sm:$0xf] %vm2138, %v4411
        %4598 = vst.msk [vmem:[#allocation3 + $0x444] sm:$0xf] %vm2138, %v4413
        %4599 = vst.msk [vmem:[#allocation3 + $0x458] sm:$0xf] %vm2138, %v4415
        %4600 = vst.msk [vmem:[#allocation3 + $0x46c] sm:$0xf] %vm2138, %v4417
        %4601 = vst.msk [vmem:[#allocation3 + $0x480] sm:$0xf] %vm2138, %v4419
        %4602 = vst.msk [vmem:[#allocation3 + $0x494] sm:$0xf] %vm2138, %v4421
        %4603 = vst.msk [vmem:[#allocation3 + $0x4a8] sm:$0xf] %vm2138, %v4423
        %4604 = vst.msk [vmem:[#allocation3 + $0x4bc] sm:$0xf] %vm2138, %v4425
        %4605 = vst.msk [vmem:[#allocation3 + $0x4d0] sm:$0xf] %vm2138, %v4427
        %4606 = vst.msk [vmem:[#allocation3 + $0x4e4] sm:$0xf] %vm2138, %v4429
        %4607 = vst.msk [vmem:[#allocation3 + $0x4f8] sm:$0xf] %vm2138, %v4431
        %4608 = vst.msk [vmem:[#allocation3 + $0x50c] sm:$0xf] %vm2138, %v4433
        %4609 = vst.msk [vmem:[#allocation3 + $0x520] sm:$0xf] %vm2138, %v4435
        %4610 = vst.msk [vmem:[#allocation3 + $0x534] sm:$0xf] %vm2138, %v4437
        %4611 = vst.msk [vmem:[#allocation3 + $0x548] sm:$0xf] %vm2138, %v4439
        %4612 = vst.msk [vmem:[#allocation3 + $0x55c] sm:$0xf] %vm2138, %v4441
        %4613 = vst.msk [vmem:[#allocation3 + $0x570] sm:$0xf] %vm2138, %v4443
        %4614 = vst.msk [vmem:[#allocation3 + $0x584] sm:$0xf] %vm2138, %v4445
        %4615 = vst.msk [vmem:[#allocation3 + $0x598] sm:$0xf] %vm2138, %v4447
        %4616 = vst.msk [vmem:[#allocation3 + $0x5ac] sm:$0xf] %vm2138, %v4449
        %4617 = vst.msk [vmem:[#allocation3 + $0x5c0] sm:$0xf] %vm2138, %v4451
        %4618 = vst.msk [vmem:[#allocation3 + $0x5d4] sm:$0xf] %vm2138, %v4453
        %4619 = vst.msk [vmem:[#allocation3 + $0x5e8] sm:$0xf] %vm2138, %v4455
        %4620 = vst.msk [vmem:[#allocation3 + $0x5fc] sm:$0xf] %vm2138, %v4457
        %4621 = vst.msk [vmem:[#allocation3 + $0x610] sm:$0xf] %vm2138, %v4459
        %4622 = vst.msk [vmem:[#allocation3 + $0x624] sm:$0xf] %vm2138, %v4461
        %4623 = vst.msk [vmem:[#allocation3 + $0x638] sm:$0xf] %vm2138, %v4463
        %v4624 = vld [vmem:[%s1353] sm:$0xff]
        %v4625 = vld [vmem:[%s1353 + $0x8] sm:$0xff]
        %v4626 = vld [vmem:[%s1353 + $0x10] sm:$0xff]
        %v4627 = vld [vmem:[%s1353 + $0x18] sm:$0xff]
        %v4628 = vld [vmem:[%s1353 + $0x20] sm:$0xff]
        %v4629 = vld [vmem:[%s1353 + $0x28] sm:$0xff]
        %v4630 = vld [vmem:[%s1353 + $0x30] sm:$0xff]
        %v4631 = vld [vmem:[%s1353 + $0x38] sm:$0xff]
        %v4632 = vld [vmem:[%s1353 + $0x40] sm:$0xff]
        %v4633 = vld [vmem:[%s1353 + $0x48] sm:$0xff]
        %v4634 = vld [vmem:[%s1353 + $0x50] sm:$0xff]
        %v4635 = vld [vmem:[%s1353 + $0x58] sm:$0xff]
        %v4636 = vld [vmem:[%s1353 + $0x60] sm:$0xff]
        %v4637 = vld [vmem:[%s1353 + $0x68] sm:$0xff]
        %v4638 = vld [vmem:[%s1353 + $0x70] sm:$0xff]
        %v4639 = vld [vmem:[%s1353 + $0x78] sm:$0xff]
        %v4640 = vld [vmem:[%s1353 + $0x80] sm:$0xff]
        %v4641 = vld [vmem:[%s1353 + $0x88] sm:$0xff]
        %v4642 = vld [vmem:[%s1353 + $0x90] sm:$0xff]
        %v4643 = vld [vmem:[%s1353 + $0x98] sm:$0xff]
        %v4644 = vld [vmem:[%s1353 + $0xa0] sm:$0xff]
        %v4645 = vld [vmem:[%s1353 + $0xa8] sm:$0xff]
        %v4646 = vld [vmem:[%s1353 + $0xb0] sm:$0xff]
        %v4647 = vld [vmem:[%s1353 + $0xb8] sm:$0xff]
        %v4648 = vld [vmem:[%s1353 + $0xc0] sm:$0xff]
        %v4649 = vld [vmem:[%s1353 + $0xc8] sm:$0xff]
        %v4650 = vld [vmem:[%s1353 + $0xd0] sm:$0xff]
        %v4651 = vld [vmem:[%s1353 + $0xd8] sm:$0xff]
        %v4652 = vld [vmem:[%s1353 + $0xe0] sm:$0xff]
        %v4653 = vld [vmem:[%s1353 + $0xe8] sm:$0xff]
        %v4654 = vld [vmem:[%s1353 + $0xf0] sm:$0xff]
        %v4655 = vld [vmem:[%s1353 + $0xf8] sm:$0xff]
        %v4656 = vld [vmem:[%s1353 + $0x100] sm:$0xff]
        %v4657 = vld [vmem:[%s1353 + $0x108] sm:$0xff]
        %v4658 = vld [vmem:[%s1353 + $0x110] sm:$0xff]
        %v4659 = vld [vmem:[%s1353 + $0x118] sm:$0xff]
        %v4660 = vld [vmem:[%s1353 + $0x120] sm:$0xff]
        %v4661 = vld [vmem:[%s1353 + $0x128] sm:$0xff]
        %v4662 = vld [vmem:[%s1353 + $0x130] sm:$0xff]
        %v4663 = vld [vmem:[%s1353 + $0x138] sm:$0xff]
        %v4664 = vld [vmem:[%s1353 + $0x140] sm:$0xff]
        %v4665 = vld [vmem:[%s1353 + $0x148] sm:$0xff]
        %v4666 = vld [vmem:[%s1353 + $0x150] sm:$0xff]
        %v4667 = vld [vmem:[%s1353 + $0x158] sm:$0xff]
        %v4668 = vld [vmem:[%s1353 + $0x160] sm:$0xff]
        %v4669 = vld [vmem:[%s1353 + $0x168] sm:$0xff]
        %v4670 = vld [vmem:[%s1353 + $0x170] sm:$0xff]
        %v4671 = vld [vmem:[%s1353 + $0x178] sm:$0xff]
        %v4672 = vld [vmem:[%s1353 + $0x180] sm:$0xff]
        %v4673 = vld [vmem:[%s1353 + $0x188] sm:$0xff]
        %v4674 = vld [vmem:[%s1353 + $0x190] sm:$0xff]
        %v4675 = vld [vmem:[%s1353 + $0x198] sm:$0xff]
        %v4676 = vld [vmem:[%s1353 + $0x1a0] sm:$0xff]
        %v4677 = vld [vmem:[%s1353 + $0x1a8] sm:$0xff]
        %v4678 = vld [vmem:[%s1353 + $0x1b0] sm:$0xff]
        %v4679 = vld [vmem:[%s1353 + $0x1b8] sm:$0xff]
        %v4680 = vld [vmem:[%s1353 + $0x1c0] sm:$0xff]
        %v4681 = vld [vmem:[%s1353 + $0x1c8] sm:$0xff]
        %v4682 = vld [vmem:[%s1353 + $0x1d0] sm:$0xff]
        %v4683 = vld [vmem:[%s1353 + $0x1d8] sm:$0xff]
        %v4684 = vld [vmem:[%s1353 + $0x1e0] sm:$0xff]
        %v4685 = vld [vmem:[%s1353 + $0x1e8] sm:$0xff]
        %v4686 = vld [vmem:[%s1353 + $0x1f0] sm:$0xff]
        %v4687 = vld [vmem:[%s1353 + $0x1f8] sm:$0xff]
        %v4688 = vld [vmem:[%s1353 + $0x200] sm:$0xff]
        %v4689 = vld [vmem:[%s1353 + $0x208] sm:$0xff]
        %v4690 = vld [vmem:[%s1353 + $0x210] sm:$0xff]
        %v4691 = vld [vmem:[%s1353 + $0x218] sm:$0xff]
        %v4692 = vld [vmem:[%s1353 + $0x220] sm:$0xff]
        %v4693 = vld [vmem:[%s1353 + $0x228] sm:$0xff]
        %v4694 = vld [vmem:[%s1353 + $0x230] sm:$0xff]
        %v4695 = vld [vmem:[%s1353 + $0x238] sm:$0xff]
        %v4696 = vld [vmem:[%s1353 + $0x240] sm:$0xff]
        %v4697 = vld [vmem:[%s1353 + $0x248] sm:$0xff]
        %v4698 = vld [vmem:[%s1353 + $0x250] sm:$0xff]
        %v4699 = vld [vmem:[%s1353 + $0x258] sm:$0xff]
        %v4700 = vld [vmem:[%s1353 + $0x260] sm:$0xff]
        %v4701 = vld [vmem:[%s1353 + $0x268] sm:$0xff]
        %v4702 = vld [vmem:[%s1353 + $0x270] sm:$0xff]
        %v4703 = vld [vmem:[%s1353 + $0x278] sm:$0xff]
        %v4704 = vpack.c.bf16 %v4624, %v4624
        %v4705 = vpack.c.bf16 %v4625, %v4625
        %v4706 = vpack.c.bf16 %v4626, %v4626
        %v4707 = vpack.c.bf16 %v4627, %v4627
        %v4708 = vpack.c.bf16 %v4628, %v4628
        %v4709 = vpack.c.bf16 %v4629, %v4629
        %v4710 = vpack.c.bf16 %v4630, %v4630
        %v4711 = vpack.c.bf16 %v4631, %v4631
        %v4712 = vpack.c.bf16 %v4632, %v4632
        %v4713 = vpack.c.bf16 %v4633, %v4633
        %v4714 = vpack.c.bf16 %v4634, %v4634
        %v4715 = vpack.c.bf16 %v4635, %v4635
        %v4716 = vpack.c.bf16 %v4636, %v4636
        %v4717 = vpack.c.bf16 %v4637, %v4637
        %v4718 = vpack.c.bf16 %v4638, %v4638
        %v4719 = vpack.c.bf16 %v4639, %v4639
        %v4720 = vpack.c.bf16 %v4640, %v4640
        %v4721 = vpack.c.bf16 %v4641, %v4641
        %v4722 = vpack.c.bf16 %v4642, %v4642
        %v4723 = vpack.c.bf16 %v4643, %v4643
        %v4724 = vpack.c.bf16 %v4644, %v4644
        %v4725 = vpack.c.bf16 %v4645, %v4645
        %v4726 = vpack.c.bf16 %v4646, %v4646
        %v4727 = vpack.c.bf16 %v4647, %v4647
        %v4728 = vpack.c.bf16 %v4648, %v4648
        %v4729 = vpack.c.bf16 %v4649, %v4649
        %v4730 = vpack.c.bf16 %v4650, %v4650
        %v4731 = vpack.c.bf16 %v4651, %v4651
        %v4732 = vpack.c.bf16 %v4652, %v4652
        %v4733 = vpack.c.bf16 %v4653, %v4653
        %v4734 = vpack.c.bf16 %v4654, %v4654
        %v4735 = vpack.c.bf16 %v4655, %v4655
        %v4736 = vpack.c.bf16 %v4656, %v4656
        %v4737 = vpack.c.bf16 %v4657, %v4657
        %v4738 = vpack.c.bf16 %v4658, %v4658
        %v4739 = vpack.c.bf16 %v4659, %v4659
        %v4740 = vpack.c.bf16 %v4660, %v4660
        %v4741 = vpack.c.bf16 %v4661, %v4661
        %v4742 = vpack.c.bf16 %v4662, %v4662
        %v4743 = vpack.c.bf16 %v4663, %v4663
        %v4744 = vpack.c.bf16 %v4664, %v4664
        %v4745 = vpack.c.bf16 %v4665, %v4665
        %v4746 = vpack.c.bf16 %v4666, %v4666
        %v4747 = vpack.c.bf16 %v4667, %v4667
        %v4748 = vpack.c.bf16 %v4668, %v4668
        %v4749 = vpack.c.bf16 %v4669, %v4669
        %v4750 = vpack.c.bf16 %v4670, %v4670
        %v4751 = vpack.c.bf16 %v4671, %v4671
        %v4752 = vpack.c.bf16 %v4672, %v4672
        %v4753 = vpack.c.bf16 %v4673, %v4673
        %v4754 = vpack.c.bf16 %v4674, %v4674
        %v4755 = vpack.c.bf16 %v4675, %v4675
        %v4756 = vpack.c.bf16 %v4676, %v4676
        %v4757 = vpack.c.bf16 %v4677, %v4677
        %v4758 = vpack.c.bf16 %v4678, %v4678
        %v4759 = vpack.c.bf16 %v4679, %v4679
        %v4760 = vpack.c.bf16 %v4680, %v4680
        %v4761 = vpack.c.bf16 %v4681, %v4681
        %v4762 = vpack.c.bf16 %v4682, %v4682
        %v4763 = vpack.c.bf16 %v4683, %v4683
        %v4764 = vpack.c.bf16 %v4684, %v4684
        %v4765 = vpack.c.bf16 %v4685, %v4685
        %v4766 = vpack.c.bf16 %v4686, %v4686
        %v4767 = vpack.c.bf16 %v4687, %v4687
        %v4768 = vpack.c.bf16 %v4688, %v4688
        %v4769 = vpack.c.bf16 %v4689, %v4689
        %v4770 = vpack.c.bf16 %v4690, %v4690
        %v4771 = vpack.c.bf16 %v4691, %v4691
        %v4772 = vpack.c.bf16 %v4692, %v4692
        %v4773 = vpack.c.bf16 %v4693, %v4693
        %v4774 = vpack.c.bf16 %v4694, %v4694
        %v4775 = vpack.c.bf16 %v4695, %v4695
        %v4776 = vpack.c.bf16 %v4696, %v4696
        %v4777 = vpack.c.bf16 %v4697, %v4697
        %v4778 = vpack.c.bf16 %v4698, %v4698
        %v4779 = vpack.c.bf16 %v4699, %v4699
        %v4780 = vpack.c.bf16 %v4700, %v4700
        %v4781 = vpack.c.bf16 %v4701, %v4701
        %v4782 = vpack.c.bf16 %v4702, %v4702
        %v4783 = vpack.c.bf16 %v4703, %v4703
        %4784 = vst.msk [vmem:[#allocation3 + $0x10] sm:$0xf] %vm1576, %v4704
        %4785 = vst.msk [vmem:[#allocation3 + $0x24] sm:$0xf] %vm1576, %v4705
        %4786 = vst.msk [vmem:[#allocation3 + $0x38] sm:$0xf] %vm1576, %v4706
        %4787 = vst.msk [vmem:[#allocation3 + $0x4c] sm:$0xf] %vm1576, %v4707
        %4788 = vst.msk [vmem:[#allocation3 + $0x60] sm:$0xf] %vm1576, %v4708
        %4789 = vst.msk [vmem:[#allocation3 + $0x74] sm:$0xf] %vm1576, %v4709
        %4790 = vst.msk [vmem:[#allocation3 + $0x88] sm:$0xf] %vm1576, %v4710
        %4791 = vst.msk [vmem:[#allocation3 + $0x9c] sm:$0xf] %vm1576, %v4711
        %4792 = vst.msk [vmem:[#allocation3 + $0xb0] sm:$0xf] %vm1576, %v4712
        %4793 = vst.msk [vmem:[#allocation3 + $0xc4] sm:$0xf] %vm1576, %v4713
        %4794 = vst.msk [vmem:[#allocation3 + $0xd8] sm:$0xf] %vm1576, %v4714
        %4795 = vst.msk [vmem:[#allocation3 + $0xec] sm:$0xf] %vm1576, %v4715
        %4796 = vst.msk [vmem:[#allocation3 + $0x100] sm:$0xf] %vm1576, %v4716
        %4797 = vst.msk [vmem:[#allocation3 + $0x114] sm:$0xf] %vm1576, %v4717
        %4798 = vst.msk [vmem:[#allocation3 + $0x128] sm:$0xf] %vm1576, %v4718
        %4799 = vst.msk [vmem:[#allocation3 + $0x13c] sm:$0xf] %vm1576, %v4719
        %4800 = vst.msk [vmem:[#allocation3 + $0x150] sm:$0xf] %vm1576, %v4720
        %4801 = vst.msk [vmem:[#allocation3 + $0x164] sm:$0xf] %vm1576, %v4721
        %4802 = vst.msk [vmem:[#allocation3 + $0x178] sm:$0xf] %vm1576, %v4722
        %4803 = vst.msk [vmem:[#allocation3 + $0x18c] sm:$0xf] %vm1576, %v4723
        %4804 = vst.msk [vmem:[#allocation3 + $0x1a0] sm:$0xf] %vm1576, %v4724
        %4805 = vst.msk [vmem:[#allocation3 + $0x1b4] sm:$0xf] %vm1576, %v4725
        %4806 = vst.msk [vmem:[#allocation3 + $0x1c8] sm:$0xf] %vm1576, %v4726
        %4807 = vst.msk [vmem:[#allocation3 + $0x1dc] sm:$0xf] %vm1576, %v4727
        %4808 = vst.msk [vmem:[#allocation3 + $0x1f0] sm:$0xf] %vm1576, %v4728
        %4809 = vst.msk [vmem:[#allocation3 + $0x204] sm:$0xf] %vm1576, %v4729
        %4810 = vst.msk [vmem:[#allocation3 + $0x218] sm:$0xf] %vm1576, %v4730
        %4811 = vst.msk [vmem:[#allocation3 + $0x22c] sm:$0xf] %vm1576, %v4731
        %4812 = vst.msk [vmem:[#allocation3 + $0x240] sm:$0xf] %vm1576, %v4732
        %4813 = vst.msk [vmem:[#allocation3 + $0x254] sm:$0xf] %vm1576, %v4733
        %4814 = vst.msk [vmem:[#allocation3 + $0x268] sm:$0xf] %vm1576, %v4734
        %4815 = vst.msk [vmem:[#allocation3 + $0x27c] sm:$0xf] %vm1576, %v4735
        %4816 = vst.msk [vmem:[#allocation3 + $0x290] sm:$0xf] %vm1576, %v4736
        %4817 = vst.msk [vmem:[#allocation3 + $0x2a4] sm:$0xf] %vm1576, %v4737
        %4818 = vst.msk [vmem:[#allocation3 + $0x2b8] sm:$0xf] %vm1576, %v4738
        %4819 = vst.msk [vmem:[#allocation3 + $0x2cc] sm:$0xf] %vm1576, %v4739
        %4820 = vst.msk [vmem:[#allocation3 + $0x2e0] sm:$0xf] %vm1576, %v4740
        %4821 = vst.msk [vmem:[#allocation3 + $0x2f4] sm:$0xf] %vm1576, %v4741
        %4822 = vst.msk [vmem:[#allocation3 + $0x308] sm:$0xf] %vm1576, %v4742
        %4823 = vst.msk [vmem:[#allocation3 + $0x31c] sm:$0xf] %vm1576, %v4743
        %4824 = vst.msk [vmem:[#allocation3 + $0x330] sm:$0xf] %vm1576, %v4744
        %4825 = vst.msk [vmem:[#allocation3 + $0x344] sm:$0xf] %vm1576, %v4745
        %4826 = vst.msk [vmem:[#allocation3 + $0x358] sm:$0xf] %vm1576, %v4746
        %4827 = vst.msk [vmem:[#allocation3 + $0x36c] sm:$0xf] %vm1576, %v4747
        %4828 = vst.msk [vmem:[#allocation3 + $0x380] sm:$0xf] %vm1576, %v4748
        %4829 = vst.msk [vmem:[#allocation3 + $0x394] sm:$0xf] %vm1576, %v4749
        %4830 = vst.msk [vmem:[#allocation3 + $0x3a8] sm:$0xf] %vm1576, %v4750
        %4831 = vst.msk [vmem:[#allocation3 + $0x3bc] sm:$0xf] %vm1576, %v4751
        %4832 = vst.msk [vmem:[#allocation3 + $0x3d0] sm:$0xf] %vm1576, %v4752
        %4833 = vst.msk [vmem:[#allocation3 + $0x3e4] sm:$0xf] %vm1576, %v4753
        %4834 = vst.msk [vmem:[#allocation3 + $0x3f8] sm:$0xf] %vm1576, %v4754
        %4835 = vst.msk [vmem:[#allocation3 + $0x40c] sm:$0xf] %vm1576, %v4755
        %4836 = vst.msk [vmem:[#allocation3 + $0x420] sm:$0xf] %vm1576, %v4756
        %4837 = vst.msk [vmem:[#allocation3 + $0x434] sm:$0xf] %vm1576, %v4757
        %4838 = vst.msk [vmem:[#allocation3 + $0x448] sm:$0xf] %vm1576, %v4758
        %4839 = vst.msk [vmem:[#allocation3 + $0x45c] sm:$0xf] %vm1576, %v4759
        %4840 = vst.msk [vmem:[#allocation3 + $0x470] sm:$0xf] %vm1576, %v4760
        %4841 = vst.msk [vmem:[#allocation3 + $0x484] sm:$0xf] %vm1576, %v4761
        %4842 = vst.msk [vmem:[#allocation3 + $0x498] sm:$0xf] %vm1576, %v4762
        %4843 = vst.msk [vmem:[#allocation3 + $0x4ac] sm:$0xf] %vm1576, %v4763
        %4844 = vst.msk [vmem:[#allocation3 + $0x4c0] sm:$0xf] %vm1576, %v4764
        %4845 = vst.msk [vmem:[#allocation3 + $0x4d4] sm:$0xf] %vm1576, %v4765
        %4846 = vst.msk [vmem:[#allocation3 + $0x4e8] sm:$0xf] %vm1576, %v4766
        %4847 = vst.msk [vmem:[#allocation3 + $0x4fc] sm:$0xf] %vm1576, %v4767
        %4848 = vst.msk [vmem:[#allocation3 + $0x510] sm:$0xf] %vm1576, %v4768
        %4849 = vst.msk [vmem:[#allocation3 + $0x524] sm:$0xf] %vm1576, %v4769
        %4850 = vst.msk [vmem:[#allocation3 + $0x538] sm:$0xf] %vm1576, %v4770
        %4851 = vst.msk [vmem:[#allocation3 + $0x54c] sm:$0xf] %vm1576, %v4771
        %4852 = vst.msk [vmem:[#allocation3 + $0x560] sm:$0xf] %vm1576, %v4772
        %4853 = vst.msk [vmem:[#allocation3 + $0x574] sm:$0xf] %vm1576, %v4773
        %4854 = vst.msk [vmem:[#allocation3 + $0x588] sm:$0xf] %vm1576, %v4774
        %4855 = vst.msk [vmem:[#allocation3 + $0x59c] sm:$0xf] %vm1576, %v4775
        %4856 = vst.msk [vmem:[#allocation3 + $0x5b0] sm:$0xf] %vm1576, %v4776
        %4857 = vst.msk [vmem:[#allocation3 + $0x5c4] sm:$0xf] %vm1576, %v4777
        %4858 = vst.msk [vmem:[#allocation3 + $0x5d8] sm:$0xf] %vm1576, %v4778
        %4859 = vst.msk [vmem:[#allocation3 + $0x5ec] sm:$0xf] %vm1576, %v4779
        %4860 = vst.msk [vmem:[#allocation3 + $0x600] sm:$0xf] %vm1576, %v4780
        %4861 = vst.msk [vmem:[#allocation3 + $0x614] sm:$0xf] %vm1576, %v4781
        %4862 = vst.msk [vmem:[#allocation3 + $0x628] sm:$0xf] %vm1576, %v4782
        %4863 = vst.msk [vmem:[#allocation3 + $0x63c] sm:$0xf] %vm1576, %v4783
        %v4864 = vld [vmem:[#allocation3] sm:$0xff]
        %v4865 = vld [vmem:[#allocation3 + $0x8] sm:$0xff]
        %v4866 = vld [vmem:[#allocation3 + $0x10] sm:$0xf]
        %v4867 = vld [vmem:[#allocation3 + $0x14] sm:$0xff]
        %v4868 = vld [vmem:[#allocation3 + $0x1c] sm:$0xff]
        %v4869 = vld [vmem:[#allocation3 + $0x24] sm:$0xf]
        %v4870 = vld [vmem:[#allocation3 + $0x28] sm:$0xff]
        %v4871 = vld [vmem:[#allocation3 + $0x30] sm:$0xff]
        %v4872 = vld [vmem:[#allocation3 + $0x38] sm:$0xf]
        %v4873 = vld [vmem:[#allocation3 + $0x3c] sm:$0xff]
        %v4874 = vld [vmem:[#allocation3 + $0x44] sm:$0xff]
        %v4875 = vld [vmem:[#allocation3 + $0x4c] sm:$0xf]
        %v4876 = vld [vmem:[#allocation3 + $0x50] sm:$0xff]
        %v4877 = vld [vmem:[#allocation3 + $0x58] sm:$0xff]
        %v4878 = vld [vmem:[#allocation3 + $0x60] sm:$0xf]
        %v4879 = vld [vmem:[#allocation3 + $0x64] sm:$0xff]
        %v4880 = vld [vmem:[#allocation3 + $0x6c] sm:$0xff]
        %v4881 = vld [vmem:[#allocation3 + $0x74] sm:$0xf]
        %v4882 = vld [vmem:[#allocation3 + $0x78] sm:$0xff]
        %v4883 = vld [vmem:[#allocation3 + $0x80] sm:$0xff]
        %v4884 = vld [vmem:[#allocation3 + $0x88] sm:$0xf]
        %v4885 = vld [vmem:[#allocation3 + $0x8c] sm:$0xff]
        %v4886 = vld [vmem:[#allocation3 + $0x94] sm:$0xff]
        %v4887 = vld [vmem:[#allocation3 + $0x9c] sm:$0xf]
        %v4888 = vld [vmem:[#allocation3 + $0xa0] sm:$0xff]
        %v4889 = vld [vmem:[#allocation3 + $0xa8] sm:$0xff]
        %v4890 = vld [vmem:[#allocation3 + $0xb0] sm:$0xf]
        %v4891 = vld [vmem:[#allocation3 + $0xb4] sm:$0xff]
        %v4892 = vld [vmem:[#allocation3 + $0xbc] sm:$0xff]
        %v4893 = vld [vmem:[#allocation3 + $0xc4] sm:$0xf]
        %v4894 = vld [vmem:[#allocation3 + $0xc8] sm:$0xff]
        %v4895 = vld [vmem:[#allocation3 + $0xd0] sm:$0xff]
        %v4896 = vld [vmem:[#allocation3 + $0xd8] sm:$0xf]
        %v4897 = vld [vmem:[#allocation3 + $0xdc] sm:$0xff]
        %v4898 = vld [vmem:[#allocation3 + $0xe4] sm:$0xff]
        %v4899 = vld [vmem:[#allocation3 + $0xec] sm:$0xf]
        %v4900 = vld [vmem:[#allocation3 + $0xf0] sm:$0xff]
        %v4901 = vld [vmem:[#allocation3 + $0xf8] sm:$0xff]
        %v4902 = vld [vmem:[#allocation3 + $0x100] sm:$0xf]
        %v4903 = vld [vmem:[#allocation3 + $0x104] sm:$0xff]
        %v4904 = vld [vmem:[#allocation3 + $0x10c] sm:$0xff]
        %v4905 = vld [vmem:[#allocation3 + $0x114] sm:$0xf]
        %v4906 = vld [vmem:[#allocation3 + $0x118] sm:$0xff]
        %v4907 = vld [vmem:[#allocation3 + $0x120] sm:$0xff]
        %v4908 = vld [vmem:[#allocation3 + $0x128] sm:$0xf]
        %v4909 = vld [vmem:[#allocation3 + $0x12c] sm:$0xff]
        %v4910 = vld [vmem:[#allocation3 + $0x134] sm:$0xff]
        %v4911 = vld [vmem:[#allocation3 + $0x13c] sm:$0xf]
        %v4912 = vld [vmem:[#allocation3 + $0x140] sm:$0xff]
        %v4913 = vld [vmem:[#allocation3 + $0x148] sm:$0xff]
        %v4914 = vld [vmem:[#allocation3 + $0x150] sm:$0xf]
        %v4915 = vld [vmem:[#allocation3 + $0x154] sm:$0xff]
        %v4916 = vld [vmem:[#allocation3 + $0x15c] sm:$0xff]
        %v4917 = vld [vmem:[#allocation3 + $0x164] sm:$0xf]
        %v4918 = vld [vmem:[#allocation3 + $0x168] sm:$0xff]
        %v4919 = vld [vmem:[#allocation3 + $0x170] sm:$0xff]
        %v4920 = vld [vmem:[#allocation3 + $0x178] sm:$0xf]
        %v4921 = vld [vmem:[#allocation3 + $0x17c] sm:$0xff]
        %v4922 = vld [vmem:[#allocation3 + $0x184] sm:$0xff]
        %v4923 = vld [vmem:[#allocation3 + $0x18c] sm:$0xf]
        %v4924 = vld [vmem:[#allocation3 + $0x190] sm:$0xff]
        %v4925 = vld [vmem:[#allocation3 + $0x198] sm:$0xff]
        %v4926 = vld [vmem:[#allocation3 + $0x1a0] sm:$0xf]
        %v4927 = vld [vmem:[#allocation3 + $0x1a4] sm:$0xff]
        %v4928 = vld [vmem:[#allocation3 + $0x1ac] sm:$0xff]
        %v4929 = vld [vmem:[#allocation3 + $0x1b4] sm:$0xf]
        %v4930 = vld [vmem:[#allocation3 + $0x1b8] sm:$0xff]
        %v4931 = vld [vmem:[#allocation3 + $0x1c0] sm:$0xff]
        %v4932 = vld [vmem:[#allocation3 + $0x1c8] sm:$0xf]
        %v4933 = vld [vmem:[#allocation3 + $0x1cc] sm:$0xff]
        %v4934 = vld [vmem:[#allocation3 + $0x1d4] sm:$0xff]
        %v4935 = vld [vmem:[#allocation3 + $0x1dc] sm:$0xf]
        %v4936 = vld [vmem:[#allocation3 + $0x1e0] sm:$0xff]
        %v4937 = vld [vmem:[#allocation3 + $0x1e8] sm:$0xff]
        %v4938 = vld [vmem:[#allocation3 + $0x1f0] sm:$0xf]
        %v4939 = vld [vmem:[#allocation3 + $0x1f4] sm:$0xff]
        %v4940 = vld [vmem:[#allocation3 + $0x1fc] sm:$0xff]
        %v4941 = vld [vmem:[#allocation3 + $0x204] sm:$0xf]
        %v4942 = vld [vmem:[#allocation3 + $0x208] sm:$0xff]
        %v4943 = vld [vmem:[#allocation3 + $0x210] sm:$0xff]
        %v4944 = vld [vmem:[#allocation3 + $0x218] sm:$0xf]
        %v4945 = vld [vmem:[#allocation3 + $0x21c] sm:$0xff]
        %v4946 = vld [vmem:[#allocation3 + $0x224] sm:$0xff]
        %v4947 = vld [vmem:[#allocation3 + $0x22c] sm:$0xf]
        %v4948 = vld [vmem:[#allocation3 + $0x230] sm:$0xff]
        %v4949 = vld [vmem:[#allocation3 + $0x238] sm:$0xff]
        %v4950 = vld [vmem:[#allocation3 + $0x240] sm:$0xf]
        %v4951 = vld [vmem:[#allocation3 + $0x244] sm:$0xff]
        %v4952 = vld [vmem:[#allocation3 + $0x24c] sm:$0xff]
        %v4953 = vld [vmem:[#allocation3 + $0x254] sm:$0xf]
        %v4954 = vld [vmem:[#allocation3 + $0x258] sm:$0xff]
        %v4955 = vld [vmem:[#allocation3 + $0x260] sm:$0xff]
        %v4956 = vld [vmem:[#allocation3 + $0x268] sm:$0xf]
        %v4957 = vld [vmem:[#allocation3 + $0x26c] sm:$0xff]
        %v4958 = vld [vmem:[#allocation3 + $0x274] sm:$0xff]
        %v4959 = vld [vmem:[#allocation3 + $0x27c] sm:$0xf]
        %v4960 = vld [vmem:[#allocation3 + $0x280] sm:$0xff]
        %v4961 = vld [vmem:[#allocation3 + $0x288] sm:$0xff]
        %v4962 = vld [vmem:[#allocation3 + $0x290] sm:$0xf]
        %v4963 = vld [vmem:[#allocation3 + $0x294] sm:$0xff]
        %v4964 = vld [vmem:[#allocation3 + $0x29c] sm:$0xff]
        %v4965 = vld [vmem:[#allocation3 + $0x2a4] sm:$0xf]
        %v4966 = vld [vmem:[#allocation3 + $0x2a8] sm:$0xff]
        %v4967 = vld [vmem:[#allocation3 + $0x2b0] sm:$0xff]
        %v4968 = vld [vmem:[#allocation3 + $0x2b8] sm:$0xf]
        %v4969 = vld [vmem:[#allocation3 + $0x2bc] sm:$0xff]
        %v4970 = vld [vmem:[#allocation3 + $0x2c4] sm:$0xff]
        %v4971 = vld [vmem:[#allocation3 + $0x2cc] sm:$0xf]
        %v4972 = vld [vmem:[#allocation3 + $0x2d0] sm:$0xff]
        %v4973 = vld [vmem:[#allocation3 + $0x2d8] sm:$0xff]
        %v4974 = vld [vmem:[#allocation3 + $0x2e0] sm:$0xf]
        %v4975 = vld [vmem:[#allocation3 + $0x2e4] sm:$0xff]
        %v4976 = vld [vmem:[#allocation3 + $0x2ec] sm:$0xff]
        %v4977 = vld [vmem:[#allocation3 + $0x2f4] sm:$0xf]
        %v4978 = vld [vmem:[#allocation3 + $0x2f8] sm:$0xff]
        %v4979 = vld [vmem:[#allocation3 + $0x300] sm:$0xff]
        %v4980 = vld [vmem:[#allocation3 + $0x308] sm:$0xf]
        %v4981 = vld [vmem:[#allocation3 + $0x30c] sm:$0xff]
        %v4982 = vld [vmem:[#allocation3 + $0x314] sm:$0xff]
        %v4983 = vld [vmem:[#allocation3 + $0x31c] sm:$0xf]
        %v4984 = vld [vmem:[#allocation3 + $0x320] sm:$0xff]
        %v4985 = vld [vmem:[#allocation3 + $0x328] sm:$0xff]
        %v4986 = vld [vmem:[#allocation3 + $0x330] sm:$0xf]
        %v4987 = vld [vmem:[#allocation3 + $0x334] sm:$0xff]
        %v4988 = vld [vmem:[#allocation3 + $0x33c] sm:$0xff]
        %v4989 = vld [vmem:[#allocation3 + $0x344] sm:$0xf]
        %v4990 = vld [vmem:[#allocation3 + $0x348] sm:$0xff]
        %v4991 = vld [vmem:[#allocation3 + $0x350] sm:$0xff]
        %v4992 = vld [vmem:[#allocation3 + $0x358] sm:$0xf]
        %v4993 = vld [vmem:[#allocation3 + $0x35c] sm:$0xff]
        %v4994 = vld [vmem:[#allocation3 + $0x364] sm:$0xff]
        %v4995 = vld [vmem:[#allocation3 + $0x36c] sm:$0xf]
        %v4996 = vld [vmem:[#allocation3 + $0x370] sm:$0xff]
        %v4997 = vld [vmem:[#allocation3 + $0x378] sm:$0xff]
        %v4998 = vld [vmem:[#allocation3 + $0x380] sm:$0xf]
        %v4999 = vld [vmem:[#allocation3 + $0x384] sm:$0xff]
        %v5000 = vld [vmem:[#allocation3 + $0x38c] sm:$0xff]
        %v5001 = vld [vmem:[#allocation3 + $0x394] sm:$0xf]
        %v5002 = vld [vmem:[#allocation3 + $0x398] sm:$0xff]
        %v5003 = vld [vmem:[#allocation3 + $0x3a0] sm:$0xff]
        %v5004 = vld [vmem:[#allocation3 + $0x3a8] sm:$0xf]
        %v5005 = vld [vmem:[#allocation3 + $0x3ac] sm:$0xff]
        %v5006 = vld [vmem:[#allocation3 + $0x3b4] sm:$0xff]
        %v5007 = vld [vmem:[#allocation3 + $0x3bc] sm:$0xf]
        %v5008 = vld [vmem:[#allocation3 + $0x3c0] sm:$0xff]
        %v5009 = vld [vmem:[#allocation3 + $0x3c8] sm:$0xff]
        %v5010 = vld [vmem:[#allocation3 + $0x3d0] sm:$0xf]
        %v5011 = vld [vmem:[#allocation3 + $0x3d4] sm:$0xff]
        %v5012 = vld [vmem:[#allocation3 + $0x3dc] sm:$0xff]
        %v5013 = vld [vmem:[#allocation3 + $0x3e4] sm:$0xf]
        %v5014 = vld [vmem:[#allocation3 + $0x3e8] sm:$0xff]
        %v5015 = vld [vmem:[#allocation3 + $0x3f0] sm:$0xff]
        %v5016 = vld [vmem:[#allocation3 + $0x3f8] sm:$0xf]
        %v5017 = vld [vmem:[#allocation3 + $0x3fc] sm:$0xff]
        %v5018 = vld [vmem:[#allocation3 + $0x404] sm:$0xff]
        %v5019 = vld [vmem:[#allocation3 + $0x40c] sm:$0xf]
        %v5020 = vld [vmem:[#allocation3 + $0x410] sm:$0xff]
        %v5021 = vld [vmem:[#allocation3 + $0x418] sm:$0xff]
        %v5022 = vld [vmem:[#allocation3 + $0x420] sm:$0xf]
        %v5023 = vld [vmem:[#allocation3 + $0x424] sm:$0xff]
        %v5024 = vld [vmem:[#allocation3 + $0x42c] sm:$0xff]
        %v5025 = vld [vmem:[#allocation3 + $0x434] sm:$0xf]
        %v5026 = vld [vmem:[#allocation3 + $0x438] sm:$0xff]
        %v5027 = vld [vmem:[#allocation3 + $0x440] sm:$0xff]
        %v5028 = vld [vmem:[#allocation3 + $0x448] sm:$0xf]
        %v5029 = vld [vmem:[#allocation3 + $0x44c] sm:$0xff]
        %v5030 = vld [vmem:[#allocation3 + $0x454] sm:$0xff]
        %v5031 = vld [vmem:[#allocation3 + $0x45c] sm:$0xf]
        %v5032 = vld [vmem:[#allocation3 + $0x460] sm:$0xff]
        %v5033 = vld [vmem:[#allocation3 + $0x468] sm:$0xff]
        %v5034 = vld [vmem:[#allocation3 + $0x470] sm:$0xf]
        %v5035 = vld [vmem:[#allocation3 + $0x474] sm:$0xff]
        %v5036 = vld [vmem:[#allocation3 + $0x47c] sm:$0xff]
        %v5037 = vld [vmem:[#allocation3 + $0x484] sm:$0xf]
        %v5038 = vld [vmem:[#allocation3 + $0x488] sm:$0xff]
        %v5039 = vld [vmem:[#allocation3 + $0x490] sm:$0xff]
        %v5040 = vld [vmem:[#allocation3 + $0x498] sm:$0xf]
        %v5041 = vld [vmem:[#allocation3 + $0x49c] sm:$0xff]
        %v5042 = vld [vmem:[#allocation3 + $0x4a4] sm:$0xff]
        %v5043 = vld [vmem:[#allocation3 + $0x4ac] sm:$0xf]
        %v5044 = vld [vmem:[#allocation3 + $0x4b0] sm:$0xff]
        %v5045 = vld [vmem:[#allocation3 + $0x4b8] sm:$0xff]
        %v5046 = vld [vmem:[#allocation3 + $0x4c0] sm:$0xf]
        %v5047 = vld [vmem:[#allocation3 + $0x4c4] sm:$0xff]
        %v5048 = vld [vmem:[#allocation3 + $0x4cc] sm:$0xff]
        %v5049 = vld [vmem:[#allocation3 + $0x4d4] sm:$0xf]
        %v5050 = vld [vmem:[#allocation3 + $0x4d8] sm:$0xff]
        %v5051 = vld [vmem:[#allocation3 + $0x4e0] sm:$0xff]
        %v5052 = vld [vmem:[#allocation3 + $0x4e8] sm:$0xf]
        %v5053 = vld [vmem:[#allocation3 + $0x4ec] sm:$0xff]
        %v5054 = vld [vmem:[#allocation3 + $0x4f4] sm:$0xff]
        %v5055 = vld [vmem:[#allocation3 + $0x4fc] sm:$0xf]
        %v5056 = vld [vmem:[#allocation3 + $0x500] sm:$0xff]
        %v5057 = vld [vmem:[#allocation3 + $0x508] sm:$0xff]
        %v5058 = vld [vmem:[#allocation3 + $0x510] sm:$0xf]
        %v5059 = vld [vmem:[#allocation3 + $0x514] sm:$0xff]
        %v5060 = vld [vmem:[#allocation3 + $0x51c] sm:$0xff]
        %v5061 = vld [vmem:[#allocation3 + $0x524] sm:$0xf]
        %v5062 = vld [vmem:[#allocation3 + $0x528] sm:$0xff]
        %v5063 = vld [vmem:[#allocation3 + $0x530] sm:$0xff]
        %v5064 = vld [vmem:[#allocation3 + $0x538] sm:$0xf]
        %v5065 = vld [vmem:[#allocation3 + $0x53c] sm:$0xff]
        %v5066 = vld [vmem:[#allocation3 + $0x544] sm:$0xff]
        %v5067 = vld [vmem:[#allocation3 + $0x54c] sm:$0xf]
        %v5068 = vld [vmem:[#allocation3 + $0x550] sm:$0xff]
        %v5069 = vld [vmem:[#allocation3 + $0x558] sm:$0xff]
        %v5070 = vld [vmem:[#allocation3 + $0x560] sm:$0xf]
        %v5071 = vld [vmem:[#allocation3 + $0x564] sm:$0xff]
        %v5072 = vld [vmem:[#allocation3 + $0x56c] sm:$0xff]
        %v5073 = vld [vmem:[#allocation3 + $0x574] sm:$0xf]
        %v5074 = vld [vmem:[#allocation3 + $0x578] sm:$0xff]
        %v5075 = vld [vmem:[#allocation3 + $0x580] sm:$0xff]
        %v5076 = vld [vmem:[#allocation3 + $0x588] sm:$0xf]
        %v5077 = vld [vmem:[#allocation3 + $0x58c] sm:$0xff]
        %v5078 = vld [vmem:[#allocation3 + $0x594] sm:$0xff]
        %v5079 = vld [vmem:[#allocation3 + $0x59c] sm:$0xf]
        %v5080 = vld [vmem:[#allocation3 + $0x5a0] sm:$0xff]
        %v5081 = vld [vmem:[#allocation3 + $0x5a8] sm:$0xff]
        %v5082 = vld [vmem:[#allocation3 + $0x5b0] sm:$0xf]
        %v5083 = vld [vmem:[#allocation3 + $0x5b4] sm:$0xff]
        %v5084 = vld [vmem:[#allocation3 + $0x5bc] sm:$0xff]
        %v5085 = vld [vmem:[#allocation3 + $0x5c4] sm:$0xf]
        %v5086 = vld [vmem:[#allocation3 + $0x5c8] sm:$0xff]
        %v5087 = vld [vmem:[#allocation3 + $0x5d0] sm:$0xff]
        %v5088 = vld [vmem:[#allocation3 + $0x5d8] sm:$0xf]
        %v5089 = vld [vmem:[#allocation3 + $0x5dc] sm:$0xff]
        %v5090 = vld [vmem:[#allocation3 + $0x5e4] sm:$0xff]
        %v5091 = vld [vmem:[#allocation3 + $0x5ec] sm:$0xf]
        %v5092 = vld [vmem:[#allocation3 + $0x5f0] sm:$0xff]
        %v5093 = vld [vmem:[#allocation3 + $0x5f8] sm:$0xff]
        %v5094 = vld [vmem:[#allocation3 + $0x600] sm:$0xf]
        %v5095 = vld [vmem:[#allocation3 + $0x604] sm:$0xff]
        %v5096 = vld [vmem:[#allocation3 + $0x60c] sm:$0xff]
        %v5097 = vld [vmem:[#allocation3 + $0x614] sm:$0xf]
        %v5098 = vld [vmem:[#allocation3 + $0x618] sm:$0xff]
        %v5099 = vld [vmem:[#allocation3 + $0x620] sm:$0xff]
        %v5100 = vld [vmem:[#allocation3 + $0x628] sm:$0xf]
        %v5101 = vld [vmem:[#allocation3 + $0x62c] sm:$0xff]
        %v5102 = vld [vmem:[#allocation3 + $0x634] sm:$0xff]
        %v5103 = vld [vmem:[#allocation3 + $0x63c] sm:$0xf]
        %v5104 = vld [vmem:[%s2] sm:$0xf]
        %v5105 = vld [vmem:[%s2 + $0x4] sm:$0xf]
        %v5106 = vld [vmem:[%s2 + $0x8] sm:$0xf]
        %v5107 = vld [vmem:[%s2 + $0xc] sm:$0xf]
        %v5108 = vld [vmem:[%s2 + $0x10] sm:$0xf]
        %v5109 = vld [vmem:[%s2 + $0x14] sm:$0xf]
        %v5110 = vld [vmem:[%s2 + $0x18] sm:$0xf]
        %v5111 = vld [vmem:[%s2 + $0x1c] sm:$0xf]
        %v5112 = vld [vmem:[%s2 + $0x20] sm:$0xf]
        %v5113 = vld [vmem:[%s2 + $0x24] sm:$0xf]
        %v5114 = vld [vmem:[%s2 + $0x28] sm:$0xf]
        %v5115 = vld [vmem:[%s2 + $0x2c] sm:$0xf]
        %v5116 = vld [vmem:[%s2 + $0x30] sm:$0xf]
        %v5117 = vld [vmem:[%s2 + $0x34] sm:$0xf]
        %v5118 = vld [vmem:[%s2 + $0x38] sm:$0xf]
        %v5119 = vld [vmem:[%s2 + $0x3c] sm:$0xf]
        %v5120 = vld [vmem:[%s2 + $0x40] sm:$0xf]
        %v5121 = vld [vmem:[%s2 + $0x44] sm:$0xf]
        %v5122 = vld [vmem:[%s2 + $0x48] sm:$0xf]
        %v5123 = vld [vmem:[%s2 + $0x4c] sm:$0xf]
        %v5124 = vld [vmem:[%s2 + $0x50] sm:$0xf]
        %v5125 = vld [vmem:[%s2 + $0x54] sm:$0xf]
        %v5126 = vld [vmem:[%s2 + $0x58] sm:$0xf]
        %v5127 = vld [vmem:[%s2 + $0x5c] sm:$0xf]
        %v5128 = vld [vmem:[%s2 + $0x60] sm:$0xf]
        %v5129 = vld [vmem:[%s2 + $0x64] sm:$0xf]
        %v5130 = vld [vmem:[%s2 + $0x68] sm:$0xf]
        %v5131 = vld [vmem:[%s2 + $0x6c] sm:$0xf]
        %v5132 = vld [vmem:[%s2 + $0x70] sm:$0xf]
        %v5133 = vld [vmem:[%s2 + $0x74] sm:$0xf]
        %v5134 = vld [vmem:[%s2 + $0x78] sm:$0xf]
        %v5135 = vld [vmem:[%s2 + $0x7c] sm:$0xf]
        %v5136 = vld [vmem:[%s2 + $0x80] sm:$0xf]
        %v5137 = vld [vmem:[%s2 + $0x84] sm:$0xf]
        %v5138 = vld [vmem:[%s2 + $0x88] sm:$0xf]
        %v5139 = vld [vmem:[%s2 + $0x8c] sm:$0xf]
        %v5140 = vld [vmem:[%s2 + $0x90] sm:$0xf]
        %v5141 = vld [vmem:[%s2 + $0x94] sm:$0xf]
        %v5142 = vld [vmem:[%s2 + $0x98] sm:$0xf]
        %v5143 = vld [vmem:[%s2 + $0x9c] sm:$0xf]
        %v5144 = vld [vmem:[%s2 + $0xa0] sm:$0xf]
        %v5145 = vld [vmem:[%s2 + $0xa4] sm:$0xf]
        %v5146 = vld [vmem:[%s2 + $0xa8] sm:$0xf]
        %v5147 = vld [vmem:[%s2 + $0xac] sm:$0xf]
        %v5148 = vld [vmem:[%s2 + $0xb0] sm:$0xf]
        %v5149 = vld [vmem:[%s2 + $0xb4] sm:$0xf]
        %v5150 = vld [vmem:[%s2 + $0xb8] sm:$0xf]
        %v5151 = vld [vmem:[%s2 + $0xbc] sm:$0xf]
        %v5152 = vld [vmem:[%s2 + $0xc0] sm:$0xf]
        %v5153 = vld [vmem:[%s2 + $0xc4] sm:$0xf]
        %v5154 = vld [vmem:[%s2 + $0xc8] sm:$0xf]
        %v5155 = vld [vmem:[%s2 + $0xcc] sm:$0xf]
        %v5156 = vld [vmem:[%s2 + $0xd0] sm:$0xf]
        %v5157 = vld [vmem:[%s2 + $0xd4] sm:$0xf]
        %v5158 = vld [vmem:[%s2 + $0xd8] sm:$0xf]
        %v5159 = vld [vmem:[%s2 + $0xdc] sm:$0xf]
        %v5160 = vld [vmem:[%s2 + $0xe0] sm:$0xf]
        %v5161 = vld [vmem:[%s2 + $0xe4] sm:$0xf]
        %v5162 = vld [vmem:[%s2 + $0xe8] sm:$0xf]
        %v5163 = vld [vmem:[%s2 + $0xec] sm:$0xf]
        %v5164 = vld [vmem:[%s2 + $0xf0] sm:$0xf]
        %v5165 = vld [vmem:[%s2 + $0xf4] sm:$0xf]
        %v5166 = vld [vmem:[%s2 + $0xf8] sm:$0xf]
        %v5167 = vld [vmem:[%s2 + $0xfc] sm:$0xf]
        %v5168 = vld [vmem:[%s2 + $0x100] sm:$0xf]
        %v5169 = vld [vmem:[%s2 + $0x104] sm:$0xf]
        %v5170 = vld [vmem:[%s2 + $0x108] sm:$0xf]
        %v5171 = vld [vmem:[%s2 + $0x10c] sm:$0xf]
        %v5172 = vld [vmem:[%s2 + $0x110] sm:$0xf]
        %v5173 = vld [vmem:[%s2 + $0x114] sm:$0xf]
        %v5174 = vld [vmem:[%s2 + $0x118] sm:$0xf]
        %v5175 = vld [vmem:[%s2 + $0x11c] sm:$0xf]
        %v5416 = vunpack.c.l.b16 %v4864
        %v5417 = vunpack.c.h.b16 %v4864
        %v5418 = vunpack.c.l.b16 %v4865
        %v5419 = vunpack.c.h.b16 %v4865
        %v5420 = vunpack.c.l.b16 %v4866
        %v5421 = vunpack.c.l.b16 %v4867
        %v5422 = vunpack.c.h.b16 %v4867
        %v5423 = vunpack.c.l.b16 %v4868
        %v5424 = vunpack.c.h.b16 %v4868
        %v5425 = vunpack.c.l.b16 %v4869
        %v5426 = vunpack.c.l.b16 %v4870
        %v5427 = vunpack.c.h.b16 %v4870
        %v5428 = vunpack.c.l.b16 %v4871
        %v5429 = vunpack.c.h.b16 %v4871
        %v5430 = vunpack.c.l.b16 %v4872
        %v5431 = vunpack.c.l.b16 %v4873
        %v5432 = vunpack.c.h.b16 %v4873
        %v5433 = vunpack.c.l.b16 %v4874
        %v5434 = vunpack.c.h.b16 %v4874
        %v5435 = vunpack.c.l.b16 %v4875
        %v5436 = vunpack.c.l.b16 %v4876
        %v5437 = vunpack.c.h.b16 %v4876
        %v5438 = vunpack.c.l.b16 %v4877
        %v5439 = vunpack.c.h.b16 %v4877
        %v5440 = vunpack.c.l.b16 %v4878
        %v5441 = vunpack.c.l.b16 %v4879
        %v5442 = vunpack.c.h.b16 %v4879
        %v5443 = vunpack.c.l.b16 %v4880
        %v5444 = vunpack.c.h.b16 %v4880
        %v5445 = vunpack.c.l.b16 %v4881
        %v5446 = vunpack.c.l.b16 %v4882
        %v5447 = vunpack.c.h.b16 %v4882
        %v5448 = vunpack.c.l.b16 %v4883
        %v5449 = vunpack.c.h.b16 %v4883
        %v5450 = vunpack.c.l.b16 %v4884
        %v5451 = vunpack.c.l.b16 %v4885
        %v5452 = vunpack.c.h.b16 %v4885
        %v5453 = vunpack.c.l.b16 %v4886
        %v5454 = vunpack.c.h.b16 %v4886
        %v5455 = vunpack.c.l.b16 %v4887
        %v5456 = vunpack.c.l.b16 %v4888
        %v5457 = vunpack.c.h.b16 %v4888
        %v5458 = vunpack.c.l.b16 %v4889
        %v5459 = vunpack.c.h.b16 %v4889
        %v5460 = vunpack.c.l.b16 %v4890
        %v5461 = vunpack.c.l.b16 %v4891
        %v5462 = vunpack.c.h.b16 %v4891
        %v5463 = vunpack.c.l.b16 %v4892
        %v5464 = vunpack.c.h.b16 %v4892
        %v5465 = vunpack.c.l.b16 %v4893
        %v5466 = vunpack.c.l.b16 %v4894
        %v5467 = vunpack.c.h.b16 %v4894
        %v5468 = vunpack.c.l.b16 %v4895
        %v5469 = vunpack.c.h.b16 %v4895
        %v5470 = vunpack.c.l.b16 %v4896
        %v5471 = vunpack.c.l.b16 %v4897
        %v5472 = vunpack.c.h.b16 %v4897
        %v5473 = vunpack.c.l.b16 %v4898
        %v5474 = vunpack.c.h.b16 %v4898
        %v5475 = vunpack.c.l.b16 %v4899
        %v5476 = vunpack.c.l.b16 %v4900
        %v5477 = vunpack.c.h.b16 %v4900
        %v5478 = vunpack.c.l.b16 %v4901
        %v5479 = vunpack.c.h.b16 %v4901
        %v5480 = vunpack.c.l.b16 %v4902
        %v5481 = vunpack.c.l.b16 %v4903
        %v5482 = vunpack.c.h.b16 %v4903
        %v5483 = vunpack.c.l.b16 %v4904
        %v5484 = vunpack.c.h.b16 %v4904
        %v5485 = vunpack.c.l.b16 %v4905
        %v5486 = vunpack.c.l.b16 %v4906
        %v5487 = vunpack.c.h.b16 %v4906
        %v5488 = vunpack.c.l.b16 %v4907
        %v5489 = vunpack.c.h.b16 %v4907
        %v5490 = vunpack.c.l.b16 %v4908
        %v5491 = vunpack.c.l.b16 %v4909
        %v5492 = vunpack.c.h.b16 %v4909
        %v5493 = vunpack.c.l.b16 %v4910
        %v5494 = vunpack.c.h.b16 %v4910
        %v5495 = vunpack.c.l.b16 %v4911
        %v5496 = vunpack.c.l.b16 %v4912
        %v5497 = vunpack.c.h.b16 %v4912
        %v5498 = vunpack.c.l.b16 %v4913
        %v5499 = vunpack.c.h.b16 %v4913
        %v5500 = vunpack.c.l.b16 %v4914
        %v5501 = vunpack.c.l.b16 %v4915
        %v5502 = vunpack.c.h.b16 %v4915
        %v5503 = vunpack.c.l.b16 %v4916
        %v5504 = vunpack.c.h.b16 %v4916
        %v5505 = vunpack.c.l.b16 %v4917
        %v5506 = vunpack.c.l.b16 %v4918
        %v5507 = vunpack.c.h.b16 %v4918
        %v5508 = vunpack.c.l.b16 %v4919
        %v5509 = vunpack.c.h.b16 %v4919
        %v5510 = vunpack.c.l.b16 %v4920
        %v5511 = vunpack.c.l.b16 %v4921
        %v5512 = vunpack.c.h.b16 %v4921
        %v5513 = vunpack.c.l.b16 %v4922
        %v5514 = vunpack.c.h.b16 %v4922
        %v5515 = vunpack.c.l.b16 %v4923
        %v5516 = vunpack.c.l.b16 %v4924
        %v5517 = vunpack.c.h.b16 %v4924
        %v5518 = vunpack.c.l.b16 %v4925
        %v5519 = vunpack.c.h.b16 %v4925
        %v5520 = vunpack.c.l.b16 %v4926
        %v5521 = vunpack.c.l.b16 %v4927
        %v5522 = vunpack.c.h.b16 %v4927
        %v5523 = vunpack.c.l.b16 %v4928
        %v5524 = vunpack.c.h.b16 %v4928
        %v5525 = vunpack.c.l.b16 %v4929
        %v5526 = vunpack.c.l.b16 %v4930
        %v5527 = vunpack.c.h.b16 %v4930
        %v5528 = vunpack.c.l.b16 %v4931
        %v5529 = vunpack.c.h.b16 %v4931
        %v5530 = vunpack.c.l.b16 %v4932
        %v5531 = vunpack.c.l.b16 %v4933
        %v5532 = vunpack.c.h.b16 %v4933
        %v5533 = vunpack.c.l.b16 %v4934
        %v5534 = vunpack.c.h.b16 %v4934
        %v5535 = vunpack.c.l.b16 %v4935
        %v5536 = vunpack.c.l.b16 %v4936
        %v5537 = vunpack.c.h.b16 %v4936
        %v5538 = vunpack.c.l.b16 %v4937
        %v5539 = vunpack.c.h.b16 %v4937
        %v5540 = vunpack.c.l.b16 %v4938
        %v5541 = vunpack.c.l.b16 %v4939
        %v5542 = vunpack.c.h.b16 %v4939
        %v5543 = vunpack.c.l.b16 %v4940
        %v5544 = vunpack.c.h.b16 %v4940
        %v5545 = vunpack.c.l.b16 %v4941
        %v5546 = vunpack.c.l.b16 %v4942
        %v5547 = vunpack.c.h.b16 %v4942
        %v5548 = vunpack.c.l.b16 %v4943
        %v5549 = vunpack.c.h.b16 %v4943
        %v5550 = vunpack.c.l.b16 %v4944
        %v5551 = vunpack.c.l.b16 %v4945
        %v5552 = vunpack.c.h.b16 %v4945
        %v5553 = vunpack.c.l.b16 %v4946
        %v5554 = vunpack.c.h.b16 %v4946
        %v5555 = vunpack.c.l.b16 %v4947
        %v5556 = vunpack.c.l.b16 %v4948
        %v5557 = vunpack.c.h.b16 %v4948
        %v5558 = vunpack.c.l.b16 %v4949
        %v5559 = vunpack.c.h.b16 %v4949
        %v5560 = vunpack.c.l.b16 %v4950
        %v5561 = vunpack.c.l.b16 %v4951
        %v5562 = vunpack.c.h.b16 %v4951
        %v5563 = vunpack.c.l.b16 %v4952
        %v5564 = vunpack.c.h.b16 %v4952
        %v5565 = vunpack.c.l.b16 %v4953
        %v5566 = vunpack.c.l.b16 %v4954
        %v5567 = vunpack.c.h.b16 %v4954
        %v5568 = vunpack.c.l.b16 %v4955
        %v5569 = vunpack.c.h.b16 %v4955
        %v5570 = vunpack.c.l.b16 %v4956
        %v5571 = vunpack.c.l.b16 %v4957
        %v5572 = vunpack.c.h.b16 %v4957
        %v5573 = vunpack.c.l.b16 %v4958
        %v5574 = vunpack.c.h.b16 %v4958
        %v5575 = vunpack.c.l.b16 %v4959
        %v5576 = vunpack.c.l.b16 %v4960
        %v5577 = vunpack.c.h.b16 %v4960
        %v5578 = vunpack.c.l.b16 %v4961
        %v5579 = vunpack.c.h.b16 %v4961
        %v5580 = vunpack.c.l.b16 %v4962
        %v5581 = vunpack.c.l.b16 %v4963
        %v5582 = vunpack.c.h.b16 %v4963
        %v5583 = vunpack.c.l.b16 %v4964
        %v5584 = vunpack.c.h.b16 %v4964
        %v5585 = vunpack.c.l.b16 %v4965
        %v5586 = vunpack.c.l.b16 %v4966
        %v5587 = vunpack.c.h.b16 %v4966
        %v5588 = vunpack.c.l.b16 %v4967
        %v5589 = vunpack.c.h.b16 %v4967
        %v5590 = vunpack.c.l.b16 %v4968
        %v5591 = vunpack.c.l.b16 %v4969
        %v5592 = vunpack.c.h.b16 %v4969
        %v5593 = vunpack.c.l.b16 %v4970
        %v5594 = vunpack.c.h.b16 %v4970
        %v5595 = vunpack.c.l.b16 %v4971
        %v5596 = vunpack.c.l.b16 %v4972
        %v5597 = vunpack.c.h.b16 %v4972
        %v5598 = vunpack.c.l.b16 %v4973
        %v5599 = vunpack.c.h.b16 %v4973
        %v5600 = vunpack.c.l.b16 %v4974
        %v5601 = vunpack.c.l.b16 %v4975
        %v5602 = vunpack.c.h.b16 %v4975
        %v5603 = vunpack.c.l.b16 %v4976
        %v5604 = vunpack.c.h.b16 %v4976
        %v5605 = vunpack.c.l.b16 %v4977
        %v5606 = vunpack.c.l.b16 %v4978
        %v5607 = vunpack.c.h.b16 %v4978
        %v5608 = vunpack.c.l.b16 %v4979
        %v5609 = vunpack.c.h.b16 %v4979
        %v5610 = vunpack.c.l.b16 %v4980
        %v5611 = vunpack.c.l.b16 %v4981
        %v5612 = vunpack.c.h.b16 %v4981
        %v5613 = vunpack.c.l.b16 %v4982
        %v5614 = vunpack.c.h.b16 %v4982
        %v5615 = vunpack.c.l.b16 %v4983
        %v5616 = vunpack.c.l.b16 %v4984
        %v5617 = vunpack.c.h.b16 %v4984
        %v5618 = vunpack.c.l.b16 %v4985
        %v5619 = vunpack.c.h.b16 %v4985
        %v5620 = vunpack.c.l.b16 %v4986
        %v5621 = vunpack.c.l.b16 %v4987
        %v5622 = vunpack.c.h.b16 %v4987
        %v5623 = vunpack.c.l.b16 %v4988
        %v5624 = vunpack.c.h.b16 %v4988
        %v5625 = vunpack.c.l.b16 %v4989
        %v5626 = vunpack.c.l.b16 %v4990
        %v5627 = vunpack.c.h.b16 %v4990
        %v5628 = vunpack.c.l.b16 %v4991
        %v5629 = vunpack.c.h.b16 %v4991
        %v5630 = vunpack.c.l.b16 %v4992
        %v5631 = vunpack.c.l.b16 %v4993
        %v5632 = vunpack.c.h.b16 %v4993
        %v5633 = vunpack.c.l.b16 %v4994
        %v5634 = vunpack.c.h.b16 %v4994
        %v5635 = vunpack.c.l.b16 %v4995
        %v5636 = vunpack.c.l.b16 %v4996
        %v5637 = vunpack.c.h.b16 %v4996
        %v5638 = vunpack.c.l.b16 %v4997
        %v5639 = vunpack.c.h.b16 %v4997
        %v5640 = vunpack.c.l.b16 %v4998
        %v5641 = vunpack.c.l.b16 %v4999
        %v5642 = vunpack.c.h.b16 %v4999
        %v5643 = vunpack.c.l.b16 %v5000
        %v5644 = vunpack.c.h.b16 %v5000
        %v5645 = vunpack.c.l.b16 %v5001
        %v5646 = vunpack.c.l.b16 %v5002
        %v5647 = vunpack.c.h.b16 %v5002
        %v5648 = vunpack.c.l.b16 %v5003
        %v5649 = vunpack.c.h.b16 %v5003
        %v5650 = vunpack.c.l.b16 %v5004
        %v5651 = vunpack.c.l.b16 %v5005
        %v5652 = vunpack.c.h.b16 %v5005
        %v5653 = vunpack.c.l.b16 %v5006
        %v5654 = vunpack.c.h.b16 %v5006
        %v5655 = vunpack.c.l.b16 %v5007
        %v5656 = vunpack.c.l.b16 %v5008
        %v5657 = vunpack.c.h.b16 %v5008
        %v5658 = vunpack.c.l.b16 %v5009
        %v5659 = vunpack.c.h.b16 %v5009
        %v5660 = vunpack.c.l.b16 %v5010
        %v5661 = vunpack.c.l.b16 %v5011
        %v5662 = vunpack.c.h.b16 %v5011
        %v5663 = vunpack.c.l.b16 %v5012
        %v5664 = vunpack.c.h.b16 %v5012
        %v5665 = vunpack.c.l.b16 %v5013
        %v5666 = vunpack.c.l.b16 %v5014
        %v5667 = vunpack.c.h.b16 %v5014
        %v5668 = vunpack.c.l.b16 %v5015
        %v5669 = vunpack.c.h.b16 %v5015
        %v5670 = vunpack.c.l.b16 %v5016
        %v5671 = vunpack.c.l.b16 %v5017
        %v5672 = vunpack.c.h.b16 %v5017
        %v5673 = vunpack.c.l.b16 %v5018
        %v5674 = vunpack.c.h.b16 %v5018
        %v5675 = vunpack.c.l.b16 %v5019
        %v5676 = vunpack.c.l.b16 %v5020
        %v5677 = vunpack.c.h.b16 %v5020
        %v5678 = vunpack.c.l.b16 %v5021
        %v5679 = vunpack.c.h.b16 %v5021
        %v5680 = vunpack.c.l.b16 %v5022
        %v5681 = vunpack.c.l.b16 %v5023
        %v5682 = vunpack.c.h.b16 %v5023
        %v5683 = vunpack.c.l.b16 %v5024
        %v5684 = vunpack.c.h.b16 %v5024
        %v5685 = vunpack.c.l.b16 %v5025
        %v5686 = vunpack.c.l.b16 %v5026
        %v5687 = vunpack.c.h.b16 %v5026
        %v5688 = vunpack.c.l.b16 %v5027
        %v5689 = vunpack.c.h.b16 %v5027
        %v5690 = vunpack.c.l.b16 %v5028
        %v5691 = vunpack.c.l.b16 %v5029
        %v5692 = vunpack.c.h.b16 %v5029
        %v5693 = vunpack.c.l.b16 %v5030
        %v5694 = vunpack.c.h.b16 %v5030
        %v5695 = vunpack.c.l.b16 %v5031
        %v5696 = vunpack.c.l.b16 %v5032
        %v5697 = vunpack.c.h.b16 %v5032
        %v5698 = vunpack.c.l.b16 %v5033
        %v5699 = vunpack.c.h.b16 %v5033
        %v5700 = vunpack.c.l.b16 %v5034
        %v5701 = vunpack.c.l.b16 %v5035
        %v5702 = vunpack.c.h.b16 %v5035
        %v5703 = vunpack.c.l.b16 %v5036
        %v5704 = vunpack.c.h.b16 %v5036
        %v5705 = vunpack.c.l.b16 %v5037
        %v5706 = vunpack.c.l.b16 %v5038
        %v5707 = vunpack.c.h.b16 %v5038
        %v5708 = vunpack.c.l.b16 %v5039
        %v5709 = vunpack.c.h.b16 %v5039
        %v5710 = vunpack.c.l.b16 %v5040
        %v5711 = vunpack.c.l.b16 %v5041
        %v5712 = vunpack.c.h.b16 %v5041
        %v5713 = vunpack.c.l.b16 %v5042
        %v5714 = vunpack.c.h.b16 %v5042
        %v5715 = vunpack.c.l.b16 %v5043
        %v5716 = vunpack.c.l.b16 %v5044
        %v5717 = vunpack.c.h.b16 %v5044
        %v5718 = vunpack.c.l.b16 %v5045
        %v5719 = vunpack.c.h.b16 %v5045
        %v5720 = vunpack.c.l.b16 %v5046
        %v5721 = vunpack.c.l.b16 %v5047
        %v5722 = vunpack.c.h.b16 %v5047
        %v5723 = vunpack.c.l.b16 %v5048
        %v5724 = vunpack.c.h.b16 %v5048
        %v5725 = vunpack.c.l.b16 %v5049
        %v5726 = vunpack.c.l.b16 %v5050
        %v5727 = vunpack.c.h.b16 %v5050
        %v5728 = vunpack.c.l.b16 %v5051
        %v5729 = vunpack.c.h.b16 %v5051
        %v5730 = vunpack.c.l.b16 %v5052
        %v5731 = vunpack.c.l.b16 %v5053
        %v5732 = vunpack.c.h.b16 %v5053
        %v5733 = vunpack.c.l.b16 %v5054
        %v5734 = vunpack.c.h.b16 %v5054
        %v5735 = vunpack.c.l.b16 %v5055
        %v5736 = vunpack.c.l.b16 %v5056
        %v5737 = vunpack.c.h.b16 %v5056
        %v5738 = vunpack.c.l.b16 %v5057
        %v5739 = vunpack.c.h.b16 %v5057
        %v5740 = vunpack.c.l.b16 %v5058
        %v5741 = vunpack.c.l.b16 %v5059
        %v5742 = vunpack.c.h.b16 %v5059
        %v5743 = vunpack.c.l.b16 %v5060
        %v5744 = vunpack.c.h.b16 %v5060
        %v5745 = vunpack.c.l.b16 %v5061
        %v5746 = vunpack.c.l.b16 %v5062
        %v5747 = vunpack.c.h.b16 %v5062
        %v5748 = vunpack.c.l.b16 %v5063
        %v5749 = vunpack.c.h.b16 %v5063
        %v5750 = vunpack.c.l.b16 %v5064
        %v5751 = vunpack.c.l.b16 %v5065
        %v5752 = vunpack.c.h.b16 %v5065
        %v5753 = vunpack.c.l.b16 %v5066
        %v5754 = vunpack.c.h.b16 %v5066
        %v5755 = vunpack.c.l.b16 %v5067
        %v5756 = vunpack.c.l.b16 %v5068
        %v5757 = vunpack.c.h.b16 %v5068
        %v5758 = vunpack.c.l.b16 %v5069
        %v5759 = vunpack.c.h.b16 %v5069
        %v5760 = vunpack.c.l.b16 %v5070
        %v5761 = vunpack.c.l.b16 %v5071
        %v5762 = vunpack.c.h.b16 %v5071
        %v5763 = vunpack.c.l.b16 %v5072
        %v5764 = vunpack.c.h.b16 %v5072
        %v5765 = vunpack.c.l.b16 %v5073
        %v5766 = vunpack.c.l.b16 %v5074
        %v5767 = vunpack.c.h.b16 %v5074
        %v5768 = vunpack.c.l.b16 %v5075
        %v5769 = vunpack.c.h.b16 %v5075
        %v5770 = vunpack.c.l.b16 %v5076
        %v5771 = vunpack.c.l.b16 %v5077
        %v5772 = vunpack.c.h.b16 %v5077
        %v5773 = vunpack.c.l.b16 %v5078
        %v5774 = vunpack.c.h.b16 %v5078
        %v5775 = vunpack.c.l.b16 %v5079
        %v5776 = vunpack.c.l.b16 %v5080
        %v5777 = vunpack.c.h.b16 %v5080
        %v5778 = vunpack.c.l.b16 %v5081
        %v5779 = vunpack.c.h.b16 %v5081
        %v5780 = vunpack.c.l.b16 %v5082
        %v5781 = vunpack.c.l.b16 %v5083
        %v5782 = vunpack.c.h.b16 %v5083
        %v5783 = vunpack.c.l.b16 %v5084
        %v5784 = vunpack.c.h.b16 %v5084
        %v5785 = vunpack.c.l.b16 %v5085
        %v5786 = vunpack.c.l.b16 %v5086
        %v5787 = vunpack.c.h.b16 %v5086
        %v5788 = vunpack.c.l.b16 %v5087
        %v5789 = vunpack.c.h.b16 %v5087
        %v5790 = vunpack.c.l.b16 %v5088
        %v5791 = vunpack.c.l.b16 %v5089
        %v5792 = vunpack.c.h.b16 %v5089
        %v5793 = vunpack.c.l.b16 %v5090
        %v5794 = vunpack.c.h.b16 %v5090
        %v5795 = vunpack.c.l.b16 %v5091
        %v5796 = vunpack.c.l.b16 %v5092
        %v5797 = vunpack.c.h.b16 %v5092
        %v5798 = vunpack.c.l.b16 %v5093
        %v5799 = vunpack.c.h.b16 %v5093
        %v5800 = vunpack.c.l.b16 %v5094
        %v5801 = vunpack.c.l.b16 %v5095
        %v5802 = vunpack.c.h.b16 %v5095
        %v5803 = vunpack.c.l.b16 %v5096
        %v5804 = vunpack.c.h.b16 %v5096
        %v5805 = vunpack.c.l.b16 %v5097
        %v5806 = vunpack.c.l.b16 %v5098
        %v5807 = vunpack.c.h.b16 %v5098
        %v5808 = vunpack.c.l.b16 %v5099
        %v5809 = vunpack.c.h.b16 %v5099
        %v5810 = vunpack.c.l.b16 %v5100
        %v5811 = vunpack.c.l.b16 %v5101
        %v5812 = vunpack.c.h.b16 %v5101
        %v5813 = vunpack.c.l.b16 %v5102
        %v5814 = vunpack.c.h.b16 %v5102
        %v5815 = vunpack.c.l.b16 %v5103
        %v5816 = vpack.c.b16 %v5421, %v5416
        %v5817 = vpack.c.b16 %v5422, %v5417
        %v5818 = vpack.c.b16 %v5423, %v5418
        %v5819 = vpack.c.b16 %v5424, %v5419
        %v5820 = vpack.c.b16 %v5425, %v5420
        %v5821 = vpack.c.b16 %v5431, %v5426
        %v5822 = vpack.c.b16 %v5432, %v5427
        %v5823 = vpack.c.b16 %v5433, %v5428
        %v5824 = vpack.c.b16 %v5434, %v5429
        %v5825 = vpack.c.b16 %v5435, %v5430
        %v5826 = vpack.c.b16 %v5441, %v5436
        %v5827 = vpack.c.b16 %v5442, %v5437
        %v5828 = vpack.c.b16 %v5443, %v5438
        %v5829 = vpack.c.b16 %v5444, %v5439
        %v5830 = vpack.c.b16 %v5445, %v5440
        %v5831 = vpack.c.b16 %v5451, %v5446
        %v5832 = vpack.c.b16 %v5452, %v5447
        %v5833 = vpack.c.b16 %v5453, %v5448
        %v5834 = vpack.c.b16 %v5454, %v5449
        %v5835 = vpack.c.b16 %v5455, %v5450
        %v5836 = vpack.c.b16 %v5461, %v5456
        %v5837 = vpack.c.b16 %v5462, %v5457
        %v5838 = vpack.c.b16 %v5463, %v5458
        %v5839 = vpack.c.b16 %v5464, %v5459
        %v5840 = vpack.c.b16 %v5465, %v5460
        %v5841 = vpack.c.b16 %v5471, %v5466
        %v5842 = vpack.c.b16 %v5472, %v5467
        %v5843 = vpack.c.b16 %v5473, %v5468
        %v5844 = vpack.c.b16 %v5474, %v5469
        %v5845 = vpack.c.b16 %v5475, %v5470
        %v5846 = vpack.c.b16 %v5481, %v5476
        %v5847 = vpack.c.b16 %v5482, %v5477
        %v5848 = vpack.c.b16 %v5483, %v5478
        %v5849 = vpack.c.b16 %v5484, %v5479
        %v5850 = vpack.c.b16 %v5485, %v5480
        %v5851 = vpack.c.b16 %v5491, %v5486
        %v5852 = vpack.c.b16 %v5492, %v5487
        %v5853 = vpack.c.b16 %v5493, %v5488
        %v5854 = vpack.c.b16 %v5494, %v5489
        %v5855 = vpack.c.b16 %v5495, %v5490
        %v5856 = vpack.c.b16 %v5501, %v5496
        %v5857 = vpack.c.b16 %v5502, %v5497
        %v5858 = vpack.c.b16 %v5503, %v5498
        %v5859 = vpack.c.b16 %v5504, %v5499
        %v5860 = vpack.c.b16 %v5505, %v5500
        %v5861 = vpack.c.b16 %v5511, %v5506
        %v5862 = vpack.c.b16 %v5512, %v5507
        %v5863 = vpack.c.b16 %v5513, %v5508
        %v5864 = vpack.c.b16 %v5514, %v5509
        %v5865 = vpack.c.b16 %v5515, %v5510
        %v5866 = vpack.c.b16 %v5521, %v5516
        %v5867 = vpack.c.b16 %v5522, %v5517
        %v5868 = vpack.c.b16 %v5523, %v5518
        %v5869 = vpack.c.b16 %v5524, %v5519
        %v5870 = vpack.c.b16 %v5525, %v5520
        %v5871 = vpack.c.b16 %v5531, %v5526
        %v5872 = vpack.c.b16 %v5532, %v5527
        %v5873 = vpack.c.b16 %v5533, %v5528
        %v5874 = vpack.c.b16 %v5534, %v5529
        %v5875 = vpack.c.b16 %v5535, %v5530
        %v5876 = vpack.c.b16 %v5541, %v5536
        %v5877 = vpack.c.b16 %v5542, %v5537
        %v5878 = vpack.c.b16 %v5543, %v5538
        %v5879 = vpack.c.b16 %v5544, %v5539
        %v5880 = vpack.c.b16 %v5545, %v5540
        %v5881 = vpack.c.b16 %v5551, %v5546
        %v5882 = vpack.c.b16 %v5552, %v5547
        %v5883 = vpack.c.b16 %v5553, %v5548
        %v5884 = vpack.c.b16 %v5554, %v5549
        %v5885 = vpack.c.b16 %v5555, %v5550
        %v5886 = vpack.c.b16 %v5561, %v5556
        %v5887 = vpack.c.b16 %v5562, %v5557
        %v5888 = vpack.c.b16 %v5563, %v5558
        %v5889 = vpack.c.b16 %v5564, %v5559
        %v5890 = vpack.c.b16 %v5565, %v5560
        %v5891 = vpack.c.b16 %v5571, %v5566
        %v5892 = vpack.c.b16 %v5572, %v5567
        %v5893 = vpack.c.b16 %v5573, %v5568
        %v5894 = vpack.c.b16 %v5574, %v5569
        %v5895 = vpack.c.b16 %v5575, %v5570
        %v5896 = vpack.c.b16 %v5581, %v5576
        %v5897 = vpack.c.b16 %v5582, %v5577
        %v5898 = vpack.c.b16 %v5583, %v5578
        %v5899 = vpack.c.b16 %v5584, %v5579
        %v5900 = vpack.c.b16 %v5585, %v5580
        %v5901 = vpack.c.b16 %v5591, %v5586
        %v5902 = vpack.c.b16 %v5592, %v5587
        %v5903 = vpack.c.b16 %v5593, %v5588
        %v5904 = vpack.c.b16 %v5594, %v5589
        %v5905 = vpack.c.b16 %v5595, %v5590
        %v5906 = vpack.c.b16 %v5601, %v5596
        %v5907 = vpack.c.b16 %v5602, %v5597
        %v5908 = vpack.c.b16 %v5603, %v5598
        %v5909 = vpack.c.b16 %v5604, %v5599
        %v5910 = vpack.c.b16 %v5605, %v5600
        %v5911 = vpack.c.b16 %v5611, %v5606
        %v5912 = vpack.c.b16 %v5612, %v5607
        %v5913 = vpack.c.b16 %v5613, %v5608
        %v5914 = vpack.c.b16 %v5614, %v5609
        %v5915 = vpack.c.b16 %v5615, %v5610
        %v5916 = vpack.c.b16 %v5621, %v5616
        %v5917 = vpack.c.b16 %v5622, %v5617
        %v5918 = vpack.c.b16 %v5623, %v5618
        %v5919 = vpack.c.b16 %v5624, %v5619
        %v5920 = vpack.c.b16 %v5625, %v5620
        %v5921 = vpack.c.b16 %v5631, %v5626
        %v5922 = vpack.c.b16 %v5632, %v5627
        %v5923 = vpack.c.b16 %v5633, %v5628
        %v5924 = vpack.c.b16 %v5634, %v5629
        %v5925 = vpack.c.b16 %v5635, %v5630
        %v5926 = vpack.c.b16 %v5641, %v5636
        %v5927 = vpack.c.b16 %v5642, %v5637
        %v5928 = vpack.c.b16 %v5643, %v5638
        %v5929 = vpack.c.b16 %v5644, %v5639
        %v5930 = vpack.c.b16 %v5645, %v5640
        %v5931 = vpack.c.b16 %v5651, %v5646
        %v5932 = vpack.c.b16 %v5652, %v5647
        %v5933 = vpack.c.b16 %v5653, %v5648
        %v5934 = vpack.c.b16 %v5654, %v5649
        %v5935 = vpack.c.b16 %v5655, %v5650
        %v5936 = vpack.c.b16 %v5661, %v5656
        %v5937 = vpack.c.b16 %v5662, %v5657
        %v5938 = vpack.c.b16 %v5663, %v5658
        %v5939 = vpack.c.b16 %v5664, %v5659
        %v5940 = vpack.c.b16 %v5665, %v5660
        %v5941 = vpack.c.b16 %v5671, %v5666
        %v5942 = vpack.c.b16 %v5672, %v5667
        %v5943 = vpack.c.b16 %v5673, %v5668
        %v5944 = vpack.c.b16 %v5674, %v5669
        %v5945 = vpack.c.b16 %v5675, %v5670
        %v5946 = vpack.c.b16 %v5681, %v5676
        %v5947 = vpack.c.b16 %v5682, %v5677
        %v5948 = vpack.c.b16 %v5683, %v5678
        %v5949 = vpack.c.b16 %v5684, %v5679
        %v5950 = vpack.c.b16 %v5685, %v5680
        %v5951 = vpack.c.b16 %v5691, %v5686
        %v5952 = vpack.c.b16 %v5692, %v5687
        %v5953 = vpack.c.b16 %v5693, %v5688
        %v5954 = vpack.c.b16 %v5694, %v5689
        %v5955 = vpack.c.b16 %v5695, %v5690
        %v5956 = vpack.c.b16 %v5701, %v5696
        %v5957 = vpack.c.b16 %v5702, %v5697
        %v5958 = vpack.c.b16 %v5703, %v5698
        %v5959 = vpack.c.b16 %v5704, %v5699
        %v5960 = vpack.c.b16 %v5705, %v5700
        %v5961 = vpack.c.b16 %v5711, %v5706
        %v5962 = vpack.c.b16 %v5712, %v5707
        %v5963 = vpack.c.b16 %v5713, %v5708
        %v5964 = vpack.c.b16 %v5714, %v5709
        %v5965 = vpack.c.b16 %v5715, %v5710
        %v5966 = vpack.c.b16 %v5721, %v5716
        %v5967 = vpack.c.b16 %v5722, %v5717
        %v5968 = vpack.c.b16 %v5723, %v5718
        %v5969 = vpack.c.b16 %v5724, %v5719
        %v5970 = vpack.c.b16 %v5725, %v5720
        %v5971 = vpack.c.b16 %v5731, %v5726
        %v5972 = vpack.c.b16 %v5732, %v5727
        %v5973 = vpack.c.b16 %v5733, %v5728
        %v5974 = vpack.c.b16 %v5734, %v5729
        %v5975 = vpack.c.b16 %v5735, %v5730
        %v5976 = vpack.c.b16 %v5741, %v5736
        %v5977 = vpack.c.b16 %v5742, %v5737
        %v5978 = vpack.c.b16 %v5743, %v5738
        %v5979 = vpack.c.b16 %v5744, %v5739
        %v5980 = vpack.c.b16 %v5745, %v5740
        %v5981 = vpack.c.b16 %v5751, %v5746
        %v5982 = vpack.c.b16 %v5752, %v5747
        %v5983 = vpack.c.b16 %v5753, %v5748
        %v5984 = vpack.c.b16 %v5754, %v5749
        %v5985 = vpack.c.b16 %v5755, %v5750
        %v5986 = vpack.c.b16 %v5761, %v5756
        %v5987 = vpack.c.b16 %v5762, %v5757
        %v5988 = vpack.c.b16 %v5763, %v5758
        %v5989 = vpack.c.b16 %v5764, %v5759
        %v5990 = vpack.c.b16 %v5765, %v5760
        %v5991 = vpack.c.b16 %v5771, %v5766
        %v5992 = vpack.c.b16 %v5772, %v5767
        %v5993 = vpack.c.b16 %v5773, %v5768
        %v5994 = vpack.c.b16 %v5774, %v5769
        %v5995 = vpack.c.b16 %v5775, %v5770
        %v5996 = vpack.c.b16 %v5781, %v5776
        %v5997 = vpack.c.b16 %v5782, %v5777
        %v5998 = vpack.c.b16 %v5783, %v5778
        %v5999 = vpack.c.b16 %v5784, %v5779
        %v6000 = vpack.c.b16 %v5785, %v5780
        %v6001 = vpack.c.b16 %v5791, %v5786
        %v6002 = vpack.c.b16 %v5792, %v5787
        %v6003 = vpack.c.b16 %v5793, %v5788
        %v6004 = vpack.c.b16 %v5794, %v5789
        %v6005 = vpack.c.b16 %v5795, %v5790
        %v6006 = vpack.c.b16 %v5801, %v5796
        %v6007 = vpack.c.b16 %v5802, %v5797
        %v6008 = vpack.c.b16 %v5803, %v5798
        %v6009 = vpack.c.b16 %v5804, %v5799
        %v6010 = vpack.c.b16 %v5805, %v5800
        %v6011 = vpack.c.b16 %v5811, %v5806
        %v6012 = vpack.c.b16 %v5812, %v5807
        %v6013 = vpack.c.b16 %v5813, %v5808
        %v6014 = vpack.c.b16 %v5814, %v5809
        %v6015 = vpack.c.b16 %v5815, %v5810
        %v6248 = vunpack.c.l.b16 %v5104
        %v6249 = vunpack.c.l.b16 %v5105
        %v6250 = vunpack.c.l.b16 %v5106
        %v6251 = vunpack.c.l.b16 %v5107
        %v6252 = vunpack.c.l.b16 %v5108
        %v6253 = vunpack.c.l.b16 %v5109
        %v6254 = vunpack.c.l.b16 %v5110
        %v6255 = vunpack.c.l.b16 %v5111
        %v6256 = vunpack.c.l.b16 %v5112
        %v6257 = vunpack.c.l.b16 %v5113
        %v6258 = vunpack.c.l.b16 %v5114
        %v6259 = vunpack.c.l.b16 %v5115
        %v6260 = vunpack.c.l.b16 %v5116
        %v6261 = vunpack.c.l.b16 %v5117
        %v6262 = vunpack.c.l.b16 %v5118
        %v6263 = vunpack.c.l.b16 %v5119
        %v6264 = vunpack.c.l.b16 %v5120
        %v6265 = vunpack.c.l.b16 %v5121
        %v6266 = vunpack.c.l.b16 %v5122
        %v6267 = vunpack.c.l.b16 %v5123
        %v6268 = vunpack.c.l.b16 %v5124
        %v6269 = vunpack.c.l.b16 %v5125
        %v6270 = vunpack.c.l.b16 %v5126
        %v6271 = vunpack.c.l.b16 %v5127
        %v6272 = vunpack.c.l.b16 %v5128
        %v6273 = vunpack.c.l.b16 %v5129
        %v6274 = vunpack.c.l.b16 %v5130
        %v6275 = vunpack.c.l.b16 %v5131
        %v6276 = vunpack.c.l.b16 %v5132
        %v6277 = vunpack.c.l.b16 %v5133
        %v6278 = vunpack.c.l.b16 %v5134
        %v6279 = vunpack.c.l.b16 %v5135
        %v6280 = vunpack.c.l.b16 %v5136
        %v6281 = vunpack.c.l.b16 %v5137
        %v6282 = vunpack.c.l.b16 %v5138
        %v6283 = vunpack.c.l.b16 %v5139
        %v6284 = vunpack.c.l.b16 %v5140
        %v6285 = vunpack.c.l.b16 %v5141
        %v6286 = vunpack.c.l.b16 %v5142
        %v6287 = vunpack.c.l.b16 %v5143
        %v6288 = vunpack.c.l.b16 %v5144
        %v6289 = vunpack.c.l.b16 %v5145
        %v6290 = vunpack.c.l.b16 %v5146
        %v6291 = vunpack.c.l.b16 %v5147
        %v6292 = vunpack.c.l.b16 %v5148
        %v6293 = vunpack.c.l.b16 %v5149
        %v6294 = vunpack.c.l.b16 %v5150
        %v6295 = vunpack.c.l.b16 %v5151
        %v6296 = vunpack.c.l.b16 %v5152
        %v6297 = vunpack.c.l.b16 %v5153
        %v6298 = vunpack.c.l.b16 %v5154
        %v6299 = vunpack.c.l.b16 %v5155
        %v6300 = vunpack.c.l.b16 %v5156
        %v6301 = vunpack.c.l.b16 %v5157
        %v6302 = vunpack.c.l.b16 %v5158
        %v6303 = vunpack.c.l.b16 %v5159
        %v6304 = vunpack.c.l.b16 %v5160
        %v6305 = vunpack.c.l.b16 %v5161
        %v6306 = vunpack.c.l.b16 %v5162
        %v6307 = vunpack.c.l.b16 %v5163
        %v6308 = vunpack.c.l.b16 %v5164
        %v6309 = vunpack.c.l.b16 %v5165
        %v6310 = vunpack.c.l.b16 %v5166
        %v6311 = vunpack.c.l.b16 %v5167
        %v6312 = vunpack.c.l.b16 %v5168
        %v6313 = vunpack.c.l.b16 %v5169
        %v6314 = vunpack.c.l.b16 %v5170
        %v6315 = vunpack.c.l.b16 %v5171
        %v6316 = vunpack.c.l.b16 %v5172
        %v6317 = vunpack.c.l.b16 %v5173
        %v6318 = vunpack.c.l.b16 %v5174
        %v6319 = vunpack.c.l.b16 %v5175
        %v6320 = vpack.c.b16 %v6249, %v6248
        %v6321 = vpack.c.b16 %v6251, %v6250
        %v6322 = vpack.c.b16 %v6253, %v6252
        %v6323 = vpack.c.b16 %v6255, %v6254
        %v6324 = vpack.c.b16 %v6257, %v6256
        %v6325 = vpack.c.b16 %v6259, %v6258
        %v6326 = vpack.c.b16 %v6261, %v6260
        %v6327 = vpack.c.b16 %v6263, %v6262
        %v6328 = vpack.c.b16 %v6265, %v6264
        %v6329 = vpack.c.b16 %v6267, %v6266
        %v6330 = vpack.c.b16 %v6269, %v6268
        %v6331 = vpack.c.b16 %v6271, %v6270
        %v6332 = vpack.c.b16 %v6273, %v6272
        %v6333 = vpack.c.b16 %v6275, %v6274
        %v6334 = vpack.c.b16 %v6277, %v6276
        %v6335 = vpack.c.b16 %v6279, %v6278
        %v6336 = vpack.c.b16 %v6281, %v6280
        %v6337 = vpack.c.b16 %v6283, %v6282
        %v6338 = vpack.c.b16 %v6285, %v6284
        %v6339 = vpack.c.b16 %v6287, %v6286
        %v6340 = vpack.c.b16 %v6289, %v6288
        %v6341 = vpack.c.b16 %v6291, %v6290
        %v6342 = vpack.c.b16 %v6293, %v6292
        %v6343 = vpack.c.b16 %v6295, %v6294
        %v6344 = vpack.c.b16 %v6297, %v6296
        %v6345 = vpack.c.b16 %v6299, %v6298
        %v6346 = vpack.c.b16 %v6301, %v6300
        %v6347 = vpack.c.b16 %v6303, %v6302
        %v6348 = vpack.c.b16 %v6305, %v6304
        %v6349 = vpack.c.b16 %v6307, %v6306
        %v6350 = vpack.c.b16 %v6309, %v6308
        %v6351 = vpack.c.b16 %v6311, %v6310
        %v6352 = vpack.c.b16 %v6313, %v6312
        %v6353 = vpack.c.b16 %v6315, %v6314
        %v6354 = vpack.c.b16 %v6317, %v6316
        %v6355 = vpack.c.b16 %v6319, %v6318
        %v6393 = vsel %vm708, %v5820, 0
        %v6396 = vsel %vm708, %v5825, 0
        %v6399 = vsel %vm708, %v5830, 0
        %v6402 = vsel %vm708, %v5835, 0
        %v6405 = vsel %vm708, %v5840, 0
        %v6408 = vsel %vm708, %v5845, 0
        %v6411 = vsel %vm708, %v5850, 0
        %v6414 = vsel %vm708, %v5855, 0
        %v6417 = vsel %vm708, %v5860, 0
        %v6420 = vsel %vm708, %v5865, 0
        %v6423 = vsel %vm708, %v5870, 0
        %v6426 = vsel %vm708, %v5875, 0
        %v6429 = vsel %vm708, %v5880, 0
        %v6432 = vsel %vm708, %v5885, 0
        %v6435 = vsel %vm708, %v5890, 0
        %v6438 = vsel %vm708, %v5895, 0
        %v6441 = vsel %vm708, %v5900, 0
        %v6444 = vsel %vm708, %v5905, 0
        %v6447 = vsel %vm708, %v5910, 0
        %v6450 = vsel %vm708, %v5915, 0
        %v6453 = vsel %vm708, %v5920, 0
        %v6456 = vsel %vm708, %v5925, 0
        %v6459 = vsel %vm708, %v5930, 0
        %v6462 = vsel %vm708, %v5935, 0
        %v6465 = vsel %vm708, %v5940, 0
        %v6468 = vsel %vm708, %v5945, 0
        %v6471 = vsel %vm708, %v5950, 0
        %v6474 = vsel %vm708, %v5955, 0
        %v6477 = vsel %vm708, %v5960, 0
        %v6480 = vsel %vm708, %v5965, 0
        %v6483 = vsel %vm708, %v5970, 0
        %v6486 = vsel %vm708, %v5975, 0
        %v6489 = vsel %vm708, %v5980, 0
        %v6492 = vsel %vm708, %v5985, 0
        %v6495 = vsel %vm708, %v5990, 0
        %v6498 = vsel %vm708, %v5995, 0
        %v6501 = vsel %vm708, %v6000, 0
        %v6504 = vsel %vm708, %v6005, 0
        %v6507 = vsel %vm708, %v6010, 0
        %v6510 = vsel %vm708, %v6015, 0
        %6512 = vmatpush.bf16.msra.mxu0 %v6327
        %6513 = vmatpush.bf16.msra.mxu0 %v6326
        %6514 = vmatpush.bf16.msra.mxu0 %v6325
        %6515 = vmatpush.bf16.msra.mxu0 %v6324
        %6516 = vmatpush.bf16.msra.mxu0 %v6323
        %6517 = vmatpush.bf16.msra.mxu0 %v6322
        %6518 = vmatpush.bf16.msra.mxu0 %v6321
        %6519 = vmatpush.bf16.msra.mxu0 %v6320
        %6520 = vmatmul.bf16.gmra.mxu0 %v5816
        %v6521 = vpop.f32.mrf.mxu0
        %v6522 = vpop.f32.mrf.mxu0
        %v6523 = vadd.f32 0.0, %v6522
        %6524 = vmatmul.bf16.gmra.mxu0 %v5821
        %v6525 = vpop.f32.mrf.mxu0
        %v6526 = vadd.f32 0.0, %v6525
        %v6527 = vpop.f32.mrf.mxu0
        %v6528 = vadd.f32 0.0, %v6527
        %6529 = vmatmul.bf16.gmra.mxu0 %v5826
        %v6530 = vpop.f32.mrf.mxu0
        %v6531 = vadd.f32 0.0, %v6530
        %v6532 = vpop.f32.mrf.mxu0
        %v6533 = vadd.f32 0.0, %v6532
        %6534 = vmatmul.bf16.gmra.mxu0 %v5831
        %v6535 = vpop.f32.mrf.mxu0
        %v6536 = vadd.f32 0.0, %v6535
        %v6537 = vpop.f32.mrf.mxu0
        %v6538 = vadd.f32 0.0, %v6537
        %6539 = vmatmul.bf16.gmra.mxu0 %v5836
        %v6540 = vpop.f32.mrf.mxu0
        %v6541 = vadd.f32 0.0, %v6540
        %v6542 = vpop.f32.mrf.mxu0
        %6543 = vmatmul.bf16.gmra.mxu0 %v5841
        %v6544 = vpop.f32.mrf.mxu0
        %v6545 = vpop.f32.mrf.mxu0
        %v6546 = vadd.f32 0.0, %v6545
        %6547 = vmatmul.bf16.gmra.mxu0 %v5846
        %v6548 = vpop.f32.mrf.mxu0
        %v6549 = vadd.f32 0.0, %v6548
        %v6550 = vpop.f32.mrf.mxu0
        %v6551 = vadd.f32 0.0, %v6550
        %6552 = vmatmul.bf16.gmra.mxu0 %v5851
        %v6553 = vpop.f32.mrf.mxu0
        %v6554 = vadd.f32 0.0, %v6553
        %v6555 = vpop.f32.mrf.mxu0
        %v6556 = vadd.f32 0.0, %v6555
        %6557 = vmatmul.bf16.gmra.mxu0 %v5856
        %v6558 = vpop.f32.mrf.mxu0
        %v6559 = vadd.f32 0.0, %v6558
        %v6560 = vpop.f32.mrf.mxu0
        %v6561 = vadd.f32 0.0, %v6560
        %6562 = vmatmul.bf16.gmra.mxu0 %v5861
        %v6563 = vpop.f32.mrf.mxu0
        %v6564 = vadd.f32 0.0, %v6563
        %v6565 = vpop.f32.mrf.mxu0
        %6566 = vmatmul.bf16.gmra.mxu0 %v5866
        %v6567 = vpop.f32.mrf.mxu0
        %v6568 = vpop.f32.mrf.mxu0
        %v6569 = vadd.f32 0.0, %v6568
        %6570 = vmatmul.bf16.gmra.mxu0 %v5871
        %v6571 = vpop.f32.mrf.mxu0
        %v6572 = vadd.f32 0.0, %v6571
        %v6573 = vpop.f32.mrf.mxu0
        %v6574 = vadd.f32 0.0, %v6573
        %6575 = vmatmul.bf16.gmra.mxu0 %v5876
        %v6576 = vpop.f32.mrf.mxu0
        %v6577 = vadd.f32 0.0, %v6576
        %v6578 = vpop.f32.mrf.mxu0
        %v6579 = vadd.f32 0.0, %v6578
        %6580 = vmatmul.bf16.gmra.mxu0 %v5881
        %v6581 = vpop.f32.mrf.mxu0
        %v6582 = vadd.f32 0.0, %v6581
        %v6583 = vpop.f32.mrf.mxu0
        %v6584 = vadd.f32 0.0, %v6583
        %6585 = vmatmul.bf16.gmra.mxu0 %v5886
        %v6586 = vpop.f32.mrf.mxu0
        %v6587 = vadd.f32 0.0, %v6586
        %v6588 = vpop.f32.mrf.mxu0
        %6589 = vmatmul.bf16.gmra.mxu0 %v5891
        %v6590 = vpop.f32.mrf.mxu0
        %v6591 = vpop.f32.mrf.mxu0
        %v6592 = vadd.f32 0.0, %v6591
        %6593 = vmatmul.bf16.gmra.mxu0 %v5896
        %v6594 = vpop.f32.mrf.mxu0
        %v6595 = vadd.f32 0.0, %v6594
        %v6596 = vpop.f32.mrf.mxu0
        %v6597 = vadd.f32 0.0, %v6596
        %6598 = vmatmul.bf16.gmra.mxu0 %v5901
        %v6599 = vpop.f32.mrf.mxu0
        %v6600 = vadd.f32 0.0, %v6599
        %v6601 = vpop.f32.mrf.mxu0
        %v6602 = vadd.f32 0.0, %v6601
        %6603 = vmatmul.bf16.gmra.mxu0 %v5906
        %v6604 = vpop.f32.mrf.mxu0
        %v6605 = vadd.f32 0.0, %v6604
        %v6606 = vpop.f32.mrf.mxu0
        %v6607 = vadd.f32 0.0, %v6606
        %6608 = vmatmul.bf16.gmra.mxu0 %v5911
        %v6609 = vpop.f32.mrf.mxu0
        %v6610 = vadd.f32 0.0, %v6609
        %v6611 = vpop.f32.mrf.mxu0
        %6612 = vmatmul.bf16.gmra.mxu0 %v5916
        %v6613 = vpop.f32.mrf.mxu0
        %v6614 = vpop.f32.mrf.mxu0
        %v6615 = vadd.f32 0.0, %v6614
        %6616 = vmatmul.bf16.gmra.mxu0 %v5921
        %v6617 = vpop.f32.mrf.mxu0
        %v6618 = vadd.f32 0.0, %v6617
        %v6619 = vpop.f32.mrf.mxu0
        %v6620 = vadd.f32 0.0, %v6619
        %6621 = vmatmul.bf16.gmra.mxu0 %v5926
        %v6622 = vpop.f32.mrf.mxu0
        %v6623 = vadd.f32 0.0, %v6622
        %v6624 = vpop.f32.mrf.mxu0
        %v6625 = vadd.f32 0.0, %v6624
        %6626 = vmatmul.bf16.gmra.mxu0 %v5931
        %v6627 = vpop.f32.mrf.mxu0
        %v6628 = vadd.f32 0.0, %v6627
        %v6629 = vpop.f32.mrf.mxu0
        %v6630 = vadd.f32 0.0, %v6629
        %6631 = vmatmul.bf16.gmra.mxu0 %v5936
        %v6632 = vpop.f32.mrf.mxu0
        %v6633 = vadd.f32 0.0, %v6632
        %v6634 = vpop.f32.mrf.mxu0
        %6635 = vmatmul.bf16.gmra.mxu0 %v5941
        %v6636 = vpop.f32.mrf.mxu0
        %v6637 = vpop.f32.mrf.mxu0
        %v6638 = vadd.f32 0.0, %v6637
        %6639 = vmatmul.bf16.gmra.mxu0 %v5946
        %v6640 = vpop.f32.mrf.mxu0
        %v6641 = vadd.f32 0.0, %v6640
        %v6642 = vpop.f32.mrf.mxu0
        %v6643 = vadd.f32 0.0, %v6642
        %6644 = vmatmul.bf16.gmra.mxu0 %v5951
        %v6645 = vpop.f32.mrf.mxu0
        %v6646 = vadd.f32 0.0, %v6645
        %v6647 = vpop.f32.mrf.mxu0
        %v6648 = vadd.f32 0.0, %v6647
        %6649 = vmatmul.bf16.gmra.mxu0 %v5956
        %v6650 = vpop.f32.mrf.mxu0
        %v6651 = vadd.f32 0.0, %v6650
        %v6652 = vpop.f32.mrf.mxu0
        %v6653 = vadd.f32 0.0, %v6652
        %6654 = vmatmul.bf16.gmra.mxu0 %v5961
        %v6655 = vpop.f32.mrf.mxu0
        %v6656 = vadd.f32 0.0, %v6655
        %v6657 = vpop.f32.mrf.mxu0
        %6658 = vmatmul.bf16.gmra.mxu0 %v5966
        %v6659 = vpop.f32.mrf.mxu0
        %v6660 = vpop.f32.mrf.mxu0
        %v6661 = vadd.f32 0.0, %v6660
        %6662 = vmatmul.bf16.gmra.mxu0 %v5971
        %v6663 = vpop.f32.mrf.mxu0
        %v6664 = vadd.f32 0.0, %v6663
        %v6665 = vpop.f32.mrf.mxu0
        %v6666 = vadd.f32 0.0, %v6665
        %6667 = vmatmul.bf16.gmra.mxu0 %v5976
        %v6668 = vpop.f32.mrf.mxu0
        %v6669 = vadd.f32 0.0, %v6668
        %v6670 = vpop.f32.mrf.mxu0
        %v6671 = vadd.f32 0.0, %v6670
        %6672 = vmatmul.bf16.gmra.mxu0 %v5981
        %v6673 = vpop.f32.mrf.mxu0
        %v6674 = vadd.f32 0.0, %v6673
        %v6675 = vpop.f32.mrf.mxu0
        %v6676 = vadd.f32 0.0, %v6675
        %6677 = vmatmul.bf16.gmra.mxu0 %v5986
        %v6678 = vpop.f32.mrf.mxu0
        %v6679 = vadd.f32 0.0, %v6678
        %v6680 = vpop.f32.mrf.mxu0
        %6681 = vmatmul.bf16.gmra.mxu0 %v5991
        %v6682 = vpop.f32.mrf.mxu0
        %v6683 = vpop.f32.mrf.mxu0
        %v6684 = vadd.f32 0.0, %v6683
        %6685 = vmatmul.bf16.gmra.mxu0 %v5996
        %v6686 = vpop.f32.mrf.mxu0
        %v6687 = vadd.f32 0.0, %v6686
        %v6688 = vpop.f32.mrf.mxu0
        %v6689 = vadd.f32 0.0, %v6688
        %6690 = vmatmul.bf16.gmra.mxu0 %v6001
        %v6691 = vpop.f32.mrf.mxu0
        %v6692 = vadd.f32 0.0, %v6691
        %v6693 = vpop.f32.mrf.mxu0
        %v6694 = vadd.f32 0.0, %v6693
        %6695 = vmatmul.bf16.gmra.mxu0 %v6006
        %v6696 = vpop.f32.mrf.mxu0
        %v6697 = vadd.f32 0.0, %v6696
        %v6698 = vpop.f32.mrf.mxu0
        %v6699 = vadd.f32 0.0, %v6698
        %6700 = vmatmul.bf16.gmra.mxu0 %v6011
        %v6701 = vpop.f32.mrf.mxu0
        %v6702 = vadd.f32 0.0, %v6701
        %v6703 = vpop.f32.mrf.mxu0
        %6704 = vdwg.mxu0
        %6705 = vmatpush.bf16.msra.mxu0 %v6335
        %6706 = vmatpush.bf16.msra.mxu0 %v6334
        %6707 = vmatpush.bf16.msra.mxu0 %v6333
        %6708 = vmatpush.bf16.msra.mxu0 %v6332
        %6709 = vmatpush.bf16.msra.mxu0 %v6331
        %6710 = vmatpush.bf16.msra.mxu0 %v6330
        %6711 = vmatpush.bf16.msra.mxu0 %v6329
        %6712 = vmatpush.bf16.msra.mxu0 %v6328
        %6713 = vmatmul.bf16.gmra.mxu0 %v5817
        %v6714 = vpop.f32.mrf.mxu0
        %v6715 = vpop.f32.mrf.mxu0
        %v6716 = vadd.f32 %v6523, %v6715
        %6717 = vmatmul.bf16.gmra.mxu0 %v5822
        %v6718 = vpop.f32.mrf.mxu0
        %v6719 = vadd.f32 %v6526, %v6718
        %v6720 = vpop.f32.mrf.mxu0
        %v6721 = vadd.f32 %v6528, %v6720
        %6722 = vmatmul.bf16.gmra.mxu0 %v5827
        %v6723 = vpop.f32.mrf.mxu0
        %v6724 = vadd.f32 %v6531, %v6723
        %v6725 = vpop.f32.mrf.mxu0
        %v6726 = vadd.f32 %v6533, %v6725
        %6727 = vmatmul.bf16.gmra.mxu0 %v5832
        %v6728 = vpop.f32.mrf.mxu0
        %v6729 = vadd.f32 %v6536, %v6728
        %v6730 = vpop.f32.mrf.mxu0
        %v6731 = vadd.f32 %v6538, %v6730
        %6732 = vmatmul.bf16.gmra.mxu0 %v5837
        %v6733 = vpop.f32.mrf.mxu0
        %v6734 = vadd.f32 %v6541, %v6733
        %v6735 = vpop.f32.mrf.mxu0
        %6736 = vmatmul.bf16.gmra.mxu0 %v5842
        %v6737 = vpop.f32.mrf.mxu0
        %v6738 = vpop.f32.mrf.mxu0
        %v6739 = vadd.f32 %v6546, %v6738
        %6740 = vmatmul.bf16.gmra.mxu0 %v5847
        %v6741 = vpop.f32.mrf.mxu0
        %v6742 = vadd.f32 %v6549, %v6741
        %v6743 = vpop.f32.mrf.mxu0
        %v6744 = vadd.f32 %v6551, %v6743
        %6745 = vmatmul.bf16.gmra.mxu0 %v5852
        %v6746 = vpop.f32.mrf.mxu0
        %v6747 = vadd.f32 %v6554, %v6746
        %v6748 = vpop.f32.mrf.mxu0
        %v6749 = vadd.f32 %v6556, %v6748
        %6750 = vmatmul.bf16.gmra.mxu0 %v5857
        %v6751 = vpop.f32.mrf.mxu0
        %v6752 = vadd.f32 %v6559, %v6751
        %v6753 = vpop.f32.mrf.mxu0
        %v6754 = vadd.f32 %v6561, %v6753
        %6755 = vmatmul.bf16.gmra.mxu0 %v5862
        %v6756 = vpop.f32.mrf.mxu0
        %v6757 = vadd.f32 %v6564, %v6756
        %v6758 = vpop.f32.mrf.mxu0
        %6759 = vmatmul.bf16.gmra.mxu0 %v5867
        %v6760 = vpop.f32.mrf.mxu0
        %v6761 = vpop.f32.mrf.mxu0
        %v6762 = vadd.f32 %v6569, %v6761
        %6763 = vmatmul.bf16.gmra.mxu0 %v5872
        %v6764 = vpop.f32.mrf.mxu0
        %v6765 = vadd.f32 %v6572, %v6764
        %v6766 = vpop.f32.mrf.mxu0
        %v6767 = vadd.f32 %v6574, %v6766
        %6768 = vmatmul.bf16.gmra.mxu0 %v5877
        %v6769 = vpop.f32.mrf.mxu0
        %v6770 = vadd.f32 %v6577, %v6769
        %v6771 = vpop.f32.mrf.mxu0
        %v6772 = vadd.f32 %v6579, %v6771
        %6773 = vmatmul.bf16.gmra.mxu0 %v5882
        %v6774 = vpop.f32.mrf.mxu0
        %v6775 = vadd.f32 %v6582, %v6774
        %v6776 = vpop.f32.mrf.mxu0
        %v6777 = vadd.f32 %v6584, %v6776
        %6778 = vmatmul.bf16.gmra.mxu0 %v5887
        %v6779 = vpop.f32.mrf.mxu0
        %v6780 = vadd.f32 %v6587, %v6779
        %v6781 = vpop.f32.mrf.mxu0
        %6782 = vmatmul.bf16.gmra.mxu0 %v5892
        %v6783 = vpop.f32.mrf.mxu0
        %v6784 = vpop.f32.mrf.mxu0
        %v6785 = vadd.f32 %v6592, %v6784
        %6786 = vmatmul.bf16.gmra.mxu0 %v5897
        %v6787 = vpop.f32.mrf.mxu0
        %v6788 = vadd.f32 %v6595, %v6787
        %v6789 = vpop.f32.mrf.mxu0
        %v6790 = vadd.f32 %v6597, %v6789
        %6791 = vmatmul.bf16.gmra.mxu0 %v5902
        %v6792 = vpop.f32.mrf.mxu0
        %v6793 = vadd.f32 %v6600, %v6792
        %v6794 = vpop.f32.mrf.mxu0
        %v6795 = vadd.f32 %v6602, %v6794
        %6796 = vmatmul.bf16.gmra.mxu0 %v5907
        %v6797 = vpop.f32.mrf.mxu0
        %v6798 = vadd.f32 %v6605, %v6797
        %v6799 = vpop.f32.mrf.mxu0
        %v6800 = vadd.f32 %v6607, %v6799
        %6801 = vmatmul.bf16.gmra.mxu0 %v5912
        %v6802 = vpop.f32.mrf.mxu0
        %v6803 = vadd.f32 %v6610, %v6802
        %v6804 = vpop.f32.mrf.mxu0
        %6805 = vmatmul.bf16.gmra.mxu0 %v5917
        %v6806 = vpop.f32.mrf.mxu0
        %v6807 = vpop.f32.mrf.mxu0
        %v6808 = vadd.f32 %v6615, %v6807
        %6809 = vmatmul.bf16.gmra.mxu0 %v5922
        %v6810 = vpop.f32.mrf.mxu0
        %v6811 = vadd.f32 %v6618, %v6810
        %v6812 = vpop.f32.mrf.mxu0
        %v6813 = vadd.f32 %v6620, %v6812
        %6814 = vmatmul.bf16.gmra.mxu0 %v5927
        %v6815 = vpop.f32.mrf.mxu0
        %v6816 = vadd.f32 %v6623, %v6815
        %v6817 = vpop.f32.mrf.mxu0
        %v6818 = vadd.f32 %v6625, %v6817
        %6819 = vmatmul.bf16.gmra.mxu0 %v5932
        %v6820 = vpop.f32.mrf.mxu0
        %v6821 = vadd.f32 %v6628, %v6820
        %v6822 = vpop.f32.mrf.mxu0
        %v6823 = vadd.f32 %v6630, %v6822
        %6824 = vmatmul.bf16.gmra.mxu0 %v5937
        %v6825 = vpop.f32.mrf.mxu0
        %v6826 = vadd.f32 %v6633, %v6825
        %v6827 = vpop.f32.mrf.mxu0
        %6828 = vmatmul.bf16.gmra.mxu0 %v5942
        %v6829 = vpop.f32.mrf.mxu0
        %v6830 = vpop.f32.mrf.mxu0
        %v6831 = vadd.f32 %v6638, %v6830
        %6832 = vmatmul.bf16.gmra.mxu0 %v5947
        %v6833 = vpop.f32.mrf.mxu0
        %v6834 = vadd.f32 %v6641, %v6833
        %v6835 = vpop.f32.mrf.mxu0
        %v6836 = vadd.f32 %v6643, %v6835
        %6837 = vmatmul.bf16.gmra.mxu0 %v5952
        %v6838 = vpop.f32.mrf.mxu0
        %v6839 = vadd.f32 %v6646, %v6838
        %v6840 = vpop.f32.mrf.mxu0
        %v6841 = vadd.f32 %v6648, %v6840
        %6842 = vmatmul.bf16.gmra.mxu0 %v5957
        %v6843 = vpop.f32.mrf.mxu0
        %v6844 = vadd.f32 %v6651, %v6843
        %v6845 = vpop.f32.mrf.mxu0
        %v6846 = vadd.f32 %v6653, %v6845
        %6847 = vmatmul.bf16.gmra.mxu0 %v5962
        %v6848 = vpop.f32.mrf.mxu0
        %v6849 = vadd.f32 %v6656, %v6848
        %v6850 = vpop.f32.mrf.mxu0
        %6851 = vmatmul.bf16.gmra.mxu0 %v5967
        %v6852 = vpop.f32.mrf.mxu0
        %v6853 = vpop.f32.mrf.mxu0
        %v6854 = vadd.f32 %v6661, %v6853
        %6855 = vmatmul.bf16.gmra.mxu0 %v5972
        %v6856 = vpop.f32.mrf.mxu0
        %v6857 = vadd.f32 %v6664, %v6856
        %v6858 = vpop.f32.mrf.mxu0
        %v6859 = vadd.f32 %v6666, %v6858
        %6860 = vmatmul.bf16.gmra.mxu0 %v5977
        %v6861 = vpop.f32.mrf.mxu0
        %v6862 = vadd.f32 %v6669, %v6861
        %v6863 = vpop.f32.mrf.mxu0
        %v6864 = vadd.f32 %v6671, %v6863
        %6865 = vmatmul.bf16.gmra.mxu0 %v5982
        %v6866 = vpop.f32.mrf.mxu0
        %v6867 = vadd.f32 %v6674, %v6866
        %v6868 = vpop.f32.mrf.mxu0
        %v6869 = vadd.f32 %v6676, %v6868
        %6870 = vmatmul.bf16.gmra.mxu0 %v5987
        %v6871 = vpop.f32.mrf.mxu0
        %v6872 = vadd.f32 %v6679, %v6871
        %v6873 = vpop.f32.mrf.mxu0
        %6874 = vmatmul.bf16.gmra.mxu0 %v5992
        %v6875 = vpop.f32.mrf.mxu0
        %v6876 = vpop.f32.mrf.mxu0
        %v6877 = vadd.f32 %v6684, %v6876
        %6878 = vmatmul.bf16.gmra.mxu0 %v5997
        %v6879 = vpop.f32.mrf.mxu0
        %v6880 = vadd.f32 %v6687, %v6879
        %v6881 = vpop.f32.mrf.mxu0
        %v6882 = vadd.f32 %v6689, %v6881
        %6883 = vmatmul.bf16.gmra.mxu0 %v6002
        %v6884 = vpop.f32.mrf.mxu0
        %v6885 = vadd.f32 %v6692, %v6884
        %v6886 = vpop.f32.mrf.mxu0
        %v6887 = vadd.f32 %v6694, %v6886
        %6888 = vmatmul.bf16.gmra.mxu0 %v6007
        %v6889 = vpop.f32.mrf.mxu0
        %v6890 = vadd.f32 %v6697, %v6889
        %v6891 = vpop.f32.mrf.mxu0
        %v6892 = vadd.f32 %v6699, %v6891
        %6893 = vmatmul.bf16.gmra.mxu0 %v6012
        %v6894 = vpop.f32.mrf.mxu0
        %v6895 = vadd.f32 %v6702, %v6894
        %v6896 = vpop.f32.mrf.mxu0
        %6897 = vdwg.mxu0
        %6898 = vmatpush.bf16.msra.mxu0 %v6343
        %6899 = vmatpush.bf16.msra.mxu0 %v6342
        %6900 = vmatpush.bf16.msra.mxu0 %v6341
        %6901 = vmatpush.bf16.msra.mxu0 %v6340
        %6902 = vmatpush.bf16.msra.mxu0 %v6339
        %6903 = vmatpush.bf16.msra.mxu0 %v6338
        %6904 = vmatpush.bf16.msra.mxu0 %v6337
        %6905 = vmatpush.bf16.msra.mxu0 %v6336
        %6906 = vmatmul.bf16.gmra.mxu0 %v5818
        %v6907 = vpop.f32.mrf.mxu0
        %v6908 = vpop.f32.mrf.mxu0
        %v6909 = vadd.f32 %v6716, %v6908
        %6910 = vmatmul.bf16.gmra.mxu0 %v5823
        %v6911 = vpop.f32.mrf.mxu0
        %v6912 = vadd.f32 %v6719, %v6911
        %v6913 = vpop.f32.mrf.mxu0
        %v6914 = vadd.f32 %v6721, %v6913
        %6915 = vmatmul.bf16.gmra.mxu0 %v5828
        %v6916 = vpop.f32.mrf.mxu0
        %v6917 = vadd.f32 %v6724, %v6916
        %v6918 = vpop.f32.mrf.mxu0
        %v6919 = vadd.f32 %v6726, %v6918
        %6920 = vmatmul.bf16.gmra.mxu0 %v5833
        %v6921 = vpop.f32.mrf.mxu0
        %v6922 = vadd.f32 %v6729, %v6921
        %v6923 = vpop.f32.mrf.mxu0
        %v6924 = vadd.f32 %v6731, %v6923
        %6925 = vmatmul.bf16.gmra.mxu0 %v5838
        %v6926 = vpop.f32.mrf.mxu0
        %v6927 = vadd.f32 %v6734, %v6926
        %v6928 = vpop.f32.mrf.mxu0
        %6929 = vmatmul.bf16.gmra.mxu0 %v5843
        %v6930 = vpop.f32.mrf.mxu0
        %v6931 = vpop.f32.mrf.mxu0
        %v6932 = vadd.f32 %v6739, %v6931
        %6933 = vmatmul.bf16.gmra.mxu0 %v5848
        %v6934 = vpop.f32.mrf.mxu0
        %v6935 = vadd.f32 %v6742, %v6934
        %v6936 = vpop.f32.mrf.mxu0
        %v6937 = vadd.f32 %v6744, %v6936
        %6938 = vmatmul.bf16.gmra.mxu0 %v5853
        %v6939 = vpop.f32.mrf.mxu0
        %v6940 = vadd.f32 %v6747, %v6939
        %v6941 = vpop.f32.mrf.mxu0
        %v6942 = vadd.f32 %v6749, %v6941
        %6943 = vmatmul.bf16.gmra.mxu0 %v5858
        %v6944 = vpop.f32.mrf.mxu0
        %v6945 = vadd.f32 %v6752, %v6944
        %v6946 = vpop.f32.mrf.mxu0
        %v6947 = vadd.f32 %v6754, %v6946
        %6948 = vmatmul.bf16.gmra.mxu0 %v5863
        %v6949 = vpop.f32.mrf.mxu0
        %v6950 = vadd.f32 %v6757, %v6949
        %v6951 = vpop.f32.mrf.mxu0
        %6952 = vmatmul.bf16.gmra.mxu0 %v5868
        %v6953 = vpop.f32.mrf.mxu0
        %v6954 = vpop.f32.mrf.mxu0
        %v6955 = vadd.f32 %v6762, %v6954
        %6956 = vmatmul.bf16.gmra.mxu0 %v5873
        %v6957 = vpop.f32.mrf.mxu0
        %v6958 = vadd.f32 %v6765, %v6957
        %v6959 = vpop.f32.mrf.mxu0
        %v6960 = vadd.f32 %v6767, %v6959
        %6961 = vmatmul.bf16.gmra.mxu0 %v5878
        %v6962 = vpop.f32.mrf.mxu0
        %v6963 = vadd.f32 %v6770, %v6962
        %v6964 = vpop.f32.mrf.mxu0
        %v6965 = vadd.f32 %v6772, %v6964
        %6966 = vmatmul.bf16.gmra.mxu0 %v5883
        %v6967 = vpop.f32.mrf.mxu0
        %v6968 = vadd.f32 %v6775, %v6967
        %v6969 = vpop.f32.mrf.mxu0
        %v6970 = vadd.f32 %v6777, %v6969
        %6971 = vmatmul.bf16.gmra.mxu0 %v5888
        %v6972 = vpop.f32.mrf.mxu0
        %v6973 = vadd.f32 %v6780, %v6972
        %v6974 = vpop.f32.mrf.mxu0
        %6975 = vmatmul.bf16.gmra.mxu0 %v5893
        %v6976 = vpop.f32.mrf.mxu0
        %v6977 = vpop.f32.mrf.mxu0
        %v6978 = vadd.f32 %v6785, %v6977
        %6979 = vmatmul.bf16.gmra.mxu0 %v5898
        %v6980 = vpop.f32.mrf.mxu0
        %v6981 = vadd.f32 %v6788, %v6980
        %v6982 = vpop.f32.mrf.mxu0
        %v6983 = vadd.f32 %v6790, %v6982
        %6984 = vmatmul.bf16.gmra.mxu0 %v5903
        %v6985 = vpop.f32.mrf.mxu0
        %v6986 = vadd.f32 %v6793, %v6985
        %v6987 = vpop.f32.mrf.mxu0
        %v6988 = vadd.f32 %v6795, %v6987
        %6989 = vmatmul.bf16.gmra.mxu0 %v5908
        %v6990 = vpop.f32.mrf.mxu0
        %v6991 = vadd.f32 %v6798, %v6990
        %v6992 = vpop.f32.mrf.mxu0
        %v6993 = vadd.f32 %v6800, %v6992
        %6994 = vmatmul.bf16.gmra.mxu0 %v5913
        %v6995 = vpop.f32.mrf.mxu0
        %v6996 = vadd.f32 %v6803, %v6995
        %v6997 = vpop.f32.mrf.mxu0
        %6998 = vmatmul.bf16.gmra.mxu0 %v5918
        %v6999 = vpop.f32.mrf.mxu0
        %v7000 = vpop.f32.mrf.mxu0
        %v7001 = vadd.f32 %v6808, %v7000
        %7002 = vmatmul.bf16.gmra.mxu0 %v5923
        %v7003 = vpop.f32.mrf.mxu0
        %v7004 = vadd.f32 %v6811, %v7003
        %v7005 = vpop.f32.mrf.mxu0
        %v7006 = vadd.f32 %v6813, %v7005
        %7007 = vmatmul.bf16.gmra.mxu0 %v5928
        %v7008 = vpop.f32.mrf.mxu0
        %v7009 = vadd.f32 %v6816, %v7008
        %v7010 = vpop.f32.mrf.mxu0
        %v7011 = vadd.f32 %v6818, %v7010
        %7012 = vmatmul.bf16.gmra.mxu0 %v5933
        %v7013 = vpop.f32.mrf.mxu0
        %v7014 = vadd.f32 %v6821, %v7013
        %v7015 = vpop.f32.mrf.mxu0
        %v7016 = vadd.f32 %v6823, %v7015
        %7017 = vmatmul.bf16.gmra.mxu0 %v5938
        %v7018 = vpop.f32.mrf.mxu0
        %v7019 = vadd.f32 %v6826, %v7018
        %v7020 = vpop.f32.mrf.mxu0
        %7021 = vmatmul.bf16.gmra.mxu0 %v5943
        %v7022 = vpop.f32.mrf.mxu0
        %v7023 = vpop.f32.mrf.mxu0
        %v7024 = vadd.f32 %v6831, %v7023
        %7025 = vmatmul.bf16.gmra.mxu0 %v5948
        %v7026 = vpop.f32.mrf.mxu0
        %v7027 = vadd.f32 %v6834, %v7026
        %v7028 = vpop.f32.mrf.mxu0
        %v7029 = vadd.f32 %v6836, %v7028
        %7030 = vmatmul.bf16.gmra.mxu0 %v5953
        %v7031 = vpop.f32.mrf.mxu0
        %v7032 = vadd.f32 %v6839, %v7031
        %v7033 = vpop.f32.mrf.mxu0
        %v7034 = vadd.f32 %v6841, %v7033
        %7035 = vmatmul.bf16.gmra.mxu0 %v5958
        %v7036 = vpop.f32.mrf.mxu0
        %v7037 = vadd.f32 %v6844, %v7036
        %v7038 = vpop.f32.mrf.mxu0
        %v7039 = vadd.f32 %v6846, %v7038
        %7040 = vmatmul.bf16.gmra.mxu0 %v5963
        %v7041 = vpop.f32.mrf.mxu0
        %v7042 = vadd.f32 %v6849, %v7041
        %v7043 = vpop.f32.mrf.mxu0
        %7044 = vmatmul.bf16.gmra.mxu0 %v5968
        %v7045 = vpop.f32.mrf.mxu0
        %v7046 = vpop.f32.mrf.mxu0
        %v7047 = vadd.f32 %v6854, %v7046
        %7048 = vmatmul.bf16.gmra.mxu0 %v5973
        %v7049 = vpop.f32.mrf.mxu0
        %v7050 = vadd.f32 %v6857, %v7049
        %v7051 = vpop.f32.mrf.mxu0
        %v7052 = vadd.f32 %v6859, %v7051
        %7053 = vmatmul.bf16.gmra.mxu0 %v5978
        %v7054 = vpop.f32.mrf.mxu0
        %v7055 = vadd.f32 %v6862, %v7054
        %v7056 = vpop.f32.mrf.mxu0
        %v7057 = vadd.f32 %v6864, %v7056
        %7058 = vmatmul.bf16.gmra.mxu0 %v5983
        %v7059 = vpop.f32.mrf.mxu0
        %v7060 = vadd.f32 %v6867, %v7059
        %v7061 = vpop.f32.mrf.mxu0
        %v7062 = vadd.f32 %v6869, %v7061
        %7063 = vmatmul.bf16.gmra.mxu0 %v5988
        %v7064 = vpop.f32.mrf.mxu0
        %v7065 = vadd.f32 %v6872, %v7064
        %v7066 = vpop.f32.mrf.mxu0
        %7067 = vmatmul.bf16.gmra.mxu0 %v5993
        %v7068 = vpop.f32.mrf.mxu0
        %v7069 = vpop.f32.mrf.mxu0
        %v7070 = vadd.f32 %v6877, %v7069
        %7071 = vmatmul.bf16.gmra.mxu0 %v5998
        %v7072 = vpop.f32.mrf.mxu0
        %v7073 = vadd.f32 %v6880, %v7072
        %v7074 = vpop.f32.mrf.mxu0
        %v7075 = vadd.f32 %v6882, %v7074
        %7076 = vmatmul.bf16.gmra.mxu0 %v6003
        %v7077 = vpop.f32.mrf.mxu0
        %v7078 = vadd.f32 %v6885, %v7077
        %v7079 = vpop.f32.mrf.mxu0
        %v7080 = vadd.f32 %v6887, %v7079
        %7081 = vmatmul.bf16.gmra.mxu0 %v6008
        %v7082 = vpop.f32.mrf.mxu0
        %v7083 = vadd.f32 %v6890, %v7082
        %v7084 = vpop.f32.mrf.mxu0
        %v7085 = vadd.f32 %v6892, %v7084
        %7086 = vmatmul.bf16.gmra.mxu0 %v6013
        %v7087 = vpop.f32.mrf.mxu0
        %v7088 = vadd.f32 %v6895, %v7087
        %v7089 = vpop.f32.mrf.mxu0
        %7090 = vdwg.mxu0
        %7091 = vmatpush.bf16.msra.mxu0 %v6351
        %7092 = vmatpush.bf16.msra.mxu0 %v6350
        %7093 = vmatpush.bf16.msra.mxu0 %v6349
        %7094 = vmatpush.bf16.msra.mxu0 %v6348
        %7095 = vmatpush.bf16.msra.mxu0 %v6347
        %7096 = vmatpush.bf16.msra.mxu0 %v6346
        %7097 = vmatpush.bf16.msra.mxu0 %v6345
        %7098 = vmatpush.bf16.msra.mxu0 %v6344
        %7099 = vmatmul.bf16.gmra.mxu0 %v5819
        %v7100 = vpop.f32.mrf.mxu0
        %v7101 = vpop.f32.mrf.mxu0
        %v7102 = vadd.f32 %v6909, %v7101
        %7103 = vmatmul.bf16.gmra.mxu0 %v5824
        %v7104 = vpop.f32.mrf.mxu0
        %v7105 = vadd.f32 %v6912, %v7104
        %v7106 = vpop.f32.mrf.mxu0
        %v7107 = vadd.f32 %v6914, %v7106
        %7108 = vmatmul.bf16.gmra.mxu0 %v5829
        %v7109 = vpop.f32.mrf.mxu0
        %v7110 = vadd.f32 %v6917, %v7109
        %v7111 = vpop.f32.mrf.mxu0
        %v7112 = vadd.f32 %v6919, %v7111
        %7113 = vmatmul.bf16.gmra.mxu0 %v5834
        %v7114 = vpop.f32.mrf.mxu0
        %v7115 = vadd.f32 %v6922, %v7114
        %v7116 = vpop.f32.mrf.mxu0
        %v7117 = vadd.f32 %v6924, %v7116
        %7118 = vmatmul.bf16.gmra.mxu0 %v5839
        %v7119 = vpop.f32.mrf.mxu0
        %v7120 = vadd.f32 %v6927, %v7119
        %v7121 = vpop.f32.mrf.mxu0
        %7122 = vmatmul.bf16.gmra.mxu0 %v5844
        %v7123 = vpop.f32.mrf.mxu0
        %v7124 = vpop.f32.mrf.mxu0
        %v7125 = vadd.f32 %v6932, %v7124
        %7126 = vmatmul.bf16.gmra.mxu0 %v5849
        %v7127 = vpop.f32.mrf.mxu0
        %v7128 = vadd.f32 %v6935, %v7127
        %v7129 = vpop.f32.mrf.mxu0
        %v7130 = vadd.f32 %v6937, %v7129
        %7131 = vmatmul.bf16.gmra.mxu0 %v5854
        %v7132 = vpop.f32.mrf.mxu0
        %v7133 = vadd.f32 %v6940, %v7132
        %v7134 = vpop.f32.mrf.mxu0
        %v7135 = vadd.f32 %v6942, %v7134
        %7136 = vmatmul.bf16.gmra.mxu0 %v5859
        %v7137 = vpop.f32.mrf.mxu0
        %v7138 = vadd.f32 %v6945, %v7137
        %v7139 = vpop.f32.mrf.mxu0
        %v7140 = vadd.f32 %v6947, %v7139
        %7141 = vmatmul.bf16.gmra.mxu0 %v5864
        %v7142 = vpop.f32.mrf.mxu0
        %v7143 = vadd.f32 %v6950, %v7142
        %v7144 = vpop.f32.mrf.mxu0
        %7145 = vmatmul.bf16.gmra.mxu0 %v5869
        %v7146 = vpop.f32.mrf.mxu0
        %v7147 = vpop.f32.mrf.mxu0
        %v7148 = vadd.f32 %v6955, %v7147
        %7149 = vmatmul.bf16.gmra.mxu0 %v5874
        %v7150 = vpop.f32.mrf.mxu0
        %v7151 = vadd.f32 %v6958, %v7150
        %v7152 = vpop.f32.mrf.mxu0
        %v7153 = vadd.f32 %v6960, %v7152
        %7154 = vmatmul.bf16.gmra.mxu0 %v5879
        %v7155 = vpop.f32.mrf.mxu0
        %v7156 = vadd.f32 %v6963, %v7155
        %v7157 = vpop.f32.mrf.mxu0
        %v7158 = vadd.f32 %v6965, %v7157
        %7159 = vmatmul.bf16.gmra.mxu0 %v5884
        %v7160 = vpop.f32.mrf.mxu0
        %v7161 = vadd.f32 %v6968, %v7160
        %v7162 = vpop.f32.mrf.mxu0
        %v7163 = vadd.f32 %v6970, %v7162
        %7164 = vmatmul.bf16.gmra.mxu0 %v5889
        %v7165 = vpop.f32.mrf.mxu0
        %v7166 = vadd.f32 %v6973, %v7165
        %v7167 = vpop.f32.mrf.mxu0
        %7168 = vmatmul.bf16.gmra.mxu0 %v5894
        %v7169 = vpop.f32.mrf.mxu0
        %v7170 = vpop.f32.mrf.mxu0
        %v7171 = vadd.f32 %v6978, %v7170
        %7172 = vmatmul.bf16.gmra.mxu0 %v5899
        %v7173 = vpop.f32.mrf.mxu0
        %v7174 = vadd.f32 %v6981, %v7173
        %v7175 = vpop.f32.mrf.mxu0
        %v7176 = vadd.f32 %v6983, %v7175
        %7177 = vmatmul.bf16.gmra.mxu0 %v5904
        %v7178 = vpop.f32.mrf.mxu0
        %v7179 = vadd.f32 %v6986, %v7178
        %v7180 = vpop.f32.mrf.mxu0
        %v7181 = vadd.f32 %v6988, %v7180
        %7182 = vmatmul.bf16.gmra.mxu0 %v5909
        %v7183 = vpop.f32.mrf.mxu0
        %v7184 = vadd.f32 %v6991, %v7183
        %v7185 = vpop.f32.mrf.mxu0
        %v7186 = vadd.f32 %v6993, %v7185
        %7187 = vmatmul.bf16.gmra.mxu0 %v5914
        %v7188 = vpop.f32.mrf.mxu0
        %v7189 = vadd.f32 %v6996, %v7188
        %v7190 = vpop.f32.mrf.mxu0
        %7191 = vmatmul.bf16.gmra.mxu0 %v5919
        %v7192 = vpop.f32.mrf.mxu0
        %v7193 = vpop.f32.mrf.mxu0
        %v7194 = vadd.f32 %v7001, %v7193
        %7195 = vmatmul.bf16.gmra.mxu0 %v5924
        %v7196 = vpop.f32.mrf.mxu0
        %v7197 = vadd.f32 %v7004, %v7196
        %v7198 = vpop.f32.mrf.mxu0
        %v7199 = vadd.f32 %v7006, %v7198
        %7200 = vmatmul.bf16.gmra.mxu0 %v5929
        %v7201 = vpop.f32.mrf.mxu0
        %v7202 = vadd.f32 %v7009, %v7201
        %v7203 = vpop.f32.mrf.mxu0
        %v7204 = vadd.f32 %v7011, %v7203
        %7205 = vmatmul.bf16.gmra.mxu0 %v5934
        %v7206 = vpop.f32.mrf.mxu0
        %v7207 = vadd.f32 %v7014, %v7206
        %v7208 = vpop.f32.mrf.mxu0
        %v7209 = vadd.f32 %v7016, %v7208
        %7210 = vmatmul.bf16.gmra.mxu0 %v5939
        %v7211 = vpop.f32.mrf.mxu0
        %v7212 = vadd.f32 %v7019, %v7211
        %v7213 = vpop.f32.mrf.mxu0
        %7214 = vmatmul.bf16.gmra.mxu0 %v5944
        %v7215 = vpop.f32.mrf.mxu0
        %v7216 = vpop.f32.mrf.mxu0
        %v7217 = vadd.f32 %v7024, %v7216
        %7218 = vmatmul.bf16.gmra.mxu0 %v5949
        %v7219 = vpop.f32.mrf.mxu0
        %v7220 = vadd.f32 %v7027, %v7219
        %v7221 = vpop.f32.mrf.mxu0
        %v7222 = vadd.f32 %v7029, %v7221
        %7223 = vmatmul.bf16.gmra.mxu0 %v5954
        %v7224 = vpop.f32.mrf.mxu0
        %v7225 = vadd.f32 %v7032, %v7224
        %v7226 = vpop.f32.mrf.mxu0
        %v7227 = vadd.f32 %v7034, %v7226
        %7228 = vmatmul.bf16.gmra.mxu0 %v5959
        %v7229 = vpop.f32.mrf.mxu0
        %v7230 = vadd.f32 %v7037, %v7229
        %v7231 = vpop.f32.mrf.mxu0
        %v7232 = vadd.f32 %v7039, %v7231
        %7233 = vmatmul.bf16.gmra.mxu0 %v5964
        %v7234 = vpop.f32.mrf.mxu0
        %v7235 = vadd.f32 %v7042, %v7234
        %v7236 = vpop.f32.mrf.mxu0
        %7237 = vmatmul.bf16.gmra.mxu0 %v5969
        %v7238 = vpop.f32.mrf.mxu0
        %v7239 = vpop.f32.mrf.mxu0
        %v7240 = vadd.f32 %v7047, %v7239
        %7241 = vmatmul.bf16.gmra.mxu0 %v5974
        %v7242 = vpop.f32.mrf.mxu0
        %v7243 = vadd.f32 %v7050, %v7242
        %v7244 = vpop.f32.mrf.mxu0
        %v7245 = vadd.f32 %v7052, %v7244
        %7246 = vmatmul.bf16.gmra.mxu0 %v5979
        %v7247 = vpop.f32.mrf.mxu0
        %v7248 = vadd.f32 %v7055, %v7247
        %v7249 = vpop.f32.mrf.mxu0
        %v7250 = vadd.f32 %v7057, %v7249
        %7251 = vmatmul.bf16.gmra.mxu0 %v5984
        %v7252 = vpop.f32.mrf.mxu0
        %v7253 = vadd.f32 %v7060, %v7252
        %v7254 = vpop.f32.mrf.mxu0
        %v7255 = vadd.f32 %v7062, %v7254
        %7256 = vmatmul.bf16.gmra.mxu0 %v5989
        %v7257 = vpop.f32.mrf.mxu0
        %v7258 = vadd.f32 %v7065, %v7257
        %v7259 = vpop.f32.mrf.mxu0
        %7260 = vmatmul.bf16.gmra.mxu0 %v5994
        %v7261 = vpop.f32.mrf.mxu0
        %v7262 = vpop.f32.mrf.mxu0
        %v7263 = vadd.f32 %v7070, %v7262
        %7264 = vmatmul.bf16.gmra.mxu0 %v5999
        %v7265 = vpop.f32.mrf.mxu0
        %v7266 = vadd.f32 %v7073, %v7265
        %v7267 = vpop.f32.mrf.mxu0
        %v7268 = vadd.f32 %v7075, %v7267
        %7269 = vmatmul.bf16.gmra.mxu0 %v6004
        %v7270 = vpop.f32.mrf.mxu0
        %v7271 = vadd.f32 %v7078, %v7270
        %v7272 = vpop.f32.mrf.mxu0
        %v7273 = vadd.f32 %v7080, %v7272
        %7274 = vmatmul.bf16.gmra.mxu0 %v6009
        %v7275 = vpop.f32.mrf.mxu0
        %v7276 = vadd.f32 %v7083, %v7275
        %v7277 = vpop.f32.mrf.mxu0
        %v7278 = vadd.f32 %v7085, %v7277
        %7279 = vmatmul.bf16.gmra.mxu0 %v6014
        %v7280 = vpop.f32.mrf.mxu0
        %v7281 = vadd.f32 %v7088, %v7280
        %v7282 = vpop.f32.mrf.mxu0
        %7283 = vdwg.mxu0
        %7284 = vmatpush.bf16.msra.mxu0 0
        %7285 = vmatpush.bf16.msra.mxu0 0
        %7286 = vmatpush.bf16.msra.mxu0 0
        %7287 = vmatpush.bf16.msra.mxu0 0
        %7288 = vmatpush.bf16.msra.mxu0 %v6355
        %7289 = vmatpush.bf16.msra.mxu0 %v6354
        %7290 = vmatpush.bf16.msra.mxu0 %v6353
        %7291 = vmatpush.bf16.msra.mxu0 %v6352
        %7292 = vmatmul.bf16.gmra.mxu0 %v6393
        %v7293 = vpop.f32.mrf.mxu0
        %v7294 = vpop.f32.mrf.mxu0
        %v7295 = vadd.f32 %v7102, %v7294
        %7296 = vmatmul.bf16.gmra.mxu0 %v6396
        %v7297 = vpop.f32.mrf.mxu0
        %v7298 = vadd.f32 %v7105, %v7297
        %v7299 = vpop.f32.mrf.mxu0
        %v7300 = vadd.f32 %v7107, %v7299
        %7301 = vmatmul.bf16.gmra.mxu0 %v6399
        %v7302 = vpop.f32.mrf.mxu0
        %v7303 = vadd.f32 %v7110, %v7302
        %v7304 = vpop.f32.mrf.mxu0
        %v7305 = vadd.f32 %v7112, %v7304
        %7306 = vmatmul.bf16.gmra.mxu0 %v6402
        %v7307 = vpop.f32.mrf.mxu0
        %v7308 = vadd.f32 %v7115, %v7307
        %v7309 = vpop.f32.mrf.mxu0
        %v7310 = vadd.f32 %v7117, %v7309
        %7311 = vmatmul.bf16.gmra.mxu0 %v6405
        %v7312 = vpop.f32.mrf.mxu0
        %v7313 = vadd.f32 %v7120, %v7312
        %v7314 = vpop.f32.mrf.mxu0
        %7315 = vmatmul.bf16.gmra.mxu0 %v6408
        %v7316 = vpop.f32.mrf.mxu0
        %v7317 = vpop.f32.mrf.mxu0
        %v7318 = vadd.f32 %v7125, %v7317
        %7319 = vmatmul.bf16.gmra.mxu0 %v6411
        %v7320 = vpop.f32.mrf.mxu0
        %v7321 = vadd.f32 %v7128, %v7320
        %v7322 = vpop.f32.mrf.mxu0
        %v7323 = vadd.f32 %v7130, %v7322
        %7324 = vmatmul.bf16.gmra.mxu0 %v6414
        %v7325 = vpop.f32.mrf.mxu0
        %v7326 = vadd.f32 %v7133, %v7325
        %v7327 = vpop.f32.mrf.mxu0
        %v7328 = vadd.f32 %v7135, %v7327
        %7329 = vmatmul.bf16.gmra.mxu0 %v6417
        %v7330 = vpop.f32.mrf.mxu0
        %v7331 = vadd.f32 %v7138, %v7330
        %v7332 = vpop.f32.mrf.mxu0
        %v7333 = vadd.f32 %v7140, %v7332
        %7334 = vmatmul.bf16.gmra.mxu0 %v6420
        %v7335 = vpop.f32.mrf.mxu0
        %v7336 = vadd.f32 %v7143, %v7335
        %v7337 = vpop.f32.mrf.mxu0
        %7338 = vmatmul.bf16.gmra.mxu0 %v6423
        %v7339 = vpop.f32.mrf.mxu0
        %v7340 = vpop.f32.mrf.mxu0
        %v7341 = vadd.f32 %v7148, %v7340
        %7342 = vmatmul.bf16.gmra.mxu0 %v6426
        %v7343 = vpop.f32.mrf.mxu0
        %v7344 = vadd.f32 %v7151, %v7343
        %v7345 = vpop.f32.mrf.mxu0
        %v7346 = vadd.f32 %v7153, %v7345
        %7347 = vmatmul.bf16.gmra.mxu0 %v6429
        %v7348 = vpop.f32.mrf.mxu0
        %v7349 = vadd.f32 %v7156, %v7348
        %v7350 = vpop.f32.mrf.mxu0
        %v7351 = vadd.f32 %v7158, %v7350
        %7352 = vmatmul.bf16.gmra.mxu0 %v6432
        %v7353 = vpop.f32.mrf.mxu0
        %v7354 = vadd.f32 %v7161, %v7353
        %v7355 = vpop.f32.mrf.mxu0
        %v7356 = vadd.f32 %v7163, %v7355
        %7357 = vmatmul.bf16.gmra.mxu0 %v6435
        %v7358 = vpop.f32.mrf.mxu0
        %v7359 = vadd.f32 %v7166, %v7358
        %v7360 = vpop.f32.mrf.mxu0
        %7361 = vmatmul.bf16.gmra.mxu0 %v6438
        %v7362 = vpop.f32.mrf.mxu0
        %v7363 = vpop.f32.mrf.mxu0
        %v7364 = vadd.f32 %v7171, %v7363
        %7365 = vmatmul.bf16.gmra.mxu0 %v6441
        %v7366 = vpop.f32.mrf.mxu0
        %v7367 = vadd.f32 %v7174, %v7366
        %v7368 = vpop.f32.mrf.mxu0
        %v7369 = vadd.f32 %v7176, %v7368
        %7370 = vmatmul.bf16.gmra.mxu0 %v6444
        %v7371 = vpop.f32.mrf.mxu0
        %v7372 = vadd.f32 %v7179, %v7371
        %v7373 = vpop.f32.mrf.mxu0
        %v7374 = vadd.f32 %v7181, %v7373
        %7375 = vmatmul.bf16.gmra.mxu0 %v6447
        %v7376 = vpop.f32.mrf.mxu0
        %v7377 = vadd.f32 %v7184, %v7376
        %v7378 = vpop.f32.mrf.mxu0
        %v7379 = vadd.f32 %v7186, %v7378
        %7380 = vmatmul.bf16.gmra.mxu0 %v6450
        %v7381 = vpop.f32.mrf.mxu0
        %v7382 = vadd.f32 %v7189, %v7381
        %v7383 = vpop.f32.mrf.mxu0
        %7384 = vmatmul.bf16.gmra.mxu0 %v6453
        %v7385 = vpop.f32.mrf.mxu0
        %v7386 = vpop.f32.mrf.mxu0
        %v7387 = vadd.f32 %v7194, %v7386
        %7388 = vmatmul.bf16.gmra.mxu0 %v6456
        %v7389 = vpop.f32.mrf.mxu0
        %v7390 = vadd.f32 %v7197, %v7389
        %v7391 = vpop.f32.mrf.mxu0
        %v7392 = vadd.f32 %v7199, %v7391
        %7393 = vmatmul.bf16.gmra.mxu0 %v6459
        %v7394 = vpop.f32.mrf.mxu0
        %v7395 = vadd.f32 %v7202, %v7394
        %v7396 = vpop.f32.mrf.mxu0
        %v7397 = vadd.f32 %v7204, %v7396
        %7398 = vmatmul.bf16.gmra.mxu0 %v6462
        %v7399 = vpop.f32.mrf.mxu0
        %v7400 = vadd.f32 %v7207, %v7399
        %v7401 = vpop.f32.mrf.mxu0
        %v7402 = vadd.f32 %v7209, %v7401
        %7403 = vmatmul.bf16.gmra.mxu0 %v6465
        %v7404 = vpop.f32.mrf.mxu0
        %v7405 = vadd.f32 %v7212, %v7404
        %v7406 = vpop.f32.mrf.mxu0
        %7407 = vmatmul.bf16.gmra.mxu0 %v6468
        %v7408 = vpop.f32.mrf.mxu0
        %v7409 = vpop.f32.mrf.mxu0
        %v7410 = vadd.f32 %v7217, %v7409
        %7411 = vmatmul.bf16.gmra.mxu0 %v6471
        %v7412 = vpop.f32.mrf.mxu0
        %v7413 = vadd.f32 %v7220, %v7412
        %v7414 = vpop.f32.mrf.mxu0
        %v7415 = vadd.f32 %v7222, %v7414
        %7416 = vmatmul.bf16.gmra.mxu0 %v6474
        %v7417 = vpop.f32.mrf.mxu0
        %v7418 = vadd.f32 %v7225, %v7417
        %v7419 = vpop.f32.mrf.mxu0
        %v7420 = vadd.f32 %v7227, %v7419
        %7421 = vmatmul.bf16.gmra.mxu0 %v6477
        %v7422 = vpop.f32.mrf.mxu0
        %v7423 = vadd.f32 %v7230, %v7422
        %v7424 = vpop.f32.mrf.mxu0
        %v7425 = vadd.f32 %v7232, %v7424
        %7426 = vmatmul.bf16.gmra.mxu0 %v6480
        %v7427 = vpop.f32.mrf.mxu0
        %v7428 = vadd.f32 %v7235, %v7427
        %v7429 = vpop.f32.mrf.mxu0
        %7430 = vmatmul.bf16.gmra.mxu0 %v6483
        %v7431 = vpop.f32.mrf.mxu0
        %v7432 = vpop.f32.mrf.mxu0
        %v7433 = vadd.f32 %v7240, %v7432
        %7434 = vmatmul.bf16.gmra.mxu0 %v6486
        %v7435 = vpop.f32.mrf.mxu0
        %v7436 = vadd.f32 %v7243, %v7435
        %v7437 = vpop.f32.mrf.mxu0
        %v7438 = vadd.f32 %v7245, %v7437
        %7439 = vmatmul.bf16.gmra.mxu0 %v6489
        %v7440 = vpop.f32.mrf.mxu0
        %v7441 = vadd.f32 %v7248, %v7440
        %v7442 = vpop.f32.mrf.mxu0
        %v7443 = vadd.f32 %v7250, %v7442
        %7444 = vmatmul.bf16.gmra.mxu0 %v6492
        %v7445 = vpop.f32.mrf.mxu0
        %v7446 = vadd.f32 %v7253, %v7445
        %v7447 = vpop.f32.mrf.mxu0
        %v7448 = vadd.f32 %v7255, %v7447
        %7449 = vmatmul.bf16.gmra.mxu0 %v6495
        %v7450 = vpop.f32.mrf.mxu0
        %v7451 = vadd.f32 %v7258, %v7450
        %v7452 = vpop.f32.mrf.mxu0
        %7453 = vmatmul.bf16.gmra.mxu0 %v6498
        %v7454 = vpop.f32.mrf.mxu0
        %v7455 = vpop.f32.mrf.mxu0
        %v7456 = vadd.f32 %v7263, %v7455
        %7457 = vmatmul.bf16.gmra.mxu0 %v6501
        %v7458 = vpop.f32.mrf.mxu0
        %v7459 = vadd.f32 %v7266, %v7458
        %v7460 = vpop.f32.mrf.mxu0
        %v7461 = vadd.f32 %v7268, %v7460
        %7462 = vmatmul.bf16.gmra.mxu0 %v6504
        %v7463 = vpop.f32.mrf.mxu0
        %v7464 = vadd.f32 %v7271, %v7463
        %v7465 = vpop.f32.mrf.mxu0
        %v7466 = vadd.f32 %v7273, %v7465
        %7467 = vmatmul.bf16.gmra.mxu0 %v6507
        %v7468 = vpop.f32.mrf.mxu0
        %v7469 = vadd.f32 %v7276, %v7468
        %v7470 = vpop.f32.mrf.mxu0
        %v7471 = vadd.f32 %v7278, %v7470
        %7472 = vmatmul.bf16.gmra.mxu0 %v6510
        %v7473 = vpop.f32.mrf.mxu0
        %v7474 = vadd.f32 %v7281, %v7473
        %v7475 = vpop.f32.mrf.mxu0
        %7476 = vdwg.mxu0
        %v7477 = vsel %vm708, %v7295, 0.0
        %v7478 = vsel %vm708, %v7298, 0.0
        %v7479 = vadd.f32 %v7477, %v7478
        %v7480 = vsel %vm708, %v7300, 0.0
        %v7481 = vadd.f32 %v7479, %v7480
        %v7482 = vsel %vm708, %v7303, 0.0
        %v7483 = vadd.f32 %v7481, %v7482
        %v7484 = vsel %vm708, %v7305, 0.0
        %v7485 = vadd.f32 %v7483, %v7484
        %v7486 = vsel %vm708, %v7308, 0.0
        %v7487 = vadd.f32 %v7485, %v7486
        %v7488 = vsel %vm708, %v7310, 0.0
        %v7489 = vadd.f32 %v7487, %v7488
        %v7490 = vsel %vm708, %v7313, 0.0
        %v7491 = vadd.f32 %v7489, %v7490
        %v7492 = vsel %vm708, %v7318, 0.0
        %v7493 = vadd.f32 %v7491, %v7492
        %v7494 = vsel %vm708, %v7321, 0.0
        %v7495 = vadd.f32 %v7493, %v7494
        %v7496 = vsel %vm708, %v7323, 0.0
        %v7497 = vadd.f32 %v7495, %v7496
        %v7498 = vsel %vm708, %v7326, 0.0
        %v7499 = vadd.f32 %v7497, %v7498
        %v7500 = vsel %vm708, %v7328, 0.0
        %v7501 = vadd.f32 %v7499, %v7500
        %v7502 = vsel %vm708, %v7331, 0.0
        %v7503 = vadd.f32 %v7501, %v7502
        %v7504 = vsel %vm708, %v7333, 0.0
        %v7505 = vadd.f32 %v7503, %v7504
        %v7506 = vsel %vm708, %v7336, 0.0
        %v7507 = vadd.f32 %v7505, %v7506
        %v7508 = vsel %vm708, %v7341, 0.0
        %v7509 = vadd.f32 %v7507, %v7508
        %v7510 = vsel %vm708, %v7344, 0.0
        %v7511 = vadd.f32 %v7509, %v7510
        %v7512 = vsel %vm708, %v7346, 0.0
        %v7513 = vadd.f32 %v7511, %v7512
        %v7514 = vsel %vm708, %v7349, 0.0
        %v7515 = vadd.f32 %v7513, %v7514
        %v7516 = vsel %vm708, %v7351, 0.0
        %v7517 = vadd.f32 %v7515, %v7516
        %v7518 = vsel %vm708, %v7354, 0.0
        %v7519 = vadd.f32 %v7517, %v7518
        %v7520 = vsel %vm708, %v7356, 0.0
        %v7521 = vadd.f32 %v7519, %v7520
        %v7522 = vsel %vm708, %v7359, 0.0
        %v7523 = vadd.f32 %v7521, %v7522
        %v7524 = vsel %vm708, %v7364, 0.0
        %v7525 = vadd.f32 %v7523, %v7524
        %v7526 = vsel %vm708, %v7367, 0.0
        %v7527 = vadd.f32 %v7525, %v7526
        %v7528 = vsel %vm708, %v7369, 0.0
        %v7529 = vadd.f32 %v7527, %v7528
        %v7530 = vsel %vm708, %v7372, 0.0
        %v7531 = vadd.f32 %v7529, %v7530
        %v7532 = vsel %vm708, %v7374, 0.0
        %v7533 = vadd.f32 %v7531, %v7532
        %v7534 = vsel %vm708, %v7377, 0.0
        %v7535 = vadd.f32 %v7533, %v7534
        %v7536 = vsel %vm708, %v7379, 0.0
        %v7537 = vadd.f32 %v7535, %v7536
        %v7538 = vsel %vm708, %v7382, 0.0
        %v7539 = vadd.f32 %v7537, %v7538
        %v7540 = vsel %vm708, %v7387, 0.0
        %v7541 = vadd.f32 %v7539, %v7540
        %v7542 = vsel %vm708, %v7390, 0.0
        %v7543 = vadd.f32 %v7541, %v7542
        %v7544 = vsel %vm708, %v7392, 0.0
        %v7545 = vadd.f32 %v7543, %v7544
        %v7546 = vsel %vm708, %v7395, 0.0
        %v7547 = vadd.f32 %v7545, %v7546
        %v7548 = vsel %vm708, %v7397, 0.0
        %v7549 = vadd.f32 %v7547, %v7548
        %v7550 = vsel %vm708, %v7400, 0.0
        %v7551 = vadd.f32 %v7549, %v7550
        %v7552 = vsel %vm708, %v7402, 0.0
        %v7553 = vadd.f32 %v7551, %v7552
        %v7554 = vsel %vm708, %v7405, 0.0
        %v7555 = vadd.f32 %v7553, %v7554
        %v7556 = vsel %vm708, %v7410, 0.0
        %v7557 = vadd.f32 %v7555, %v7556
        %v7558 = vsel %vm708, %v7413, 0.0
        %v7559 = vadd.f32 %v7557, %v7558
        %v7560 = vsel %vm708, %v7415, 0.0
        %v7561 = vadd.f32 %v7559, %v7560
        %v7562 = vsel %vm708, %v7418, 0.0
        %v7563 = vadd.f32 %v7561, %v7562
        %v7564 = vsel %vm708, %v7420, 0.0
        %v7565 = vadd.f32 %v7563, %v7564
        %v7566 = vsel %vm708, %v7423, 0.0
        %v7567 = vadd.f32 %v7565, %v7566
        %v7568 = vsel %vm708, %v7425, 0.0
        %v7569 = vadd.f32 %v7567, %v7568
        %v7570 = vsel %vm708, %v7428, 0.0
        %v7571 = vadd.f32 %v7569, %v7570
        %v7572 = vsel %vm708, %v7433, 0.0
        %v7573 = vadd.f32 %v7571, %v7572
        %v7574 = vsel %vm708, %v7436, 0.0
        %v7575 = vadd.f32 %v7573, %v7574
        %v7576 = vsel %vm708, %v7438, 0.0
        %v7577 = vadd.f32 %v7575, %v7576
        %v7578 = vsel %vm708, %v7441, 0.0
        %v7579 = vadd.f32 %v7577, %v7578
        %v7580 = vsel %vm708, %v7443, 0.0
        %v7581 = vadd.f32 %v7579, %v7580
        %v7582 = vsel %vm708, %v7446, 0.0
        %v7583 = vadd.f32 %v7581, %v7582
        %v7584 = vsel %vm708, %v7448, 0.0
        %v7585 = vadd.f32 %v7583, %v7584
        %v7586 = vsel %vm708, %v7451, 0.0
        %v7587 = vadd.f32 %v7585, %v7586
        %v7588 = vsel %vm708, %v7456, 0.0
        %v7589 = vadd.f32 %v7587, %v7588
        %v7590 = vsel %vm708, %v7459, 0.0
        %v7591 = vadd.f32 %v7589, %v7590
        %v7592 = vsel %vm708, %v7461, 0.0
        %v7593 = vadd.f32 %v7591, %v7592
        %v7594 = vsel %vm708, %v7464, 0.0
        %v7595 = vadd.f32 %v7593, %v7594
        %v7596 = vsel %vm708, %v7466, 0.0
        %v7597 = vadd.f32 %v7595, %v7596
        %v7598 = vsel %vm708, %v7469, 0.0
        %v7599 = vadd.f32 %v7597, %v7598
        %v7600 = vsel %vm708, %v7471, 0.0
        %v7601 = vadd.f32 %v7599, %v7600
        %v7602 = vsel %vm708, %v7474, 0.0
        %v7603 = vadd.f32 %v7601, %v7602
        %v7604 = vmul.f32 %v7603, %v842
        %v7605 = vmul.f32 %v7295, %v7295
        %v7606 = vmul.f32 %v7298, %v7298
        %v7607 = vmul.f32 %v7300, %v7300
        %v7608 = vmul.f32 %v7303, %v7303
        %v7609 = vmul.f32 %v7305, %v7305
        %v7610 = vmul.f32 %v7308, %v7308
        %v7611 = vmul.f32 %v7310, %v7310
        %v7612 = vmul.f32 %v7313, %v7313
        %v7613 = vmul.f32 %v7318, %v7318
        %v7614 = vmul.f32 %v7321, %v7321
        %v7615 = vmul.f32 %v7323, %v7323
        %v7616 = vmul.f32 %v7326, %v7326
        %v7617 = vmul.f32 %v7328, %v7328
        %v7618 = vmul.f32 %v7331, %v7331
        %v7619 = vmul.f32 %v7333, %v7333
        %v7620 = vmul.f32 %v7336, %v7336
        %v7621 = vmul.f32 %v7341, %v7341
        %v7622 = vmul.f32 %v7344, %v7344
        %v7623 = vmul.f32 %v7346, %v7346
        %v7624 = vmul.f32 %v7349, %v7349
        %v7625 = vmul.f32 %v7351, %v7351
        %v7626 = vmul.f32 %v7354, %v7354
        %v7627 = vmul.f32 %v7356, %v7356
        %v7628 = vmul.f32 %v7359, %v7359
        %v7629 = vmul.f32 %v7364, %v7364
        %v7630 = vmul.f32 %v7367, %v7367
        %v7631 = vmul.f32 %v7369, %v7369
        %v7632 = vmul.f32 %v7372, %v7372
        %v7633 = vmul.f32 %v7374, %v7374
        %v7634 = vmul.f32 %v7377, %v7377
        %v7635 = vmul.f32 %v7379, %v7379
        %v7636 = vmul.f32 %v7382, %v7382
        %v7637 = vmul.f32 %v7387, %v7387
        %v7638 = vmul.f32 %v7390, %v7390
        %v7639 = vmul.f32 %v7392, %v7392
        %v7640 = vmul.f32 %v7395, %v7395
        %v7641 = vmul.f32 %v7397, %v7397
        %v7642 = vmul.f32 %v7400, %v7400
        %v7643 = vmul.f32 %v7402, %v7402
        %v7644 = vmul.f32 %v7405, %v7405
        %v7645 = vmul.f32 %v7410, %v7410
        %v7646 = vmul.f32 %v7413, %v7413
        %v7647 = vmul.f32 %v7415, %v7415
        %v7648 = vmul.f32 %v7418, %v7418
        %v7649 = vmul.f32 %v7420, %v7420
        %v7650 = vmul.f32 %v7423, %v7423
        %v7651 = vmul.f32 %v7425, %v7425
        %v7652 = vmul.f32 %v7428, %v7428
        %v7653 = vmul.f32 %v7433, %v7433
        %v7654 = vmul.f32 %v7436, %v7436
        %v7655 = vmul.f32 %v7438, %v7438
        %v7656 = vmul.f32 %v7441, %v7441
        %v7657 = vmul.f32 %v7443, %v7443
        %v7658 = vmul.f32 %v7446, %v7446
        %v7659 = vmul.f32 %v7448, %v7448
        %v7660 = vmul.f32 %v7451, %v7451
        %v7661 = vmul.f32 %v7456, %v7456
        %v7662 = vmul.f32 %v7459, %v7459
        %v7663 = vmul.f32 %v7461, %v7461
        %v7664 = vmul.f32 %v7464, %v7464
        %v7665 = vmul.f32 %v7466, %v7466
        %v7666 = vmul.f32 %v7469, %v7469
        %v7667 = vmul.f32 %v7471, %v7471
        %v7668 = vmul.f32 %v7474, %v7474
        %v7669 = vsel %vm708, %v7605, 0.0
        %v7670 = vsel %vm708, %v7606, 0.0
        %v7671 = vadd.f32 %v7669, %v7670
        %v7672 = vsel %vm708, %v7607, 0.0
        %v7673 = vadd.f32 %v7671, %v7672
        %v7674 = vsel %vm708, %v7608, 0.0
        %v7675 = vadd.f32 %v7673, %v7674
        %v7676 = vsel %vm708, %v7609, 0.0
        %v7677 = vadd.f32 %v7675, %v7676
        %v7678 = vsel %vm708, %v7610, 0.0
        %v7679 = vadd.f32 %v7677, %v7678
        %v7680 = vsel %vm708, %v7611, 0.0
        %v7681 = vadd.f32 %v7679, %v7680
        %v7682 = vsel %vm708, %v7612, 0.0
        %v7683 = vadd.f32 %v7681, %v7682
        %v7684 = vsel %vm708, %v7613, 0.0
        %v7685 = vadd.f32 %v7683, %v7684
        %v7686 = vsel %vm708, %v7614, 0.0
        %v7687 = vadd.f32 %v7685, %v7686
        %v7688 = vsel %vm708, %v7615, 0.0
        %v7689 = vadd.f32 %v7687, %v7688
        %v7690 = vsel %vm708, %v7616, 0.0
        %v7691 = vadd.f32 %v7689, %v7690
        %v7692 = vsel %vm708, %v7617, 0.0
        %v7693 = vadd.f32 %v7691, %v7692
        %v7694 = vsel %vm708, %v7618, 0.0
        %v7695 = vadd.f32 %v7693, %v7694
        %v7696 = vsel %vm708, %v7619, 0.0
        %v7697 = vadd.f32 %v7695, %v7696
        %v7698 = vsel %vm708, %v7620, 0.0
        %v7699 = vadd.f32 %v7697, %v7698
        %v7700 = vsel %vm708, %v7621, 0.0
        %v7701 = vadd.f32 %v7699, %v7700
        %v7702 = vsel %vm708, %v7622, 0.0
        %v7703 = vadd.f32 %v7701, %v7702
        %v7704 = vsel %vm708, %v7623, 0.0
        %v7705 = vadd.f32 %v7703, %v7704
        %v7706 = vsel %vm708, %v7624, 0.0
        %v7707 = vadd.f32 %v7705, %v7706
        %v7708 = vsel %vm708, %v7625, 0.0
        %v7709 = vadd.f32 %v7707, %v7708
        %v7710 = vsel %vm708, %v7626, 0.0
        %v7711 = vadd.f32 %v7709, %v7710
        %v7712 = vsel %vm708, %v7627, 0.0
        %v7713 = vadd.f32 %v7711, %v7712
        %v7714 = vsel %vm708, %v7628, 0.0
        %v7715 = vadd.f32 %v7713, %v7714
        %v7716 = vsel %vm708, %v7629, 0.0
        %v7717 = vadd.f32 %v7715, %v7716
        %v7718 = vsel %vm708, %v7630, 0.0
        %v7719 = vadd.f32 %v7717, %v7718
        %v7720 = vsel %vm708, %v7631, 0.0
        %v7721 = vadd.f32 %v7719, %v7720
        %v7722 = vsel %vm708, %v7632, 0.0
        %v7723 = vadd.f32 %v7721, %v7722
        %v7724 = vsel %vm708, %v7633, 0.0
        %v7725 = vadd.f32 %v7723, %v7724
        %v7726 = vsel %vm708, %v7634, 0.0
        %v7727 = vadd.f32 %v7725, %v7726
        %v7728 = vsel %vm708, %v7635, 0.0
        %v7729 = vadd.f32 %v7727, %v7728
        %v7730 = vsel %vm708, %v7636, 0.0
        %v7731 = vadd.f32 %v7729, %v7730
        %v7732 = vsel %vm708, %v7637, 0.0
        %v7733 = vadd.f32 %v7731, %v7732
        %v7734 = vsel %vm708, %v7638, 0.0
        %v7735 = vadd.f32 %v7733, %v7734
        %v7736 = vsel %vm708, %v7639, 0.0
        %v7737 = vadd.f32 %v7735, %v7736
        %v7738 = vsel %vm708, %v7640, 0.0
        %v7739 = vadd.f32 %v7737, %v7738
        %v7740 = vsel %vm708, %v7641, 0.0
        %v7741 = vadd.f32 %v7739, %v7740
        %v7742 = vsel %vm708, %v7642, 0.0
        %v7743 = vadd.f32 %v7741, %v7742
        %v7744 = vsel %vm708, %v7643, 0.0
        %v7745 = vadd.f32 %v7743, %v7744
        %v7746 = vsel %vm708, %v7644, 0.0
        %v7747 = vadd.f32 %v7745, %v7746
        %v7748 = vsel %vm708, %v7645, 0.0
        %v7749 = vadd.f32 %v7747, %v7748
        %v7750 = vsel %vm708, %v7646, 0.0
        %v7751 = vadd.f32 %v7749, %v7750
        %v7752 = vsel %vm708, %v7647, 0.0
        %v7753 = vadd.f32 %v7751, %v7752
        %v7754 = vsel %vm708, %v7648, 0.0
        %v7755 = vadd.f32 %v7753, %v7754
        %v7756 = vsel %vm708, %v7649, 0.0
        %v7757 = vadd.f32 %v7755, %v7756
        %v7758 = vsel %vm708, %v7650, 0.0
        %v7759 = vadd.f32 %v7757, %v7758
        %v7760 = vsel %vm708, %v7651, 0.0
        %v7761 = vadd.f32 %v7759, %v7760
        %v7762 = vsel %vm708, %v7652, 0.0
        %v7763 = vadd.f32 %v7761, %v7762
        %v7764 = vsel %vm708, %v7653, 0.0
        %v7765 = vadd.f32 %v7763, %v7764
        %v7766 = vsel %vm708, %v7654, 0.0
        %v7767 = vadd.f32 %v7765, %v7766
        %v7768 = vsel %vm708, %v7655, 0.0
        %v7769 = vadd.f32 %v7767, %v7768
        %v7770 = vsel %vm708, %v7656, 0.0
        %v7771 = vadd.f32 %v7769, %v7770
        %v7772 = vsel %vm708, %v7657, 0.0
        %v7773 = vadd.f32 %v7771, %v7772
        %v7774 = vsel %vm708, %v7658, 0.0
        %v7775 = vadd.f32 %v7773, %v7774
        %v7776 = vsel %vm708, %v7659, 0.0
        %v7777 = vadd.f32 %v7775, %v7776
        %v7778 = vsel %vm708, %v7660, 0.0
        %v7779 = vadd.f32 %v7777, %v7778
        %v7780 = vsel %vm708, %v7661, 0.0
        %v7781 = vadd.f32 %v7779, %v7780
        %v7782 = vsel %vm708, %v7662, 0.0
        %v7783 = vadd.f32 %v7781, %v7782
        %v7784 = vsel %vm708, %v7663, 0.0
        %v7785 = vadd.f32 %v7783, %v7784
        %v7786 = vsel %vm708, %v7664, 0.0
        %v7787 = vadd.f32 %v7785, %v7786
        %v7788 = vsel %vm708, %v7665, 0.0
        %v7789 = vadd.f32 %v7787, %v7788
        %v7790 = vsel %vm708, %v7666, 0.0
        %v7791 = vadd.f32 %v7789, %v7790
        %v7792 = vsel %vm708, %v7667, 0.0
        %v7793 = vadd.f32 %v7791, %v7792
        %v7794 = vsel %vm708, %v7668, 0.0
        %v7795 = vadd.f32 %v7793, %v7794
        %v7796 = vmul.f32 %v7795, %v842
        %v7797 = vmul.f32 %v7604, %v7604
        %v7798 = vsub.f32 %v7796, %v7797
        %v7799 = vmax.f32 %v7798, 0.0
        %v7800 = vsub.f32 %v7295, %v7604
        %v7801 = vsub.f32 %v7298, %v7604
        %v7802 = vsub.f32 %v7300, %v7604
        %v7803 = vsub.f32 %v7303, %v7604
        %v7804 = vsub.f32 %v7305, %v7604
        %v7805 = vsub.f32 %v7308, %v7604
        %v7806 = vsub.f32 %v7310, %v7604
        %v7807 = vsub.f32 %v7313, %v7604
        %v7808 = vsub.f32 %v7318, %v7604
        %v7809 = vsub.f32 %v7321, %v7604
        %v7810 = vsub.f32 %v7323, %v7604
        %v7811 = vsub.f32 %v7326, %v7604
        %v7812 = vsub.f32 %v7328, %v7604
        %v7813 = vsub.f32 %v7331, %v7604
        %v7814 = vsub.f32 %v7333, %v7604
        %v7815 = vsub.f32 %v7336, %v7604
        %v7816 = vsub.f32 %v7341, %v7604
        %v7817 = vsub.f32 %v7344, %v7604
        %v7818 = vsub.f32 %v7346, %v7604
        %v7819 = vsub.f32 %v7349, %v7604
        %v7820 = vsub.f32 %v7351, %v7604
        %v7821 = vsub.f32 %v7354, %v7604
        %v7822 = vsub.f32 %v7356, %v7604
        %v7823 = vsub.f32 %v7359, %v7604
        %v7824 = vsub.f32 %v7364, %v7604
        %v7825 = vsub.f32 %v7367, %v7604
        %v7826 = vsub.f32 %v7369, %v7604
        %v7827 = vsub.f32 %v7372, %v7604
        %v7828 = vsub.f32 %v7374, %v7604
        %v7829 = vsub.f32 %v7377, %v7604
        %v7830 = vsub.f32 %v7379, %v7604
        %v7831 = vsub.f32 %v7382, %v7604
        %v7832 = vsub.f32 %v7387, %v7604
        %v7833 = vsub.f32 %v7390, %v7604
        %v7834 = vsub.f32 %v7392, %v7604
        %v7835 = vsub.f32 %v7395, %v7604
        %v7836 = vsub.f32 %v7397, %v7604
        %v7837 = vsub.f32 %v7400, %v7604
        %v7838 = vsub.f32 %v7402, %v7604
        %v7839 = vsub.f32 %v7405, %v7604
        %v7840 = vsub.f32 %v7410, %v7604
        %v7841 = vsub.f32 %v7413, %v7604
        %v7842 = vsub.f32 %v7415, %v7604
        %v7843 = vsub.f32 %v7418, %v7604
        %v7844 = vsub.f32 %v7420, %v7604
        %v7845 = vsub.f32 %v7423, %v7604
        %v7846 = vsub.f32 %v7425, %v7604
        %v7847 = vsub.f32 %v7428, %v7604
        %v7848 = vsub.f32 %v7433, %v7604
        %v7849 = vsub.f32 %v7436, %v7604
        %v7850 = vsub.f32 %v7438, %v7604
        %v7851 = vsub.f32 %v7441, %v7604
        %v7852 = vsub.f32 %v7443, %v7604
        %v7853 = vsub.f32 %v7446, %v7604
        %v7854 = vsub.f32 %v7448, %v7604
        %v7855 = vsub.f32 %v7451, %v7604
        %v7856 = vsub.f32 %v7456, %v7604
        %v7857 = vsub.f32 %v7459, %v7604
        %v7858 = vsub.f32 %v7461, %v7604
        %v7859 = vsub.f32 %v7464, %v7604
        %v7860 = vsub.f32 %v7466, %v7604
        %v7861 = vsub.f32 %v7469, %v7604
        %v7862 = vsub.f32 %v7471, %v7604
        %v7863 = vsub.f32 %v7474, %v7604
        %v7864 = vadd.f32 %v7799, 1e-05
        %v7865 = vrsqrt.pop %v7864
        %v7866 = vmul.f32 %v7865, %v7864
        %v7867 = vmul.f32 %v7866, %v7865
        %v7868 = vmul.f32 0.5, %v7867
        %v7869 = vsub.f32 1.5, %v7868
        %v7870 = vmul.f32 %v7865, %v7869
        %vm7871 = vweird.f32 %v7864
        %vm7872 = vweird.f32 %v7865
        %vm7873 = vmor %vm7871, %vm7872
        %v7874 = vsel %vm7873, %v7865, %v7870
        %v7875 = vmul.f32 %v7800, %v7874
        %v7876 = vmul.f32 %v7801, %v7874
        %v7877 = vmul.f32 %v7802, %v7874
        %v7878 = vmul.f32 %v7803, %v7874
        %v7879 = vmul.f32 %v7804, %v7874
        %v7880 = vmul.f32 %v7805, %v7874
        %v7881 = vmul.f32 %v7806, %v7874
        %v7882 = vmul.f32 %v7807, %v7874
        %v7883 = vmul.f32 %v7808, %v7874
        %v7884 = vmul.f32 %v7809, %v7874
        %v7885 = vmul.f32 %v7810, %v7874
        %v7886 = vmul.f32 %v7811, %v7874
        %v7887 = vmul.f32 %v7812, %v7874
        %v7888 = vmul.f32 %v7813, %v7874
        %v7889 = vmul.f32 %v7814, %v7874
        %v7890 = vmul.f32 %v7815, %v7874
        %v7891 = vmul.f32 %v7816, %v7874
        %v7892 = vmul.f32 %v7817, %v7874
        %v7893 = vmul.f32 %v7818, %v7874
        %v7894 = vmul.f32 %v7819, %v7874
        %v7895 = vmul.f32 %v7820, %v7874
        %v7896 = vmul.f32 %v7821, %v7874
        %v7897 = vmul.f32 %v7822, %v7874
        %v7898 = vmul.f32 %v7823, %v7874
        %v7899 = vmul.f32 %v7824, %v7874
        %v7900 = vmul.f32 %v7825, %v7874
        %v7901 = vmul.f32 %v7826, %v7874
        %v7902 = vmul.f32 %v7827, %v7874
        %v7903 = vmul.f32 %v7828, %v7874
        %v7904 = vmul.f32 %v7829, %v7874
        %v7905 = vmul.f32 %v7830, %v7874
        %v7906 = vmul.f32 %v7831, %v7874
        %v7907 = vmul.f32 %v7832, %v7874
        %v7908 = vmul.f32 %v7833, %v7874
        %v7909 = vmul.f32 %v7834, %v7874
        %v7910 = vmul.f32 %v7835, %v7874
        %v7911 = vmul.f32 %v7836, %v7874
        %v7912 = vmul.f32 %v7837, %v7874
        %v7913 = vmul.f32 %v7838, %v7874
        %v7914 = vmul.f32 %v7839, %v7874
        %v7915 = vmul.f32 %v7840, %v7874
        %v7916 = vmul.f32 %v7841, %v7874
        %v7917 = vmul.f32 %v7842, %v7874
        %v7918 = vmul.f32 %v7843, %v7874
        %v7919 = vmul.f32 %v7844, %v7874
        %v7920 = vmul.f32 %v7845, %v7874
        %v7921 = vmul.f32 %v7846, %v7874
        %v7922 = vmul.f32 %v7847, %v7874
        %v7923 = vmul.f32 %v7848, %v7874
        %v7924 = vmul.f32 %v7849, %v7874
        %v7925 = vmul.f32 %v7850, %v7874
        %v7926 = vmul.f32 %v7851, %v7874
        %v7927 = vmul.f32 %v7852, %v7874
        %v7928 = vmul.f32 %v7853, %v7874
        %v7929 = vmul.f32 %v7854, %v7874
        %v7930 = vmul.f32 %v7855, %v7874
        %v7931 = vmul.f32 %v7856, %v7874
        %v7932 = vmul.f32 %v7857, %v7874
        %v7933 = vmul.f32 %v7858, %v7874
        %v7934 = vmul.f32 %v7859, %v7874
        %v7935 = vmul.f32 %v7860, %v7874
        %v7936 = vmul.f32 %v7861, %v7874
        %v7937 = vmul.f32 %v7862, %v7874
        %v7938 = vmul.f32 %v7863, %v7874
        %v7939 = vmax.f32 %v7875, 0.0
        %v7940 = vmax.f32 %v7876, 0.0
        %v7941 = vmax.f32 %v7877, 0.0
        %v7942 = vmax.f32 %v7878, 0.0
        %v7943 = vmax.f32 %v7879, 0.0
        %v7944 = vmax.f32 %v7880, 0.0
        %v7945 = vmax.f32 %v7881, 0.0
        %v7946 = vmax.f32 %v7882, 0.0
        %v7947 = vmax.f32 %v7883, 0.0
        %v7948 = vmax.f32 %v7884, 0.0
        %v7949 = vmax.f32 %v7885, 0.0
        %v7950 = vmax.f32 %v7886, 0.0
        %v7951 = vmax.f32 %v7887, 0.0
        %v7952 = vmax.f32 %v7888, 0.0
        %v7953 = vmax.f32 %v7889, 0.0
        %v7954 = vmax.f32 %v7890, 0.0
        %v7955 = vmax.f32 %v7891, 0.0
        %v7956 = vmax.f32 %v7892, 0.0
        %v7957 = vmax.f32 %v7893, 0.0
        %v7958 = vmax.f32 %v7894, 0.0
        %v7959 = vmax.f32 %v7895, 0.0
        %v7960 = vmax.f32 %v7896, 0.0
        %v7961 = vmax.f32 %v7897, 0.0
        %v7962 = vmax.f32 %v7898, 0.0
        %v7963 = vmax.f32 %v7899, 0.0
        %v7964 = vmax.f32 %v7900, 0.0
        %v7965 = vmax.f32 %v7901, 0.0
        %v7966 = vmax.f32 %v7902, 0.0
        %v7967 = vmax.f32 %v7903, 0.0
        %v7968 = vmax.f32 %v7904, 0.0
        %v7969 = vmax.f32 %v7905, 0.0
        %v7970 = vmax.f32 %v7906, 0.0
        %v7971 = vmax.f32 %v7907, 0.0
        %v7972 = vmax.f32 %v7908, 0.0
        %v7973 = vmax.f32 %v7909, 0.0
        %v7974 = vmax.f32 %v7910, 0.0
        %v7975 = vmax.f32 %v7911, 0.0
        %v7976 = vmax.f32 %v7912, 0.0
        %v7977 = vmax.f32 %v7913, 0.0
        %v7978 = vmax.f32 %v7914, 0.0
        %v7979 = vmax.f32 %v7915, 0.0
        %v7980 = vmax.f32 %v7916, 0.0
        %v7981 = vmax.f32 %v7917, 0.0
        %v7982 = vmax.f32 %v7918, 0.0
        %v7983 = vmax.f32 %v7919, 0.0
        %v7984 = vmax.f32 %v7920, 0.0
        %v7985 = vmax.f32 %v7921, 0.0
        %v7986 = vmax.f32 %v7922, 0.0
        %v7987 = vmax.f32 %v7923, 0.0
        %v7988 = vmax.f32 %v7924, 0.0
        %v7989 = vmax.f32 %v7925, 0.0
        %v7990 = vmax.f32 %v7926, 0.0
        %v7991 = vmax.f32 %v7927, 0.0
        %v7992 = vmax.f32 %v7928, 0.0
        %v7993 = vmax.f32 %v7929, 0.0
        %v7994 = vmax.f32 %v7930, 0.0
        %v7995 = vmax.f32 %v7931, 0.0
        %v7996 = vmax.f32 %v7932, 0.0
        %v7997 = vmax.f32 %v7933, 0.0
        %v7998 = vmax.f32 %v7934, 0.0
        %v7999 = vmax.f32 %v7935, 0.0
        %v8000 = vmax.f32 %v7936, 0.0
        %v8001 = vmax.f32 %v7937, 0.0
        %v8002 = vmax.f32 %v7938, 0.0
        %v8003 = vpack.c.bf16 %v7940, %v7939
        %v8004 = vpack.c.bf16 %v7942, %v7941
        %v8005 = vpack.c.bf16 %v7944, %v7943
        %v8006 = vpack.c.bf16 %v7946, %v7945
        %v8007 = vpack.c.bf16 %v7948, %v7947
        %v8008 = vpack.c.bf16 %v7950, %v7949
        %v8009 = vpack.c.bf16 %v7952, %v7951
        %v8010 = vpack.c.bf16 %v7954, %v7953
        %v8011 = vpack.c.bf16 %v7956, %v7955
        %v8012 = vpack.c.bf16 %v7958, %v7957
        %v8013 = vpack.c.bf16 %v7960, %v7959
        %v8014 = vpack.c.bf16 %v7962, %v7961
        %v8015 = vpack.c.bf16 %v7964, %v7963
        %v8016 = vpack.c.bf16 %v7966, %v7965
        %v8017 = vpack.c.bf16 %v7968, %v7967
        %v8018 = vpack.c.bf16 %v7970, %v7969
        %v8019 = vpack.c.bf16 %v7972, %v7971
        %v8020 = vpack.c.bf16 %v7974, %v7973
        %v8021 = vpack.c.bf16 %v7976, %v7975
        %v8022 = vpack.c.bf16 %v7978, %v7977
        %v8023 = vpack.c.bf16 %v7980, %v7979
        %v8024 = vpack.c.bf16 %v7982, %v7981
        %v8025 = vpack.c.bf16 %v7984, %v7983
        %v8026 = vpack.c.bf16 %v7986, %v7985
        %v8027 = vpack.c.bf16 %v7988, %v7987
        %v8028 = vpack.c.bf16 %v7990, %v7989
        %v8029 = vpack.c.bf16 %v7992, %v7991
        %v8030 = vpack.c.bf16 %v7994, %v7993
        %v8031 = vpack.c.bf16 %v7996, %v7995
        %v8032 = vpack.c.bf16 %v7998, %v7997
        %v8033 = vpack.c.bf16 %v8000, %v7999
        %v8034 = vpack.c.bf16 %v8002, %v8001
        %v8035 = vld [vmem:[%s3] sm:$0xf]
        %v8036 = vld [vmem:[%s3 + $0x4] sm:$0xf]
        %v8037 = vld [vmem:[%s3 + $0x8] sm:$0xf]
        %v8038 = vld [vmem:[%s3 + $0xc] sm:$0xf]
        %v8039 = vld [vmem:[%s3 + $0x10] sm:$0xf]
        %v8040 = vld [vmem:[%s3 + $0x14] sm:$0xf]
        %v8041 = vld [vmem:[%s3 + $0x18] sm:$0xf]
        %v8042 = vld [vmem:[%s3 + $0x1c] sm:$0xf]
        %v8051 = vunpack.c.l.b16 %v8035
        %v8052 = vunpack.c.l.b16 %v8036
        %v8053 = vunpack.c.l.b16 %v8037
        %v8054 = vunpack.c.l.b16 %v8038
        %v8055 = vunpack.c.l.b16 %v8039
        %v8056 = vunpack.c.l.b16 %v8040
        %v8057 = vunpack.c.l.b16 %v8041
        %v8058 = vunpack.c.l.b16 %v8042
        %v8059 = vpack.c.b16 %v8052, %v8051
        %v8060 = vpack.c.b16 %v8054, %v8053
        %v8061 = vpack.c.b16 %v8056, %v8055
        %v8062 = vpack.c.b16 %v8058, %v8057
        %v8068 = vsel %vm708, %v8003, 0
        %v8071 = vsel %vm708, %v8004, 0
        %v8074 = vsel %vm708, %v8005, 0
        %v8077 = vsel %vm708, %v8006, 0
        %v8080 = vsel %vm708, %v8007, 0
        %v8083 = vsel %vm708, %v8008, 0
        %v8086 = vsel %vm708, %v8009, 0
        %v8089 = vsel %vm708, %v8010, 0
        %v8092 = vsel %vm708, %v8011, 0
        %v8095 = vsel %vm708, %v8012, 0
        %v8098 = vsel %vm708, %v8013, 0
        %v8101 = vsel %vm708, %v8014, 0
        %v8104 = vsel %vm708, %v8015, 0
        %v8107 = vsel %vm708, %v8016, 0
        %v8110 = vsel %vm708, %v8017, 0
        %v8113 = vsel %vm708, %v8018, 0
        %v8116 = vsel %vm708, %v8019, 0
        %v8119 = vsel %vm708, %v8020, 0
        %v8122 = vsel %vm708, %v8021, 0
        %v8125 = vsel %vm708, %v8022, 0
        %v8128 = vsel %vm708, %v8023, 0
        %v8131 = vsel %vm708, %v8024, 0
        %v8134 = vsel %vm708, %v8025, 0
        %v8137 = vsel %vm708, %v8026, 0
        %v8140 = vsel %vm708, %v8027, 0
        %v8143 = vsel %vm708, %v8028, 0
        %v8146 = vsel %vm708, %v8029, 0
        %v8149 = vsel %vm708, %v8030, 0
        %v8152 = vsel %vm708, %v8031, 0
        %v8155 = vsel %vm708, %v8032, 0
        %v8158 = vsel %vm708, %v8033, 0
        %v8161 = vsel %vm708, %v8034, 0
        %8163 = vmatpush.bf16.msra.mxu0 0
        %8164 = vmatpush.bf16.msra.mxu0 0
        %8165 = vmatpush.bf16.msra.mxu0 0
        %8166 = vmatpush.bf16.msra.mxu0 0
        %8167 = vmatpush.bf16.msra.mxu0 %v8062
        %8168 = vmatpush.bf16.msra.mxu0 %v8061
        %8169 = vmatpush.bf16.msra.mxu0 %v8060
        %8170 = vmatpush.bf16.msra.mxu0 %v8059
        %8171 = vmatmul.bf16.gmra.mxu0 %v8068
        %v8172 = vpop.f32.mrf.mxu0
        %v8173 = vadd.f32 0.0, %v8172
        %v8174 = vpop.f32.mrf.mxu0
        %v8175 = vadd.f32 0.0, %v8174
        %8176 = vmatmul.bf16.gmra.mxu0 %v8071
        %v8177 = vpop.f32.mrf.mxu0
        %v8178 = vadd.f32 0.0, %v8177
        %v8179 = vpop.f32.mrf.mxu0
        %v8180 = vadd.f32 0.0, %v8179
        %8181 = vmatmul.bf16.gmra.mxu0 %v8074
        %v8182 = vpop.f32.mrf.mxu0
        %v8183 = vadd.f32 0.0, %v8182
        %v8184 = vpop.f32.mrf.mxu0
        %v8185 = vadd.f32 0.0, %v8184
        %8186 = vmatmul.bf16.gmra.mxu0 %v8077
        %v8187 = vpop.f32.mrf.mxu0
        %v8188 = vadd.f32 0.0, %v8187
        %v8189 = vpop.f32.mrf.mxu0
        %v8190 = vadd.f32 0.0, %v8189
        %8191 = vmatmul.bf16.gmra.mxu0 %v8080
        %v8192 = vpop.f32.mrf.mxu0
        %v8193 = vadd.f32 0.0, %v8192
        %v8194 = vpop.f32.mrf.mxu0
        %v8195 = vadd.f32 0.0, %v8194
        %8196 = vmatmul.bf16.gmra.mxu0 %v8083
        %v8197 = vpop.f32.mrf.mxu0
        %v8198 = vadd.f32 0.0, %v8197
        %v8199 = vpop.f32.mrf.mxu0
        %v8200 = vadd.f32 0.0, %v8199
        %8201 = vmatmul.bf16.gmra.mxu0 %v8086
        %v8202 = vpop.f32.mrf.mxu0
        %v8203 = vadd.f32 0.0, %v8202
        %v8204 = vpop.f32.mrf.mxu0
        %v8205 = vadd.f32 0.0, %v8204
        %8206 = vmatmul.bf16.gmra.mxu0 %v8089
        %v8207 = vpop.f32.mrf.mxu0
        %v8208 = vadd.f32 0.0, %v8207
        %v8209 = vpop.f32.mrf.mxu0
        %v8210 = vadd.f32 0.0, %v8209
        %8211 = vmatmul.bf16.gmra.mxu0 %v8092
        %v8212 = vpop.f32.mrf.mxu0
        %v8213 = vadd.f32 0.0, %v8212
        %v8214 = vpop.f32.mrf.mxu0
        %v8215 = vadd.f32 0.0, %v8214
        %8216 = vmatmul.bf16.gmra.mxu0 %v8095
        %v8217 = vpop.f32.mrf.mxu0
        %v8218 = vadd.f32 0.0, %v8217
        %v8219 = vpop.f32.mrf.mxu0
        %v8220 = vadd.f32 0.0, %v8219
        %8221 = vmatmul.bf16.gmra.mxu0 %v8098
        %v8222 = vpop.f32.mrf.mxu0
        %v8223 = vadd.f32 0.0, %v8222
        %v8224 = vpop.f32.mrf.mxu0
        %v8225 = vadd.f32 0.0, %v8224
        %8226 = vmatmul.bf16.gmra.mxu0 %v8101
        %v8227 = vpop.f32.mrf.mxu0
        %v8228 = vadd.f32 0.0, %v8227
        %v8229 = vpop.f32.mrf.mxu0
        %v8230 = vadd.f32 0.0, %v8229
        %8231 = vmatmul.bf16.gmra.mxu0 %v8104
        %v8232 = vpop.f32.mrf.mxu0
        %v8233 = vadd.f32 0.0, %v8232
        %v8234 = vpop.f32.mrf.mxu0
        %v8235 = vadd.f32 0.0, %v8234
        %8236 = vmatmul.bf16.gmra.mxu0 %v8107
        %v8237 = vpop.f32.mrf.mxu0
        %v8238 = vadd.f32 0.0, %v8237
        %v8239 = vpop.f32.mrf.mxu0
        %v8240 = vadd.f32 0.0, %v8239
        %8241 = vmatmul.bf16.gmra.mxu0 %v8110
        %v8242 = vpop.f32.mrf.mxu0
        %v8243 = vadd.f32 0.0, %v8242
        %v8244 = vpop.f32.mrf.mxu0
        %v8245 = vadd.f32 0.0, %v8244
        %8246 = vmatmul.bf16.gmra.mxu0 %v8113
        %v8247 = vpop.f32.mrf.mxu0
        %v8248 = vadd.f32 0.0, %v8247
        %v8249 = vpop.f32.mrf.mxu0
        %v8250 = vadd.f32 0.0, %v8249
        %8251 = vmatmul.bf16.gmra.mxu0 %v8116
        %v8252 = vpop.f32.mrf.mxu0
        %v8253 = vadd.f32 0.0, %v8252
        %v8254 = vpop.f32.mrf.mxu0
        %v8255 = vadd.f32 0.0, %v8254
        %8256 = vmatmul.bf16.gmra.mxu0 %v8119
        %v8257 = vpop.f32.mrf.mxu0
        %v8258 = vadd.f32 0.0, %v8257
        %v8259 = vpop.f32.mrf.mxu0
        %v8260 = vadd.f32 0.0, %v8259
        %8261 = vmatmul.bf16.gmra.mxu0 %v8122
        %v8262 = vpop.f32.mrf.mxu0
        %v8263 = vadd.f32 0.0, %v8262
        %v8264 = vpop.f32.mrf.mxu0
        %v8265 = vadd.f32 0.0, %v8264
        %8266 = vmatmul.bf16.gmra.mxu0 %v8125
        %v8267 = vpop.f32.mrf.mxu0
        %v8268 = vadd.f32 0.0, %v8267
        %v8269 = vpop.f32.mrf.mxu0
        %v8270 = vadd.f32 0.0, %v8269
        %8271 = vmatmul.bf16.gmra.mxu0 %v8128
        %v8272 = vpop.f32.mrf.mxu0
        %v8273 = vadd.f32 0.0, %v8272
        %v8274 = vpop.f32.mrf.mxu0
        %v8275 = vadd.f32 0.0, %v8274
        %8276 = vmatmul.bf16.gmra.mxu0 %v8131
        %v8277 = vpop.f32.mrf.mxu0
        %v8278 = vadd.f32 0.0, %v8277
        %v8279 = vpop.f32.mrf.mxu0
        %v8280 = vadd.f32 0.0, %v8279
        %8281 = vmatmul.bf16.gmra.mxu0 %v8134
        %v8282 = vpop.f32.mrf.mxu0
        %v8283 = vadd.f32 0.0, %v8282
        %v8284 = vpop.f32.mrf.mxu0
        %v8285 = vadd.f32 0.0, %v8284
        %8286 = vmatmul.bf16.gmra.mxu0 %v8137
        %v8287 = vpop.f32.mrf.mxu0
        %v8288 = vadd.f32 0.0, %v8287
        %v8289 = vpop.f32.mrf.mxu0
        %v8290 = vadd.f32 0.0, %v8289
        %8291 = vmatmul.bf16.gmra.mxu0 %v8140
        %v8292 = vpop.f32.mrf.mxu0
        %v8293 = vadd.f32 0.0, %v8292
        %v8294 = vpop.f32.mrf.mxu0
        %v8295 = vadd.f32 0.0, %v8294
        %8296 = vmatmul.bf16.gmra.mxu0 %v8143
        %v8297 = vpop.f32.mrf.mxu0
        %v8298 = vadd.f32 0.0, %v8297
        %v8299 = vpop.f32.mrf.mxu0
        %v8300 = vadd.f32 0.0, %v8299
        %8301 = vmatmul.bf16.gmra.mxu0 %v8146
        %v8302 = vpop.f32.mrf.mxu0
        %v8303 = vadd.f32 0.0, %v8302
        %v8304 = vpop.f32.mrf.mxu0
        %v8305 = vadd.f32 0.0, %v8304
        %8306 = vmatmul.bf16.gmra.mxu0 %v8149
        %v8307 = vpop.f32.mrf.mxu0
        %v8308 = vadd.f32 0.0, %v8307
        %v8309 = vpop.f32.mrf.mxu0
        %v8310 = vadd.f32 0.0, %v8309
        %8311 = vmatmul.bf16.gmra.mxu0 %v8152
        %v8312 = vpop.f32.mrf.mxu0
        %v8313 = vadd.f32 0.0, %v8312
        %v8314 = vpop.f32.mrf.mxu0
        %v8315 = vadd.f32 0.0, %v8314
        %8316 = vmatmul.bf16.gmra.mxu0 %v8155
        %v8317 = vpop.f32.mrf.mxu0
        %v8318 = vadd.f32 0.0, %v8317
        %v8319 = vpop.f32.mrf.mxu0
        %v8320 = vadd.f32 0.0, %v8319
        %8321 = vmatmul.bf16.gmra.mxu0 %v8158
        %v8322 = vpop.f32.mrf.mxu0
        %v8323 = vadd.f32 0.0, %v8322
        %v8324 = vpop.f32.mrf.mxu0
        %v8325 = vadd.f32 0.0, %v8324
        %8326 = vmatmul.bf16.gmra.mxu0 %v8161
        %v8327 = vpop.f32.mrf.mxu0
        %v8328 = vadd.f32 0.0, %v8327
        %v8329 = vpop.f32.mrf.mxu0
        %v8330 = vadd.f32 0.0, %v8329
        %8331 = vdwg.mxu0
        %v8332 = vadd.f32 %v8173, %v8175
        %v8333 = vadd.f32 %v8332, %v8178
        %v8334 = vadd.f32 %v8333, %v8180
        %v8335 = vadd.f32 %v8334, %v8183
        %v8336 = vadd.f32 %v8335, %v8185
        %v8337 = vadd.f32 %v8336, %v8188
        %v8338 = vadd.f32 %v8337, %v8190
        %v8339 = vadd.f32 %v8338, %v8193
        %v8340 = vadd.f32 %v8339, %v8195
        %v8341 = vadd.f32 %v8340, %v8198
        %v8342 = vadd.f32 %v8341, %v8200
        %v8343 = vadd.f32 %v8342, %v8203
        %v8344 = vadd.f32 %v8343, %v8205
        %v8345 = vadd.f32 %v8344, %v8208
        %v8346 = vadd.f32 %v8345, %v8210
        %v8347 = vadd.f32 %v8346, %v8213
        %v8348 = vadd.f32 %v8347, %v8215
        %v8349 = vadd.f32 %v8348, %v8218
        %v8350 = vadd.f32 %v8349, %v8220
        %v8351 = vadd.f32 %v8350, %v8223
        %v8352 = vadd.f32 %v8351, %v8225
        %v8353 = vadd.f32 %v8352, %v8228
        %v8354 = vadd.f32 %v8353, %v8230
        %v8355 = vadd.f32 %v8354, %v8233
        %v8356 = vadd.f32 %v8355, %v8235
        %v8357 = vadd.f32 %v8356, %v8238
        %v8358 = vadd.f32 %v8357, %v8240
        %v8359 = vadd.f32 %v8358, %v8243
        %v8360 = vadd.f32 %v8359, %v8245
        %v8361 = vadd.f32 %v8360, %v8248
        %v8362 = vadd.f32 %v8361, %v8250
        %v8363 = vadd.f32 %v8362, %v8253
        %v8364 = vadd.f32 %v8363, %v8255
        %v8365 = vadd.f32 %v8364, %v8258
        %v8366 = vadd.f32 %v8365, %v8260
        %v8367 = vadd.f32 %v8366, %v8263
        %v8368 = vadd.f32 %v8367, %v8265
        %v8369 = vadd.f32 %v8368, %v8268
        %v8370 = vadd.f32 %v8369, %v8270
        %v8371 = vadd.f32 %v8370, %v8273
        %v8372 = vadd.f32 %v8371, %v8275
        %v8373 = vadd.f32 %v8372, %v8278
        %v8374 = vadd.f32 %v8373, %v8280
        %v8375 = vadd.f32 %v8374, %v8283
        %v8376 = vadd.f32 %v8375, %v8285
        %v8377 = vadd.f32 %v8376, %v8288
        %v8378 = vadd.f32 %v8377, %v8290
        %v8379 = vadd.f32 %v8378, %v8293
        %v8380 = vadd.f32 %v8379, %v8295
        %v8381 = vadd.f32 %v8380, %v8298
        %v8382 = vadd.f32 %v8381, %v8300
        %v8383 = vadd.f32 %v8382, %v8303
        %v8384 = vadd.f32 %v8383, %v8305
        %v8385 = vadd.f32 %v8384, %v8308
        %v8386 = vadd.f32 %v8385, %v8310
        %v8387 = vadd.f32 %v8386, %v8313
        %v8388 = vadd.f32 %v8387, %v8315
        %v8389 = vadd.f32 %v8388, %v8318
        %v8390 = vadd.f32 %v8389, %v8320
        %v8391 = vadd.f32 %v8390, %v8323
        %v8392 = vadd.f32 %v8391, %v8325
        %v8393 = vadd.f32 %v8392, %v8328
        %v8394 = vadd.f32 %v8393, %v8330
        %v8395 = vmul.f32 %v8394, %v842
        %v8396 = vmul.f32 %v8173, %v8173
        %v8397 = vmul.f32 %v8175, %v8175
        %v8398 = vmul.f32 %v8178, %v8178
        %v8399 = vmul.f32 %v8180, %v8180
        %v8400 = vmul.f32 %v8183, %v8183
        %v8401 = vmul.f32 %v8185, %v8185
        %v8402 = vmul.f32 %v8188, %v8188
        %v8403 = vmul.f32 %v8190, %v8190
        %v8404 = vmul.f32 %v8193, %v8193
        %v8405 = vmul.f32 %v8195, %v8195
        %v8406 = vmul.f32 %v8198, %v8198
        %v8407 = vmul.f32 %v8200, %v8200
        %v8408 = vmul.f32 %v8203, %v8203
        %v8409 = vmul.f32 %v8205, %v8205
        %v8410 = vmul.f32 %v8208, %v8208
        %v8411 = vmul.f32 %v8210, %v8210
        %v8412 = vmul.f32 %v8213, %v8213
        %v8413 = vmul.f32 %v8215, %v8215
        %v8414 = vmul.f32 %v8218, %v8218
        %v8415 = vmul.f32 %v8220, %v8220
        %v8416 = vmul.f32 %v8223, %v8223
        %v8417 = vmul.f32 %v8225, %v8225
        %v8418 = vmul.f32 %v8228, %v8228
        %v8419 = vmul.f32 %v8230, %v8230
        %v8420 = vmul.f32 %v8233, %v8233
        %v8421 = vmul.f32 %v8235, %v8235
        %v8422 = vmul.f32 %v8238, %v8238
        %v8423 = vmul.f32 %v8240, %v8240
        %v8424 = vmul.f32 %v8243, %v8243
        %v8425 = vmul.f32 %v8245, %v8245
        %v8426 = vmul.f32 %v8248, %v8248
        %v8427 = vmul.f32 %v8250, %v8250
        %v8428 = vmul.f32 %v8253, %v8253
        %v8429 = vmul.f32 %v8255, %v8255
        %v8430 = vmul.f32 %v8258, %v8258
        %v8431 = vmul.f32 %v8260, %v8260
        %v8432 = vmul.f32 %v8263, %v8263
        %v8433 = vmul.f32 %v8265, %v8265
        %v8434 = vmul.f32 %v8268, %v8268
        %v8435 = vmul.f32 %v8270, %v8270
        %v8436 = vmul.f32 %v8273, %v8273
        %v8437 = vmul.f32 %v8275, %v8275
        %v8438 = vmul.f32 %v8278, %v8278
        %v8439 = vmul.f32 %v8280, %v8280
        %v8440 = vmul.f32 %v8283, %v8283
        %v8441 = vmul.f32 %v8285, %v8285
        %v8442 = vmul.f32 %v8288, %v8288
        %v8443 = vmul.f32 %v8290, %v8290
        %v8444 = vmul.f32 %v8293, %v8293
        %v8445 = vmul.f32 %v8295, %v8295
        %v8446 = vmul.f32 %v8298, %v8298
        %v8447 = vmul.f32 %v8300, %v8300
        %v8448 = vmul.f32 %v8303, %v8303
        %v8449 = vmul.f32 %v8305, %v8305
        %v8450 = vmul.f32 %v8308, %v8308
        %v8451 = vmul.f32 %v8310, %v8310
        %v8452 = vmul.f32 %v8313, %v8313
        %v8453 = vmul.f32 %v8315, %v8315
        %v8454 = vmul.f32 %v8318, %v8318
        %v8455 = vmul.f32 %v8320, %v8320
        %v8456 = vmul.f32 %v8323, %v8323
        %v8457 = vmul.f32 %v8325, %v8325
        %v8458 = vmul.f32 %v8328, %v8328
        %v8459 = vmul.f32 %v8330, %v8330
        %v8460 = vadd.f32 %v8396, %v8397
        %v8461 = vadd.f32 %v8460, %v8398
        %v8462 = vadd.f32 %v8461, %v8399
        %v8463 = vadd.f32 %v8462, %v8400
        %v8464 = vadd.f32 %v8463, %v8401
        %v8465 = vadd.f32 %v8464, %v8402
        %v8466 = vadd.f32 %v8465, %v8403
        %v8467 = vadd.f32 %v8466, %v8404
        %v8468 = vadd.f32 %v8467, %v8405
        %v8469 = vadd.f32 %v8468, %v8406
        %v8470 = vadd.f32 %v8469, %v8407
        %v8471 = vadd.f32 %v8470, %v8408
        %v8472 = vadd.f32 %v8471, %v8409
        %v8473 = vadd.f32 %v8472, %v8410
        %v8474 = vadd.f32 %v8473, %v8411
        %v8475 = vadd.f32 %v8474, %v8412
        %v8476 = vadd.f32 %v8475, %v8413
        %v8477 = vadd.f32 %v8476, %v8414
        %v8478 = vadd.f32 %v8477, %v8415
        %v8479 = vadd.f32 %v8478, %v8416
        %v8480 = vadd.f32 %v8479, %v8417
        %v8481 = vadd.f32 %v8480, %v8418
        %v8482 = vadd.f32 %v8481, %v8419
        %v8483 = vadd.f32 %v8482, %v8420
        %v8484 = vadd.f32 %v8483, %v8421
        %v8485 = vadd.f32 %v8484, %v8422
        %v8486 = vadd.f32 %v8485, %v8423
        %v8487 = vadd.f32 %v8486, %v8424
        %v8488 = vadd.f32 %v8487, %v8425
        %v8489 = vadd.f32 %v8488, %v8426
        %v8490 = vadd.f32 %v8489, %v8427
        %v8491 = vadd.f32 %v8490, %v8428
        %v8492 = vadd.f32 %v8491, %v8429
        %v8493 = vadd.f32 %v8492, %v8430
        %v8494 = vadd.f32 %v8493, %v8431
        %v8495 = vadd.f32 %v8494, %v8432
        %v8496 = vadd.f32 %v8495, %v8433
        %v8497 = vadd.f32 %v8496, %v8434
        %v8498 = vadd.f32 %v8497, %v8435
        %v8499 = vadd.f32 %v8498, %v8436
        %v8500 = vadd.f32 %v8499, %v8437
        %v8501 = vadd.f32 %v8500, %v8438
        %v8502 = vadd.f32 %v8501, %v8439
        %v8503 = vadd.f32 %v8502, %v8440
        %v8504 = vadd.f32 %v8503, %v8441
        %v8505 = vadd.f32 %v8504, %v8442
        %v8506 = vadd.f32 %v8505, %v8443
        %v8507 = vadd.f32 %v8506, %v8444
        %v8508 = vadd.f32 %v8507, %v8445
        %v8509 = vadd.f32 %v8508, %v8446
        %v8510 = vadd.f32 %v8509, %v8447
        %v8511 = vadd.f32 %v8510, %v8448
        %v8512 = vadd.f32 %v8511, %v8449
        %v8513 = vadd.f32 %v8512, %v8450
        %v8514 = vadd.f32 %v8513, %v8451
        %v8515 = vadd.f32 %v8514, %v8452
        %v8516 = vadd.f32 %v8515, %v8453
        %v8517 = vadd.f32 %v8516, %v8454
        %v8518 = vadd.f32 %v8517, %v8455
        %v8519 = vadd.f32 %v8518, %v8456
        %v8520 = vadd.f32 %v8519, %v8457
        %v8521 = vadd.f32 %v8520, %v8458
        %v8522 = vadd.f32 %v8521, %v8459
        %v8523 = vmul.f32 %v8522, %v842
        %v8524 = vmul.f32 %v8395, %v8395
        %v8525 = vsub.f32 %v8523, %v8524
        %v8526 = vmax.f32 %v8525, 0.0
        %v8527 = vsub.f32 %v8173, %v8395
        %v8528 = vsub.f32 %v8175, %v8395
        %v8529 = vsub.f32 %v8178, %v8395
        %v8530 = vsub.f32 %v8180, %v8395
        %v8531 = vsub.f32 %v8183, %v8395
        %v8532 = vsub.f32 %v8185, %v8395
        %v8533 = vsub.f32 %v8188, %v8395
        %v8534 = vsub.f32 %v8190, %v8395
        %v8535 = vsub.f32 %v8193, %v8395
        %v8536 = vsub.f32 %v8195, %v8395
        %v8537 = vsub.f32 %v8198, %v8395
        %v8538 = vsub.f32 %v8200, %v8395
        %v8539 = vsub.f32 %v8203, %v8395
        %v8540 = vsub.f32 %v8205, %v8395
        %v8541 = vsub.f32 %v8208, %v8395
        %v8542 = vsub.f32 %v8210, %v8395
        %v8543 = vsub.f32 %v8213, %v8395
        %v8544 = vsub.f32 %v8215, %v8395
        %v8545 = vsub.f32 %v8218, %v8395
        %v8546 = vsub.f32 %v8220, %v8395
        %v8547 = vsub.f32 %v8223, %v8395
        %v8548 = vsub.f32 %v8225, %v8395
        %v8549 = vsub.f32 %v8228, %v8395
        %v8550 = vsub.f32 %v8230, %v8395
        %v8551 = vsub.f32 %v8233, %v8395
        %v8552 = vsub.f32 %v8235, %v8395
        %v8553 = vsub.f32 %v8238, %v8395
        %v8554 = vsub.f32 %v8240, %v8395
        %v8555 = vsub.f32 %v8243, %v8395
        %v8556 = vsub.f32 %v8245, %v8395
        %v8557 = vsub.f32 %v8248, %v8395
        %v8558 = vsub.f32 %v8250, %v8395
        %v8559 = vsub.f32 %v8253, %v8395
        %v8560 = vsub.f32 %v8255, %v8395
        %v8561 = vsub.f32 %v8258, %v8395
        %v8562 = vsub.f32 %v8260, %v8395
        %v8563 = vsub.f32 %v8263, %v8395
        %v8564 = vsub.f32 %v8265, %v8395
        %v8565 = vsub.f32 %v8268, %v8395
        %v8566 = vsub.f32 %v8270, %v8395
        %v8567 = vsub.f32 %v8273, %v8395
        %v8568 = vsub.f32 %v8275, %v8395
        %v8569 = vsub.f32 %v8278, %v8395
        %v8570 = vsub.f32 %v8280, %v8395
        %v8571 = vsub.f32 %v8283, %v8395
        %v8572 = vsub.f32 %v8285, %v8395
        %v8573 = vsub.f32 %v8288, %v8395
        %v8574 = vsub.f32 %v8290, %v8395
        %v8575 = vsub.f32 %v8293, %v8395
        %v8576 = vsub.f32 %v8295, %v8395
        %v8577 = vsub.f32 %v8298, %v8395
        %v8578 = vsub.f32 %v8300, %v8395
        %v8579 = vsub.f32 %v8303, %v8395
        %v8580 = vsub.f32 %v8305, %v8395
        %v8581 = vsub.f32 %v8308, %v8395
        %v8582 = vsub.f32 %v8310, %v8395
        %v8583 = vsub.f32 %v8313, %v8395
        %v8584 = vsub.f32 %v8315, %v8395
        %v8585 = vsub.f32 %v8318, %v8395
        %v8586 = vsub.f32 %v8320, %v8395
        %v8587 = vsub.f32 %v8323, %v8395
        %v8588 = vsub.f32 %v8325, %v8395
        %v8589 = vsub.f32 %v8328, %v8395
        %v8590 = vsub.f32 %v8330, %v8395
        %v8591 = vadd.f32 %v8526, 1e-05
        %v8592 = vrsqrt.pop %v8591
        %v8593 = vmul.f32 %v8592, %v8591
        %v8594 = vmul.f32 %v8593, %v8592
        %v8595 = vmul.f32 0.5, %v8594
        %v8596 = vsub.f32 1.5, %v8595
        %v8597 = vmul.f32 %v8592, %v8596
        %vm8598 = vweird.f32 %v8591
        %vm8599 = vweird.f32 %v8592
        %vm8600 = vmor %vm8598, %vm8599
        %v8601 = vsel %vm8600, %v8592, %v8597
        %v8602 = vmul.f32 %v8527, %v8601
        %v8603 = vmul.f32 %v8528, %v8601
        %v8604 = vmul.f32 %v8529, %v8601
        %v8605 = vmul.f32 %v8530, %v8601
        %v8606 = vmul.f32 %v8531, %v8601
        %v8607 = vmul.f32 %v8532, %v8601
        %v8608 = vmul.f32 %v8533, %v8601
        %v8609 = vmul.f32 %v8534, %v8601
        %v8610 = vmul.f32 %v8535, %v8601
        %v8611 = vmul.f32 %v8536, %v8601
        %v8612 = vmul.f32 %v8537, %v8601
        %v8613 = vmul.f32 %v8538, %v8601
        %v8614 = vmul.f32 %v8539, %v8601
        %v8615 = vmul.f32 %v8540, %v8601
        %v8616 = vmul.f32 %v8541, %v8601
        %v8617 = vmul.f32 %v8542, %v8601
        %v8618 = vmul.f32 %v8543, %v8601
        %v8619 = vmul.f32 %v8544, %v8601
        %v8620 = vmul.f32 %v8545, %v8601
        %v8621 = vmul.f32 %v8546, %v8601
        %v8622 = vmul.f32 %v8547, %v8601
        %v8623 = vmul.f32 %v8548, %v8601
        %v8624 = vmul.f32 %v8549, %v8601
        %v8625 = vmul.f32 %v8550, %v8601
        %v8626 = vmul.f32 %v8551, %v8601
        %v8627 = vmul.f32 %v8552, %v8601
        %v8628 = vmul.f32 %v8553, %v8601
        %v8629 = vmul.f32 %v8554, %v8601
        %v8630 = vmul.f32 %v8555, %v8601
        %v8631 = vmul.f32 %v8556, %v8601
        %v8632 = vmul.f32 %v8557, %v8601
        %v8633 = vmul.f32 %v8558, %v8601
        %v8634 = vmul.f32 %v8559, %v8601
        %v8635 = vmul.f32 %v8560, %v8601
        %v8636 = vmul.f32 %v8561, %v8601
        %v8637 = vmul.f32 %v8562, %v8601
        %v8638 = vmul.f32 %v8563, %v8601
        %v8639 = vmul.f32 %v8564, %v8601
        %v8640 = vmul.f32 %v8565, %v8601
        %v8641 = vmul.f32 %v8566, %v8601
        %v8642 = vmul.f32 %v8567, %v8601
        %v8643 = vmul.f32 %v8568, %v8601
        %v8644 = vmul.f32 %v8569, %v8601
        %v8645 = vmul.f32 %v8570, %v8601
        %v8646 = vmul.f32 %v8571, %v8601
        %v8647 = vmul.f32 %v8572, %v8601
        %v8648 = vmul.f32 %v8573, %v8601
        %v8649 = vmul.f32 %v8574, %v8601
        %v8650 = vmul.f32 %v8575, %v8601
        %v8651 = vmul.f32 %v8576, %v8601
        %v8652 = vmul.f32 %v8577, %v8601
        %v8653 = vmul.f32 %v8578, %v8601
        %v8654 = vmul.f32 %v8579, %v8601
        %v8655 = vmul.f32 %v8580, %v8601
        %v8656 = vmul.f32 %v8581, %v8601
        %v8657 = vmul.f32 %v8582, %v8601
        %v8658 = vmul.f32 %v8583, %v8601
        %v8659 = vmul.f32 %v8584, %v8601
        %v8660 = vmul.f32 %v8585, %v8601
        %v8661 = vmul.f32 %v8586, %v8601
        %v8662 = vmul.f32 %v8587, %v8601
        %v8663 = vmul.f32 %v8588, %v8601
        %v8664 = vmul.f32 %v8589, %v8601
        %v8665 = vmul.f32 %v8590, %v8601
        %v8666 = vld [vmem:[%s192] sm:$0xf]
        %v8667 = vld [vmem:[%s192 + $0x4] sm:$0xf]
        %v8668 = vld [vmem:[%s192 + $0x8] sm:$0xf]
        %v8669 = vld [vmem:[%s192 + $0xc] sm:$0xf]
        %v8670 = vld [vmem:[%s192 + $0x10] sm:$0xf]
        %v8671 = vld [vmem:[%s192 + $0x14] sm:$0xf]
        %v8672 = vld [vmem:[%s192 + $0x18] sm:$0xf]
        %v8673 = vld [vmem:[%s192 + $0x1c] sm:$0xf]
        %v8674 = vld [vmem:[%s192 + $0x20] sm:$0xf]
        %v8675 = vld [vmem:[%s192 + $0x24] sm:$0xf]
        %v8676 = vld [vmem:[%s192 + $0x28] sm:$0xf]
        %v8677 = vld [vmem:[%s192 + $0x2c] sm:$0xf]
        %v8678 = vld [vmem:[%s192 + $0x30] sm:$0xf]
        %v8679 = vld [vmem:[%s192 + $0x34] sm:$0xf]
        %v8680 = vld [vmem:[%s192 + $0x38] sm:$0xf]
        %v8681 = vld [vmem:[%s192 + $0x3c] sm:$0xf]
        %v8682 = vld [vmem:[%s192 + $0x40] sm:$0xf]
        %v8683 = vld [vmem:[%s192 + $0x44] sm:$0xf]
        %v8684 = vld [vmem:[%s192 + $0x48] sm:$0xf]
        %v8685 = vld [vmem:[%s192 + $0x4c] sm:$0xf]
        %v8686 = vld [vmem:[%s192 + $0x50] sm:$0xf]
        %v8687 = vld [vmem:[%s192 + $0x54] sm:$0xf]
        %v8688 = vld [vmem:[%s192 + $0x58] sm:$0xf]
        %v8689 = vld [vmem:[%s192 + $0x5c] sm:$0xf]
        %v8690 = vld [vmem:[%s192 + $0x60] sm:$0xf]
        %v8691 = vld [vmem:[%s192 + $0x64] sm:$0xf]
        %v8692 = vld [vmem:[%s192 + $0x68] sm:$0xf]
        %v8693 = vld [vmem:[%s192 + $0x6c] sm:$0xf]
        %v8694 = vld [vmem:[%s192 + $0x70] sm:$0xf]
        %v8695 = vld [vmem:[%s192 + $0x74] sm:$0xf]
        %v8696 = vld [vmem:[%s192 + $0x78] sm:$0xf]
        %v8697 = vld [vmem:[%s192 + $0x7c] sm:$0xf]
        %v8698 = vld [vmem:[%s192 + $0x80] sm:$0xf]
        %v8699 = vld [vmem:[%s192 + $0x84] sm:$0xf]
        %v8700 = vld [vmem:[%s192 + $0x88] sm:$0xf]
        %v8701 = vld [vmem:[%s192 + $0x8c] sm:$0xf]
        %v8702 = vld [vmem:[%s192 + $0x90] sm:$0xf]
        %v8703 = vld [vmem:[%s192 + $0x94] sm:$0xf]
        %v8704 = vld [vmem:[%s192 + $0x98] sm:$0xf]
        %v8705 = vld [vmem:[%s192 + $0x9c] sm:$0xf]
        %v8706 = vld [vmem:[%s192 + $0xa0] sm:$0xf]
        %v8707 = vld [vmem:[%s192 + $0xa4] sm:$0xf]
        %v8708 = vld [vmem:[%s192 + $0xa8] sm:$0xf]
        %v8709 = vld [vmem:[%s192 + $0xac] sm:$0xf]
        %v8710 = vld [vmem:[%s192 + $0xb0] sm:$0xf]
        %v8711 = vld [vmem:[%s192 + $0xb4] sm:$0xf]
        %v8712 = vld [vmem:[%s192 + $0xb8] sm:$0xf]
        %v8713 = vld [vmem:[%s192 + $0xbc] sm:$0xf]
        %v8714 = vld [vmem:[%s192 + $0xc0] sm:$0xf]
        %v8715 = vld [vmem:[%s192 + $0xc4] sm:$0xf]
        %v8716 = vld [vmem:[%s192 + $0xc8] sm:$0xf]
        %v8717 = vld [vmem:[%s192 + $0xcc] sm:$0xf]
        %v8718 = vld [vmem:[%s192 + $0xd0] sm:$0xf]
        %v8719 = vld [vmem:[%s192 + $0xd4] sm:$0xf]
        %v8720 = vld [vmem:[%s192 + $0xd8] sm:$0xf]
        %v8721 = vld [vmem:[%s192 + $0xdc] sm:$0xf]
        %v8722 = vld [vmem:[%s192 + $0xe0] sm:$0xf]
        %v8723 = vld [vmem:[%s192 + $0xe4] sm:$0xf]
        %v8724 = vld [vmem:[%s192 + $0xe8] sm:$0xf]
        %v8725 = vld [vmem:[%s192 + $0xec] sm:$0xf]
        %v8726 = vld [vmem:[%s192 + $0xf0] sm:$0xf]
        %v8727 = vld [vmem:[%s192 + $0xf4] sm:$0xf]
        %v8728 = vld [vmem:[%s192 + $0xf8] sm:$0xf]
        %v8729 = vld [vmem:[%s192 + $0xfc] sm:$0xf]
        %v8730 = vunpack.c.l.bf16 %v8666
        %v8731 = vunpack.c.l.bf16 %v8667
        %v8732 = vunpack.c.l.bf16 %v8668
        %v8733 = vunpack.c.l.bf16 %v8669
        %v8734 = vunpack.c.l.bf16 %v8670
        %v8735 = vunpack.c.l.bf16 %v8671
        %v8736 = vunpack.c.l.bf16 %v8672
        %v8737 = vunpack.c.l.bf16 %v8673
        %v8738 = vunpack.c.l.bf16 %v8674
        %v8739 = vunpack.c.l.bf16 %v8675
        %v8740 = vunpack.c.l.bf16 %v8676
        %v8741 = vunpack.c.l.bf16 %v8677
        %v8742 = vunpack.c.l.bf16 %v8678
        %v8743 = vunpack.c.l.bf16 %v8679
        %v8744 = vunpack.c.l.bf16 %v8680
        %v8745 = vunpack.c.l.bf16 %v8681
        %v8746 = vunpack.c.l.bf16 %v8682
        %v8747 = vunpack.c.l.bf16 %v8683
        %v8748 = vunpack.c.l.bf16 %v8684
        %v8749 = vunpack.c.l.bf16 %v8685
        %v8750 = vunpack.c.l.bf16 %v8686
        %v8751 = vunpack.c.l.bf16 %v8687
        %v8752 = vunpack.c.l.bf16 %v8688
        %v8753 = vunpack.c.l.bf16 %v8689
        %v8754 = vunpack.c.l.bf16 %v8690
        %v8755 = vunpack.c.l.bf16 %v8691
        %v8756 = vunpack.c.l.bf16 %v8692
        %v8757 = vunpack.c.l.bf16 %v8693
        %v8758 = vunpack.c.l.bf16 %v8694
        %v8759 = vunpack.c.l.bf16 %v8695
        %v8760 = vunpack.c.l.bf16 %v8696
        %v8761 = vunpack.c.l.bf16 %v8697
        %v8762 = vunpack.c.l.bf16 %v8698
        %v8763 = vunpack.c.l.bf16 %v8699
        %v8764 = vunpack.c.l.bf16 %v8700
        %v8765 = vunpack.c.l.bf16 %v8701
        %v8766 = vunpack.c.l.bf16 %v8702
        %v8767 = vunpack.c.l.bf16 %v8703
        %v8768 = vunpack.c.l.bf16 %v8704
        %v8769 = vunpack.c.l.bf16 %v8705
        %v8770 = vunpack.c.l.bf16 %v8706
        %v8771 = vunpack.c.l.bf16 %v8707
        %v8772 = vunpack.c.l.bf16 %v8708
        %v8773 = vunpack.c.l.bf16 %v8709
        %v8774 = vunpack.c.l.bf16 %v8710
        %v8775 = vunpack.c.l.bf16 %v8711
        %v8776 = vunpack.c.l.bf16 %v8712
        %v8777 = vunpack.c.l.bf16 %v8713
        %v8778 = vunpack.c.l.bf16 %v8714
        %v8779 = vunpack.c.l.bf16 %v8715
        %v8780 = vunpack.c.l.bf16 %v8716
        %v8781 = vunpack.c.l.bf16 %v8717
        %v8782 = vunpack.c.l.bf16 %v8718
        %v8783 = vunpack.c.l.bf16 %v8719
        %v8784 = vunpack.c.l.bf16 %v8720
        %v8785 = vunpack.c.l.bf16 %v8721
        %v8786 = vunpack.c.l.bf16 %v8722
        %v8787 = vunpack.c.l.bf16 %v8723
        %v8788 = vunpack.c.l.bf16 %v8724
        %v8789 = vunpack.c.l.bf16 %v8725
        %v8790 = vunpack.c.l.bf16 %v8726
        %v8791 = vunpack.c.l.bf16 %v8727
        %v8792 = vunpack.c.l.bf16 %v8728
        %v8793 = vunpack.c.l.bf16 %v8729
        %v8794 = vadd.f32 %v8602, %v8730
        %v8795 = vadd.f32 %v8603, %v8731
        %v8796 = vadd.f32 %v8604, %v8732
        %v8797 = vadd.f32 %v8605, %v8733
        %v8798 = vadd.f32 %v8606, %v8734
        %v8799 = vadd.f32 %v8607, %v8735
        %v8800 = vadd.f32 %v8608, %v8736
        %v8801 = vadd.f32 %v8609, %v8737
        %v8802 = vadd.f32 %v8610, %v8738
        %v8803 = vadd.f32 %v8611, %v8739
        %v8804 = vadd.f32 %v8612, %v8740
        %v8805 = vadd.f32 %v8613, %v8741
        %v8806 = vadd.f32 %v8614, %v8742
        %v8807 = vadd.f32 %v8615, %v8743
        %v8808 = vadd.f32 %v8616, %v8744
        %v8809 = vadd.f32 %v8617, %v8745
        %v8810 = vadd.f32 %v8618, %v8746
        %v8811 = vadd.f32 %v8619, %v8747
        %v8812 = vadd.f32 %v8620, %v8748
        %v8813 = vadd.f32 %v8621, %v8749
        %v8814 = vadd.f32 %v8622, %v8750
        %v8815 = vadd.f32 %v8623, %v8751
        %v8816 = vadd.f32 %v8624, %v8752
        %v8817 = vadd.f32 %v8625, %v8753
        %v8818 = vadd.f32 %v8626, %v8754
        %v8819 = vadd.f32 %v8627, %v8755
        %v8820 = vadd.f32 %v8628, %v8756
        %v8821 = vadd.f32 %v8629, %v8757
        %v8822 = vadd.f32 %v8630, %v8758
        %v8823 = vadd.f32 %v8631, %v8759
        %v8824 = vadd.f32 %v8632, %v8760
        %v8825 = vadd.f32 %v8633, %v8761
        %v8826 = vadd.f32 %v8634, %v8762
        %v8827 = vadd.f32 %v8635, %v8763
        %v8828 = vadd.f32 %v8636, %v8764
        %v8829 = vadd.f32 %v8637, %v8765
        %v8830 = vadd.f32 %v8638, %v8766
        %v8831 = vadd.f32 %v8639, %v8767
        %v8832 = vadd.f32 %v8640, %v8768
        %v8833 = vadd.f32 %v8641, %v8769
        %v8834 = vadd.f32 %v8642, %v8770
        %v8835 = vadd.f32 %v8643, %v8771
        %v8836 = vadd.f32 %v8644, %v8772
        %v8837 = vadd.f32 %v8645, %v8773
        %v8838 = vadd.f32 %v8646, %v8774
        %v8839 = vadd.f32 %v8647, %v8775
        %v8840 = vadd.f32 %v8648, %v8776
        %v8841 = vadd.f32 %v8649, %v8777
        %v8842 = vadd.f32 %v8650, %v8778
        %v8843 = vadd.f32 %v8651, %v8779
        %v8844 = vadd.f32 %v8652, %v8780
        %v8845 = vadd.f32 %v8653, %v8781
        %v8846 = vadd.f32 %v8654, %v8782
        %v8847 = vadd.f32 %v8655, %v8783
        %v8848 = vadd.f32 %v8656, %v8784
        %v8849 = vadd.f32 %v8657, %v8785
        %v8850 = vadd.f32 %v8658, %v8786
        %v8851 = vadd.f32 %v8659, %v8787
        %v8852 = vadd.f32 %v8660, %v8788
        %v8853 = vadd.f32 %v8661, %v8789
        %v8854 = vadd.f32 %v8662, %v8790
        %v8855 = vadd.f32 %v8663, %v8791
        %v8856 = vadd.f32 %v8664, %v8792
        %v8857 = vadd.f32 %v8665, %v8793
        %v8858 = vmax.f32 %v8794, 0.0
        %v8859 = vmax.f32 %v8795, 0.0
        %v8860 = vmax.f32 %v8796, 0.0
        %v8861 = vmax.f32 %v8797, 0.0
        %v8862 = vmax.f32 %v8798, 0.0
        %v8863 = vmax.f32 %v8799, 0.0
        %v8864 = vmax.f32 %v8800, 0.0
        %v8865 = vmax.f32 %v8801, 0.0
        %v8866 = vmax.f32 %v8802, 0.0
        %v8867 = vmax.f32 %v8803, 0.0
        %v8868 = vmax.f32 %v8804, 0.0
        %v8869 = vmax.f32 %v8805, 0.0
        %v8870 = vmax.f32 %v8806, 0.0
        %v8871 = vmax.f32 %v8807, 0.0
        %v8872 = vmax.f32 %v8808, 0.0
        %v8873 = vmax.f32 %v8809, 0.0
        %v8874 = vmax.f32 %v8810, 0.0
        %v8875 = vmax.f32 %v8811, 0.0
        %v8876 = vmax.f32 %v8812, 0.0
        %v8877 = vmax.f32 %v8813, 0.0
        %v8878 = vmax.f32 %v8814, 0.0
        %v8879 = vmax.f32 %v8815, 0.0
        %v8880 = vmax.f32 %v8816, 0.0
        %v8881 = vmax.f32 %v8817, 0.0
        %v8882 = vmax.f32 %v8818, 0.0
        %v8883 = vmax.f32 %v8819, 0.0
        %v8884 = vmax.f32 %v8820, 0.0
        %v8885 = vmax.f32 %v8821, 0.0
        %v8886 = vmax.f32 %v8822, 0.0
        %v8887 = vmax.f32 %v8823, 0.0
        %v8888 = vmax.f32 %v8824, 0.0
        %v8889 = vmax.f32 %v8825, 0.0
        %v8890 = vmax.f32 %v8826, 0.0
        %v8891 = vmax.f32 %v8827, 0.0
        %v8892 = vmax.f32 %v8828, 0.0
        %v8893 = vmax.f32 %v8829, 0.0
        %v8894 = vmax.f32 %v8830, 0.0
        %v8895 = vmax.f32 %v8831, 0.0
        %v8896 = vmax.f32 %v8832, 0.0
        %v8897 = vmax.f32 %v8833, 0.0
        %v8898 = vmax.f32 %v8834, 0.0
        %v8899 = vmax.f32 %v8835, 0.0
        %v8900 = vmax.f32 %v8836, 0.0
        %v8901 = vmax.f32 %v8837, 0.0
        %v8902 = vmax.f32 %v8838, 0.0
        %v8903 = vmax.f32 %v8839, 0.0
        %v8904 = vmax.f32 %v8840, 0.0
        %v8905 = vmax.f32 %v8841, 0.0
        %v8906 = vmax.f32 %v8842, 0.0
        %v8907 = vmax.f32 %v8843, 0.0
        %v8908 = vmax.f32 %v8844, 0.0
        %v8909 = vmax.f32 %v8845, 0.0
        %v8910 = vmax.f32 %v8846, 0.0
        %v8911 = vmax.f32 %v8847, 0.0
        %v8912 = vmax.f32 %v8848, 0.0
        %v8913 = vmax.f32 %v8849, 0.0
        %v8914 = vmax.f32 %v8850, 0.0
        %v8915 = vmax.f32 %v8851, 0.0
        %v8916 = vmax.f32 %v8852, 0.0
        %v8917 = vmax.f32 %v8853, 0.0
        %v8918 = vmax.f32 %v8854, 0.0
        %v8919 = vmax.f32 %v8855, 0.0
        %v8920 = vmax.f32 %v8856, 0.0
        %v8921 = vmax.f32 %v8857, 0.0
        %v8922 = vpack.c.bf16 %v8858, %v8858
        %v8923 = vpack.c.bf16 %v8859, %v8859
        %v8924 = vpack.c.bf16 %v8860, %v8860
        %v8925 = vpack.c.bf16 %v8861, %v8861
        %v8926 = vpack.c.bf16 %v8862, %v8862
        %v8927 = vpack.c.bf16 %v8863, %v8863
        %v8928 = vpack.c.bf16 %v8864, %v8864
        %v8929 = vpack.c.bf16 %v8865, %v8865
        %v8930 = vpack.c.bf16 %v8866, %v8866
        %v8931 = vpack.c.bf16 %v8867, %v8867
        %v8932 = vpack.c.bf16 %v8868, %v8868
        %v8933 = vpack.c.bf16 %v8869, %v8869
        %v8934 = vpack.c.bf16 %v8870, %v8870
        %v8935 = vpack.c.bf16 %v8871, %v8871
        %v8936 = vpack.c.bf16 %v8872, %v8872
        %v8937 = vpack.c.bf16 %v8873, %v8873
        %v8938 = vpack.c.bf16 %v8874, %v8874
        %v8939 = vpack.c.bf16 %v8875, %v8875
        %v8940 = vpack.c.bf16 %v8876, %v8876
        %v8941 = vpack.c.bf16 %v8877, %v8877
        %v8942 = vpack.c.bf16 %v8878, %v8878
        %v8943 = vpack.c.bf16 %v8879, %v8879
        %v8944 = vpack.c.bf16 %v8880, %v8880
        %v8945 = vpack.c.bf16 %v8881, %v8881
        %v8946 = vpack.c.bf16 %v8882, %v8882
        %v8947 = vpack.c.bf16 %v8883, %v8883
        %v8948 = vpack.c.bf16 %v8884, %v8884
        %v8949 = vpack.c.bf16 %v8885, %v8885
        %v8950 = vpack.c.bf16 %v8886, %v8886
        %v8951 = vpack.c.bf16 %v8887, %v8887
        %v8952 = vpack.c.bf16 %v8888, %v8888
        %v8953 = vpack.c.bf16 %v8889, %v8889
        %v8954 = vpack.c.bf16 %v8890, %v8890
        %v8955 = vpack.c.bf16 %v8891, %v8891
        %v8956 = vpack.c.bf16 %v8892, %v8892
        %v8957 = vpack.c.bf16 %v8893, %v8893
        %v8958 = vpack.c.bf16 %v8894, %v8894
        %v8959 = vpack.c.bf16 %v8895, %v8895
        %v8960 = vpack.c.bf16 %v8896, %v8896
        %v8961 = vpack.c.bf16 %v8897, %v8897
        %v8962 = vpack.c.bf16 %v8898, %v8898
        %v8963 = vpack.c.bf16 %v8899, %v8899
        %v8964 = vpack.c.bf16 %v8900, %v8900
        %v8965 = vpack.c.bf16 %v8901, %v8901
        %v8966 = vpack.c.bf16 %v8902, %v8902
        %v8967 = vpack.c.bf16 %v8903, %v8903
        %v8968 = vpack.c.bf16 %v8904, %v8904
        %v8969 = vpack.c.bf16 %v8905, %v8905
        %v8970 = vpack.c.bf16 %v8906, %v8906
        %v8971 = vpack.c.bf16 %v8907, %v8907
        %v8972 = vpack.c.bf16 %v8908, %v8908
        %v8973 = vpack.c.bf16 %v8909, %v8909
        %v8974 = vpack.c.bf16 %v8910, %v8910
        %v8975 = vpack.c.bf16 %v8911, %v8911
        %v8976 = vpack.c.bf16 %v8912, %v8912
        %v8977 = vpack.c.bf16 %v8913, %v8913
        %v8978 = vpack.c.bf16 %v8914, %v8914
        %v8979 = vpack.c.bf16 %v8915, %v8915
        %v8980 = vpack.c.bf16 %v8916, %v8916
        %v8981 = vpack.c.bf16 %v8917, %v8917
        %v8982 = vpack.c.bf16 %v8918, %v8918
        %v8983 = vpack.c.bf16 %v8919, %v8919
        %v8984 = vpack.c.bf16 %v8920, %v8920
        %v8985 = vpack.c.bf16 %v8921, %v8921
        %8986 = vst [vmem:[%s217] sm:$0xf] %v8922
        %8987 = vst [vmem:[%s217 + $0x4] sm:$0xf] %v8923
        %8988 = vst [vmem:[%s217 + $0x8] sm:$0xf] %v8924
        %8989 = vst [vmem:[%s217 + $0xc] sm:$0xf] %v8925
        %8990 = vst [vmem:[%s217 + $0x10] sm:$0xf] %v8926
        %8991 = vst [vmem:[%s217 + $0x14] sm:$0xf] %v8927
        %8992 = vst [vmem:[%s217 + $0x18] sm:$0xf] %v8928
        %8993 = vst [vmem:[%s217 + $0x1c] sm:$0xf] %v8929
        %8994 = vst [vmem:[%s217 + $0x20] sm:$0xf] %v8930
        %8995 = vst [vmem:[%s217 + $0x24] sm:$0xf] %v8931
        %8996 = vst [vmem:[%s217 + $0x28] sm:$0xf] %v8932
        %8997 = vst [vmem:[%s217 + $0x2c] sm:$0xf] %v8933
        %8998 = vst [vmem:[%s217 + $0x30] sm:$0xf] %v8934
        %8999 = vst [vmem:[%s217 + $0x34] sm:$0xf] %v8935
        %9000 = vst [vmem:[%s217 + $0x38] sm:$0xf] %v8936
        %9001 = vst [vmem:[%s217 + $0x3c] sm:$0xf] %v8937
        %9002 = vst [vmem:[%s217 + $0x40] sm:$0xf] %v8938
        %9003 = vst [vmem:[%s217 + $0x44] sm:$0xf] %v8939
        %9004 = vst [vmem:[%s217 + $0x48] sm:$0xf] %v8940
        %9005 = vst [vmem:[%s217 + $0x4c] sm:$0xf] %v8941
        %9006 = vst [vmem:[%s217 + $0x50] sm:$0xf] %v8942
        %9007 = vst [vmem:[%s217 + $0x54] sm:$0xf] %v8943
        %9008 = vst [vmem:[%s217 + $0x58] sm:$0xf] %v8944
        %9009 = vst [vmem:[%s217 + $0x5c] sm:$0xf] %v8945
        %9010 = vst [vmem:[%s217 + $0x60] sm:$0xf] %v8946
        %9011 = vst [vmem:[%s217 + $0x64] sm:$0xf] %v8947
        %9012 = vst [vmem:[%s217 + $0x68] sm:$0xf] %v8948
        %9013 = vst [vmem:[%s217 + $0x6c] sm:$0xf] %v8949
        %9014 = vst [vmem:[%s217 + $0x70] sm:$0xf] %v8950
        %9015 = vst [vmem:[%s217 + $0x74] sm:$0xf] %v8951
        %9016 = vst [vmem:[%s217 + $0x78] sm:$0xf] %v8952
        %9017 = vst [vmem:[%s217 + $0x7c] sm:$0xf] %v8953
        %9018 = vst [vmem:[%s217 + $0x80] sm:$0xf] %v8954
        %9019 = vst [vmem:[%s217 + $0x84] sm:$0xf] %v8955
        %9020 = vst [vmem:[%s217 + $0x88] sm:$0xf] %v8956
        %9021 = vst [vmem:[%s217 + $0x8c] sm:$0xf] %v8957
        %9022 = vst [vmem:[%s217 + $0x90] sm:$0xf] %v8958
        %9023 = vst [vmem:[%s217 + $0x94] sm:$0xf] %v8959
        %9024 = vst [vmem:[%s217 + $0x98] sm:$0xf] %v8960
        %9025 = vst [vmem:[%s217 + $0x9c] sm:$0xf] %v8961
        %9026 = vst [vmem:[%s217 + $0xa0] sm:$0xf] %v8962
        %9027 = vst [vmem:[%s217 + $0xa4] sm:$0xf] %v8963
        %9028 = vst [vmem:[%s217 + $0xa8] sm:$0xf] %v8964
        %9029 = vst [vmem:[%s217 + $0xac] sm:$0xf] %v8965
        %9030 = vst [vmem:[%s217 + $0xb0] sm:$0xf] %v8966
        %9031 = vst [vmem:[%s217 + $0xb4] sm:$0xf] %v8967
        %9032 = vst [vmem:[%s217 + $0xb8] sm:$0xf] %v8968
        %9033 = vst [vmem:[%s217 + $0xbc] sm:$0xf] %v8969
        %9034 = vst [vmem:[%s217 + $0xc0] sm:$0xf] %v8970
        %9035 = vst [vmem:[%s217 + $0xc4] sm:$0xf] %v8971
        %9036 = vst [vmem:[%s217 + $0xc8] sm:$0xf] %v8972
        %9037 = vst [vmem:[%s217 + $0xcc] sm:$0xf] %v8973
        %9038 = vst [vmem:[%s217 + $0xd0] sm:$0xf] %v8974
        %9039 = vst [vmem:[%s217 + $0xd4] sm:$0xf] %v8975
        %9040 = vst [vmem:[%s217 + $0xd8] sm:$0xf] %v8976
        %9041 = vst [vmem:[%s217 + $0xdc] sm:$0xf] %v8977
        %9042 = vst [vmem:[%s217 + $0xe0] sm:$0xf] %v8978
        %9043 = vst [vmem:[%s217 + $0xe4] sm:$0xf] %v8979
        %9044 = vst [vmem:[%s217 + $0xe8] sm:$0xf] %v8980
        %9045 = vst [vmem:[%s217 + $0xec] sm:$0xf] %v8981
        %9046 = vst [vmem:[%s217 + $0xf0] sm:$0xf] %v8982
        %9047 = vst [vmem:[%s217 + $0xf4] sm:$0xf] %v8983
        %9048 = vst [vmem:[%s217 + $0xf8] sm:$0xf] %v8984
        %9049 = vst [vmem:[%s217 + $0xfc] sm:$0xf] %v8985
        %s9050 = sand.u32 %s118, 1
        %s9051 = scalar_lea.sflag [#allocation6], %s9050
        %s9052 = sand.u32 %s118, 1
        %s9053 = smul.addr %s9052, 256
        %s9054 = scalar_lea.vmem [#allocation7], %s9053
        // Predicated region
        $region41: #{tpu_custom_call.1} parent=35 // pred_check
          %p9055 = pneg %p128
        $region42: #{tpu_custom_call.1} parent=35 // pred_check_branch
          %9057 = sbr.rel (%p9055) target = $region44
        $region43: #{tpu_custom_call.1} parent=35 // pred_region
          %9059 = vsyncadd %s9051, 0
          %s9060 = smul.addr %s21, 64
          %s9061 = smul.addr %s9060, 4
          %s9062 = scalar_lea.hbm %s4, %s9061
          %s9063 = sshll.u32 %s9054, 4
          %s9064 = int_to_ptr.vmem [resolvable:$true] %s9063
          %s9065 = sshll.u32 %s9062, 4
          %s9066 = int_to_ptr.hbm [resolvable:$true] %s9065
          %9071 = dma.vmem_to_hbm [thread:$0]  %s9064, 4096, %s9066, %s9051, 64, 64, 4
        $region44: #{tpu_custom_call.1} parent=35 // pred_fallthru
          _
      $region36: #{tpu_custom_call.1} parent=5 // pred_fallthru
        _
      %p9072 = scmp.le.s32.totalorder 2, %s16
      // Predicated region
      $region45: #{tpu_custom_call.1} parent=5 // pred_check
        %p9073 = pneg %p9072
      $region46: #{tpu_custom_call.1} parent=5 // pred_check_branch
        %9075 = sbr.rel (%p9073) target = $region48
      $region47: #{tpu_custom_call.1} parent=5 // pred_region
        %s9076 = ssub.s32 %s16, 2
        // Predicated region
        $region49: #{tpu_custom_call.1} parent=47 // pred_check
          %p9077 = pneg %p134
        $region50: #{tpu_custom_call.1} parent=47 // pred_check_branch
          %9079 = sbr.rel (%p9077) target = $region52
        $region51: #{tpu_custom_call.1} parent=47 // pred_region
          %s9080 = sand.u32 %s119, 1
          %s9081 = scalar_lea.sflag [#allocation6], %s9080
          %s9082 = sand.u32 %s119, 1
          %s9083 = smul.addr %s9082, 256
          %s9084 = scalar_lea.vmem [#allocation7], %s9083
          %9086 = dma.done %s9081, 4096
        $region52: #{tpu_custom_call.1} parent=47 // pred_fallthru
          _
      $region48: #{tpu_custom_call.1} parent=5 // pred_fallthru
        _
    $region6: #{tpu_custom_call.1} parent=1 // loop_footer
      %s20 = sadd.s32 1, %s16
    $region7: #{tpu_custom_call.1} parent=1 // loop_footer_branch
      %15 = sbr.rel target = $region3
    $region8: #{tpu_custom_call.1} parent=1 // loop_exit
      _
    %9087 = vsyncpa [#allocation5], 1
    %s9088 = scalar_lea.sflag [#allocation5], 1
    %9089 = vsyncpa %s9088, 1
    %9090 = vsyncpa [#allocation6], 1
    %s9091 = scalar_lea.sflag [#allocation6], 1
    %9092 = vsyncpa %s9091, 1

</llo_original>
